<compile_context>
chip_gen: v5e
topology: v5e:2x2
jax: 0.10.0
libtpu: 0.0.40
codegen_flags: <defaults>
</compile_context>

<pallas_src>
import functools
import math

import jax
import jax.numpy as jnp
from jax import lax
from jax.experimental import pallas as pl
from jax.experimental.pallas import tpu as pltpu


# ----------------------------------------------------------------------------
# Static helpers (trace-time)
# ----------------------------------------------------------------------------
def _row_taps(n_in, n_out):
    """Static 2-tap bilinear (align_corners=True) taps/weights along one axis."""
    taps = []
    for i in range(n_out):
        if n_in == 1 or n_out == 1:
            taps.append((0, 0, 0.0))
            continue
        src = i * (n_in - 1) / (n_out - 1)
        i0 = max(min(int(math.floor(src)), n_in - 2), 0)
        i1 = min(i0 + 1, n_in - 1)
        taps.append((i0, i1, float(src - i0)))
    return tuple(taps)


def _interp_matrix(n_in, n_out):
    """1-D bilinear interpolation matrix, PyTorch semantics with align_corners=True."""
    i = jnp.arange(n_out, dtype=jnp.float32)
    src = i * (n_in - 1) / max(n_out - 1, 1)
    i0 = jnp.clip(jnp.floor(src).astype(jnp.int32), 0, max(n_in - 2, 0))
    i1 = jnp.minimum(i0 + 1, n_in - 1)
    frac = src - i0.astype(jnp.float32)
    rows = jnp.arange(n_out)
    M = jnp.zeros((n_out, n_in), jnp.float32)
    M = M.at[rows, i0].add(1.0 - frac)
    M = M.at[rows, i1].add(frac)
    return M


# ----------------------------------------------------------------------------
# Fused FeatureFusionBlock kernel (per batch element)
# ----------------------------------------------------------------------------
def _ffb_kernel(x0_ref, x1_ref, w11_ref, b11_ref, w12_ref, b12_ref,
                w21_ref, b21_ref, w22_ref, b22_ref, wo_ref, bo_ref, cm_ref,
                o_ref, pad_sc, *, H, W, C, Cout, row_taps):
    f32 = jnp.float32

    # Zero the padded scratch once per grid step: the 1-px border stays zero and
    # the interior is fully overwritten before every conv read.
    pad_sc[...] = jnp.zeros((H + 2, W + 2, C), f32)

    def conv3x3(inp_hwc, w, b):
        # inp_hwc: (H, W, C) f32 (already activated); zero "SAME" padding via scratch.
        pad_sc[1:H + 1, 1:W + 1, :] = inp_hwc
        a = pad_sc[...]
        acc = jnp.zeros((H * W, C), f32)
        for dy in range(3):
            for dx in range(3):
                patch = a[dy:dy + H, dx:dx + W, :].reshape(H * W, C)
                acc = acc + jnp.dot(patch, w[dy, dx],
                                    preferred_element_type=f32)
        return acc + b                                       # (H*W, C)

    def rcu(x_hwc, w1, b1, w2, b2):
        # ResidualConvUnit_custom: relu -> conv1 -> relu -> conv2 -> skip add.
        # relu(pad(x)) == pad(relu(x)) since relu(0) == 0.
        t = conv3x3(jnp.maximum(x_hwc, 0.0), w1, b1)
        t = jnp.maximum(t, 0.0)
        t = conv3x3(t.reshape(H, W, C), w2, b2)
        return t + x_hwc.reshape(H * W, C)                   # (H*W, C)

    # res = resConfUnit1(xs[1])
    x1 = x1_ref[0].astype(f32)                               # (H, W, C)
    res = rcu(x1, w11_ref[...], b11_ref[...], w12_ref[...], b12_ref[...])

    # output = xs[0] + res ; output = resConfUnit2(output)
    x0 = x0_ref[0].astype(f32).reshape(H * W, C)
    u = x0 + res
    y = rcu(u.reshape(H, W, C), w21_ref[...], b21_ref[...],
            w22_ref[...], b22_ref[...])                      # (H*W, C)

    # 1x1 out_conv BEFORE the upsample (both linear; align_corners bilinear weights
    # sum to 1, so the bias commutes exactly).
    z = jnp.dot(y, wo_ref[...], preferred_element_type=f32) + bo_ref[...]   # (H*W, Cout)
    zv = z.reshape(H, W, Cout)

    # Separable bilinear x2 upsample (align_corners=True):
    #   H direction: static 2-tap combine (VPU), W direction: (2W, W) matmul (MXU).
    cm = cm_ref[...]                                         # (2W, W)
    for i, (h0, h1, f) in enumerate(row_taps):
        if f == 0.0:
            zi = zv[h0]                                      # (W, Cout)
        else:
            zi = (1.0 - f) * zv[h0] + f * zv[h1]             # (W, Cout)
        oi = jnp.dot(cm, zi, preferred_element_type=f32)     # (2W, Cout)
        o_ref[0, i, :, :] = oi.astype(o_ref.dtype)


def feature_fusion_block(x0, x1, p):
    """FeatureFusionBlock_custom_original.forward(x0, x1) with deconv=False, bn=False,
    expand=False, align_corners=True, activation=ReLU.  NHWC activations."""
    B, H, W, C = x0.shape
    Cout = p["wo"].shape[1]
    cm = _interp_matrix(W, 2 * W)                            # (2W, W), tiny
    kern = functools.partial(_ffb_kernel, H=H, W=W, C=C, Cout=Cout,
                             row_taps=_row_taps(H, 2 * H))
    # TODO(synk): at real MiDaS resolutions (H,W >= 96, C = 256) tile the H axis into
    # row strips with a 1-row halo (grid=(B, H/tile_h)), raise vmem_limit_bytes per
    # generation, and cast matmul operands to bf16; whole-image blocks are only
    # appropriate for the small shapes exercised here.
    return pl.pallas_call(
        kern,
        out_shape=jax.ShapeDtypeStruct((B, 2 * H, 2 * W, Cout), x0.dtype),
        grid_spec=pltpu.PrefetchScalarGridSpec(
            num_scalar_prefetch=0,
            grid=(B,),
            in_specs=[
                pl.BlockSpec((1, H, W, C), lambda b: (b, 0, 0, 0)),   # x0
                pl.BlockSpec((1, H, W, C), lambda b: (b, 0, 0, 0)),   # x1
                pl.BlockSpec((3, 3, C, C), lambda b: (0, 0, 0, 0)),   # w1_1
                pl.BlockSpec((1, C), lambda b: (0, 0)),               # b1_1
                pl.BlockSpec((3, 3, C, C), lambda b: (0, 0, 0, 0)),   # w1_2
                pl.BlockSpec((1, C), lambda b: (0, 0)),               # b1_2
                pl.BlockSpec((3, 3, C, C), lambda b: (0, 0, 0, 0)),   # w2_1
                pl.BlockSpec((1, C), lambda b: (0, 0)),               # b2_1
                pl.BlockSpec((3, 3, C, C), lambda b: (0, 0, 0, 0)),   # w2_2
                pl.BlockSpec((1, C), lambda b: (0, 0)),               # b2_2
                pl.BlockSpec((C, Cout), lambda b: (0, 0)),            # wo
                pl.BlockSpec((1, Cout), lambda b: (0, 0)),            # bo
                pl.BlockSpec((2 * W, W), lambda b: (0, 0)),           # cm
            ],
            out_specs=pl.BlockSpec((1, 2 * H, 2 * W, Cout),
                                   lambda b: (b, 0, 0, 0)),
            scratch_shapes=[pltpu.VMEM((H + 2, W + 2, C), jnp.float32)],
        ),
        compiler_params=pltpu.CompilerParams(
            dimension_semantics=("parallel",)),
    )(x0, x1, p["w1_1"], p["b1_1"], p["w1_2"], p["b1_2"],
      p["w2_1"], p["b2_1"], p["w2_2"], p["b2_2"], p["wo"], p["bo"], cm)


# ----------------------------------------------------------------------------
# Pure-JAX reference (for verification only)
# ----------------------------------------------------------------------------
def _conv3x3_ref(x, w, b):
    y = lax.conv_general_dilated(x, w, window_strides=(1, 1), padding="SAME",
                                 dimension_numbers=("NHWC", "HWIO", "NHWC"))
    return y + b.reshape(1, 1, 1, -1)


def _rcu_ref(x, w1, b1, w2, b2):
    out = jnp.maximum(x, 0.0)
    out = _conv3x3_ref(out, w1, b1)
    out = jnp.maximum(out, 0.0)
    out = _conv3x3_ref(out, w2, b2)
    return out + x


def _ffb_ref(x0, x1, p):
    B, H, W, C = x0.shape
    out = x0 + _rcu_ref(x1, p["w1_1"], p["b1_1"], p["w1_2"], p["b1_2"])
    out = _rcu_ref(out, p["w2_1"], p["b2_1"], p["w2_2"], p["b2_2"])
    R = _interp_matrix(H, 2 * H)
    Cm = _interp_matrix(W, 2 * W)
    up = jnp.einsum("ih,nhwc->niwc", R, out)
    up = jnp.einsum("jw,niwc->nijc", Cm, up)
    return jnp.einsum("nijc,cd->nijd", up, p["wo"]) + p["bo"].reshape(1, 1, 1, -1)


# ----------------------------------------------------------------------------
if __name__ == "__main__":
    key = jax.random.PRNGKey(0)
    B, H, W, C = 2, 16, 16, 8  # features=8, spatial=16x16, batch=2 (NHWC)
    ks = jax.random.split(key, 12)

    def w3(k):
        return jax.random.normal(k, (3, 3, C, C), jnp.float32) * 0.1

    params = {
        "w1_1": w3(ks[0]), "b1_1": jax.random.normal(ks[1], (1, C), jnp.float32) * 0.1,
        "w1_2": w3(ks[2]), "b1_2": jax.random.normal(ks[3], (1, C), jnp.float32) * 0.1,
        "w2_1": w3(ks[4]), "b2_1": jax.random.normal(ks[5], (1, C), jnp.float32) * 0.1,
        "w2_2": w3(ks[6]), "b2_2": jax.random.normal(ks[7], (1, C), jnp.float32) * 0.1,
        "wo": jax.random.normal(ks[8], (C, C), jnp.float32) * 0.1,
        "bo": jax.random.normal(ks[9], (1, C), jnp.float32) * 0.1,
    }
    x0 = jax.random.normal(ks[10], (B, H, W, C), jnp.float32)
    x1 = jax.random.normal(ks[11], (B, H, W, C), jnp.float32)

    out = feature_fusion_block(x0, x1, params)
    out = jax.block_until_ready(out)
    assert out.shape == (B, 2 * H, 2 * W, C), out.shape

    ref = _ffb_ref(x0, x1, params)
    err = float(jnp.max(jnp.abs(out - ref)))
    assert err < 1e-3, f"max abs error vs reference: {err}"

    print("KERNEL_OK")
</pallas_src>

<mosaic_0001>
module attributes {stable_mosaic.version = 11 : i64} {
  func.func @_ffb_kernel(%arg0: i32, %arg1: memref<1x16x16x8xf32, #tpu.memory_space<vmem>>, %arg2: memref<1x16x16x8xf32, #tpu.memory_space<vmem>>, %arg3: memref<3x3x8x8xf32, #tpu.memory_space<vmem>>, %arg4: memref<1x8xf32, #tpu.memory_space<vmem>>, %arg5: memref<3x3x8x8xf32, #tpu.memory_space<vmem>>, %arg6: memref<1x8xf32, #tpu.memory_space<vmem>>, %arg7: memref<3x3x8x8xf32, #tpu.memory_space<vmem>>, %arg8: memref<1x8xf32, #tpu.memory_space<vmem>>, %arg9: memref<3x3x8x8xf32, #tpu.memory_space<vmem>>, %arg10: memref<1x8xf32, #tpu.memory_space<vmem>>, %arg11: memref<8x8xf32, #tpu.memory_space<vmem>>, %arg12: memref<1x8xf32, #tpu.memory_space<vmem>>, %arg13: memref<32x16xf32, #tpu.memory_space<vmem>>, %arg14: memref<1x32x32x8xf32, #tpu.memory_space<vmem>>, %arg15: memref<18x18x8xf32, #tpu.memory_space<vmem>>) attributes {dimension_semantics = [#tpu.dimension_semantics<parallel>], iteration_bounds = array<i64: 2>, scalar_prefetch = 0 : i64, scratch_operands = 1 : i64, tpu.core_type = #tpu.core_type<tc>, window_params = [{transform_indices = @transform_0, window_bounds = array<i64: 1, 16, 16, 8>}, {transform_indices = @transform_1, window_bounds = array<i64: 1, 16, 16, 8>}, {pipeline_mode = #tpu.pipeline_mode<synchronous>, transform_indices = @transform_2, window_bounds = array<i64: 3, 3, 8, 8>}, {pipeline_mode = #tpu.pipeline_mode<synchronous>, transform_indices = @transform_3, window_bounds = array<i64: 1, 8>}, {pipeline_mode = #tpu.pipeline_mode<synchronous>, transform_indices = @transform_4, window_bounds = array<i64: 3, 3, 8, 8>}, {pipeline_mode = #tpu.pipeline_mode<synchronous>, transform_indices = @transform_5, window_bounds = array<i64: 1, 8>}, {pipeline_mode = #tpu.pipeline_mode<synchronous>, transform_indices = @transform_6, window_bounds = array<i64: 3, 3, 8, 8>}, {pipeline_mode = #tpu.pipeline_mode<synchronous>, transform_indices = @transform_7, window_bounds = array<i64: 1, 8>}, {pipeline_mode = #tpu.pipeline_mode<synchronous>, transform_indices = @transform_8, window_bounds = array<i64: 3, 3, 8, 8>}, {pipeline_mode = #tpu.pipeline_mode<synchronous>, transform_indices = @transform_9, window_bounds = array<i64: 1, 8>}, {pipeline_mode = #tpu.pipeline_mode<synchronous>, transform_indices = @transform_10, window_bounds = array<i64: 8, 8>}, {pipeline_mode = #tpu.pipeline_mode<synchronous>, transform_indices = @transform_11, window_bounds = array<i64: 1, 8>}, {pipeline_mode = #tpu.pipeline_mode<synchronous>, transform_indices = @transform_12, window_bounds = array<i64: 32, 16>}, {transform_indices = @transform_13, window_bounds = array<i64: 1, 32, 32, 8>}]} {
    %cst = arith.constant 0.000000e+00 : f32
    %0 = vector.broadcast %cst : f32 to vector<18x18x8xf32>
    %c0 = arith.constant 0 : index
    %c0_0 = arith.constant 0 : index
    %c0_1 = arith.constant 0 : index
    %1 = vector.load %arg15[%c0, %c0_0, %c0_1] : memref<18x18x8xf32, #tpu.memory_space<vmem>>, vector<18x18x8xf32>
    tpu.vector_store %arg15[%c0, %c0_0, %c0_1], %0 {strides = array<i32>} : memref<18x18x8xf32, #tpu.memory_space<vmem>>, vector<18x18x8xf32>,
    %c0_2 = arith.constant 0 : index
    %c0_3 = arith.constant 0 : index
    %c0_4 = arith.constant 0 : index
    %c0_5 = arith.constant 0 : index
    %2 = vector.load %arg2[%c0_2, %c0_3, %c0_4, %c0_5] : memref<1x16x16x8xf32, #tpu.memory_space<vmem>>, vector<1x16x16x8xf32>
    %3 = vector.shape_cast %2 : vector<1x16x16x8xf32> to vector<16x16x8xf32>
    %c0_6 = arith.constant 0 : index
    %c0_7 = arith.constant 0 : index
    %c0_8 = arith.constant 0 : index
    %c0_9 = arith.constant 0 : index
    %4 = vector.load %arg3[%c0_6, %c0_7, %c0_8, %c0_9] : memref<3x3x8x8xf32, #tpu.memory_space<vmem>>, vector<3x3x8x8xf32>
    %c0_10 = arith.constant 0 : index
    %c0_11 = arith.constant 0 : index
    %5 = vector.load %arg4[%c0_10, %c0_11] : memref<1x8xf32, #tpu.memory_space<vmem>>, vector<1x8xf32>
    %c0_12 = arith.constant 0 : index
    %c0_13 = arith.constant 0 : index
    %c0_14 = arith.constant 0 : index
    %c0_15 = arith.constant 0 : index
    %6 = vector.load %arg5[%c0_12, %c0_13, %c0_14, %c0_15] : memref<3x3x8x8xf32, #tpu.memory_space<vmem>>, vector<3x3x8x8xf32>
    %c0_16 = arith.constant 0 : index
    %c0_17 = arith.constant 0 : index
    %7 = vector.load %arg6[%c0_16, %c0_17] : memref<1x8xf32, #tpu.memory_space<vmem>>, vector<1x8xf32>
    %cst_18 = arith.constant 0.000000e+00 : f32
    %8 = vector.broadcast %cst_18 : f32 to vector<16x16x8xf32>
    %9 = arith.maximumf %3, %8 : vector<16x16x8xf32>
    %c1 = arith.constant 1 : index
    %c1_19 = arith.constant 1 : index
    %c0_20 = arith.constant 0 : index
    %10 = vector.load %arg15[%c1, %c1_19, %c0_20] : memref<18x18x8xf32, #tpu.memory_space<vmem>>, vector<16x16x8xf32>
    tpu.vector_store %arg15[%c1, %c1_19, %c0_20], %9 {strides = array<i32>} : memref<18x18x8xf32, #tpu.memory_space<vmem>>, vector<16x16x8xf32>,
    %c0_21 = arith.constant 0 : index
    %c0_22 = arith.constant 0 : index
    %c0_23 = arith.constant 0 : index
    %11 = vector.load %arg15[%c0_21, %c0_22, %c0_23] : memref<18x18x8xf32, #tpu.memory_space<vmem>>, vector<18x18x8xf32>
    %cst_24 = arith.constant 0.000000e+00 : f32
    %12 = vector.broadcast %cst_24 : f32 to vector<256x8xf32>
    %13 = vector.extract_strided_slice %11 {offsets = [0, 0, 0], sizes = [16, 16, 8], strides = [1, 1, 1]} : vector<18x18x8xf32> to vector<16x16x8xf32>
    %14 = vector.shape_cast %13 : vector<16x16x8xf32> to vector<256x8xf32>
    %15 = vector.extract_strided_slice %4 {offsets = [0, 0, 0, 0], sizes = [1, 1, 8, 8], strides = [1, 1, 1, 1]} : vector<3x3x8x8xf32> to vector<1x1x8x8xf32>
    %16 = vector.shape_cast %15 : vector<1x1x8x8xf32> to vector<8x8xf32>
    %cst_25 = arith.constant dense<0.000000e+00> : vector<256x8xf32>
    %17 = tpu.matmul %14, %16, %cst_25 {dimension_numbers = #tpu.dot_dimension_numbers<[1], [0], [0], [1], [0, 0, 1, 1], [], []>} : vector<256x8xf32>, vector<8x8xf32>, vector<256x8xf32> -> vector<256x8xf32>
    %18 = arith.addf %12, %17 : vector<256x8xf32>
    %19 = vector.extract_strided_slice %11 {offsets = [0, 1, 0], sizes = [16, 16, 8], strides = [1, 1, 1]} : vector<18x18x8xf32> to vector<16x16x8xf32>
    %20 = vector.shape_cast %19 : vector<16x16x8xf32> to vector<256x8xf32>
    %21 = vector.extract_strided_slice %4 {offsets = [0, 1, 0, 0], sizes = [1, 1, 8, 8], strides = [1, 1, 1, 1]} : vector<3x3x8x8xf32> to vector<1x1x8x8xf32>
    %22 = vector.shape_cast %21 : vector<1x1x8x8xf32> to vector<8x8xf32>
    %cst_26 = arith.constant dense<0.000000e+00> : vector<256x8xf32>
    %23 = tpu.matmul %20, %22, %cst_26 {dimension_numbers = #tpu.dot_dimension_numbers<[1], [0], [0], [1], [0, 0, 1, 1], [], []>} : vector<256x8xf32>, vector<8x8xf32>, vector<256x8xf32> -> vector<256x8xf32>
    %24 = arith.addf %18, %23 : vector<256x8xf32>
    %25 = vector.extract_strided_slice %11 {offsets = [0, 2, 0], sizes = [16, 16, 8], strides = [1, 1, 1]} : vector<18x18x8xf32> to vector<16x16x8xf32>
    %26 = vector.shape_cast %25 : vector<16x16x8xf32> to vector<256x8xf32>
    %27 = vector.extract_strided_slice %4 {offsets = [0, 2, 0, 0], sizes = [1, 1, 8, 8], strides = [1, 1, 1, 1]} : vector<3x3x8x8xf32> to vector<1x1x8x8xf32>
    %28 = vector.shape_cast %27 : vector<1x1x8x8xf32> to vector<8x8xf32>
    %cst_27 = arith.constant dense<0.000000e+00> : vector<256x8xf32>
    %29 = tpu.matmul %26, %28, %cst_27 {dimension_numbers = #tpu.dot_dimension_numbers<[1], [0], [0], [1], [0, 0, 1, 1], [], []>} : vector<256x8xf32>, vector<8x8xf32>, vector<256x8xf32> -> vector<256x8xf32>
    %30 = arith.addf %24, %29 : vector<256x8xf32>
    %31 = vector.extract_strided_slice %11 {offsets = [1, 0, 0], sizes = [16, 16, 8], strides = [1, 1, 1]} : vector<18x18x8xf32> to vector<16x16x8xf32>
    %32 = vector.shape_cast %31 : vector<16x16x8xf32> to vector<256x8xf32>
    %33 = vector.extract_strided_slice %4 {offsets = [1, 0, 0, 0], sizes = [1, 1, 8, 8], strides = [1, 1, 1, 1]} : vector<3x3x8x8xf32> to vector<1x1x8x8xf32>
    %34 = vector.shape_cast %33 : vector<1x1x8x8xf32> to vector<8x8xf32>
    %cst_28 = arith.constant dense<0.000000e+00> : vector<256x8xf32>
    %35 = tpu.matmul %32, %34, %cst_28 {dimension_numbers = #tpu.dot_dimension_numbers<[1], [0], [0], [1], [0, 0, 1, 1], [], []>} : vector<256x8xf32>, vector<8x8xf32>, vector<256x8xf32> -> vector<256x8xf32>
    %36 = arith.addf %30, %35 : vector<256x8xf32>
    %37 = vector.extract_strided_slice %11 {offsets = [1, 1, 0], sizes = [16, 16, 8], strides = [1, 1, 1]} : vector<18x18x8xf32> to vector<16x16x8xf32>
    %38 = vector.shape_cast %37 : vector<16x16x8xf32> to vector<256x8xf32>
    %39 = vector.extract_strided_slice %4 {offsets = [1, 1, 0, 0], sizes = [1, 1, 8, 8], strides = [1, 1, 1, 1]} : vector<3x3x8x8xf32> to vector<1x1x8x8xf32>
    %40 = vector.shape_cast %39 : vector<1x1x8x8xf32> to vector<8x8xf32>
    %cst_29 = arith.constant dense<0.000000e+00> : vector<256x8xf32>
    %41 = tpu.matmul %38, %40, %cst_29 {dimension_numbers = #tpu.dot_dimension_numbers<[1], [0], [0], [1], [0, 0, 1, 1], [], []>} : vector<256x8xf32>, vector<8x8xf32>, vector<256x8xf32> -> vector<256x8xf32>
    %42 = arith.addf %36, %41 : vector<256x8xf32>
    %43 = vector.extract_strided_slice %11 {offsets = [1, 2, 0], sizes = [16, 16, 8], strides = [1, 1, 1]} : vector<18x18x8xf32> to vector<16x16x8xf32>
    %44 = vector.shape_cast %43 : vector<16x16x8xf32> to vector<256x8xf32>
    %45 = vector.extract_strided_slice %4 {offsets = [1, 2, 0, 0], sizes = [1, 1, 8, 8], strides = [1, 1, 1, 1]} : vector<3x3x8x8xf32> to vector<1x1x8x8xf32>
    %46 = vector.shape_cast %45 : vector<1x1x8x8xf32> to vector<8x8xf32>
    %cst_30 = arith.constant dense<0.000000e+00> : vector<256x8xf32>
    %47 = tpu.matmul %44, %46, %cst_30 {dimension_numbers = #tpu.dot_dimension_numbers<[1], [0], [0], [1], [0, 0, 1, 1], [], []>} : vector<256x8xf32>, vector<8x8xf32>, vector<256x8xf32> -> vector<256x8xf32>
    %48 = arith.addf %42, %47 : vector<256x8xf32>
    %49 = vector.extract_strided_slice %11 {offsets = [2, 0, 0], sizes = [16, 16, 8], strides = [1, 1, 1]} : vector<18x18x8xf32> to vector<16x16x8xf32>
    %50 = vector.shape_cast %49 : vector<16x16x8xf32> to vector<256x8xf32>
    %51 = vector.extract_strided_slice %4 {offsets = [2, 0, 0, 0], sizes = [1, 1, 8, 8], strides = [1, 1, 1, 1]} : vector<3x3x8x8xf32> to vector<1x1x8x8xf32>
    %52 = vector.shape_cast %51 : vector<1x1x8x8xf32> to vector<8x8xf32>
    %cst_31 = arith.constant dense<0.000000e+00> : vector<256x8xf32>
    %53 = tpu.matmul %50, %52, %cst_31 {dimension_numbers = #tpu.dot_dimension_numbers<[1], [0], [0], [1], [0, 0, 1, 1], [], []>} : vector<256x8xf32>, vector<8x8xf32>, vector<256x8xf32> -> vector<256x8xf32>
    %54 = arith.addf %48, %53 : vector<256x8xf32>
    %55 = vector.extract_strided_slice %11 {offsets = [2, 1, 0], sizes = [16, 16, 8], strides = [1, 1, 1]} : vector<18x18x8xf32> to vector<16x16x8xf32>
    %56 = vector.shape_cast %55 : vector<16x16x8xf32> to vector<256x8xf32>
    %57 = vector.extract_strided_slice %4 {offsets = [2, 1, 0, 0], sizes = [1, 1, 8, 8], strides = [1, 1, 1, 1]} : vector<3x3x8x8xf32> to vector<1x1x8x8xf32>
    %58 = vector.shape_cast %57 : vector<1x1x8x8xf32> to vector<8x8xf32>
    %cst_32 = arith.constant dense<0.000000e+00> : vector<256x8xf32>
    %59 = tpu.matmul %56, %58, %cst_32 {dimension_numbers = #tpu.dot_dimension_numbers<[1], [0], [0], [1], [0, 0, 1, 1], [], []>} : vector<256x8xf32>, vector<8x8xf32>, vector<256x8xf32> -> vector<256x8xf32>
    %60 = arith.addf %54, %59 : vector<256x8xf32>
    %61 = vector.extract_strided_slice %11 {offsets = [2, 2, 0], sizes = [16, 16, 8], strides = [1, 1, 1]} : vector<18x18x8xf32> to vector<16x16x8xf32>
    %62 = vector.shape_cast %61 : vector<16x16x8xf32> to vector<256x8xf32>
    %63 = vector.extract_strided_slice %4 {offsets = [2, 2, 0, 0], sizes = [1, 1, 8, 8], strides = [1, 1, 1, 1]} : vector<3x3x8x8xf32> to vector<1x1x8x8xf32>
    %64 = vector.shape_cast %63 : vector<1x1x8x8xf32> to vector<8x8xf32>
    %cst_33 = arith.constant dense<0.000000e+00> : vector<256x8xf32>
    %65 = tpu.matmul %62, %64, %cst_33 {dimension_numbers = #tpu.dot_dimension_numbers<[1], [0], [0], [1], [0, 0, 1, 1], [], []>} : vector<256x8xf32>, vector<8x8xf32>, vector<256x8xf32> -> vector<256x8xf32>
    %66 = arith.addf %60, %65 : vector<256x8xf32>
    %67 = vector.broadcast %5 : vector<1x8xf32> to vector<256x8xf32>
    %68 = arith.addf %66, %67 : vector<256x8xf32>
    %cst_34 = arith.constant 0.000000e+00 : f32
    %69 = vector.broadcast %cst_34 : f32 to vector<256x8xf32>
    %70 = arith.maximumf %68, %69 : vector<256x8xf32>
    %71 = vector.shape_cast %70 : vector<256x8xf32> to vector<16x16x8xf32>
    %c1_35 = arith.constant 1 : index
    %c1_36 = arith.constant 1 : index
    %c0_37 = arith.constant 0 : index
    %72 = vector.load %arg15[%c1_35, %c1_36, %c0_37] : memref<18x18x8xf32, #tpu.memory_space<vmem>>, vector<16x16x8xf32>
    tpu.vector_store %arg15[%c1_35, %c1_36, %c0_37], %71 {strides = array<i32>} : memref<18x18x8xf32, #tpu.memory_space<vmem>>, vector<16x16x8xf32>,
    %c0_38 = arith.constant 0 : index
    %c0_39 = arith.constant 0 : index
    %c0_40 = arith.constant 0 : index
    %73 = vector.load %arg15[%c0_38, %c0_39, %c0_40] : memref<18x18x8xf32, #tpu.memory_space<vmem>>, vector<18x18x8xf32>
    %cst_41 = arith.constant 0.000000e+00 : f32
    %74 = vector.broadcast %cst_41 : f32 to vector<256x8xf32>
    %75 = vector.extract_strided_slice %73 {offsets = [0, 0, 0], sizes = [16, 16, 8], strides = [1, 1, 1]} : vector<18x18x8xf32> to vector<16x16x8xf32>
    %76 = vector.shape_cast %75 : vector<16x16x8xf32> to vector<256x8xf32>
    %77 = vector.extract_strided_slice %6 {offsets = [0, 0, 0, 0], sizes = [1, 1, 8, 8], strides = [1, 1, 1, 1]} : vector<3x3x8x8xf32> to vector<1x1x8x8xf32>
    %78 = vector.shape_cast %77 : vector<1x1x8x8xf32> to vector<8x8xf32>
    %cst_42 = arith.constant dense<0.000000e+00> : vector<256x8xf32>
    %79 = tpu.matmul %76, %78, %cst_42 {dimension_numbers = #tpu.dot_dimension_numbers<[1], [0], [0], [1], [0, 0, 1, 1], [], []>} : vector<256x8xf32>, vector<8x8xf32>, vector<256x8xf32> -> vector<256x8xf32>
    %80 = arith.addf %74, %79 : vector<256x8xf32>
    %81 = vector.extract_strided_slice %73 {offsets = [0, 1, 0], sizes = [16, 16, 8], strides = [1, 1, 1]} : vector<18x18x8xf32> to vector<16x16x8xf32>
    %82 = vector.shape_cast %81 : vector<16x16x8xf32> to vector<256x8xf32>
    %83 = vector.extract_strided_slice %6 {offsets = [0, 1, 0, 0], sizes = [1, 1, 8, 8], strides = [1, 1, 1, 1]} : vector<3x3x8x8xf32> to vector<1x1x8x8xf32>
    %84 = vector.shape_cast %83 : vector<1x1x8x8xf32> to vector<8x8xf32>
    %cst_43 = arith.constant dense<0.000000e+00> : vector<256x8xf32>
    %85 = tpu.matmul %82, %84, %cst_43 {dimension_numbers = #tpu.dot_dimension_numbers<[1], [0], [0], [1], [0, 0, 1, 1], [], []>} : vector<256x8xf32>, vector<8x8xf32>, vector<256x8xf32> -> vector<256x8xf32>
    %86 = arith.addf %80, %85 : vector<256x8xf32>
    %87 = vector.extract_strided_slice %73 {offsets = [0, 2, 0], sizes = [16, 16, 8], strides = [1, 1, 1]} : vector<18x18x8xf32> to vector<16x16x8xf32>
    %88 = vector.shape_cast %87 : vector<16x16x8xf32> to vector<256x8xf32>
    %89 = vector.extract_strided_slice %6 {offsets = [0, 2, 0, 0], sizes = [1, 1, 8, 8], strides = [1, 1, 1, 1]} : vector<3x3x8x8xf32> to vector<1x1x8x8xf32>
    %90 = vector.shape_cast %89 : vector<1x1x8x8xf32> to vector<8x8xf32>
    %cst_44 = arith.constant dense<0.000000e+00> : vector<256x8xf32>
    %91 = tpu.matmul %88, %90, %cst_44 {dimension_numbers = #tpu.dot_dimension_numbers<[1], [0], [0], [1], [0, 0, 1, 1], [], []>} : vector<256x8xf32>, vector<8x8xf32>, vector<256x8xf32> -> vector<256x8xf32>
    %92 = arith.addf %86, %91 : vector<256x8xf32>
    %93 = vector.extract_strided_slice %73 {offsets = [1, 0, 0], sizes = [16, 16, 8], strides = [1, 1, 1]} : vector<18x18x8xf32> to vector<16x16x8xf32>
    %94 = vector.shape_cast %93 : vector<16x16x8xf32> to vector<256x8xf32>
    %95 = vector.extract_strided_slice %6 {offsets = [1, 0, 0, 0], sizes = [1, 1, 8, 8], strides = [1, 1, 1, 1]} : vector<3x3x8x8xf32> to vector<1x1x8x8xf32>
    %96 = vector.shape_cast %95 : vector<1x1x8x8xf32> to vector<8x8xf32>
    %cst_45 = arith.constant dense<0.000000e+00> : vector<256x8xf32>
    %97 = tpu.matmul %94, %96, %cst_45 {dimension_numbers = #tpu.dot_dimension_numbers<[1], [0], [0], [1], [0, 0, 1, 1], [], []>} : vector<256x8xf32>, vector<8x8xf32>, vector<256x8xf32> -> vector<256x8xf32>
    %98 = arith.addf %92, %97 : vector<256x8xf32>
    %99 = vector.extract_strided_slice %73 {offsets = [1, 1, 0], sizes = [16, 16, 8], strides = [1, 1, 1]} : vector<18x18x8xf32> to vector<16x16x8xf32>
    %100 = vector.shape_cast %99 : vector<16x16x8xf32> to vector<256x8xf32>
    %101 = vector.extract_strided_slice %6 {offsets = [1, 1, 0, 0], sizes = [1, 1, 8, 8], strides = [1, 1, 1, 1]} : vector<3x3x8x8xf32> to vector<1x1x8x8xf32>
    %102 = vector.shape_cast %101 : vector<1x1x8x8xf32> to vector<8x8xf32>
    %cst_46 = arith.constant dense<0.000000e+00> : vector<256x8xf32>
    %103 = tpu.matmul %100, %102, %cst_46 {dimension_numbers = #tpu.dot_dimension_numbers<[1], [0], [0], [1], [0, 0, 1, 1], [], []>} : vector<256x8xf32>, vector<8x8xf32>, vector<256x8xf32> -> vector<256x8xf32>
    %104 = arith.addf %98, %103 : vector<256x8xf32>
    %105 = vector.extract_strided_slice %73 {offsets = [1, 2, 0], sizes = [16, 16, 8], strides = [1, 1, 1]} : vector<18x18x8xf32> to vector<16x16x8xf32>
    %106 = vector.shape_cast %105 : vector<16x16x8xf32> to vector<256x8xf32>
    %107 = vector.extract_strided_slice %6 {offsets = [1, 2, 0, 0], sizes = [1, 1, 8, 8], strides = [1, 1, 1, 1]} : vector<3x3x8x8xf32> to vector<1x1x8x8xf32>
    %108 = vector.shape_cast %107 : vector<1x1x8x8xf32> to vector<8x8xf32>
    %cst_47 = arith.constant dense<0.000000e+00> : vector<256x8xf32>
    %109 = tpu.matmul %106, %108, %cst_47 {dimension_numbers = #tpu.dot_dimension_numbers<[1], [0], [0], [1], [0, 0, 1, 1], [], []>} : vector<256x8xf32>, vector<8x8xf32>, vector<256x8xf32> -> vector<256x8xf32>
    %110 = arith.addf %104, %109 : vector<256x8xf32>
    %111 = vector.extract_strided_slice %73 {offsets = [2, 0, 0], sizes = [16, 16, 8], strides = [1, 1, 1]} : vector<18x18x8xf32> to vector<16x16x8xf32>
    %112 = vector.shape_cast %111 : vector<16x16x8xf32> to vector<256x8xf32>
    %113 = vector.extract_strided_slice %6 {offsets = [2, 0, 0, 0], sizes = [1, 1, 8, 8], strides = [1, 1, 1, 1]} : vector<3x3x8x8xf32> to vector<1x1x8x8xf32>
    %114 = vector.shape_cast %113 : vector<1x1x8x8xf32> to vector<8x8xf32>
    %cst_48 = arith.constant dense<0.000000e+00> : vector<256x8xf32>
    %115 = tpu.matmul %112, %114, %cst_48 {dimension_numbers = #tpu.dot_dimension_numbers<[1], [0], [0], [1], [0, 0, 1, 1], [], []>} : vector<256x8xf32>, vector<8x8xf32>, vector<256x8xf32> -> vector<256x8xf32>
    %116 = arith.addf %110, %115 : vector<256x8xf32>
    %117 = vector.extract_strided_slice %73 {offsets = [2, 1, 0], sizes = [16, 16, 8], strides = [1, 1, 1]} : vector<18x18x8xf32> to vector<16x16x8xf32>
    %118 = vector.shape_cast %117 : vector<16x16x8xf32> to vector<256x8xf32>
    %119 = vector.extract_strided_slice %6 {offsets = [2, 1, 0, 0], sizes = [1, 1, 8, 8], strides = [1, 1, 1, 1]} : vector<3x3x8x8xf32> to vector<1x1x8x8xf32>
    %120 = vector.shape_cast %119 : vector<1x1x8x8xf32> to vector<8x8xf32>
    %cst_49 = arith.constant dense<0.000000e+00> : vector<256x8xf32>
    %121 = tpu.matmul %118, %120, %cst_49 {dimension_numbers = #tpu.dot_dimension_numbers<[1], [0], [0], [1], [0, 0, 1, 1], [], []>} : vector<256x8xf32>, vector<8x8xf32>, vector<256x8xf32> -> vector<256x8xf32>
    %122 = arith.addf %116, %121 : vector<256x8xf32>
    %123 = vector.extract_strided_slice %73 {offsets = [2, 2, 0], sizes = [16, 16, 8], strides = [1, 1, 1]} : vector<18x18x8xf32> to vector<16x16x8xf32>
    %124 = vector.shape_cast %123 : vector<16x16x8xf32> to vector<256x8xf32>
    %125 = vector.extract_strided_slice %6 {offsets = [2, 2, 0, 0], sizes = [1, 1, 8, 8], strides = [1, 1, 1, 1]} : vector<3x3x8x8xf32> to vector<1x1x8x8xf32>
    %126 = vector.shape_cast %125 : vector<1x1x8x8xf32> to vector<8x8xf32>
    %cst_50 = arith.constant dense<0.000000e+00> : vector<256x8xf32>
    %127 = tpu.matmul %124, %126, %cst_50 {dimension_numbers = #tpu.dot_dimension_numbers<[1], [0], [0], [1], [0, 0, 1, 1], [], []>} : vector<256x8xf32>, vector<8x8xf32>, vector<256x8xf32> -> vector<256x8xf32>
    %128 = arith.addf %122, %127 : vector<256x8xf32>
    %129 = vector.broadcast %7 : vector<1x8xf32> to vector<256x8xf32>
    %130 = arith.addf %128, %129 : vector<256x8xf32>
    %131 = vector.shape_cast %3 : vector<16x16x8xf32> to vector<256x8xf32>
    %132 = arith.addf %130, %131 : vector<256x8xf32>
    %c0_51 = arith.constant 0 : index
    %c0_52 = arith.constant 0 : index
    %c0_53 = arith.constant 0 : index
    %c0_54 = arith.constant 0 : index
    %133 = vector.load %arg1[%c0_51, %c0_52, %c0_53, %c0_54] : memref<1x16x16x8xf32, #tpu.memory_space<vmem>>, vector<1x16x16x8xf32>
    %134 = vector.shape_cast %133 : vector<1x16x16x8xf32> to vector<16x16x8xf32>
    %135 = vector.shape_cast %134 : vector<16x16x8xf32> to vector<256x8xf32>
    %136 = arith.addf %135, %132 : vector<256x8xf32>
    %137 = vector.shape_cast %136 : vector<256x8xf32> to vector<16x16x8xf32>
    %c0_55 = arith.constant 0 : index
    %c0_56 = arith.constant 0 : index
    %c0_57 = arith.constant 0 : index
    %c0_58 = arith.constant 0 : index
    %138 = vector.load %arg7[%c0_55, %c0_56, %c0_57, %c0_58] : memref<3x3x8x8xf32, #tpu.memory_space<vmem>>, vector<3x3x8x8xf32>
    %c0_59 = arith.constant 0 : index
    %c0_60 = arith.constant 0 : index
    %139 = vector.load %arg8[%c0_59, %c0_60] : memref<1x8xf32, #tpu.memory_space<vmem>>, vector<1x8xf32>
    %c0_61 = arith.constant 0 : index
    %c0_62 = arith.constant 0 : index
    %c0_63 = arith.constant 0 : index
    %c0_64 = arith.constant 0 : index
    %140 = vector.load %arg9[%c0_61, %c0_62, %c0_63, %c0_64] : memref<3x3x8x8xf32, #tpu.memory_space<vmem>>, vector<3x3x8x8xf32>
    %c0_65 = arith.constant 0 : index
    %c0_66 = arith.constant 0 : index
    %141 = vector.load %arg10[%c0_65, %c0_66] : memref<1x8xf32, #tpu.memory_space<vmem>>, vector<1x8xf32>
    %cst_67 = arith.constant 0.000000e+00 : f32
    %142 = vector.broadcast %cst_67 : f32 to vector<16x16x8xf32>
    %143 = arith.maximumf %137, %142 : vector<16x16x8xf32>
    %c1_68 = arith.constant 1 : index
    %c1_69 = arith.constant 1 : index
    %c0_70 = arith.constant 0 : index
    %144 = vector.load %arg15[%c1_68, %c1_69, %c0_70] : memref<18x18x8xf32, #tpu.memory_space<vmem>>, vector<16x16x8xf32>
    tpu.vector_store %arg15[%c1_68, %c1_69, %c0_70], %143 {strides = array<i32>} : memref<18x18x8xf32, #tpu.memory_space<vmem>>, vector<16x16x8xf32>,
    %c0_71 = arith.constant 0 : index
    %c0_72 = arith.constant 0 : index
    %c0_73 = arith.constant 0 : index
    %145 = vector.load %arg15[%c0_71, %c0_72, %c0_73] : memref<18x18x8xf32, #tpu.memory_space<vmem>>, vector<18x18x8xf32>
    %cst_74 = arith.constant 0.000000e+00 : f32
    %146 = vector.broadcast %cst_74 : f32 to vector<256x8xf32>
    %147 = vector.extract_strided_slice %145 {offsets = [0, 0, 0], sizes = [16, 16, 8], strides = [1, 1, 1]} : vector<18x18x8xf32> to vector<16x16x8xf32>
    %148 = vector.shape_cast %147 : vector<16x16x8xf32> to vector<256x8xf32>
    %149 = vector.extract_strided_slice %138 {offsets = [0, 0, 0, 0], sizes = [1, 1, 8, 8], strides = [1, 1, 1, 1]} : vector<3x3x8x8xf32> to vector<1x1x8x8xf32>
    %150 = vector.shape_cast %149 : vector<1x1x8x8xf32> to vector<8x8xf32>
    %cst_75 = arith.constant dense<0.000000e+00> : vector<256x8xf32>
    %151 = tpu.matmul %148, %150, %cst_75 {dimension_numbers = #tpu.dot_dimension_numbers<[1], [0], [0], [1], [0, 0, 1, 1], [], []>} : vector<256x8xf32>, vector<8x8xf32>, vector<256x8xf32> -> vector<256x8xf32>
    %152 = arith.addf %146, %151 : vector<256x8xf32>
    %153 = vector.extract_strided_slice %145 {offsets = [0, 1, 0], sizes = [16, 16, 8], strides = [1, 1, 1]} : vector<18x18x8xf32> to vector<16x16x8xf32>
    %154 = vector.shape_cast %153 : vector<16x16x8xf32> to vector<256x8xf32>
    %155 = vector.extract_strided_slice %138 {offsets = [0, 1, 0, 0], sizes = [1, 1, 8, 8], strides = [1, 1, 1, 1]} : vector<3x3x8x8xf32> to vector<1x1x8x8xf32>
    %156 = vector.shape_cast %155 : vector<1x1x8x8xf32> to vector<8x8xf32>
    %cst_76 = arith.constant dense<0.000000e+00> : vector<256x8xf32>
    %157 = tpu.matmul %154, %156, %cst_76 {dimension_numbers = #tpu.dot_dimension_numbers<[1], [0], [0], [1], [0, 0, 1, 1], [], []>} : vector<256x8xf32>, vector<8x8xf32>, vector<256x8xf32> -> vector<256x8xf32>
    %158 = arith.addf %152, %157 : vector<256x8xf32>
    %159 = vector.extract_strided_slice %145 {offsets = [0, 2, 0], sizes = [16, 16, 8], strides = [1, 1, 1]} : vector<18x18x8xf32> to vector<16x16x8xf32>
    %160 = vector.shape_cast %159 : vector<16x16x8xf32> to vector<256x8xf32>
    %161 = vector.extract_strided_slice %138 {offsets = [0, 2, 0, 0], sizes = [1, 1, 8, 8], strides = [1, 1, 1, 1]} : vector<3x3x8x8xf32> to vector<1x1x8x8xf32>
    %162 = vector.shape_cast %161 : vector<1x1x8x8xf32> to vector<8x8xf32>
    %cst_77 = arith.constant dense<0.000000e+00> : vector<256x8xf32>
    %163 = tpu.matmul %160, %162, %cst_77 {dimension_numbers = #tpu.dot_dimension_numbers<[1], [0], [0], [1], [0, 0, 1, 1], [], []>} : vector<256x8xf32>, vector<8x8xf32>, vector<256x8xf32> -> vector<256x8xf32>
    %164 = arith.addf %158, %163 : vector<256x8xf32>
    %165 = vector.extract_strided_slice %145 {offsets = [1, 0, 0], sizes = [16, 16, 8], strides = [1, 1, 1]} : vector<18x18x8xf32> to vector<16x16x8xf32>
    %166 = vector.shape_cast %165 : vector<16x16x8xf32> to vector<256x8xf32>
    %167 = vector.extract_strided_slice %138 {offsets = [1, 0, 0, 0], sizes = [1, 1, 8, 8], strides = [1, 1, 1, 1]} : vector<3x3x8x8xf32> to vector<1x1x8x8xf32>
    %168 = vector.shape_cast %167 : vector<1x1x8x8xf32> to vector<8x8xf32>
    %cst_78 = arith.constant dense<0.000000e+00> : vector<256x8xf32>
    %169 = tpu.matmul %166, %168, %cst_78 {dimension_numbers = #tpu.dot_dimension_numbers<[1], [0], [0], [1], [0, 0, 1, 1], [], []>} : vector<256x8xf32>, vector<8x8xf32>, vector<256x8xf32> -> vector<256x8xf32>
    %170 = arith.addf %164, %169 : vector<256x8xf32>
    %171 = vector.extract_strided_slice %145 {offsets = [1, 1, 0], sizes = [16, 16, 8], strides = [1, 1, 1]} : vector<18x18x8xf32> to vector<16x16x8xf32>
    %172 = vector.shape_cast %171 : vector<16x16x8xf32> to vector<256x8xf32>
    %173 = vector.extract_strided_slice %138 {offsets = [1, 1, 0, 0], sizes = [1, 1, 8, 8], strides = [1, 1, 1, 1]} : vector<3x3x8x8xf32> to vector<1x1x8x8xf32>
    %174 = vector.shape_cast %173 : vector<1x1x8x8xf32> to vector<8x8xf32>
    %cst_79 = arith.constant dense<0.000000e+00> : vector<256x8xf32>
    %175 = tpu.matmul %172, %174, %cst_79 {dimension_numbers = #tpu.dot_dimension_numbers<[1], [0], [0], [1], [0, 0, 1, 1], [], []>} : vector<256x8xf32>, vector<8x8xf32>, vector<256x8xf32> -> vector<256x8xf32>
    %176 = arith.addf %170, %175 : vector<256x8xf32>
    %177 = vector.extract_strided_slice %145 {offsets = [1, 2, 0], sizes = [16, 16, 8], strides = [1, 1, 1]} : vector<18x18x8xf32> to vector<16x16x8xf32>
    %178 = vector.shape_cast %177 : vector<16x16x8xf32> to vector<256x8xf32>
    %179 = vector.extract_strided_slice %138 {offsets = [1, 2, 0, 0], sizes = [1, 1, 8, 8], strides = [1, 1, 1, 1]} : vector<3x3x8x8xf32> to vector<1x1x8x8xf32>
    %180 = vector.shape_cast %179 : vector<1x1x8x8xf32> to vector<8x8xf32>
    %cst_80 = arith.constant dense<0.000000e+00> : vector<256x8xf32>
    %181 = tpu.matmul %178, %180, %cst_80 {dimension_numbers = #tpu.dot_dimension_numbers<[1], [0], [0], [1], [0, 0, 1, 1], [], []>} : vector<256x8xf32>, vector<8x8xf32>, vector<256x8xf32> -> vector<256x8xf32>
    %182 = arith.addf %176, %181 : vector<256x8xf32>
    %183 = vector.extract_strided_slice %145 {offsets = [2, 0, 0], sizes = [16, 16, 8], strides = [1, 1, 1]} : vector<18x18x8xf32> to vector<16x16x8xf32>
    %184 = vector.shape_cast %183 : vector<16x16x8xf32> to vector<256x8xf32>
    %185 = vector.extract_strided_slice %138 {offsets = [2, 0, 0, 0], sizes = [1, 1, 8, 8], strides = [1, 1, 1, 1]} : vector<3x3x8x8xf32> to vector<1x1x8x8xf32>
    %186 = vector.shape_cast %185 : vector<1x1x8x8xf32> to vector<8x8xf32>
    %cst_81 = arith.constant dense<0.000000e+00> : vector<256x8xf32>
    %187 = tpu.matmul %184, %186, %cst_81 {dimension_numbers = #tpu.dot_dimension_numbers<[1], [0], [0], [1], [0, 0, 1, 1], [], []>} : vector<256x8xf32>, vector<8x8xf32>, vector<256x8xf32> -> vector<256x8xf32>
    %188 = arith.addf %182, %187 : vector<256x8xf32>
    %189 = vector.extract_strided_slice %145 {offsets = [2, 1, 0], sizes = [16, 16, 8], strides = [1, 1, 1]} : vector<18x18x8xf32> to vector<16x16x8xf32>
    %190 = vector.shape_cast %189 : vector<16x16x8xf32> to vector<256x8xf32>
    %191 = vector.extract_strided_slice %138 {offsets = [2, 1, 0, 0], sizes = [1, 1, 8, 8], strides = [1, 1, 1, 1]} : vector<3x3x8x8xf32> to vector<1x1x8x8xf32>
    %192 = vector.shape_cast %191 : vector<1x1x8x8xf32> to vector<8x8xf32>
    %cst_82 = arith.constant dense<0.000000e+00> : vector<256x8xf32>
    %193 = tpu.matmul %190, %192, %cst_82 {dimension_numbers = #tpu.dot_dimension_numbers<[1], [0], [0], [1], [0, 0, 1, 1], [], []>} : vector<256x8xf32>, vector<8x8xf32>, vector<256x8xf32> -> vector<256x8xf32>
    %194 = arith.addf %188, %193 : vector<256x8xf32>
    %195 = vector.extract_strided_slice %145 {offsets = [2, 2, 0], sizes = [16, 16, 8], strides = [1, 1, 1]} : vector<18x18x8xf32> to vector<16x16x8xf32>
    %196 = vector.shape_cast %195 : vector<16x16x8xf32> to vector<256x8xf32>
    %197 = vector.extract_strided_slice %138 {offsets = [2, 2, 0, 0], sizes = [1, 1, 8, 8], strides = [1, 1, 1, 1]} : vector<3x3x8x8xf32> to vector<1x1x8x8xf32>
    %198 = vector.shape_cast %197 : vector<1x1x8x8xf32> to vector<8x8xf32>
    %cst_83 = arith.constant dense<0.000000e+00> : vector<256x8xf32>
    %199 = tpu.matmul %196, %198, %cst_83 {dimension_numbers = #tpu.dot_dimension_numbers<[1], [0], [0], [1], [0, 0, 1, 1], [], []>} : vector<256x8xf32>, vector<8x8xf32>, vector<256x8xf32> -> vector<256x8xf32>
    %200 = arith.addf %194, %199 : vector<256x8xf32>
    %201 = vector.broadcast %139 : vector<1x8xf32> to vector<256x8xf32>
    %202 = arith.addf %200, %201 : vector<256x8xf32>
    %cst_84 = arith.constant 0.000000e+00 : f32
    %203 = vector.broadcast %cst_84 : f32 to vector<256x8xf32>
    %204 = arith.maximumf %202, %203 : vector<256x8xf32>
    %205 = vector.shape_cast %204 : vector<256x8xf32> to vector<16x16x8xf32>
    %c1_85 = arith.constant 1 : index
    %c1_86 = arith.constant 1 : index
    %c0_87 = arith.constant 0 : index
    %206 = vector.load %arg15[%c1_85, %c1_86, %c0_87] : memref<18x18x8xf32, #tpu.memory_space<vmem>>, vector<16x16x8xf32>
    tpu.vector_store %arg15[%c1_85, %c1_86, %c0_87], %205 {strides = array<i32>} : memref<18x18x8xf32, #tpu.memory_space<vmem>>, vector<16x16x8xf32>,
    %c0_88 = arith.constant 0 : index
    %c0_89 = arith.constant 0 : index
    %c0_90 = arith.constant 0 : index
    %207 = vector.load %arg15[%c0_88, %c0_89, %c0_90] : memref<18x18x8xf32, #tpu.memory_space<vmem>>, vector<18x18x8xf32>
    %cst_91 = arith.constant 0.000000e+00 : f32
    %208 = vector.broadcast %cst_91 : f32 to vector<256x8xf32>
    %209 = vector.extract_strided_slice %207 {offsets = [0, 0, 0], sizes = [16, 16, 8], strides = [1, 1, 1]} : vector<18x18x8xf32> to vector<16x16x8xf32>
    %210 = vector.shape_cast %209 : vector<16x16x8xf32> to vector<256x8xf32>
    %211 = vector.extract_strided_slice %140 {offsets = [0, 0, 0, 0], sizes = [1, 1, 8, 8], strides = [1, 1, 1, 1]} : vector<3x3x8x8xf32> to vector<1x1x8x8xf32>
    %212 = vector.shape_cast %211 : vector<1x1x8x8xf32> to vector<8x8xf32>
    %cst_92 = arith.constant dense<0.000000e+00> : vector<256x8xf32>
    %213 = tpu.matmul %210, %212, %cst_92 {dimension_numbers = #tpu.dot_dimension_numbers<[1], [0], [0], [1], [0, 0, 1, 1], [], []>} : vector<256x8xf32>, vector<8x8xf32>, vector<256x8xf32> -> vector<256x8xf32>
    %214 = arith.addf %208, %213 : vector<256x8xf32>
    %215 = vector.extract_strided_slice %207 {offsets = [0, 1, 0], sizes = [16, 16, 8], strides = [1, 1, 1]} : vector<18x18x8xf32> to vector<16x16x8xf32>
    %216 = vector.shape_cast %215 : vector<16x16x8xf32> to vector<256x8xf32>
    %217 = vector.extract_strided_slice %140 {offsets = [0, 1, 0, 0], sizes = [1, 1, 8, 8], strides = [1, 1, 1, 1]} : vector<3x3x8x8xf32> to vector<1x1x8x8xf32>
    %218 = vector.shape_cast %217 : vector<1x1x8x8xf32> to vector<8x8xf32>
    %cst_93 = arith.constant dense<0.000000e+00> : vector<256x8xf32>
    %219 = tpu.matmul %216, %218, %cst_93 {dimension_numbers = #tpu.dot_dimension_numbers<[1], [0], [0], [1], [0, 0, 1, 1], [], []>} : vector<256x8xf32>, vector<8x8xf32>, vector<256x8xf32> -> vector<256x8xf32>
    %220 = arith.addf %214, %219 : vector<256x8xf32>
    %221 = vector.extract_strided_slice %207 {offsets = [0, 2, 0], sizes = [16, 16, 8], strides = [1, 1, 1]} : vector<18x18x8xf32> to vector<16x16x8xf32>
    %222 = vector.shape_cast %221 : vector<16x16x8xf32> to vector<256x8xf32>
    %223 = vector.extract_strided_slice %140 {offsets = [0, 2, 0, 0], sizes = [1, 1, 8, 8], strides = [1, 1, 1, 1]} : vector<3x3x8x8xf32> to vector<1x1x8x8xf32>
    %224 = vector.shape_cast %223 : vector<1x1x8x8xf32> to vector<8x8xf32>
    %cst_94 = arith.constant dense<0.000000e+00> : vector<256x8xf32>
    %225 = tpu.matmul %222, %224, %cst_94 {dimension_numbers = #tpu.dot_dimension_numbers<[1], [0], [0], [1], [0, 0, 1, 1], [], []>} : vector<256x8xf32>, vector<8x8xf32>, vector<256x8xf32> -> vector<256x8xf32>
    %226 = arith.addf %220, %225 : vector<256x8xf32>
    %227 = vector.extract_strided_slice %207 {offsets = [1, 0, 0], sizes = [16, 16, 8], strides = [1, 1, 1]} : vector<18x18x8xf32> to vector<16x16x8xf32>
    %228 = vector.shape_cast %227 : vector<16x16x8xf32> to vector<256x8xf32>
    %229 = vector.extract_strided_slice %140 {offsets = [1, 0, 0, 0], sizes = [1, 1, 8, 8], strides = [1, 1, 1, 1]} : vector<3x3x8x8xf32> to vector<1x1x8x8xf32>
    %230 = vector.shape_cast %229 : vector<1x1x8x8xf32> to vector<8x8xf32>
    %cst_95 = arith.constant dense<0.000000e+00> : vector<256x8xf32>
    %231 = tpu.matmul %228, %230, %cst_95 {dimension_numbers = #tpu.dot_dimension_numbers<[1], [0], [0], [1], [0, 0, 1, 1], [], []>} : vector<256x8xf32>, vector<8x8xf32>, vector<256x8xf32> -> vector<256x8xf32>
    %232 = arith.addf %226, %231 : vector<256x8xf32>
    %233 = vector.extract_strided_slice %207 {offsets = [1, 1, 0], sizes = [16, 16, 8], strides = [1, 1, 1]} : vector<18x18x8xf32> to vector<16x16x8xf32>
    %234 = vector.shape_cast %233 : vector<16x16x8xf32> to vector<256x8xf32>
    %235 = vector.extract_strided_slice %140 {offsets = [1, 1, 0, 0], sizes = [1, 1, 8, 8], strides = [1, 1, 1, 1]} : vector<3x3x8x8xf32> to vector<1x1x8x8xf32>
    %236 = vector.shape_cast %235 : vector<1x1x8x8xf32> to vector<8x8xf32>
    %cst_96 = arith.constant dense<0.000000e+00> : vector<256x8xf32>
    %237 = tpu.matmul %234, %236, %cst_96 {dimension_numbers = #tpu.dot_dimension_numbers<[1], [0], [0], [1], [0, 0, 1, 1], [], []>} : vector<256x8xf32>, vector<8x8xf32>, vector<256x8xf32> -> vector<256x8xf32>
    %238 = arith.addf %232, %237 : vector<256x8xf32>
    %239 = vector.extract_strided_slice %207 {offsets = [1, 2, 0], sizes = [16, 16, 8], strides = [1, 1, 1]} : vector<18x18x8xf32> to vector<16x16x8xf32>
    %240 = vector.shape_cast %239 : vector<16x16x8xf32> to vector<256x8xf32>
    %241 = vector.extract_strided_slice %140 {offsets = [1, 2, 0, 0], sizes = [1, 1, 8, 8], strides = [1, 1, 1, 1]} : vector<3x3x8x8xf32> to vector<1x1x8x8xf32>
    %242 = vector.shape_cast %241 : vector<1x1x8x8xf32> to vector<8x8xf32>
    %cst_97 = arith.constant dense<0.000000e+00> : vector<256x8xf32>
    %243 = tpu.matmul %240, %242, %cst_97 {dimension_numbers = #tpu.dot_dimension_numbers<[1], [0], [0], [1], [0, 0, 1, 1], [], []>} : vector<256x8xf32>, vector<8x8xf32>, vector<256x8xf32> -> vector<256x8xf32>
    %244 = arith.addf %238, %243 : vector<256x8xf32>
    %245 = vector.extract_strided_slice %207 {offsets = [2, 0, 0], sizes = [16, 16, 8], strides = [1, 1, 1]} : vector<18x18x8xf32> to vector<16x16x8xf32>
    %246 = vector.shape_cast %245 : vector<16x16x8xf32> to vector<256x8xf32>
    %247 = vector.extract_strided_slice %140 {offsets = [2, 0, 0, 0], sizes = [1, 1, 8, 8], strides = [1, 1, 1, 1]} : vector<3x3x8x8xf32> to vector<1x1x8x8xf32>
    %248 = vector.shape_cast %247 : vector<1x1x8x8xf32> to vector<8x8xf32>
    %cst_98 = arith.constant dense<0.000000e+00> : vector<256x8xf32>
    %249 = tpu.matmul %246, %248, %cst_98 {dimension_numbers = #tpu.dot_dimension_numbers<[1], [0], [0], [1], [0, 0, 1, 1], [], []>} : vector<256x8xf32>, vector<8x8xf32>, vector<256x8xf32> -> vector<256x8xf32>
    %250 = arith.addf %244, %249 : vector<256x8xf32>
    %251 = vector.extract_strided_slice %207 {offsets = [2, 1, 0], sizes = [16, 16, 8], strides = [1, 1, 1]} : vector<18x18x8xf32> to vector<16x16x8xf32>
    %252 = vector.shape_cast %251 : vector<16x16x8xf32> to vector<256x8xf32>
    %253 = vector.extract_strided_slice %140 {offsets = [2, 1, 0, 0], sizes = [1, 1, 8, 8], strides = [1, 1, 1, 1]} : vector<3x3x8x8xf32> to vector<1x1x8x8xf32>
    %254 = vector.shape_cast %253 : vector<1x1x8x8xf32> to vector<8x8xf32>
    %cst_99 = arith.constant dense<0.000000e+00> : vector<256x8xf32>
    %255 = tpu.matmul %252, %254, %cst_99 {dimension_numbers = #tpu.dot_dimension_numbers<[1], [0], [0], [1], [0, 0, 1, 1], [], []>} : vector<256x8xf32>, vector<8x8xf32>, vector<256x8xf32> -> vector<256x8xf32>
    %256 = arith.addf %250, %255 : vector<256x8xf32>
    %257 = vector.extract_strided_slice %207 {offsets = [2, 2, 0], sizes = [16, 16, 8], strides = [1, 1, 1]} : vector<18x18x8xf32> to vector<16x16x8xf32>
    %258 = vector.shape_cast %257 : vector<16x16x8xf32> to vector<256x8xf32>
    %259 = vector.extract_strided_slice %140 {offsets = [2, 2, 0, 0], sizes = [1, 1, 8, 8], strides = [1, 1, 1, 1]} : vector<3x3x8x8xf32> to vector<1x1x8x8xf32>
    %260 = vector.shape_cast %259 : vector<1x1x8x8xf32> to vector<8x8xf32>
    %cst_100 = arith.constant dense<0.000000e+00> : vector<256x8xf32>
    %261 = tpu.matmul %258, %260, %cst_100 {dimension_numbers = #tpu.dot_dimension_numbers<[1], [0], [0], [1], [0, 0, 1, 1], [], []>} : vector<256x8xf32>, vector<8x8xf32>, vector<256x8xf32> -> vector<256x8xf32>
    %262 = arith.addf %256, %261 : vector<256x8xf32>
    %263 = vector.broadcast %141 : vector<1x8xf32> to vector<256x8xf32>
    %264 = arith.addf %262, %263 : vector<256x8xf32>
    %265 = vector.shape_cast %137 : vector<16x16x8xf32> to vector<256x8xf32>
    %266 = arith.addf %264, %265 : vector<256x8xf32>
    %c0_101 = arith.constant 0 : index
    %c0_102 = arith.constant 0 : index
    %267 = vector.load %arg11[%c0_101, %c0_102] : memref<8x8xf32, #tpu.memory_space<vmem>>, vector<8x8xf32>
    %cst_103 = arith.constant dense<0.000000e+00> : vector<256x8xf32>
    %268 = tpu.matmul %266, %267, %cst_103 {dimension_numbers = #tpu.dot_dimension_numbers<[1], [0], [0], [1], [0, 0, 1, 1], [], []>} : vector<256x8xf32>, vector<8x8xf32>, vector<256x8xf32> -> vector<256x8xf32>
    %c0_104 = arith.constant 0 : index
    %c0_105 = arith.constant 0 : index
    %269 = vector.load %arg12[%c0_104, %c0_105] : memref<1x8xf32, #tpu.memory_space<vmem>>, vector<1x8xf32>
    %270 = vector.broadcast %269 : vector<1x8xf32> to vector<256x8xf32>
    %271 = arith.addf %268, %270 : vector<256x8xf32>
    %272 = vector.shape_cast %271 : vector<256x8xf32> to vector<16x16x8xf32>
    %c0_106 = arith.constant 0 : index
    %c0_107 = arith.constant 0 : index
    %273 = vector.load %arg13[%c0_106, %c0_107] : memref<32x16xf32, #tpu.memory_space<vmem>>, vector<32x16xf32>
    %274 = vector.extract_strided_slice %272 {offsets = [0, 0, 0], sizes = [1, 16, 8], strides = [1, 1, 1]} : vector<16x16x8xf32> to vector<1x16x8xf32>
    %275 = vector.shape_cast %274 : vector<1x16x8xf32> to vector<16x8xf32>
    %cst_108 = arith.constant dense<0.000000e+00> : vector<32x8xf32>
    %276 = tpu.matmul %273, %275, %cst_108 {dimension_numbers = #tpu.dot_dimension_numbers<[1], [0], [0], [1], [0, 0, 1, 1], [], []>} : vector<32x16xf32>, vector<16x8xf32>, vector<32x8xf32> -> vector<32x8xf32>
    %c0_109 = arith.constant 0 : index
    %c0_110 = arith.constant 0 : index
    %c0_111 = arith.constant 0 : index
    %c0_112 = arith.constant 0 : index
    %277 = vector.load %arg14[%c0_109, %c0_110, %c0_111, %c0_112] : memref<1x32x32x8xf32, #tpu.memory_space<vmem>>, vector<1x1x32x8xf32>
    %278 = vector.shape_cast %277 : vector<1x1x32x8xf32> to vector<32x8xf32>
    %279 = vector.shape_cast %276 : vector<32x8xf32> to vector<1x1x32x8xf32>
    tpu.vector_store %arg14[%c0_109, %c0_110, %c0_111, %c0_112], %279 {strides = array<i32>} : memref<1x32x32x8xf32, #tpu.memory_space<vmem>>, vector<1x1x32x8xf32>,
    %280 = vector.extract_strided_slice %272 {offsets = [0, 0, 0], sizes = [1, 16, 8], strides = [1, 1, 1]} : vector<16x16x8xf32> to vector<1x16x8xf32>
    %281 = vector.shape_cast %280 : vector<1x16x8xf32> to vector<16x8xf32>
    %cst_113 = arith.constant 5.161290e-01 : f32
    %282 = vector.broadcast %cst_113 : f32 to vector<16x8xf32>
    %283 = arith.mulf %282, %281 : vector<16x8xf32>
    %284 = vector.extract_strided_slice %272 {offsets = [1, 0, 0], sizes = [1, 16, 8], strides = [1, 1, 1]} : vector<16x16x8xf32> to vector<1x16x8xf32>
    %285 = vector.shape_cast %284 : vector<1x16x8xf32> to vector<16x8xf32>
    %cst_114 = arith.constant 0.483870953 : f32
    %286 = vector.broadcast %cst_114 : f32 to vector<16x8xf32>
    %287 = arith.mulf %286, %285 : vector<16x8xf32>
    %288 = arith.addf %283, %287 : vector<16x8xf32>
    %cst_115 = arith.constant dense<0.000000e+00> : vector<32x8xf32>
    %289 = tpu.matmul %273, %288, %cst_115 {dimension_numbers = #tpu.dot_dimension_numbers<[1], [0], [0], [1], [0, 0, 1, 1], [], []>} : vector<32x16xf32>, vector<16x8xf32>, vector<32x8xf32> -> vector<32x8xf32>
    %c0_116 = arith.constant 0 : index
    %c1_117 = arith.constant 1 : index
    %c0_118 = arith.constant 0 : index
    %c0_119 = arith.constant 0 : index
    %290 = vector.load %arg14[%c0_116, %c1_117, %c0_118, %c0_119] : memref<1x32x32x8xf32, #tpu.memory_space<vmem>>, vector<1x1x32x8xf32>
    %291 = vector.shape_cast %290 : vector<1x1x32x8xf32> to vector<32x8xf32>
    %292 = vector.shape_cast %289 : vector<32x8xf32> to vector<1x1x32x8xf32>
    tpu.vector_store %arg14[%c0_116, %c1_117, %c0_118, %c0_119], %292 {strides = array<i32>} : memref<1x32x32x8xf32, #tpu.memory_space<vmem>>, vector<1x1x32x8xf32>,
    %293 = vector.extract_strided_slice %272 {offsets = [0, 0, 0], sizes = [1, 16, 8], strides = [1, 1, 1]} : vector<16x16x8xf32> to vector<1x16x8xf32>
    %294 = vector.shape_cast %293 : vector<1x16x8xf32> to vector<16x8xf32>
    %cst_120 = arith.constant 0.0322580636 : f32
    %295 = vector.broadcast %cst_120 : f32 to vector<16x8xf32>
    %296 = arith.mulf %295, %294 : vector<16x8xf32>
    %297 = vector.extract_strided_slice %272 {offsets = [1, 0, 0], sizes = [1, 16, 8], strides = [1, 1, 1]} : vector<16x16x8xf32> to vector<1x16x8xf32>
    %298 = vector.shape_cast %297 : vector<1x16x8xf32> to vector<16x8xf32>
    %cst_121 = arith.constant 0.967741906 : f32
    %299 = vector.broadcast %cst_121 : f32 to vector<16x8xf32>
    %300 = arith.mulf %299, %298 : vector<16x8xf32>
    %301 = arith.addf %296, %300 : vector<16x8xf32>
    %cst_122 = arith.constant dense<0.000000e+00> : vector<32x8xf32>
    %302 = tpu.matmul %273, %301, %cst_122 {dimension_numbers = #tpu.dot_dimension_numbers<[1], [0], [0], [1], [0, 0, 1, 1], [], []>} : vector<32x16xf32>, vector<16x8xf32>, vector<32x8xf32> -> vector<32x8xf32>
    %c0_123 = arith.constant 0 : index
    %c2 = arith.constant 2 : index
    %c0_124 = arith.constant 0 : index
    %c0_125 = arith.constant 0 : index
    %303 = vector.load %arg14[%c0_123, %c2, %c0_124, %c0_125] : memref<1x32x32x8xf32, #tpu.memory_space<vmem>>, vector<1x1x32x8xf32>
    %304 = vector.shape_cast %303 : vector<1x1x32x8xf32> to vector<32x8xf32>
    %305 = vector.shape_cast %302 : vector<32x8xf32> to vector<1x1x32x8xf32>
    tpu.vector_store %arg14[%c0_123, %c2, %c0_124, %c0_125], %305 {strides = array<i32>} : memref<1x32x32x8xf32, #tpu.memory_space<vmem>>, vector<1x1x32x8xf32>,
    %306 = vector.extract_strided_slice %272 {offsets = [1, 0, 0], sizes = [1, 16, 8], strides = [1, 1, 1]} : vector<16x16x8xf32> to vector<1x16x8xf32>
    %307 = vector.shape_cast %306 : vector<1x16x8xf32> to vector<16x8xf32>
    %cst_126 = arith.constant 0.54838711 : f32
    %308 = vector.broadcast %cst_126 : f32 to vector<16x8xf32>
    %309 = arith.mulf %308, %307 : vector<16x8xf32>
    %310 = vector.extract_strided_slice %272 {offsets = [2, 0, 0], sizes = [1, 16, 8], strides = [1, 1, 1]} : vector<16x16x8xf32> to vector<1x16x8xf32>
    %311 = vector.shape_cast %310 : vector<1x16x8xf32> to vector<16x8xf32>
    %cst_127 = arith.constant 0.45161289 : f32
    %312 = vector.broadcast %cst_127 : f32 to vector<16x8xf32>
    %313 = arith.mulf %312, %311 : vector<16x8xf32>
    %314 = arith.addf %309, %313 : vector<16x8xf32>
    %cst_128 = arith.constant dense<0.000000e+00> : vector<32x8xf32>
    %315 = tpu.matmul %273, %314, %cst_128 {dimension_numbers = #tpu.dot_dimension_numbers<[1], [0], [0], [1], [0, 0, 1, 1], [], []>} : vector<32x16xf32>, vector<16x8xf32>, vector<32x8xf32> -> vector<32x8xf32>
    %c0_129 = arith.constant 0 : index
    %c3 = arith.constant 3 : index
    %c0_130 = arith.constant 0 : index
    %c0_131 = arith.constant 0 : index
    %316 = vector.load %arg14[%c0_129, %c3, %c0_130, %c0_131] : memref<1x32x32x8xf32, #tpu.memory_space<vmem>>, vector<1x1x32x8xf32>
    %317 = vector.shape_cast %316 : vector<1x1x32x8xf32> to vector<32x8xf32>
    %318 = vector.shape_cast %315 : vector<32x8xf32> to vector<1x1x32x8xf32>
    tpu.vector_store %arg14[%c0_129, %c3, %c0_130, %c0_131], %318 {strides = array<i32>} : memref<1x32x32x8xf32, #tpu.memory_space<vmem>>, vector<1x1x32x8xf32>,
    %319 = vector.extract_strided_slice %272 {offsets = [1, 0, 0], sizes = [1, 16, 8], strides = [1, 1, 1]} : vector<16x16x8xf32> to vector<1x16x8xf32>
    %320 = vector.shape_cast %319 : vector<1x16x8xf32> to vector<16x8xf32>
    %cst_132 = arith.constant 0.0645161271 : f32
    %321 = vector.broadcast %cst_132 : f32 to vector<16x8xf32>
    %322 = arith.mulf %321, %320 : vector<16x8xf32>
    %323 = vector.extract_strided_slice %272 {offsets = [2, 0, 0], sizes = [1, 16, 8], strides = [1, 1, 1]} : vector<16x16x8xf32> to vector<1x16x8xf32>
    %324 = vector.shape_cast %323 : vector<1x16x8xf32> to vector<16x8xf32>
    %cst_133 = arith.constant 0.935483872 : f32
    %325 = vector.broadcast %cst_133 : f32 to vector<16x8xf32>
    %326 = arith.mulf %325, %324 : vector<16x8xf32>
    %327 = arith.addf %322, %326 : vector<16x8xf32>
    %cst_134 = arith.constant dense<0.000000e+00> : vector<32x8xf32>
    %328 = tpu.matmul %273, %327, %cst_134 {dimension_numbers = #tpu.dot_dimension_numbers<[1], [0], [0], [1], [0, 0, 1, 1], [], []>} : vector<32x16xf32>, vector<16x8xf32>, vector<32x8xf32> -> vector<32x8xf32>
    %c0_135 = arith.constant 0 : index
    %c4 = arith.constant 4 : index
    %c0_136 = arith.constant 0 : index
    %c0_137 = arith.constant 0 : index
    %329 = vector.load %arg14[%c0_135, %c4, %c0_136, %c0_137] : memref<1x32x32x8xf32, #tpu.memory_space<vmem>>, vector<1x1x32x8xf32>
    %330 = vector.shape_cast %329 : vector<1x1x32x8xf32> to vector<32x8xf32>
    %331 = vector.shape_cast %328 : vector<32x8xf32> to vector<1x1x32x8xf32>
    tpu.vector_store %arg14[%c0_135, %c4, %c0_136, %c0_137], %331 {strides = array<i32>} : memref<1x32x32x8xf32, #tpu.memory_space<vmem>>, vector<1x1x32x8xf32>,
    %332 = vector.extract_strided_slice %272 {offsets = [2, 0, 0], sizes = [1, 16, 8], strides = [1, 1, 1]} : vector<16x16x8xf32> to vector<1x16x8xf32>
    %333 = vector.shape_cast %332 : vector<1x16x8xf32> to vector<16x8xf32>
    %cst_138 = arith.constant 0.580645144 : f32
    %334 = vector.broadcast %cst_138 : f32 to vector<16x8xf32>
    %335 = arith.mulf %334, %333 : vector<16x8xf32>
    %336 = vector.extract_strided_slice %272 {offsets = [3, 0, 0], sizes = [1, 16, 8], strides = [1, 1, 1]} : vector<16x16x8xf32> to vector<1x16x8xf32>
    %337 = vector.shape_cast %336 : vector<1x16x8xf32> to vector<16x8xf32>
    %cst_139 = arith.constant 0.419354826 : f32
    %338 = vector.broadcast %cst_139 : f32 to vector<16x8xf32>
    %339 = arith.mulf %338, %337 : vector<16x8xf32>
    %340 = arith.addf %335, %339 : vector<16x8xf32>
    %cst_140 = arith.constant dense<0.000000e+00> : vector<32x8xf32>
    %341 = tpu.matmul %273, %340, %cst_140 {dimension_numbers = #tpu.dot_dimension_numbers<[1], [0], [0], [1], [0, 0, 1, 1], [], []>} : vector<32x16xf32>, vector<16x8xf32>, vector<32x8xf32> -> vector<32x8xf32>
    %c0_141 = arith.constant 0 : index
    %c5 = arith.constant 5 : index
    %c0_142 = arith.constant 0 : index
    %c0_143 = arith.constant 0 : index
    %342 = vector.load %arg14[%c0_141, %c5, %c0_142, %c0_143] : memref<1x32x32x8xf32, #tpu.memory_space<vmem>>, vector<1x1x32x8xf32>
    %343 = vector.shape_cast %342 : vector<1x1x32x8xf32> to vector<32x8xf32>
    %344 = vector.shape_cast %341 : vector<32x8xf32> to vector<1x1x32x8xf32>
    tpu.vector_store %arg14[%c0_141, %c5, %c0_142, %c0_143], %344 {strides = array<i32>} : memref<1x32x32x8xf32, #tpu.memory_space<vmem>>, vector<1x1x32x8xf32>,
    %345 = vector.extract_strided_slice %272 {offsets = [2, 0, 0], sizes = [1, 16, 8], strides = [1, 1, 1]} : vector<16x16x8xf32> to vector<1x16x8xf32>
    %346 = vector.shape_cast %345 : vector<1x16x8xf32> to vector<16x8xf32>
    %cst_144 = arith.constant 0.0967741906 : f32
    %347 = vector.broadcast %cst_144 : f32 to vector<16x8xf32>
    %348 = arith.mulf %347, %346 : vector<16x8xf32>
    %349 = vector.extract_strided_slice %272 {offsets = [3, 0, 0], sizes = [1, 16, 8], strides = [1, 1, 1]} : vector<16x16x8xf32> to vector<1x16x8xf32>
    %350 = vector.shape_cast %349 : vector<1x16x8xf32> to vector<16x8xf32>
    %cst_145 = arith.constant 0.903225779 : f32
    %351 = vector.broadcast %cst_145 : f32 to vector<16x8xf32>
    %352 = arith.mulf %351, %350 : vector<16x8xf32>
    %353 = arith.addf %348, %352 : vector<16x8xf32>
    %cst_146 = arith.constant dense<0.000000e+00> : vector<32x8xf32>
    %354 = tpu.matmul %273, %353, %cst_146 {dimension_numbers = #tpu.dot_dimension_numbers<[1], [0], [0], [1], [0, 0, 1, 1], [], []>} : vector<32x16xf32>, vector<16x8xf32>, vector<32x8xf32> -> vector<32x8xf32>
    %c0_147 = arith.constant 0 : index
    %c6 = arith.constant 6 : index
    %c0_148 = arith.constant 0 : index
    %c0_149 = arith.constant 0 : index
    %355 = vector.load %arg14[%c0_147, %c6, %c0_148, %c0_149] : memref<1x32x32x8xf32, #tpu.memory_space<vmem>>, vector<1x1x32x8xf32>
    %356 = vector.shape_cast %355 : vector<1x1x32x8xf32> to vector<32x8xf32>
    %357 = vector.shape_cast %354 : vector<32x8xf32> to vector<1x1x32x8xf32>
    tpu.vector_store %arg14[%c0_147, %c6, %c0_148, %c0_149], %357 {strides = array<i32>} : memref<1x32x32x8xf32, #tpu.memory_space<vmem>>, vector<1x1x32x8xf32>,
    %358 = vector.extract_strided_slice %272 {offsets = [3, 0, 0], sizes = [1, 16, 8], strides = [1, 1, 1]} : vector<16x16x8xf32> to vector<1x16x8xf32>
    %359 = vector.shape_cast %358 : vector<1x16x8xf32> to vector<16x8xf32>
    %cst_150 = arith.constant 0.612903237 : f32
    %360 = vector.broadcast %cst_150 : f32 to vector<16x8xf32>
    %361 = arith.mulf %360, %359 : vector<16x8xf32>
    %362 = vector.extract_strided_slice %272 {offsets = [4, 0, 0], sizes = [1, 16, 8], strides = [1, 1, 1]} : vector<16x16x8xf32> to vector<1x16x8xf32>
    %363 = vector.shape_cast %362 : vector<1x16x8xf32> to vector<16x8xf32>
    %cst_151 = arith.constant 0.387096763 : f32
    %364 = vector.broadcast %cst_151 : f32 to vector<16x8xf32>
    %365 = arith.mulf %364, %363 : vector<16x8xf32>
    %366 = arith.addf %361, %365 : vector<16x8xf32>
    %cst_152 = arith.constant dense<0.000000e+00> : vector<32x8xf32>
    %367 = tpu.matmul %273, %366, %cst_152 {dimension_numbers = #tpu.dot_dimension_numbers<[1], [0], [0], [1], [0, 0, 1, 1], [], []>} : vector<32x16xf32>, vector<16x8xf32>, vector<32x8xf32> -> vector<32x8xf32>
    %c0_153 = arith.constant 0 : index
    %c7 = arith.constant 7 : index
    %c0_154 = arith.constant 0 : index
    %c0_155 = arith.constant 0 : index
    %368 = vector.load %arg14[%c0_153, %c7, %c0_154, %c0_155] : memref<1x32x32x8xf32, #tpu.memory_space<vmem>>, vector<1x1x32x8xf32>
    %369 = vector.shape_cast %368 : vector<1x1x32x8xf32> to vector<32x8xf32>
    %370 = vector.shape_cast %367 : vector<32x8xf32> to vector<1x1x32x8xf32>
    tpu.vector_store %arg14[%c0_153, %c7, %c0_154, %c0_155], %370 {strides = array<i32>} : memref<1x32x32x8xf32, #tpu.memory_space<vmem>>, vector<1x1x32x8xf32>,
    %371 = vector.extract_strided_slice %272 {offsets = [3, 0, 0], sizes = [1, 16, 8], strides = [1, 1, 1]} : vector<16x16x8xf32> to vector<1x16x8xf32>
    %372 = vector.shape_cast %371 : vector<1x16x8xf32> to vector<16x8xf32>
    %cst_156 = arith.constant 0.129032254 : f32
    %373 = vector.broadcast %cst_156 : f32 to vector<16x8xf32>
    %374 = arith.mulf %373, %372 : vector<16x8xf32>
    %375 = vector.extract_strided_slice %272 {offsets = [4, 0, 0], sizes = [1, 16, 8], strides = [1, 1, 1]} : vector<16x16x8xf32> to vector<1x16x8xf32>
    %376 = vector.shape_cast %375 : vector<1x16x8xf32> to vector<16x8xf32>
    %cst_157 = arith.constant 0.870967745 : f32
    %377 = vector.broadcast %cst_157 : f32 to vector<16x8xf32>
    %378 = arith.mulf %377, %376 : vector<16x8xf32>
    %379 = arith.addf %374, %378 : vector<16x8xf32>
    %cst_158 = arith.constant dense<0.000000e+00> : vector<32x8xf32>
    %380 = tpu.matmul %273, %379, %cst_158 {dimension_numbers = #tpu.dot_dimension_numbers<[1], [0], [0], [1], [0, 0, 1, 1], [], []>} : vector<32x16xf32>, vector<16x8xf32>, vector<32x8xf32> -> vector<32x8xf32>
    %c0_159 = arith.constant 0 : index
    %c8 = arith.constant 8 : index
    %c0_160 = arith.constant 0 : index
    %c0_161 = arith.constant 0 : index
    %381 = vector.load %arg14[%c0_159, %c8, %c0_160, %c0_161] : memref<1x32x32x8xf32, #tpu.memory_space<vmem>>, vector<1x1x32x8xf32>
    %382 = vector.shape_cast %381 : vector<1x1x32x8xf32> to vector<32x8xf32>
    %383 = vector.shape_cast %380 : vector<32x8xf32> to vector<1x1x32x8xf32>
    tpu.vector_store %arg14[%c0_159, %c8, %c0_160, %c0_161], %383 {strides = array<i32>} : memref<1x32x32x8xf32, #tpu.memory_space<vmem>>, vector<1x1x32x8xf32>,
    %384 = vector.extract_strided_slice %272 {offsets = [4, 0, 0], sizes = [1, 16, 8], strides = [1, 1, 1]} : vector<16x16x8xf32> to vector<1x16x8xf32>
    %385 = vector.shape_cast %384 : vector<1x16x8xf32> to vector<16x8xf32>
    %cst_162 = arith.constant 0.645161271 : f32
    %386 = vector.broadcast %cst_162 : f32 to vector<16x8xf32>
    %387 = arith.mulf %386, %385 : vector<16x8xf32>
    %388 = vector.extract_strided_slice %272 {offsets = [5, 0, 0], sizes = [1, 16, 8], strides = [1, 1, 1]} : vector<16x16x8xf32> to vector<1x16x8xf32>
    %389 = vector.shape_cast %388 : vector<1x16x8xf32> to vector<16x8xf32>
    %cst_163 = arith.constant 0.354838699 : f32
    %390 = vector.broadcast %cst_163 : f32 to vector<16x8xf32>
    %391 = arith.mulf %390, %389 : vector<16x8xf32>
    %392 = arith.addf %387, %391 : vector<16x8xf32>
    %cst_164 = arith.constant dense<0.000000e+00> : vector<32x8xf32>
    %393 = tpu.matmul %273, %392, %cst_164 {dimension_numbers = #tpu.dot_dimension_numbers<[1], [0], [0], [1], [0, 0, 1, 1], [], []>} : vector<32x16xf32>, vector<16x8xf32>, vector<32x8xf32> -> vector<32x8xf32>
    %c0_165 = arith.constant 0 : index
    %c9 = arith.constant 9 : index
    %c0_166 = arith.constant 0 : index
    %c0_167 = arith.constant 0 : index
    %394 = vector.load %arg14[%c0_165, %c9, %c0_166, %c0_167] : memref<1x32x32x8xf32, #tpu.memory_space<vmem>>, vector<1x1x32x8xf32>
    %395 = vector.shape_cast %394 : vector<1x1x32x8xf32> to vector<32x8xf32>
    %396 = vector.shape_cast %393 : vector<32x8xf32> to vector<1x1x32x8xf32>
    tpu.vector_store %arg14[%c0_165, %c9, %c0_166, %c0_167], %396 {strides = array<i32>} : memref<1x32x32x8xf32, #tpu.memory_space<vmem>>, vector<1x1x32x8xf32>,
    %397 = vector.extract_strided_slice %272 {offsets = [4, 0, 0], sizes = [1, 16, 8], strides = [1, 1, 1]} : vector<16x16x8xf32> to vector<1x16x8xf32>
    %398 = vector.shape_cast %397 : vector<1x16x8xf32> to vector<16x8xf32>
    %cst_168 = arith.constant 0.161290318 : f32
    %399 = vector.broadcast %cst_168 : f32 to vector<16x8xf32>
    %400 = arith.mulf %399, %398 : vector<16x8xf32>
    %401 = vector.extract_strided_slice %272 {offsets = [5, 0, 0], sizes = [1, 16, 8], strides = [1, 1, 1]} : vector<16x16x8xf32> to vector<1x16x8xf32>
    %402 = vector.shape_cast %401 : vector<1x16x8xf32> to vector<16x8xf32>
    %cst_169 = arith.constant 0.838709652 : f32
    %403 = vector.broadcast %cst_169 : f32 to vector<16x8xf32>
    %404 = arith.mulf %403, %402 : vector<16x8xf32>
    %405 = arith.addf %400, %404 : vector<16x8xf32>
    %cst_170 = arith.constant dense<0.000000e+00> : vector<32x8xf32>
    %406 = tpu.matmul %273, %405, %cst_170 {dimension_numbers = #tpu.dot_dimension_numbers<[1], [0], [0], [1], [0, 0, 1, 1], [], []>} : vector<32x16xf32>, vector<16x8xf32>, vector<32x8xf32> -> vector<32x8xf32>
    %c0_171 = arith.constant 0 : index
    %c10 = arith.constant 10 : index
    %c0_172 = arith.constant 0 : index
    %c0_173 = arith.constant 0 : index
    %407 = vector.load %arg14[%c0_171, %c10, %c0_172, %c0_173] : memref<1x32x32x8xf32, #tpu.memory_space<vmem>>, vector<1x1x32x8xf32>
    %408 = vector.shape_cast %407 : vector<1x1x32x8xf32> to vector<32x8xf32>
    %409 = vector.shape_cast %406 : vector<32x8xf32> to vector<1x1x32x8xf32>
    tpu.vector_store %arg14[%c0_171, %c10, %c0_172, %c0_173], %409 {strides = array<i32>} : memref<1x32x32x8xf32, #tpu.memory_space<vmem>>, vector<1x1x32x8xf32>,
    %410 = vector.extract_strided_slice %272 {offsets = [5, 0, 0], sizes = [1, 16, 8], strides = [1, 1, 1]} : vector<16x16x8xf32> to vector<1x16x8xf32>
    %411 = vector.shape_cast %410 : vector<1x16x8xf32> to vector<16x8xf32>
    %cst_174 = arith.constant 0.677419364 : f32
    %412 = vector.broadcast %cst_174 : f32 to vector<16x8xf32>
    %413 = arith.mulf %412, %411 : vector<16x8xf32>
    %414 = vector.extract_strided_slice %272 {offsets = [6, 0, 0], sizes = [1, 16, 8], strides = [1, 1, 1]} : vector<16x16x8xf32> to vector<1x16x8xf32>
    %415 = vector.shape_cast %414 : vector<1x16x8xf32> to vector<16x8xf32>
    %cst_175 = arith.constant 0.322580636 : f32
    %416 = vector.broadcast %cst_175 : f32 to vector<16x8xf32>
    %417 = arith.mulf %416, %415 : vector<16x8xf32>
    %418 = arith.addf %413, %417 : vector<16x8xf32>
    %cst_176 = arith.constant dense<0.000000e+00> : vector<32x8xf32>
    %419 = tpu.matmul %273, %418, %cst_176 {dimension_numbers = #tpu.dot_dimension_numbers<[1], [0], [0], [1], [0, 0, 1, 1], [], []>} : vector<32x16xf32>, vector<16x8xf32>, vector<32x8xf32> -> vector<32x8xf32>
    %c0_177 = arith.constant 0 : index
    %c11 = arith.constant 11 : index
    %c0_178 = arith.constant 0 : index
    %c0_179 = arith.constant 0 : index
    %420 = vector.load %arg14[%c0_177, %c11, %c0_178, %c0_179] : memref<1x32x32x8xf32, #tpu.memory_space<vmem>>, vector<1x1x32x8xf32>
    %421 = vector.shape_cast %420 : vector<1x1x32x8xf32> to vector<32x8xf32>
    %422 = vector.shape_cast %419 : vector<32x8xf32> to vector<1x1x32x8xf32>
    tpu.vector_store %arg14[%c0_177, %c11, %c0_178, %c0_179], %422 {strides = array<i32>} : memref<1x32x32x8xf32, #tpu.memory_space<vmem>>, vector<1x1x32x8xf32>,
    %423 = vector.extract_strided_slice %272 {offsets = [5, 0, 0], sizes = [1, 16, 8], strides = [1, 1, 1]} : vector<16x16x8xf32> to vector<1x16x8xf32>
    %424 = vector.shape_cast %423 : vector<1x16x8xf32> to vector<16x8xf32>
    %cst_180 = arith.constant 0.193548381 : f32
    %425 = vector.broadcast %cst_180 : f32 to vector<16x8xf32>
    %426 = arith.mulf %425, %424 : vector<16x8xf32>
    %427 = vector.extract_strided_slice %272 {offsets = [6, 0, 0], sizes = [1, 16, 8], strides = [1, 1, 1]} : vector<16x16x8xf32> to vector<1x16x8xf32>
    %428 = vector.shape_cast %427 : vector<1x16x8xf32> to vector<16x8xf32>
    %cst_181 = arith.constant 0.806451618 : f32
    %429 = vector.broadcast %cst_181 : f32 to vector<16x8xf32>
    %430 = arith.mulf %429, %428 : vector<16x8xf32>
    %431 = arith.addf %426, %430 : vector<16x8xf32>
    %cst_182 = arith.constant dense<0.000000e+00> : vector<32x8xf32>
    %432 = tpu.matmul %273, %431, %cst_182 {dimension_numbers = #tpu.dot_dimension_numbers<[1], [0], [0], [1], [0, 0, 1, 1], [], []>} : vector<32x16xf32>, vector<16x8xf32>, vector<32x8xf32> -> vector<32x8xf32>
    %c0_183 = arith.constant 0 : index
    %c12 = arith.constant 12 : index
    %c0_184 = arith.constant 0 : index
    %c0_185 = arith.constant 0 : index
    %433 = vector.load %arg14[%c0_183, %c12, %c0_184, %c0_185] : memref<1x32x32x8xf32, #tpu.memory_space<vmem>>, vector<1x1x32x8xf32>
    %434 = vector.shape_cast %433 : vector<1x1x32x8xf32> to vector<32x8xf32>
    %435 = vector.shape_cast %432 : vector<32x8xf32> to vector<1x1x32x8xf32>
    tpu.vector_store %arg14[%c0_183, %c12, %c0_184, %c0_185], %435 {strides = array<i32>} : memref<1x32x32x8xf32, #tpu.memory_space<vmem>>, vector<1x1x32x8xf32>,
    %436 = vector.extract_strided_slice %272 {offsets = [6, 0, 0], sizes = [1, 16, 8], strides = [1, 1, 1]} : vector<16x16x8xf32> to vector<1x16x8xf32>
    %437 = vector.shape_cast %436 : vector<1x16x8xf32> to vector<16x8xf32>
    %cst_186 = arith.constant 0.709677398 : f32
    %438 = vector.broadcast %cst_186 : f32 to vector<16x8xf32>
    %439 = arith.mulf %438, %437 : vector<16x8xf32>
    %440 = vector.extract_strided_slice %272 {offsets = [7, 0, 0], sizes = [1, 16, 8], strides = [1, 1, 1]} : vector<16x16x8xf32> to vector<1x16x8xf32>
    %441 = vector.shape_cast %440 : vector<1x16x8xf32> to vector<16x8xf32>
    %cst_187 = arith.constant 0.290322572 : f32
    %442 = vector.broadcast %cst_187 : f32 to vector<16x8xf32>
    %443 = arith.mulf %442, %441 : vector<16x8xf32>
    %444 = arith.addf %439, %443 : vector<16x8xf32>
    %cst_188 = arith.constant dense<0.000000e+00> : vector<32x8xf32>
    %445 = tpu.matmul %273, %444, %cst_188 {dimension_numbers = #tpu.dot_dimension_numbers<[1], [0], [0], [1], [0, 0, 1, 1], [], []>} : vector<32x16xf32>, vector<16x8xf32>, vector<32x8xf32> -> vector<32x8xf32>
    %c0_189 = arith.constant 0 : index
    %c13 = arith.constant 13 : index
    %c0_190 = arith.constant 0 : index
    %c0_191 = arith.constant 0 : index
    %446 = vector.load %arg14[%c0_189, %c13, %c0_190, %c0_191] : memref<1x32x32x8xf32, #tpu.memory_space<vmem>>, vector<1x1x32x8xf32>
    %447 = vector.shape_cast %446 : vector<1x1x32x8xf32> to vector<32x8xf32>
    %448 = vector.shape_cast %445 : vector<32x8xf32> to vector<1x1x32x8xf32>
    tpu.vector_store %arg14[%c0_189, %c13, %c0_190, %c0_191], %448 {strides = array<i32>} : memref<1x32x32x8xf32, #tpu.memory_space<vmem>>, vector<1x1x32x8xf32>,
    %449 = vector.extract_strided_slice %272 {offsets = [6, 0, 0], sizes = [1, 16, 8], strides = [1, 1, 1]} : vector<16x16x8xf32> to vector<1x16x8xf32>
    %450 = vector.shape_cast %449 : vector<1x16x8xf32> to vector<16x8xf32>
    %cst_192 = arith.constant 0.225806445 : f32
    %451 = vector.broadcast %cst_192 : f32 to vector<16x8xf32>
    %452 = arith.mulf %451, %450 : vector<16x8xf32>
    %453 = vector.extract_strided_slice %272 {offsets = [7, 0, 0], sizes = [1, 16, 8], strides = [1, 1, 1]} : vector<16x16x8xf32> to vector<1x16x8xf32>
    %454 = vector.shape_cast %453 : vector<1x16x8xf32> to vector<16x8xf32>
    %cst_193 = arith.constant 0.774193525 : f32
    %455 = vector.broadcast %cst_193 : f32 to vector<16x8xf32>
    %456 = arith.mulf %455, %454 : vector<16x8xf32>
    %457 = arith.addf %452, %456 : vector<16x8xf32>
    %cst_194 = arith.constant dense<0.000000e+00> : vector<32x8xf32>
    %458 = tpu.matmul %273, %457, %cst_194 {dimension_numbers = #tpu.dot_dimension_numbers<[1], [0], [0], [1], [0, 0, 1, 1], [], []>} : vector<32x16xf32>, vector<16x8xf32>, vector<32x8xf32> -> vector<32x8xf32>
    %c0_195 = arith.constant 0 : index
    %c14 = arith.constant 14 : index
    %c0_196 = arith.constant 0 : index
    %c0_197 = arith.constant 0 : index
    %459 = vector.load %arg14[%c0_195, %c14, %c0_196, %c0_197] : memref<1x32x32x8xf32, #tpu.memory_space<vmem>>, vector<1x1x32x8xf32>
    %460 = vector.shape_cast %459 : vector<1x1x32x8xf32> to vector<32x8xf32>
    %461 = vector.shape_cast %458 : vector<32x8xf32> to vector<1x1x32x8xf32>
    tpu.vector_store %arg14[%c0_195, %c14, %c0_196, %c0_197], %461 {strides = array<i32>} : memref<1x32x32x8xf32, #tpu.memory_space<vmem>>, vector<1x1x32x8xf32>,
    %462 = vector.extract_strided_slice %272 {offsets = [7, 0, 0], sizes = [1, 16, 8], strides = [1, 1, 1]} : vector<16x16x8xf32> to vector<1x16x8xf32>
    %463 = vector.shape_cast %462 : vector<1x16x8xf32> to vector<16x8xf32>
    %cst_198 = arith.constant 0.741935492 : f32
    %464 = vector.broadcast %cst_198 : f32 to vector<16x8xf32>
    %465 = arith.mulf %464, %463 : vector<16x8xf32>
    %466 = vector.extract_strided_slice %272 {offsets = [8, 0, 0], sizes = [1, 16, 8], strides = [1, 1, 1]} : vector<16x16x8xf32> to vector<1x16x8xf32>
    %467 = vector.shape_cast %466 : vector<1x16x8xf32> to vector<16x8xf32>
    %cst_199 = arith.constant 0.258064508 : f32
    %468 = vector.broadcast %cst_199 : f32 to vector<16x8xf32>
    %469 = arith.mulf %468, %467 : vector<16x8xf32>
    %470 = arith.addf %465, %469 : vector<16x8xf32>
    %cst_200 = arith.constant dense<0.000000e+00> : vector<32x8xf32>
    %471 = tpu.matmul %273, %470, %cst_200 {dimension_numbers = #tpu.dot_dimension_numbers<[1], [0], [0], [1], [0, 0, 1, 1], [], []>} : vector<32x16xf32>, vector<16x8xf32>, vector<32x8xf32> -> vector<32x8xf32>
    %c0_201 = arith.constant 0 : index
    %c15 = arith.constant 15 : index
    %c0_202 = arith.constant 0 : index
    %c0_203 = arith.constant 0 : index
    %472 = vector.load %arg14[%c0_201, %c15, %c0_202, %c0_203] : memref<1x32x32x8xf32, #tpu.memory_space<vmem>>, vector<1x1x32x8xf32>
    %473 = vector.shape_cast %472 : vector<1x1x32x8xf32> to vector<32x8xf32>
    %474 = vector.shape_cast %471 : vector<32x8xf32> to vector<1x1x32x8xf32>
    tpu.vector_store %arg14[%c0_201, %c15, %c0_202, %c0_203], %474 {strides = array<i32>} : memref<1x32x32x8xf32, #tpu.memory_space<vmem>>, vector<1x1x32x8xf32>,
    %475 = vector.extract_strided_slice %272 {offsets = [7, 0, 0], sizes = [1, 16, 8], strides = [1, 1, 1]} : vector<16x16x8xf32> to vector<1x16x8xf32>
    %476 = vector.shape_cast %475 : vector<1x16x8xf32> to vector<16x8xf32>
    %cst_204 = arith.constant 0.258064508 : f32
    %477 = vector.broadcast %cst_204 : f32 to vector<16x8xf32>
    %478 = arith.mulf %477, %476 : vector<16x8xf32>
    %479 = vector.extract_strided_slice %272 {offsets = [8, 0, 0], sizes = [1, 16, 8], strides = [1, 1, 1]} : vector<16x16x8xf32> to vector<1x16x8xf32>
    %480 = vector.shape_cast %479 : vector<1x16x8xf32> to vector<16x8xf32>
    %cst_205 = arith.constant 0.741935492 : f32
    %481 = vector.broadcast %cst_205 : f32 to vector<16x8xf32>
    %482 = arith.mulf %481, %480 : vector<16x8xf32>
    %483 = arith.addf %478, %482 : vector<16x8xf32>
    %cst_206 = arith.constant dense<0.000000e+00> : vector<32x8xf32>
    %484 = tpu.matmul %273, %483, %cst_206 {dimension_numbers = #tpu.dot_dimension_numbers<[1], [0], [0], [1], [0, 0, 1, 1], [], []>} : vector<32x16xf32>, vector<16x8xf32>, vector<32x8xf32> -> vector<32x8xf32>
    %c0_207 = arith.constant 0 : index
    %c16 = arith.constant 16 : index
    %c0_208 = arith.constant 0 : index
    %c0_209 = arith.constant 0 : index
    %485 = vector.load %arg14[%c0_207, %c16, %c0_208, %c0_209] : memref<1x32x32x8xf32, #tpu.memory_space<vmem>>, vector<1x1x32x8xf32>
    %486 = vector.shape_cast %485 : vector<1x1x32x8xf32> to vector<32x8xf32>
    %487 = vector.shape_cast %484 : vector<32x8xf32> to vector<1x1x32x8xf32>
    tpu.vector_store %arg14[%c0_207, %c16, %c0_208, %c0_209], %487 {strides = array<i32>} : memref<1x32x32x8xf32, #tpu.memory_space<vmem>>, vector<1x1x32x8xf32>,
    %488 = vector.extract_strided_slice %272 {offsets = [8, 0, 0], sizes = [1, 16, 8], strides = [1, 1, 1]} : vector<16x16x8xf32> to vector<1x16x8xf32>
    %489 = vector.shape_cast %488 : vector<1x16x8xf32> to vector<16x8xf32>
    %cst_210 = arith.constant 0.774193525 : f32
    %490 = vector.broadcast %cst_210 : f32 to vector<16x8xf32>
    %491 = arith.mulf %490, %489 : vector<16x8xf32>
    %492 = vector.extract_strided_slice %272 {offsets = [9, 0, 0], sizes = [1, 16, 8], strides = [1, 1, 1]} : vector<16x16x8xf32> to vector<1x16x8xf32>
    %493 = vector.shape_cast %492 : vector<1x16x8xf32> to vector<16x8xf32>
    %cst_211 = arith.constant 0.225806445 : f32
    %494 = vector.broadcast %cst_211 : f32 to vector<16x8xf32>
    %495 = arith.mulf %494, %493 : vector<16x8xf32>
    %496 = arith.addf %491, %495 : vector<16x8xf32>
    %cst_212 = arith.constant dense<0.000000e+00> : vector<32x8xf32>
    %497 = tpu.matmul %273, %496, %cst_212 {dimension_numbers = #tpu.dot_dimension_numbers<[1], [0], [0], [1], [0, 0, 1, 1], [], []>} : vector<32x16xf32>, vector<16x8xf32>, vector<32x8xf32> -> vector<32x8xf32>
    %c0_213 = arith.constant 0 : index
    %c17 = arith.constant 17 : index
    %c0_214 = arith.constant 0 : index
    %c0_215 = arith.constant 0 : index
    %498 = vector.load %arg14[%c0_213, %c17, %c0_214, %c0_215] : memref<1x32x32x8xf32, #tpu.memory_space<vmem>>, vector<1x1x32x8xf32>
    %499 = vector.shape_cast %498 : vector<1x1x32x8xf32> to vector<32x8xf32>
    %500 = vector.shape_cast %497 : vector<32x8xf32> to vector<1x1x32x8xf32>
    tpu.vector_store %arg14[%c0_213, %c17, %c0_214, %c0_215], %500 {strides = array<i32>} : memref<1x32x32x8xf32, #tpu.memory_space<vmem>>, vector<1x1x32x8xf32>,
    %501 = vector.extract_strided_slice %272 {offsets = [8, 0, 0], sizes = [1, 16, 8], strides = [1, 1, 1]} : vector<16x16x8xf32> to vector<1x16x8xf32>
    %502 = vector.shape_cast %501 : vector<1x16x8xf32> to vector<16x8xf32>
    %cst_216 = arith.constant 0.290322572 : f32
    %503 = vector.broadcast %cst_216 : f32 to vector<16x8xf32>
    %504 = arith.mulf %503, %502 : vector<16x8xf32>
    %505 = vector.extract_strided_slice %272 {offsets = [9, 0, 0], sizes = [1, 16, 8], strides = [1, 1, 1]} : vector<16x16x8xf32> to vector<1x16x8xf32>
    %506 = vector.shape_cast %505 : vector<1x16x8xf32> to vector<16x8xf32>
    %cst_217 = arith.constant 0.709677398 : f32
    %507 = vector.broadcast %cst_217 : f32 to vector<16x8xf32>
    %508 = arith.mulf %507, %506 : vector<16x8xf32>
    %509 = arith.addf %504, %508 : vector<16x8xf32>
    %cst_218 = arith.constant dense<0.000000e+00> : vector<32x8xf32>
    %510 = tpu.matmul %273, %509, %cst_218 {dimension_numbers = #tpu.dot_dimension_numbers<[1], [0], [0], [1], [0, 0, 1, 1], [], []>} : vector<32x16xf32>, vector<16x8xf32>, vector<32x8xf32> -> vector<32x8xf32>
    %c0_219 = arith.constant 0 : index
    %c18 = arith.constant 18 : index
    %c0_220 = arith.constant 0 : index
    %c0_221 = arith.constant 0 : index
    %511 = vector.load %arg14[%c0_219, %c18, %c0_220, %c0_221] : memref<1x32x32x8xf32, #tpu.memory_space<vmem>>, vector<1x1x32x8xf32>
    %512 = vector.shape_cast %511 : vector<1x1x32x8xf32> to vector<32x8xf32>
    %513 = vector.shape_cast %510 : vector<32x8xf32> to vector<1x1x32x8xf32>
    tpu.vector_store %arg14[%c0_219, %c18, %c0_220, %c0_221], %513 {strides = array<i32>} : memref<1x32x32x8xf32, #tpu.memory_space<vmem>>, vector<1x1x32x8xf32>,
    %514 = vector.extract_strided_slice %272 {offsets = [9, 0, 0], sizes = [1, 16, 8], strides = [1, 1, 1]} : vector<16x16x8xf32> to vector<1x16x8xf32>
    %515 = vector.shape_cast %514 : vector<1x16x8xf32> to vector<16x8xf32>
    %cst_222 = arith.constant 0.806451618 : f32
    %516 = vector.broadcast %cst_222 : f32 to vector<16x8xf32>
    %517 = arith.mulf %516, %515 : vector<16x8xf32>
    %518 = vector.extract_strided_slice %272 {offsets = [10, 0, 0], sizes = [1, 16, 8], strides = [1, 1, 1]} : vector<16x16x8xf32> to vector<1x16x8xf32>
    %519 = vector.shape_cast %518 : vector<1x16x8xf32> to vector<16x8xf32>
    %cst_223 = arith.constant 0.193548381 : f32
    %520 = vector.broadcast %cst_223 : f32 to vector<16x8xf32>
    %521 = arith.mulf %520, %519 : vector<16x8xf32>
    %522 = arith.addf %517, %521 : vector<16x8xf32>
    %cst_224 = arith.constant dense<0.000000e+00> : vector<32x8xf32>
    %523 = tpu.matmul %273, %522, %cst_224 {dimension_numbers = #tpu.dot_dimension_numbers<[1], [0], [0], [1], [0, 0, 1, 1], [], []>} : vector<32x16xf32>, vector<16x8xf32>, vector<32x8xf32> -> vector<32x8xf32>
    %c0_225 = arith.constant 0 : index
    %c19 = arith.constant 19 : index
    %c0_226 = arith.constant 0 : index
    %c0_227 = arith.constant 0 : index
    %524 = vector.load %arg14[%c0_225, %c19, %c0_226, %c0_227] : memref<1x32x32x8xf32, #tpu.memory_space<vmem>>, vector<1x1x32x8xf32>
    %525 = vector.shape_cast %524 : vector<1x1x32x8xf32> to vector<32x8xf32>
    %526 = vector.shape_cast %523 : vector<32x8xf32> to vector<1x1x32x8xf32>
    tpu.vector_store %arg14[%c0_225, %c19, %c0_226, %c0_227], %526 {strides = array<i32>} : memref<1x32x32x8xf32, #tpu.memory_space<vmem>>, vector<1x1x32x8xf32>,
    %527 = vector.extract_strided_slice %272 {offsets = [9, 0, 0], sizes = [1, 16, 8], strides = [1, 1, 1]} : vector<16x16x8xf32> to vector<1x16x8xf32>
    %528 = vector.shape_cast %527 : vector<1x16x8xf32> to vector<16x8xf32>
    %cst_228 = arith.constant 0.322580636 : f32
    %529 = vector.broadcast %cst_228 : f32 to vector<16x8xf32>
    %530 = arith.mulf %529, %528 : vector<16x8xf32>
    %531 = vector.extract_strided_slice %272 {offsets = [10, 0, 0], sizes = [1, 16, 8], strides = [1, 1, 1]} : vector<16x16x8xf32> to vector<1x16x8xf32>
    %532 = vector.shape_cast %531 : vector<1x16x8xf32> to vector<16x8xf32>
    %cst_229 = arith.constant 0.677419364 : f32
    %533 = vector.broadcast %cst_229 : f32 to vector<16x8xf32>
    %534 = arith.mulf %533, %532 : vector<16x8xf32>
    %535 = arith.addf %530, %534 : vector<16x8xf32>
    %cst_230 = arith.constant dense<0.000000e+00> : vector<32x8xf32>
    %536 = tpu.matmul %273, %535, %cst_230 {dimension_numbers = #tpu.dot_dimension_numbers<[1], [0], [0], [1], [0, 0, 1, 1], [], []>} : vector<32x16xf32>, vector<16x8xf32>, vector<32x8xf32> -> vector<32x8xf32>
    %c0_231 = arith.constant 0 : index
    %c20 = arith.constant 20 : index
    %c0_232 = arith.constant 0 : index
    %c0_233 = arith.constant 0 : index
    %537 = vector.load %arg14[%c0_231, %c20, %c0_232, %c0_233] : memref<1x32x32x8xf32, #tpu.memory_space<vmem>>, vector<1x1x32x8xf32>
    %538 = vector.shape_cast %537 : vector<1x1x32x8xf32> to vector<32x8xf32>
    %539 = vector.shape_cast %536 : vector<32x8xf32> to vector<1x1x32x8xf32>
    tpu.vector_store %arg14[%c0_231, %c20, %c0_232, %c0_233], %539 {strides = array<i32>} : memref<1x32x32x8xf32, #tpu.memory_space<vmem>>, vector<1x1x32x8xf32>,
    %540 = vector.extract_strided_slice %272 {offsets = [10, 0, 0], sizes = [1, 16, 8], strides = [1, 1, 1]} : vector<16x16x8xf32> to vector<1x16x8xf32>
    %541 = vector.shape_cast %540 : vector<1x16x8xf32> to vector<16x8xf32>
    %cst_234 = arith.constant 0.838709652 : f32
    %542 = vector.broadcast %cst_234 : f32 to vector<16x8xf32>
    %543 = arith.mulf %542, %541 : vector<16x8xf32>
    %544 = vector.extract_strided_slice %272 {offsets = [11, 0, 0], sizes = [1, 16, 8], strides = [1, 1, 1]} : vector<16x16x8xf32> to vector<1x16x8xf32>
    %545 = vector.shape_cast %544 : vector<1x16x8xf32> to vector<16x8xf32>
    %cst_235 = arith.constant 0.161290318 : f32
    %546 = vector.broadcast %cst_235 : f32 to vector<16x8xf32>
    %547 = arith.mulf %546, %545 : vector<16x8xf32>
    %548 = arith.addf %543, %547 : vector<16x8xf32>
    %cst_236 = arith.constant dense<0.000000e+00> : vector<32x8xf32>
    %549 = tpu.matmul %273, %548, %cst_236 {dimension_numbers = #tpu.dot_dimension_numbers<[1], [0], [0], [1], [0, 0, 1, 1], [], []>} : vector<32x16xf32>, vector<16x8xf32>, vector<32x8xf32> -> vector<32x8xf32>
    %c0_237 = arith.constant 0 : index
    %c21 = arith.constant 21 : index
    %c0_238 = arith.constant 0 : index
    %c0_239 = arith.constant 0 : index
    %550 = vector.load %arg14[%c0_237, %c21, %c0_238, %c0_239] : memref<1x32x32x8xf32, #tpu.memory_space<vmem>>, vector<1x1x32x8xf32>
    %551 = vector.shape_cast %550 : vector<1x1x32x8xf32> to vector<32x8xf32>
    %552 = vector.shape_cast %549 : vector<32x8xf32> to vector<1x1x32x8xf32>
    tpu.vector_store %arg14[%c0_237, %c21, %c0_238, %c0_239], %552 {strides = array<i32>} : memref<1x32x32x8xf32, #tpu.memory_space<vmem>>, vector<1x1x32x8xf32>,
    %553 = vector.extract_strided_slice %272 {offsets = [10, 0, 0], sizes = [1, 16, 8], strides = [1, 1, 1]} : vector<16x16x8xf32> to vector<1x16x8xf32>
    %554 = vector.shape_cast %553 : vector<1x16x8xf32> to vector<16x8xf32>
    %cst_240 = arith.constant 0.354838699 : f32
    %555 = vector.broadcast %cst_240 : f32 to vector<16x8xf32>
    %556 = arith.mulf %555, %554 : vector<16x8xf32>
    %557 = vector.extract_strided_slice %272 {offsets = [11, 0, 0], sizes = [1, 16, 8], strides = [1, 1, 1]} : vector<16x16x8xf32> to vector<1x16x8xf32>
    %558 = vector.shape_cast %557 : vector<1x16x8xf32> to vector<16x8xf32>
    %cst_241 = arith.constant 0.645161271 : f32
    %559 = vector.broadcast %cst_241 : f32 to vector<16x8xf32>
    %560 = arith.mulf %559, %558 : vector<16x8xf32>
    %561 = arith.addf %556, %560 : vector<16x8xf32>
    %cst_242 = arith.constant dense<0.000000e+00> : vector<32x8xf32>
    %562 = tpu.matmul %273, %561, %cst_242 {dimension_numbers = #tpu.dot_dimension_numbers<[1], [0], [0], [1], [0, 0, 1, 1], [], []>} : vector<32x16xf32>, vector<16x8xf32>, vector<32x8xf32> -> vector<32x8xf32>
    %c0_243 = arith.constant 0 : index
    %c22 = arith.constant 22 : index
    %c0_244 = arith.constant 0 : index
    %c0_245 = arith.constant 0 : index
    %563 = vector.load %arg14[%c0_243, %c22, %c0_244, %c0_245] : memref<1x32x32x8xf32, #tpu.memory_space<vmem>>, vector<1x1x32x8xf32>
    %564 = vector.shape_cast %563 : vector<1x1x32x8xf32> to vector<32x8xf32>
    %565 = vector.shape_cast %562 : vector<32x8xf32> to vector<1x1x32x8xf32>
    tpu.vector_store %arg14[%c0_243, %c22, %c0_244, %c0_245], %565 {strides = array<i32>} : memref<1x32x32x8xf32, #tpu.memory_space<vmem>>, vector<1x1x32x8xf32>,
    %566 = vector.extract_strided_slice %272 {offsets = [11, 0, 0], sizes = [1, 16, 8], strides = [1, 1, 1]} : vector<16x16x8xf32> to vector<1x16x8xf32>
    %567 = vector.shape_cast %566 : vector<1x16x8xf32> to vector<16x8xf32>
    %cst_246 = arith.constant 0.870967745 : f32
    %568 = vector.broadcast %cst_246 : f32 to vector<16x8xf32>
    %569 = arith.mulf %568, %567 : vector<16x8xf32>
    %570 = vector.extract_strided_slice %272 {offsets = [12, 0, 0], sizes = [1, 16, 8], strides = [1, 1, 1]} : vector<16x16x8xf32> to vector<1x16x8xf32>
    %571 = vector.shape_cast %570 : vector<1x16x8xf32> to vector<16x8xf32>
    %cst_247 = arith.constant 0.129032254 : f32
    %572 = vector.broadcast %cst_247 : f32 to vector<16x8xf32>
    %573 = arith.mulf %572, %571 : vector<16x8xf32>
    %574 = arith.addf %569, %573 : vector<16x8xf32>
    %cst_248 = arith.constant dense<0.000000e+00> : vector<32x8xf32>
    %575 = tpu.matmul %273, %574, %cst_248 {dimension_numbers = #tpu.dot_dimension_numbers<[1], [0], [0], [1], [0, 0, 1, 1], [], []>} : vector<32x16xf32>, vector<16x8xf32>, vector<32x8xf32> -> vector<32x8xf32>
    %c0_249 = arith.constant 0 : index
    %c23 = arith.constant 23 : index
    %c0_250 = arith.constant 0 : index
    %c0_251 = arith.constant 0 : index
    %576 = vector.load %arg14[%c0_249, %c23, %c0_250, %c0_251] : memref<1x32x32x8xf32, #tpu.memory_space<vmem>>, vector<1x1x32x8xf32>
    %577 = vector.shape_cast %576 : vector<1x1x32x8xf32> to vector<32x8xf32>
    %578 = vector.shape_cast %575 : vector<32x8xf32> to vector<1x1x32x8xf32>
    tpu.vector_store %arg14[%c0_249, %c23, %c0_250, %c0_251], %578 {strides = array<i32>} : memref<1x32x32x8xf32, #tpu.memory_space<vmem>>, vector<1x1x32x8xf32>,
    %579 = vector.extract_strided_slice %272 {offsets = [11, 0, 0], sizes = [1, 16, 8], strides = [1, 1, 1]} : vector<16x16x8xf32> to vector<1x16x8xf32>
    %580 = vector.shape_cast %579 : vector<1x16x8xf32> to vector<16x8xf32>
    %cst_252 = arith.constant 0.387096763 : f32
    %581 = vector.broadcast %cst_252 : f32 to vector<16x8xf32>
    %582 = arith.mulf %581, %580 : vector<16x8xf32>
    %583 = vector.extract_strided_slice %272 {offsets = [12, 0, 0], sizes = [1, 16, 8], strides = [1, 1, 1]} : vector<16x16x8xf32> to vector<1x16x8xf32>
    %584 = vector.shape_cast %583 : vector<1x16x8xf32> to vector<16x8xf32>
    %cst_253 = arith.constant 0.612903237 : f32
    %585 = vector.broadcast %cst_253 : f32 to vector<16x8xf32>
    %586 = arith.mulf %585, %584 : vector<16x8xf32>
    %587 = arith.addf %582, %586 : vector<16x8xf32>
    %cst_254 = arith.constant dense<0.000000e+00> : vector<32x8xf32>
    %588 = tpu.matmul %273, %587, %cst_254 {dimension_numbers = #tpu.dot_dimension_numbers<[1], [0], [0], [1], [0, 0, 1, 1], [], []>} : vector<32x16xf32>, vector<16x8xf32>, vector<32x8xf32> -> vector<32x8xf32>
    %c0_255 = arith.constant 0 : index
    %c24 = arith.constant 24 : index
    %c0_256 = arith.constant 0 : index
    %c0_257 = arith.constant 0 : index
    %589 = vector.load %arg14[%c0_255, %c24, %c0_256, %c0_257] : memref<1x32x32x8xf32, #tpu.memory_space<vmem>>, vector<1x1x32x8xf32>
    %590 = vector.shape_cast %589 : vector<1x1x32x8xf32> to vector<32x8xf32>
    %591 = vector.shape_cast %588 : vector<32x8xf32> to vector<1x1x32x8xf32>
    tpu.vector_store %arg14[%c0_255, %c24, %c0_256, %c0_257], %591 {strides = array<i32>} : memref<1x32x32x8xf32, #tpu.memory_space<vmem>>, vector<1x1x32x8xf32>,
    %592 = vector.extract_strided_slice %272 {offsets = [12, 0, 0], sizes = [1, 16, 8], strides = [1, 1, 1]} : vector<16x16x8xf32> to vector<1x16x8xf32>
    %593 = vector.shape_cast %592 : vector<1x16x8xf32> to vector<16x8xf32>
    %cst_258 = arith.constant 0.903225779 : f32
    %594 = vector.broadcast %cst_258 : f32 to vector<16x8xf32>
    %595 = arith.mulf %594, %593 : vector<16x8xf32>
    %596 = vector.extract_strided_slice %272 {offsets = [13, 0, 0], sizes = [1, 16, 8], strides = [1, 1, 1]} : vector<16x16x8xf32> to vector<1x16x8xf32>
    %597 = vector.shape_cast %596 : vector<1x16x8xf32> to vector<16x8xf32>
    %cst_259 = arith.constant 0.0967741906 : f32
    %598 = vector.broadcast %cst_259 : f32 to vector<16x8xf32>
    %599 = arith.mulf %598, %597 : vector<16x8xf32>
    %600 = arith.addf %595, %599 : vector<16x8xf32>
    %cst_260 = arith.constant dense<0.000000e+00> : vector<32x8xf32>
    %601 = tpu.matmul %273, %600, %cst_260 {dimension_numbers = #tpu.dot_dimension_numbers<[1], [0], [0], [1], [0, 0, 1, 1], [], []>} : vector<32x16xf32>, vector<16x8xf32>, vector<32x8xf32> -> vector<32x8xf32>
    %c0_261 = arith.constant 0 : index
    %c25 = arith.constant 25 : index
    %c0_262 = arith.constant 0 : index
    %c0_263 = arith.constant 0 : index
    %602 = vector.load %arg14[%c0_261, %c25, %c0_262, %c0_263] : memref<1x32x32x8xf32, #tpu.memory_space<vmem>>, vector<1x1x32x8xf32>
    %603 = vector.shape_cast %602 : vector<1x1x32x8xf32> to vector<32x8xf32>
    %604 = vector.shape_cast %601 : vector<32x8xf32> to vector<1x1x32x8xf32>
    tpu.vector_store %arg14[%c0_261, %c25, %c0_262, %c0_263], %604 {strides = array<i32>} : memref<1x32x32x8xf32, #tpu.memory_space<vmem>>, vector<1x1x32x8xf32>,
    %605 = vector.extract_strided_slice %272 {offsets = [12, 0, 0], sizes = [1, 16, 8], strides = [1, 1, 1]} : vector<16x16x8xf32> to vector<1x16x8xf32>
    %606 = vector.shape_cast %605 : vector<1x16x8xf32> to vector<16x8xf32>
    %cst_264 = arith.constant 0.419354826 : f32
    %607 = vector.broadcast %cst_264 : f32 to vector<16x8xf32>
    %608 = arith.mulf %607, %606 : vector<16x8xf32>
    %609 = vector.extract_strided_slice %272 {offsets = [13, 0, 0], sizes = [1, 16, 8], strides = [1, 1, 1]} : vector<16x16x8xf32> to vector<1x16x8xf32>
    %610 = vector.shape_cast %609 : vector<1x16x8xf32> to vector<16x8xf32>
    %cst_265 = arith.constant 0.580645144 : f32
    %611 = vector.broadcast %cst_265 : f32 to vector<16x8xf32>
    %612 = arith.mulf %611, %610 : vector<16x8xf32>
    %613 = arith.addf %608, %612 : vector<16x8xf32>
    %cst_266 = arith.constant dense<0.000000e+00> : vector<32x8xf32>
    %614 = tpu.matmul %273, %613, %cst_266 {dimension_numbers = #tpu.dot_dimension_numbers<[1], [0], [0], [1], [0, 0, 1, 1], [], []>} : vector<32x16xf32>, vector<16x8xf32>, vector<32x8xf32> -> vector<32x8xf32>
    %c0_267 = arith.constant 0 : index
    %c26 = arith.constant 26 : index
    %c0_268 = arith.constant 0 : index
    %c0_269 = arith.constant 0 : index
    %615 = vector.load %arg14[%c0_267, %c26, %c0_268, %c0_269] : memref<1x32x32x8xf32, #tpu.memory_space<vmem>>, vector<1x1x32x8xf32>
    %616 = vector.shape_cast %615 : vector<1x1x32x8xf32> to vector<32x8xf32>
    %617 = vector.shape_cast %614 : vector<32x8xf32> to vector<1x1x32x8xf32>
    tpu.vector_store %arg14[%c0_267, %c26, %c0_268, %c0_269], %617 {strides = array<i32>} : memref<1x32x32x8xf32, #tpu.memory_space<vmem>>, vector<1x1x32x8xf32>,
    %618 = vector.extract_strided_slice %272 {offsets = [13, 0, 0], sizes = [1, 16, 8], strides = [1, 1, 1]} : vector<16x16x8xf32> to vector<1x16x8xf32>
    %619 = vector.shape_cast %618 : vector<1x16x8xf32> to vector<16x8xf32>
    %cst_270 = arith.constant 0.935483872 : f32
    %620 = vector.broadcast %cst_270 : f32 to vector<16x8xf32>
    %621 = arith.mulf %620, %619 : vector<16x8xf32>
    %622 = vector.extract_strided_slice %272 {offsets = [14, 0, 0], sizes = [1, 16, 8], strides = [1, 1, 1]} : vector<16x16x8xf32> to vector<1x16x8xf32>
    %623 = vector.shape_cast %622 : vector<1x16x8xf32> to vector<16x8xf32>
    %cst_271 = arith.constant 0.0645161271 : f32
    %624 = vector.broadcast %cst_271 : f32 to vector<16x8xf32>
    %625 = arith.mulf %624, %623 : vector<16x8xf32>
    %626 = arith.addf %621, %625 : vector<16x8xf32>
    %cst_272 = arith.constant dense<0.000000e+00> : vector<32x8xf32>
    %627 = tpu.matmul %273, %626, %cst_272 {dimension_numbers = #tpu.dot_dimension_numbers<[1], [0], [0], [1], [0, 0, 1, 1], [], []>} : vector<32x16xf32>, vector<16x8xf32>, vector<32x8xf32> -> vector<32x8xf32>
    %c0_273 = arith.constant 0 : index
    %c27 = arith.constant 27 : index
    %c0_274 = arith.constant 0 : index
    %c0_275 = arith.constant 0 : index
    %628 = vector.load %arg14[%c0_273, %c27, %c0_274, %c0_275] : memref<1x32x32x8xf32, #tpu.memory_space<vmem>>, vector<1x1x32x8xf32>
    %629 = vector.shape_cast %628 : vector<1x1x32x8xf32> to vector<32x8xf32>
    %630 = vector.shape_cast %627 : vector<32x8xf32> to vector<1x1x32x8xf32>
    tpu.vector_store %arg14[%c0_273, %c27, %c0_274, %c0_275], %630 {strides = array<i32>} : memref<1x32x32x8xf32, #tpu.memory_space<vmem>>, vector<1x1x32x8xf32>,
    %631 = vector.extract_strided_slice %272 {offsets = [13, 0, 0], sizes = [1, 16, 8], strides = [1, 1, 1]} : vector<16x16x8xf32> to vector<1x16x8xf32>
    %632 = vector.shape_cast %631 : vector<1x16x8xf32> to vector<16x8xf32>
    %cst_276 = arith.constant 0.45161289 : f32
    %633 = vector.broadcast %cst_276 : f32 to vector<16x8xf32>
    %634 = arith.mulf %633, %632 : vector<16x8xf32>
    %635 = vector.extract_strided_slice %272 {offsets = [14, 0, 0], sizes = [1, 16, 8], strides = [1, 1, 1]} : vector<16x16x8xf32> to vector<1x16x8xf32>
    %636 = vector.shape_cast %635 : vector<1x16x8xf32> to vector<16x8xf32>
    %cst_277 = arith.constant 0.54838711 : f32
    %637 = vector.broadcast %cst_277 : f32 to vector<16x8xf32>
    %638 = arith.mulf %637, %636 : vector<16x8xf32>
    %639 = arith.addf %634, %638 : vector<16x8xf32>
    %cst_278 = arith.constant dense<0.000000e+00> : vector<32x8xf32>
    %640 = tpu.matmul %273, %639, %cst_278 {dimension_numbers = #tpu.dot_dimension_numbers<[1], [0], [0], [1], [0, 0, 1, 1], [], []>} : vector<32x16xf32>, vector<16x8xf32>, vector<32x8xf32> -> vector<32x8xf32>
    %c0_279 = arith.constant 0 : index
    %c28 = arith.constant 28 : index
    %c0_280 = arith.constant 0 : index
    %c0_281 = arith.constant 0 : index
    %641 = vector.load %arg14[%c0_279, %c28, %c0_280, %c0_281] : memref<1x32x32x8xf32, #tpu.memory_space<vmem>>, vector<1x1x32x8xf32>
    %642 = vector.shape_cast %641 : vector<1x1x32x8xf32> to vector<32x8xf32>
    %643 = vector.shape_cast %640 : vector<32x8xf32> to vector<1x1x32x8xf32>
    tpu.vector_store %arg14[%c0_279, %c28, %c0_280, %c0_281], %643 {strides = array<i32>} : memref<1x32x32x8xf32, #tpu.memory_space<vmem>>, vector<1x1x32x8xf32>,
    %644 = vector.extract_strided_slice %272 {offsets = [14, 0, 0], sizes = [1, 16, 8], strides = [1, 1, 1]} : vector<16x16x8xf32> to vector<1x16x8xf32>
    %645 = vector.shape_cast %644 : vector<1x16x8xf32> to vector<16x8xf32>
    %cst_282 = arith.constant 0.967741906 : f32
    %646 = vector.broadcast %cst_282 : f32 to vector<16x8xf32>
    %647 = arith.mulf %646, %645 : vector<16x8xf32>
    %648 = vector.extract_strided_slice %272 {offsets = [15, 0, 0], sizes = [1, 16, 8], strides = [1, 1, 1]} : vector<16x16x8xf32> to vector<1x16x8xf32>
    %649 = vector.shape_cast %648 : vector<1x16x8xf32> to vector<16x8xf32>
    %cst_283 = arith.constant 0.0322580636 : f32
    %650 = vector.broadcast %cst_283 : f32 to vector<16x8xf32>
    %651 = arith.mulf %650, %649 : vector<16x8xf32>
    %652 = arith.addf %647, %651 : vector<16x8xf32>
    %cst_284 = arith.constant dense<0.000000e+00> : vector<32x8xf32>
    %653 = tpu.matmul %273, %652, %cst_284 {dimension_numbers = #tpu.dot_dimension_numbers<[1], [0], [0], [1], [0, 0, 1, 1], [], []>} : vector<32x16xf32>, vector<16x8xf32>, vector<32x8xf32> -> vector<32x8xf32>
    %c0_285 = arith.constant 0 : index
    %c29 = arith.constant 29 : index
    %c0_286 = arith.constant 0 : index
    %c0_287 = arith.constant 0 : index
    %654 = vector.load %arg14[%c0_285, %c29, %c0_286, %c0_287] : memref<1x32x32x8xf32, #tpu.memory_space<vmem>>, vector<1x1x32x8xf32>
    %655 = vector.shape_cast %654 : vector<1x1x32x8xf32> to vector<32x8xf32>
    %656 = vector.shape_cast %653 : vector<32x8xf32> to vector<1x1x32x8xf32>
    tpu.vector_store %arg14[%c0_285, %c29, %c0_286, %c0_287], %656 {strides = array<i32>} : memref<1x32x32x8xf32, #tpu.memory_space<vmem>>, vector<1x1x32x8xf32>,
    %657 = vector.extract_strided_slice %272 {offsets = [14, 0, 0], sizes = [1, 16, 8], strides = [1, 1, 1]} : vector<16x16x8xf32> to vector<1x16x8xf32>
    %658 = vector.shape_cast %657 : vector<1x16x8xf32> to vector<16x8xf32>
    %cst_288 = arith.constant 0.483870953 : f32
    %659 = vector.broadcast %cst_288 : f32 to vector<16x8xf32>
    %660 = arith.mulf %659, %658 : vector<16x8xf32>
    %661 = vector.extract_strided_slice %272 {offsets = [15, 0, 0], sizes = [1, 16, 8], strides = [1, 1, 1]} : vector<16x16x8xf32> to vector<1x16x8xf32>
    %662 = vector.shape_cast %661 : vector<1x16x8xf32> to vector<16x8xf32>
    %cst_289 = arith.constant 5.161290e-01 : f32
    %663 = vector.broadcast %cst_289 : f32 to vector<16x8xf32>
    %664 = arith.mulf %663, %662 : vector<16x8xf32>
    %665 = arith.addf %660, %664 : vector<16x8xf32>
    %cst_290 = arith.constant dense<0.000000e+00> : vector<32x8xf32>
    %666 = tpu.matmul %273, %665, %cst_290 {dimension_numbers = #tpu.dot_dimension_numbers<[1], [0], [0], [1], [0, 0, 1, 1], [], []>} : vector<32x16xf32>, vector<16x8xf32>, vector<32x8xf32> -> vector<32x8xf32>
    %c0_291 = arith.constant 0 : index
    %c30 = arith.constant 30 : index
    %c0_292 = arith.constant 0 : index
    %c0_293 = arith.constant 0 : index
    %667 = vector.load %arg14[%c0_291, %c30, %c0_292, %c0_293] : memref<1x32x32x8xf32, #tpu.memory_space<vmem>>, vector<1x1x32x8xf32>
    %668 = vector.shape_cast %667 : vector<1x1x32x8xf32> to vector<32x8xf32>
    %669 = vector.shape_cast %666 : vector<32x8xf32> to vector<1x1x32x8xf32>
    tpu.vector_store %arg14[%c0_291, %c30, %c0_292, %c0_293], %669 {strides = array<i32>} : memref<1x32x32x8xf32, #tpu.memory_space<vmem>>, vector<1x1x32x8xf32>,
    %670 = vector.extract_strided_slice %272 {offsets = [14, 0, 0], sizes = [1, 16, 8], strides = [1, 1, 1]} : vector<16x16x8xf32> to vector<1x16x8xf32>
    %671 = vector.shape_cast %670 : vector<1x16x8xf32> to vector<16x8xf32>
    %cst_294 = arith.constant 0.000000e+00 : f32
    %672 = vector.broadcast %cst_294 : f32 to vector<16x8xf32>
    %673 = arith.mulf %672, %671 : vector<16x8xf32>
    %674 = vector.extract_strided_slice %272 {offsets = [15, 0, 0], sizes = [1, 16, 8], strides = [1, 1, 1]} : vector<16x16x8xf32> to vector<1x16x8xf32>
    %675 = vector.shape_cast %674 : vector<1x16x8xf32> to vector<16x8xf32>
    %cst_295 = arith.constant 1.000000e+00 : f32
    %676 = vector.broadcast %cst_295 : f32 to vector<16x8xf32>
    %677 = arith.mulf %676, %675 : vector<16x8xf32>
    %678 = arith.addf %673, %677 : vector<16x8xf32>
    %cst_296 = arith.constant dense<0.000000e+00> : vector<32x8xf32>
    %679 = tpu.matmul %273, %678, %cst_296 {dimension_numbers = #tpu.dot_dimension_numbers<[1], [0], [0], [1], [0, 0, 1, 1], [], []>} : vector<32x16xf32>, vector<16x8xf32>, vector<32x8xf32> -> vector<32x8xf32>
    %c0_297 = arith.constant 0 : index
    %c31 = arith.constant 31 : index
    %c0_298 = arith.constant 0 : index
    %c0_299 = arith.constant 0 : index
    %680 = vector.load %arg14[%c0_297, %c31, %c0_298, %c0_299] : memref<1x32x32x8xf32, #tpu.memory_space<vmem>>, vector<1x1x32x8xf32>
    %681 = vector.shape_cast %680 : vector<1x1x32x8xf32> to vector<32x8xf32>
    %682 = vector.shape_cast %679 : vector<32x8xf32> to vector<1x1x32x8xf32>
    tpu.vector_store %arg14[%c0_297, %c31, %c0_298, %c0_299], %682 {strides = array<i32>} : memref<1x32x32x8xf32, #tpu.memory_space<vmem>>, vector<1x1x32x8xf32>,
    return
  }
  func.func @transform_0(%arg0: i32) -> (i32, i32, i32, i32) {
    %c0_i32 = arith.constant 0 : i32
    %c0_i32_0 = arith.constant 0 : i32
    %c0_i32_1 = arith.constant 0 : i32
    %c0_i32_2 = arith.constant 0 : i32
    return %arg0, %c0_i32, %c0_i32_0, %c0_i32_1 : i32, i32, i32, i32
  }
  func.func @transform_1(%arg0: i32) -> (i32, i32, i32, i32) {
    %c0_i32 = arith.constant 0 : i32
    %c0_i32_0 = arith.constant 0 : i32
    %c0_i32_1 = arith.constant 0 : i32
    %c0_i32_2 = arith.constant 0 : i32
    return %arg0, %c0_i32, %c0_i32_0, %c0_i32_1 : i32, i32, i32, i32
  }
  func.func @transform_2(%arg0: i32) -> (i32, i32, i32, i32) {
    %c0_i32 = arith.constant 0 : i32
    %c0_i32_0 = arith.constant 0 : i32
    %c0_i32_1 = arith.constant 0 : i32
    %c0_i32_2 = arith.constant 0 : i32
    %c0_i32_3 = arith.constant 0 : i32
    return %c0_i32, %c0_i32_0, %c0_i32_1, %c0_i32_2 : i32, i32, i32, i32
  }
  func.func @transform_3(%arg0: i32) -> (i32, i32) {
    %c0_i32 = arith.constant 0 : i32
    %c0_i32_0 = arith.constant 0 : i32
    %c0_i32_1 = arith.constant 0 : i32
    return %c0_i32, %c0_i32_0 : i32, i32
  }
  func.func @transform_4(%arg0: i32) -> (i32, i32, i32, i32) {
    %c0_i32 = arith.constant 0 : i32
    %c0_i32_0 = arith.constant 0 : i32
    %c0_i32_1 = arith.constant 0 : i32
    %c0_i32_2 = arith.constant 0 : i32
    %c0_i32_3 = arith.constant 0 : i32
    return %c0_i32, %c0_i32_0, %c0_i32_1, %c0_i32_2 : i32, i32, i32, i32
  }
  func.func @transform_5(%arg0: i32) -> (i32, i32) {
    %c0_i32 = arith.constant 0 : i32
    %c0_i32_0 = arith.constant 0 : i32
    %c0_i32_1 = arith.constant 0 : i32
    return %c0_i32, %c0_i32_0 : i32, i32
  }
  func.func @transform_6(%arg0: i32) -> (i32, i32, i32, i32) {
    %c0_i32 = arith.constant 0 : i32
    %c0_i32_0 = arith.constant 0 : i32
    %c0_i32_1 = arith.constant 0 : i32
    %c0_i32_2 = arith.constant 0 : i32
    %c0_i32_3 = arith.constant 0 : i32
    return %c0_i32, %c0_i32_0, %c0_i32_1, %c0_i32_2 : i32, i32, i32, i32
  }
  func.func @transform_7(%arg0: i32) -> (i32, i32) {
    %c0_i32 = arith.constant 0 : i32
    %c0_i32_0 = arith.constant 0 : i32
    %c0_i32_1 = arith.constant 0 : i32
    return %c0_i32, %c0_i32_0 : i32, i32
  }
  func.func @transform_8(%arg0: i32) -> (i32, i32, i32, i32) {
    %c0_i32 = arith.constant 0 : i32
    %c0_i32_0 = arith.constant 0 : i32
    %c0_i32_1 = arith.constant 0 : i32
    %c0_i32_2 = arith.constant 0 : i32
    %c0_i32_3 = arith.constant 0 : i32
    return %c0_i32, %c0_i32_0, %c0_i32_1, %c0_i32_2 : i32, i32, i32, i32
  }
  func.func @transform_9(%arg0: i32) -> (i32, i32) {
    %c0_i32 = arith.constant 0 : i32
    %c0_i32_0 = arith.constant 0 : i32
    %c0_i32_1 = arith.constant 0 : i32
    return %c0_i32, %c0_i32_0 : i32, i32
  }
  func.func @transform_10(%arg0: i32) -> (i32, i32) {
    %c0_i32 = arith.constant 0 : i32
    %c0_i32_0 = arith.constant 0 : i32
    %c0_i32_1 = arith.constant 0 : i32
    return %c0_i32, %c0_i32_0 : i32, i32
  }
  func.func @transform_11(%arg0: i32) -> (i32, i32) {
    %c0_i32 = arith.constant 0 : i32
    %c0_i32_0 = arith.constant 0 : i32
    %c0_i32_1 = arith.constant 0 : i32
    return %c0_i32, %c0_i32_0 : i32, i32
  }
  func.func @transform_12(%arg0: i32) -> (i32, i32) {
    %c0_i32 = arith.constant 0 : i32
    %c0_i32_0 = arith.constant 0 : i32
    %c0_i32_1 = arith.constant 0 : i32
    return %c0_i32, %c0_i32_0 : i32, i32
  }
  func.func @transform_13(%arg0: i32) -> (i32, i32, i32, i32) {
    %c0_i32 = arith.constant 0 : i32
    %c0_i32_0 = arith.constant 0 : i32
    %c0_i32_1 = arith.constant 0 : i32
    %c0_i32_2 = arith.constant 0 : i32
    return %arg0, %c0_i32, %c0_i32_0, %c0_i32_1 : i32, i32, i32, i32
  }
}

</mosaic_0001>

<llo_original>
// kernel: tpu_custom_call.1
$region0: #{tpu_custom_call.1}
  #allocation0 [shape = 'u32[]', space=smem, size = 0x4, offset = 0x4, fixed_abs, tag = 'smem constant byte address 0x4 - core index']
  #allocation1 [shape = 'u32[72,128]{1,0:T(1,128)}', space=vmem, size = 0x9000, scoped, tag = 'internal scratch']
  #allocation2 [shape = 'f32[18,18,8]{2,1,0:T(8,128)}', space=vmem, size = 0x36000, scoped, tag = 'scratch operand']
  %s0 = inlined_call_operand.vmem [shape: f32[2,16,16,8], index: 0, kind: input, shape index: {}]
  %s1 = inlined_call_operand.vmem [shape: f32[2,16,16,8], index: 1, kind: input, shape index: {}]
  %s2 = inlined_call_operand.vmem [shape: f32[3,3,8,8], index: 2, kind: input, shape index: {}]
  %s3 = inlined_call_operand.vmem [shape: f32[1,8], index: 3, kind: input, shape index: {}]
  %s4 = inlined_call_operand.vmem [shape: f32[3,3,8,8], index: 4, kind: input, shape index: {}]
  %s5 = inlined_call_operand.vmem [shape: f32[1,8], index: 5, kind: input, shape index: {}]
  %s6 = inlined_call_operand.vmem [shape: f32[3,3,8,8], index: 6, kind: input, shape index: {}]
  %s7 = inlined_call_operand.vmem [shape: f32[1,8], index: 7, kind: input, shape index: {}]
  %s8 = inlined_call_operand.vmem [shape: f32[3,3,8,8], index: 8, kind: input, shape index: {}]
  %s9 = inlined_call_operand.vmem [shape: f32[1,8], index: 9, kind: input, shape index: {}]
  %s10 = inlined_call_operand.vmem [shape: f32[8,8], index: 10, kind: input, shape index: {}]
  %s11 = inlined_call_operand.vmem [shape: f32[1,8], index: 11, kind: input, shape index: {}]
  %s12 = inlined_call_operand.vmem [shape: f32[32,16], index: 12, kind: input, shape index: {}]
  %s13 = inlined_call_operand.vmem [shape: f32[2,32,32,8], index: 13, kind: output, shape index: {}]
  %s14 = sld [smem:[#allocation0]]
  $region85: #{tpu_custom_call.1} parent=0
    _
  %s16 = ssub.s32 1, %s14
  %s17 = scalar_select 0, %s16, %s14
  loop: start=0, step=1, limit=4
  $region2: #{tpu_custom_call.1} parent=0 // loop_pre_header
    _
  $region3: #{tpu_custom_call.1} parent=0 // loop_header
    %s19 = sphi 0, %s23
    %p20 = scmp.ge.s32.totalorder %s19, 4
    %s29 = sphi 0, %s31
    %s32 = sphi 0, %s29
    %s33 = sphi 0, %s32
    %s49 = sphi 0, %s33
    %s55 = sphi 0, %s57
    %s58 = sphi 0, %s55
    %s59 = sphi 0, %s58
    %s75 = sphi 0, %s59
    %s79 = sphi 0, %s79
    %s81 = sphi 0, %s79
    %s82 = sphi 0, %s81
    %s96 = sphi 0, %s82
    %s100 = sphi 0, %s100
    %s102 = sphi 0, %s100
    %s103 = sphi 0, %s102
    %s117 = sphi 0, %s103
    %s121 = sphi 0, %s121
    %s123 = sphi 0, %s121
    %s124 = sphi 0, %s123
    %s138 = sphi 0, %s124
    %s142 = sphi 0, %s142
    %s144 = sphi 0, %s142
    %s145 = sphi 0, %s144
    %s159 = sphi 0, %s145
    %s163 = sphi 0, %s163
    %s165 = sphi 0, %s163
    %s166 = sphi 0, %s165
    %s180 = sphi 0, %s166
    %s184 = sphi 0, %s184
    %s186 = sphi 0, %s184
    %s187 = sphi 0, %s186
    %s201 = sphi 0, %s187
    %s205 = sphi 0, %s205
    %s207 = sphi 0, %s205
    %s208 = sphi 0, %s207
    %s222 = sphi 0, %s208
    %s226 = sphi 0, %s226
    %s228 = sphi 0, %s226
    %s229 = sphi 0, %s228
    %s243 = sphi 0, %s229
    %s247 = sphi 0, %s247
    %s249 = sphi 0, %s247
    %s250 = sphi 0, %s249
    %s264 = sphi 0, %s250
    %s268 = sphi 0, %s268
    %s270 = sphi 0, %s268
    %s271 = sphi 0, %s270
    %s285 = sphi 0, %s271
    %s289 = sphi 0, %s289
    %s291 = sphi 0, %s289
    %s292 = sphi 0, %s291
    %s306 = sphi 0, %s292
    %s312 = sphi 0, %s314
    %s315 = sphi 0, %s312
    %s316 = sphi 0, %s315
    %s332 = sphi 0, %s316
  $region4: #{tpu_custom_call.1} parent=0 // loop_header_branch
    %22 = sbr.rel (%p20) target = $region8
  $region5: #{tpu_custom_call.1} parent=0 // loop_body
    %s24 = ssub.s32 %s19, 1
    %s25 = ssub.s32 %s19, 2
    %s26 = sadd.s32 %s19, 1
    %s27 = ssub.s32 %s19, %s26
    %p28 = scmp.eq.s32.totalorder %s27, 0
    %s30 = sadd.s32 %s29, 1
    %s31 = scalar_select %p28, %s29, %s30
    %p34 = pneg %p28
    %p35 = scmp.eq.s32.totalorder %s19, 1
    %p36 = por %p34, %p35
    %p37 = scmp.ne.s32.totalorder %s29, %s32
    %p38 = scmp.eq.s32.totalorder %s19, 0
    %p39 = por %p37, %p38
    %p40 = scmp.ne.s32.totalorder %s29, %s32
    %p41 = scmp.eq.s32.totalorder %s24, 1
    %p42 = por %p40, %p41
    %p43 = scmp.ne.s32.totalorder %s32, %s33
    %p44 = scmp.eq.s32.totalorder %s24, 0
    %p45 = por %p43, %p44
    %p46 = scmp.ne.s32.totalorder %s32, %s33
    %p47 = scmp.eq.s32.totalorder %s25, 1
    %p48 = por %p46, %p47
    %p50 = scmp.ne.s32.totalorder %s33, %s49
    %p51 = scmp.eq.s32.totalorder %s25, 0
    %p52 = por %p50, %p51
    %s53 = ssub.s32 %s19, %s26
    %p54 = scmp.eq.s32.totalorder %s53, 0
    %s56 = sadd.s32 %s55, 1
    %s57 = scalar_select %p54, %s55, %s56
    %p60 = pneg %p54
    %p61 = scmp.eq.s32.totalorder %s19, 1
    %p62 = por %p60, %p61
    %p63 = scmp.ne.s32.totalorder %s55, %s58
    %p64 = scmp.eq.s32.totalorder %s19, 0
    %p65 = por %p63, %p64
    %p66 = scmp.ne.s32.totalorder %s55, %s58
    %p67 = scmp.eq.s32.totalorder %s24, 1
    %p68 = por %p66, %p67
    %p69 = scmp.ne.s32.totalorder %s58, %s59
    %p70 = scmp.eq.s32.totalorder %s24, 0
    %p71 = por %p69, %p70
    %p72 = scmp.ne.s32.totalorder %s58, %s59
    %p73 = scmp.eq.s32.totalorder %s25, 1
    %p74 = por %p72, %p73
    %p76 = scmp.ne.s32.totalorder %s59, %s75
    %p77 = scmp.eq.s32.totalorder %s25, 0
    %p78 = por %p76, %p77
    %s80 = sadd.s32 %s79, 1
    %p83 = scmp.eq.s32.totalorder %s19, 1
    %p84 = scmp.ne.s32.totalorder %s79, %s81
    %p85 = scmp.eq.s32.totalorder %s19, 0
    %p86 = por %p84, %p85
    %p87 = scmp.ne.s32.totalorder %s79, %s81
    %p88 = scmp.eq.s32.totalorder %s24, 1
    %p89 = por %p87, %p88
    %p90 = scmp.ne.s32.totalorder %s81, %s82
    %p91 = scmp.eq.s32.totalorder %s24, 0
    %p92 = por %p90, %p91
    %p93 = scmp.ne.s32.totalorder %s81, %s82
    %p94 = scmp.eq.s32.totalorder %s25, 1
    %p95 = por %p93, %p94
    %p97 = scmp.ne.s32.totalorder %s82, %s96
    %p98 = scmp.eq.s32.totalorder %s25, 0
    %p99 = por %p97, %p98
    %s101 = sadd.s32 %s100, 1
    %p104 = scmp.eq.s32.totalorder %s19, 1
    %p105 = scmp.ne.s32.totalorder %s100, %s102
    %p106 = scmp.eq.s32.totalorder %s19, 0
    %p107 = por %p105, %p106
    %p108 = scmp.ne.s32.totalorder %s100, %s102
    %p109 = scmp.eq.s32.totalorder %s24, 1
    %p110 = por %p108, %p109
    %p111 = scmp.ne.s32.totalorder %s102, %s103
    %p112 = scmp.eq.s32.totalorder %s24, 0
    %p113 = por %p111, %p112
    %p114 = scmp.ne.s32.totalorder %s102, %s103
    %p115 = scmp.eq.s32.totalorder %s25, 1
    %p116 = por %p114, %p115
    %p118 = scmp.ne.s32.totalorder %s103, %s117
    %p119 = scmp.eq.s32.totalorder %s25, 0
    %p120 = por %p118, %p119
    %s122 = sadd.s32 %s121, 1
    %p125 = scmp.eq.s32.totalorder %s19, 1
    %p126 = scmp.ne.s32.totalorder %s121, %s123
    %p127 = scmp.eq.s32.totalorder %s19, 0
    %p128 = por %p126, %p127
    %p129 = scmp.ne.s32.totalorder %s121, %s123
    %p130 = scmp.eq.s32.totalorder %s24, 1
    %p131 = por %p129, %p130
    %p132 = scmp.ne.s32.totalorder %s123, %s124
    %p133 = scmp.eq.s32.totalorder %s24, 0
    %p134 = por %p132, %p133
    %p135 = scmp.ne.s32.totalorder %s123, %s124
    %p136 = scmp.eq.s32.totalorder %s25, 1
    %p137 = por %p135, %p136
    %p139 = scmp.ne.s32.totalorder %s124, %s138
    %p140 = scmp.eq.s32.totalorder %s25, 0
    %p141 = por %p139, %p140
    %s143 = sadd.s32 %s142, 1
    %p146 = scmp.eq.s32.totalorder %s19, 1
    %p147 = scmp.ne.s32.totalorder %s142, %s144
    %p148 = scmp.eq.s32.totalorder %s19, 0
    %p149 = por %p147, %p148
    %p150 = scmp.ne.s32.totalorder %s142, %s144
    %p151 = scmp.eq.s32.totalorder %s24, 1
    %p152 = por %p150, %p151
    %p153 = scmp.ne.s32.totalorder %s144, %s145
    %p154 = scmp.eq.s32.totalorder %s24, 0
    %p155 = por %p153, %p154
    %p156 = scmp.ne.s32.totalorder %s144, %s145
    %p157 = scmp.eq.s32.totalorder %s25, 1
    %p158 = por %p156, %p157
    %p160 = scmp.ne.s32.totalorder %s145, %s159
    %p161 = scmp.eq.s32.totalorder %s25, 0
    %p162 = por %p160, %p161
    %s164 = sadd.s32 %s163, 1
    %p167 = scmp.eq.s32.totalorder %s19, 1
    %p168 = scmp.ne.s32.totalorder %s163, %s165
    %p169 = scmp.eq.s32.totalorder %s19, 0
    %p170 = por %p168, %p169
    %p171 = scmp.ne.s32.totalorder %s163, %s165
    %p172 = scmp.eq.s32.totalorder %s24, 1
    %p173 = por %p171, %p172
    %p174 = scmp.ne.s32.totalorder %s165, %s166
    %p175 = scmp.eq.s32.totalorder %s24, 0
    %p176 = por %p174, %p175
    %p177 = scmp.ne.s32.totalorder %s165, %s166
    %p178 = scmp.eq.s32.totalorder %s25, 1
    %p179 = por %p177, %p178
    %p181 = scmp.ne.s32.totalorder %s166, %s180
    %p182 = scmp.eq.s32.totalorder %s25, 0
    %p183 = por %p181, %p182
    %s185 = sadd.s32 %s184, 1
    %p188 = scmp.eq.s32.totalorder %s19, 1
    %p189 = scmp.ne.s32.totalorder %s184, %s186
    %p190 = scmp.eq.s32.totalorder %s19, 0
    %p191 = por %p189, %p190
    %p192 = scmp.ne.s32.totalorder %s184, %s186
    %p193 = scmp.eq.s32.totalorder %s24, 1
    %p194 = por %p192, %p193
    %p195 = scmp.ne.s32.totalorder %s186, %s187
    %p196 = scmp.eq.s32.totalorder %s24, 0
    %p197 = por %p195, %p196
    %p198 = scmp.ne.s32.totalorder %s186, %s187
    %p199 = scmp.eq.s32.totalorder %s25, 1
    %p200 = por %p198, %p199
    %p202 = scmp.ne.s32.totalorder %s187, %s201
    %p203 = scmp.eq.s32.totalorder %s25, 0
    %p204 = por %p202, %p203
    %s206 = sadd.s32 %s205, 1
    %p209 = scmp.eq.s32.totalorder %s19, 1
    %p210 = scmp.ne.s32.totalorder %s205, %s207
    %p211 = scmp.eq.s32.totalorder %s19, 0
    %p212 = por %p210, %p211
    %p213 = scmp.ne.s32.totalorder %s205, %s207
    %p214 = scmp.eq.s32.totalorder %s24, 1
    %p215 = por %p213, %p214
    %p216 = scmp.ne.s32.totalorder %s207, %s208
    %p217 = scmp.eq.s32.totalorder %s24, 0
    %p218 = por %p216, %p217
    %p219 = scmp.ne.s32.totalorder %s207, %s208
    %p220 = scmp.eq.s32.totalorder %s25, 1
    %p221 = por %p219, %p220
    %p223 = scmp.ne.s32.totalorder %s208, %s222
    %p224 = scmp.eq.s32.totalorder %s25, 0
    %p225 = por %p223, %p224
    %s227 = sadd.s32 %s226, 1
    %p230 = scmp.eq.s32.totalorder %s19, 1
    %p231 = scmp.ne.s32.totalorder %s226, %s228
    %p232 = scmp.eq.s32.totalorder %s19, 0
    %p233 = por %p231, %p232
    %p234 = scmp.ne.s32.totalorder %s226, %s228
    %p235 = scmp.eq.s32.totalorder %s24, 1
    %p236 = por %p234, %p235
    %p237 = scmp.ne.s32.totalorder %s228, %s229
    %p238 = scmp.eq.s32.totalorder %s24, 0
    %p239 = por %p237, %p238
    %p240 = scmp.ne.s32.totalorder %s228, %s229
    %p241 = scmp.eq.s32.totalorder %s25, 1
    %p242 = por %p240, %p241
    %p244 = scmp.ne.s32.totalorder %s229, %s243
    %p245 = scmp.eq.s32.totalorder %s25, 0
    %p246 = por %p244, %p245
    %s248 = sadd.s32 %s247, 1
    %p251 = scmp.eq.s32.totalorder %s19, 1
    %p252 = scmp.ne.s32.totalorder %s247, %s249
    %p253 = scmp.eq.s32.totalorder %s19, 0
    %p254 = por %p252, %p253
    %p255 = scmp.ne.s32.totalorder %s247, %s249
    %p256 = scmp.eq.s32.totalorder %s24, 1
    %p257 = por %p255, %p256
    %p258 = scmp.ne.s32.totalorder %s249, %s250
    %p259 = scmp.eq.s32.totalorder %s24, 0
    %p260 = por %p258, %p259
    %p261 = scmp.ne.s32.totalorder %s249, %s250
    %p262 = scmp.eq.s32.totalorder %s25, 1
    %p263 = por %p261, %p262
    %p265 = scmp.ne.s32.totalorder %s250, %s264
    %p266 = scmp.eq.s32.totalorder %s25, 0
    %p267 = por %p265, %p266
    %s269 = sadd.s32 %s268, 1
    %p272 = scmp.eq.s32.totalorder %s19, 1
    %p273 = scmp.ne.s32.totalorder %s268, %s270
    %p274 = scmp.eq.s32.totalorder %s19, 0
    %p275 = por %p273, %p274
    %p276 = scmp.ne.s32.totalorder %s268, %s270
    %p277 = scmp.eq.s32.totalorder %s24, 1
    %p278 = por %p276, %p277
    %p279 = scmp.ne.s32.totalorder %s270, %s271
    %p280 = scmp.eq.s32.totalorder %s24, 0
    %p281 = por %p279, %p280
    %p282 = scmp.ne.s32.totalorder %s270, %s271
    %p283 = scmp.eq.s32.totalorder %s25, 1
    %p284 = por %p282, %p283
    %p286 = scmp.ne.s32.totalorder %s271, %s285
    %p287 = scmp.eq.s32.totalorder %s25, 0
    %p288 = por %p286, %p287
    %s290 = sadd.s32 %s289, 1
    %p293 = scmp.eq.s32.totalorder %s19, 1
    %p294 = scmp.ne.s32.totalorder %s289, %s291
    %p295 = scmp.eq.s32.totalorder %s19, 0
    %p296 = por %p294, %p295
    %p297 = scmp.ne.s32.totalorder %s289, %s291
    %p298 = scmp.eq.s32.totalorder %s24, 1
    %p299 = por %p297, %p298
    %p300 = scmp.ne.s32.totalorder %s291, %s292
    %p301 = scmp.eq.s32.totalorder %s24, 0
    %p302 = por %p300, %p301
    %p303 = scmp.ne.s32.totalorder %s291, %s292
    %p304 = scmp.eq.s32.totalorder %s25, 1
    %p305 = por %p303, %p304
    %p307 = scmp.ne.s32.totalorder %s292, %s306
    %p308 = scmp.eq.s32.totalorder %s25, 0
    %p309 = por %p307, %p308
    %s310 = ssub.s32 %s19, %s26
    %p311 = scmp.eq.s32.totalorder %s310, 0
    %s313 = sadd.s32 %s312, 1
    %s314 = scalar_select %p311, %s312, %s313
    %p317 = pneg %p311
    %p318 = scmp.eq.s32.totalorder %s19, 1
    %p319 = por %p317, %p318
    %p320 = scmp.ne.s32.totalorder %s312, %s315
    %p321 = scmp.eq.s32.totalorder %s19, 0
    %p322 = por %p320, %p321
    %p323 = scmp.ne.s32.totalorder %s312, %s315
    %p324 = scmp.eq.s32.totalorder %s24, 1
    %p325 = por %p323, %p324
    %p326 = scmp.ne.s32.totalorder %s315, %s316
    %p327 = scmp.eq.s32.totalorder %s24, 0
    %p328 = por %p326, %p327
    %p329 = scmp.ne.s32.totalorder %s315, %s316
    %p330 = scmp.eq.s32.totalorder %s25, 1
    %p331 = por %p329, %p330
    %p333 = scmp.ne.s32.totalorder %s316, %s332
    %p334 = scmp.eq.s32.totalorder %s25, 0
    %p335 = por %p333, %p334
    %p336 = scmp.le.s32.totalorder 1, %s19
    %p337 = scmp.lt.s32.totalorder %s19, 3
    %p338 = pnand %p336, %p337
    %p339 = pneg %p338
    // Predicated region
    $region9: #{tpu_custom_call.1} parent=5 // pred_check
      _
    $region10: #{tpu_custom_call.1} parent=5 // pred_check_branch
      %341 = sbr.rel (%p338) target = $region12
    $region11: #{tpu_custom_call.1} parent=5 // pred_region
      %s342 = ssub.s32 %s19, 1
      // Predicated region
      $region13: #{tpu_custom_call.1} parent=11 // pred_check
        %p343 = pneg %p92
      $region14: #{tpu_custom_call.1} parent=11 // pred_check_branch
        %345 = sbr.rel (%p343) target = $region16
      $region15: #{tpu_custom_call.1} parent=11 // pred_region
        _
      $region16: #{tpu_custom_call.1} parent=11 // pred_fallthru
        _
      // Predicated region
      $region17: #{tpu_custom_call.1} parent=11 // pred_check
        %p346 = pneg %p113
      $region18: #{tpu_custom_call.1} parent=11 // pred_check_branch
        %348 = sbr.rel (%p346) target = $region20
      $region19: #{tpu_custom_call.1} parent=11 // pred_region
        _
      $region20: #{tpu_custom_call.1} parent=11 // pred_fallthru
        _
      // Predicated region
      $region21: #{tpu_custom_call.1} parent=11 // pred_check
        %p349 = pneg %p134
      $region22: #{tpu_custom_call.1} parent=11 // pred_check_branch
        %351 = sbr.rel (%p349) target = $region24
      $region23: #{tpu_custom_call.1} parent=11 // pred_region
        _
      $region24: #{tpu_custom_call.1} parent=11 // pred_fallthru
        _
      // Predicated region
      $region25: #{tpu_custom_call.1} parent=11 // pred_check
        %p352 = pneg %p155
      $region26: #{tpu_custom_call.1} parent=11 // pred_check_branch
        %354 = sbr.rel (%p352) target = $region28
      $region27: #{tpu_custom_call.1} parent=11 // pred_region
        _
      $region28: #{tpu_custom_call.1} parent=11 // pred_fallthru
        _
      // Predicated region
      $region29: #{tpu_custom_call.1} parent=11 // pred_check
        %p355 = pneg %p176
      $region30: #{tpu_custom_call.1} parent=11 // pred_check_branch
        %357 = sbr.rel (%p355) target = $region32
      $region31: #{tpu_custom_call.1} parent=11 // pred_region
        _
      $region32: #{tpu_custom_call.1} parent=11 // pred_fallthru
        _
      // Predicated region
      $region33: #{tpu_custom_call.1} parent=11 // pred_check
        %p358 = pneg %p197
      $region34: #{tpu_custom_call.1} parent=11 // pred_check_branch
        %360 = sbr.rel (%p358) target = $region36
      $region35: #{tpu_custom_call.1} parent=11 // pred_region
        _
      $region36: #{tpu_custom_call.1} parent=11 // pred_fallthru
        _
      // Predicated region
      $region37: #{tpu_custom_call.1} parent=11 // pred_check
        %p361 = pneg %p218
      $region38: #{tpu_custom_call.1} parent=11 // pred_check_branch
        %363 = sbr.rel (%p361) target = $region40
      $region39: #{tpu_custom_call.1} parent=11 // pred_region
        _
      $region40: #{tpu_custom_call.1} parent=11 // pred_fallthru
        _
      // Predicated region
      $region41: #{tpu_custom_call.1} parent=11 // pred_check
        %p364 = pneg %p239
      $region42: #{tpu_custom_call.1} parent=11 // pred_check_branch
        %366 = sbr.rel (%p364) target = $region44
      $region43: #{tpu_custom_call.1} parent=11 // pred_region
        _
      $region44: #{tpu_custom_call.1} parent=11 // pred_fallthru
        _
      // Predicated region
      $region45: #{tpu_custom_call.1} parent=11 // pred_check
        %p367 = pneg %p260
      $region46: #{tpu_custom_call.1} parent=11 // pred_check_branch
        %369 = sbr.rel (%p367) target = $region48
      $region47: #{tpu_custom_call.1} parent=11 // pred_region
        _
      $region48: #{tpu_custom_call.1} parent=11 // pred_fallthru
        _
      // Predicated region
      $region49: #{tpu_custom_call.1} parent=11 // pred_check
        %p370 = pneg %p281
      $region50: #{tpu_custom_call.1} parent=11 // pred_check_branch
        %372 = sbr.rel (%p370) target = $region52
      $region51: #{tpu_custom_call.1} parent=11 // pred_region
        _
      $region52: #{tpu_custom_call.1} parent=11 // pred_fallthru
        _
      // Predicated region
      $region53: #{tpu_custom_call.1} parent=11 // pred_check
        %p373 = pneg %p302
      $region54: #{tpu_custom_call.1} parent=11 // pred_check_branch
        %375 = sbr.rel (%p373) target = $region56
      $region55: #{tpu_custom_call.1} parent=11 // pred_region
        _
      $region56: #{tpu_custom_call.1} parent=11 // pred_fallthru
        _
    $region12: #{tpu_custom_call.1} parent=5 // pred_fallthru
      _
    %p376 = scmp.lt.s32.totalorder %s19, 2
    // Predicated region
    $region57: #{tpu_custom_call.1} parent=5 // pred_check
      %p377 = pneg %p376
    $region58: #{tpu_custom_call.1} parent=5 // pred_check_branch
      %379 = sbr.rel (%p377) target = $region60
    $region59: #{tpu_custom_call.1} parent=5 // pred_region
      // Predicated region
      $region61: #{tpu_custom_call.1} parent=59 // pred_check
        %p380 = pneg %p39
      $region62: #{tpu_custom_call.1} parent=59 // pred_check_branch
        %382 = sbr.rel (%p380) target = $region64
      $region63: #{tpu_custom_call.1} parent=59 // pred_region
        %p383 = scmp.lt.s32.totalorder %s19, 1
        %s384 = scalar_select %p383, %s19, 1
        %s385 = smul.addr %s384, 32
        %s386 = smul.addr %s385, 8
        %s387 = scalar_lea.vmem %s0, %s386
      $region64: #{tpu_custom_call.1} parent=59 // pred_fallthru
        _
      // Predicated region
      $region65: #{tpu_custom_call.1} parent=59 // pred_check
        %p388 = pneg %p65
      $region66: #{tpu_custom_call.1} parent=59 // pred_check_branch
        %390 = sbr.rel (%p388) target = $region68
      $region67: #{tpu_custom_call.1} parent=59 // pred_region
        %p391 = scmp.lt.s32.totalorder %s19, 1
        %s392 = scalar_select %p391, %s19, 1
        %s393 = smul.addr %s392, 32
        %s394 = smul.addr %s393, 8
        %s395 = scalar_lea.vmem %s1, %s394
      $region68: #{tpu_custom_call.1} parent=59 // pred_fallthru
        _
    $region60: #{tpu_custom_call.1} parent=5 // pred_fallthru
      _
    %p396 = scmp.le.s32.totalorder 1, %s19
    %p397 = scmp.lt.s32.totalorder %s19, 3
    %p398 = pnand %p396, %p397
    %p399 = pneg %p398
    // Predicated region
    $region69: #{tpu_custom_call.1} parent=5 // pred_check
      _
    $region70: #{tpu_custom_call.1} parent=5 // pred_check_branch
      %401 = sbr.rel (%p398) target = $region72
    $region71: #{tpu_custom_call.1} parent=5 // pred_region
      %s402 = ssub.s32 %s19, 1
      %p403 = scmp.lt.s32.totalorder %s24, 1
      %s404 = scalar_select %p403, %s24, 1
      %s405 = smul.addr %s404, 32
      %s406 = smul.addr %s405, 8
      %s407 = scalar_lea.vmem %s0, %s406
      %p408 = pneg %p45
      %p409 = pneg %p42
      %p410 = scmp.lt.s32.totalorder %s24, 1
      %s411 = scalar_select %p410, %s24, 1
      %s412 = smul.addr %s411, 32
      %s413 = smul.addr %s412, 8
      %s414 = scalar_lea.vmem %s1, %s413
      %p415 = pneg %p71
      %p416 = pneg %p68
      %p417 = pneg %p92
      %p418 = pneg %p89
      %p419 = pneg %p113
      %p420 = pneg %p110
      %p421 = pneg %p134
      %p422 = pneg %p131
      %p423 = pneg %p155
      %p424 = pneg %p152
      %p425 = pneg %p176
      %p426 = pneg %p173
      %p427 = pneg %p197
      %p428 = pneg %p194
      %p429 = pneg %p218
      %p430 = pneg %p215
      %p431 = pneg %p239
      %p432 = pneg %p236
      %p433 = pneg %p260
      %p434 = pneg %p257
      %p435 = pneg %p281
      %p436 = pneg %p278
      %p437 = pneg %p302
      %p438 = pneg %p299
      %p439 = pneg %p328
      %p440 = pneg %p325
      %p441 = scmp.lt.s32.totalorder %s24, 1
      %s442 = scalar_select %p441, %s24, 1
      %s443 = smul.addr %s442, 128
      %s444 = smul.addr %s443, 8
      %s445 = scalar_lea.vmem %s13, %s444
      %p446 = scmp.lt.s32.totalorder %s24, 1
      %s447 = scalar_select %p446, %s24, 1
      %s448 = smul.addr %s447, 32
      %s449 = smul.addr %s448, 8
      %s450 = scalar_lea.vmem %s0, %s449
      %p451 = scmp.lt.s32.totalorder %s24, 1
      %s452 = scalar_select %p451, %s24, 1
      %s453 = smul.addr %s452, 32
      %s454 = smul.addr %s453, 8
      %s455 = scalar_lea.vmem %s1, %s454
      %p456 = scmp.lt.s32.totalorder %s24, 1
      %s457 = scalar_select %p456, %s24, 1
      %s458 = smul.addr %s457, 128
      %s459 = smul.addr %s458, 8
      %s460 = scalar_lea.vmem %s13, %s459
      %vm461 = vcmask 64512
      %462 = vst.msk [vmem:[#allocation2] sm:$0xff] %vm461, 0.0
      %463 = vst.msk [vmem:[#allocation2 + $0x8] sm:$0xff] %vm461, 0.0
      %vm464 = vcmask 58368
      %465 = vst.msk [vmem:[#allocation2 + $0x10] sm:$0x3] %vm464, 0.0
      %466 = vst.msk [vmem:[#allocation2 + $0x18] sm:$0xff] %vm461, 0.0
      %467 = vst.msk [vmem:[#allocation2 + $0x20] sm:$0xff] %vm461, 0.0
      %468 = vst.msk [vmem:[#allocation2 + $0x28] sm:$0x3] %vm464, 0.0
      %469 = vst.msk [vmem:[#allocation2 + $0x30] sm:$0xff] %vm461, 0.0
      %470 = vst.msk [vmem:[#allocation2 + $0x38] sm:$0xff] %vm461, 0.0
      %471 = vst.msk [vmem:[#allocation2 + $0x40] sm:$0x3] %vm464, 0.0
      %472 = vst.msk [vmem:[#allocation2 + $0x48] sm:$0xff] %vm461, 0.0
      %473 = vst.msk [vmem:[#allocation2 + $0x50] sm:$0xff] %vm461, 0.0
      %474 = vst.msk [vmem:[#allocation2 + $0x58] sm:$0x3] %vm464, 0.0
      %475 = vst.msk [vmem:[#allocation2 + $0x60] sm:$0xff] %vm461, 0.0
      %476 = vst.msk [vmem:[#allocation2 + $0x68] sm:$0xff] %vm461, 0.0
      %477 = vst.msk [vmem:[#allocation2 + $0x70] sm:$0x3] %vm464, 0.0
      %478 = vst.msk [vmem:[#allocation2 + $0x78] sm:$0xff] %vm461, 0.0
      %479 = vst.msk [vmem:[#allocation2 + $0x80] sm:$0xff] %vm461, 0.0
      %480 = vst.msk [vmem:[#allocation2 + $0x88] sm:$0x3] %vm464, 0.0
      %481 = vst.msk [vmem:[#allocation2 + $0x90] sm:$0xff] %vm461, 0.0
      %482 = vst.msk [vmem:[#allocation2 + $0x98] sm:$0xff] %vm461, 0.0
      %483 = vst.msk [vmem:[#allocation2 + $0xa0] sm:$0x3] %vm464, 0.0
      %484 = vst.msk [vmem:[#allocation2 + $0xa8] sm:$0xff] %vm461, 0.0
      %485 = vst.msk [vmem:[#allocation2 + $0xb0] sm:$0xff] %vm461, 0.0
      %486 = vst.msk [vmem:[#allocation2 + $0xb8] sm:$0x3] %vm464, 0.0
      %487 = vst.msk [vmem:[#allocation2 + $0xc0] sm:$0xff] %vm461, 0.0
      %488 = vst.msk [vmem:[#allocation2 + $0xc8] sm:$0xff] %vm461, 0.0
      %489 = vst.msk [vmem:[#allocation2 + $0xd0] sm:$0x3] %vm464, 0.0
      %490 = vst.msk [vmem:[#allocation2 + $0xd8] sm:$0xff] %vm461, 0.0
      %491 = vst.msk [vmem:[#allocation2 + $0xe0] sm:$0xff] %vm461, 0.0
      %492 = vst.msk [vmem:[#allocation2 + $0xe8] sm:$0x3] %vm464, 0.0
      %493 = vst.msk [vmem:[#allocation2 + $0xf0] sm:$0xff] %vm461, 0.0
      %494 = vst.msk [vmem:[#allocation2 + $0xf8] sm:$0xff] %vm461, 0.0
      %495 = vst.msk [vmem:[#allocation2 + $0x100] sm:$0x3] %vm464, 0.0
      %496 = vst.msk [vmem:[#allocation2 + $0x108] sm:$0xff] %vm461, 0.0
      %497 = vst.msk [vmem:[#allocation2 + $0x110] sm:$0xff] %vm461, 0.0
      %498 = vst.msk [vmem:[#allocation2 + $0x118] sm:$0x3] %vm464, 0.0
      %499 = vst.msk [vmem:[#allocation2 + $0x120] sm:$0xff] %vm461, 0.0
      %500 = vst.msk [vmem:[#allocation2 + $0x128] sm:$0xff] %vm461, 0.0
      %501 = vst.msk [vmem:[#allocation2 + $0x130] sm:$0x3] %vm464, 0.0
      %502 = vst.msk [vmem:[#allocation2 + $0x138] sm:$0xff] %vm461, 0.0
      %503 = vst.msk [vmem:[#allocation2 + $0x140] sm:$0xff] %vm461, 0.0
      %504 = vst.msk [vmem:[#allocation2 + $0x148] sm:$0x3] %vm464, 0.0
      %505 = vst.msk [vmem:[#allocation2 + $0x150] sm:$0xff] %vm461, 0.0
      %506 = vst.msk [vmem:[#allocation2 + $0x158] sm:$0xff] %vm461, 0.0
      %507 = vst.msk [vmem:[#allocation2 + $0x160] sm:$0x3] %vm464, 0.0
      %508 = vst.msk [vmem:[#allocation2 + $0x168] sm:$0xff] %vm461, 0.0
      %509 = vst.msk [vmem:[#allocation2 + $0x170] sm:$0xff] %vm461, 0.0
      %510 = vst.msk [vmem:[#allocation2 + $0x178] sm:$0x3] %vm464, 0.0
      %511 = vst.msk [vmem:[#allocation2 + $0x180] sm:$0xff] %vm461, 0.0
      %512 = vst.msk [vmem:[#allocation2 + $0x188] sm:$0xff] %vm461, 0.0
      %513 = vst.msk [vmem:[#allocation2 + $0x190] sm:$0x3] %vm464, 0.0
      %514 = vst.msk [vmem:[#allocation2 + $0x198] sm:$0xff] %vm461, 0.0
      %515 = vst.msk [vmem:[#allocation2 + $0x1a0] sm:$0xff] %vm461, 0.0
      %516 = vst.msk [vmem:[#allocation2 + $0x1a8] sm:$0x3] %vm464, 0.0
      %v517 = vld [vmem:[%s455] sm:$0xff]
      %v518 = vld [vmem:[%s455 + $0x8] sm:$0xff]
      %v519 = vld [vmem:[%s455 + $0x10] sm:$0xff]
      %v520 = vld [vmem:[%s455 + $0x18] sm:$0xff]
      %v521 = vld [vmem:[%s455 + $0x20] sm:$0xff]
      %v522 = vld [vmem:[%s455 + $0x28] sm:$0xff]
      %v523 = vld [vmem:[%s455 + $0x30] sm:$0xff]
      %v524 = vld [vmem:[%s455 + $0x38] sm:$0xff]
      %v525 = vld [vmem:[%s455 + $0x40] sm:$0xff]
      %v526 = vld [vmem:[%s455 + $0x48] sm:$0xff]
      %v527 = vld [vmem:[%s455 + $0x50] sm:$0xff]
      %v528 = vld [vmem:[%s455 + $0x58] sm:$0xff]
      %v529 = vld [vmem:[%s455 + $0x60] sm:$0xff]
      %v530 = vld [vmem:[%s455 + $0x68] sm:$0xff]
      %v531 = vld [vmem:[%s455 + $0x70] sm:$0xff]
      %v532 = vld [vmem:[%s455 + $0x78] sm:$0xff]
      %v533 = vld [vmem:[%s455 + $0x80] sm:$0xff]
      %v534 = vld [vmem:[%s455 + $0x88] sm:$0xff]
      %v535 = vld [vmem:[%s455 + $0x90] sm:$0xff]
      %v536 = vld [vmem:[%s455 + $0x98] sm:$0xff]
      %v537 = vld [vmem:[%s455 + $0xa0] sm:$0xff]
      %v538 = vld [vmem:[%s455 + $0xa8] sm:$0xff]
      %v539 = vld [vmem:[%s455 + $0xb0] sm:$0xff]
      %v540 = vld [vmem:[%s455 + $0xb8] sm:$0xff]
      %v541 = vld [vmem:[%s455 + $0xc0] sm:$0xff]
      %v542 = vld [vmem:[%s455 + $0xc8] sm:$0xff]
      %v543 = vld [vmem:[%s455 + $0xd0] sm:$0xff]
      %v544 = vld [vmem:[%s455 + $0xd8] sm:$0xff]
      %v545 = vld [vmem:[%s455 + $0xe0] sm:$0xff]
      %v546 = vld [vmem:[%s455 + $0xe8] sm:$0xff]
      %v547 = vld [vmem:[%s455 + $0xf0] sm:$0xff]
      %v548 = vld [vmem:[%s455 + $0xf8] sm:$0xff]
      %v549 = vld [vmem:[%s2] sm:$0xff]
      %v550 = vld [vmem:[%s2 + $0x8] sm:$0xff]
      %v551 = vld [vmem:[%s2 + $0x10] sm:$0xff]
      %v552 = vld [vmem:[%s2 + $0x18] sm:$0xff]
      %v553 = vld [vmem:[%s2 + $0x20] sm:$0xff]
      %v554 = vld [vmem:[%s2 + $0x28] sm:$0xff]
      %v555 = vld [vmem:[%s2 + $0x30] sm:$0xff]
      %v556 = vld [vmem:[%s2 + $0x38] sm:$0xff]
      %v557 = vld [vmem:[%s2 + $0x40] sm:$0xff]
      %v558 = vld [vmem:[%s3] sm:$0x1]
      %v559 = vld [vmem:[%s4] sm:$0xff]
      %v560 = vld [vmem:[%s4 + $0x8] sm:$0xff]
      %v561 = vld [vmem:[%s4 + $0x10] sm:$0xff]
      %v562 = vld [vmem:[%s4 + $0x18] sm:$0xff]
      %v563 = vld [vmem:[%s4 + $0x20] sm:$0xff]
      %v564 = vld [vmem:[%s4 + $0x28] sm:$0xff]
      %v565 = vld [vmem:[%s4 + $0x30] sm:$0xff]
      %v566 = vld [vmem:[%s4 + $0x38] sm:$0xff]
      %v567 = vld [vmem:[%s4 + $0x40] sm:$0xff]
      %v568 = vld [vmem:[%s5] sm:$0x1]
      %v569 = vmax.f32 %v517, 0.0
      %v570 = vmax.f32 %v518, 0.0
      %v571 = vmax.f32 %v519, 0.0
      %v572 = vmax.f32 %v520, 0.0
      %v573 = vmax.f32 %v521, 0.0
      %v574 = vmax.f32 %v522, 0.0
      %v575 = vmax.f32 %v523, 0.0
      %v576 = vmax.f32 %v524, 0.0
      %v577 = vmax.f32 %v525, 0.0
      %v578 = vmax.f32 %v526, 0.0
      %v579 = vmax.f32 %v527, 0.0
      %v580 = vmax.f32 %v528, 0.0
      %v581 = vmax.f32 %v529, 0.0
      %v582 = vmax.f32 %v530, 0.0
      %v583 = vmax.f32 %v531, 0.0
      %v584 = vmax.f32 %v532, 0.0
      %v585 = vmax.f32 %v533, 0.0
      %v586 = vmax.f32 %v534, 0.0
      %v587 = vmax.f32 %v535, 0.0
      %v588 = vmax.f32 %v536, 0.0
      %v589 = vmax.f32 %v537, 0.0
      %v590 = vmax.f32 %v538, 0.0
      %v591 = vmax.f32 %v539, 0.0
      %v592 = vmax.f32 %v540, 0.0
      %v593 = vmax.f32 %v541, 0.0
      %v594 = vmax.f32 %v542, 0.0
      %v595 = vmax.f32 %v543, 0.0
      %v596 = vmax.f32 %v544, 0.0
      %v597 = vmax.f32 %v545, 0.0
      %v598 = vmax.f32 %v546, 0.0
      %v599 = vmax.f32 %v547, 0.0
      %v600 = vmax.f32 %v548, 0.0
      %s601 = scalar_lea.vmem [#allocation2], 24
      %602 = vst.msk [vmem:[%s601 + $0x1] sm:$0xff] %vm461, %v569
      %603 = vst.msk [vmem:[%s601 + $0x9] sm:$0xff] %vm461, %v570
      %604 = vst.msk [vmem:[%s601 + $0x19] sm:$0xff] %vm461, %v571
      %605 = vst.msk [vmem:[%s601 + $0x21] sm:$0xff] %vm461, %v572
      %606 = vst.msk [vmem:[%s601 + $0x31] sm:$0xff] %vm461, %v573
      %607 = vst.msk [vmem:[%s601 + $0x39] sm:$0xff] %vm461, %v574
      %608 = vst.msk [vmem:[%s601 + $0x49] sm:$0xff] %vm461, %v575
      %609 = vst.msk [vmem:[%s601 + $0x51] sm:$0xff] %vm461, %v576
      %610 = vst.msk [vmem:[%s601 + $0x61] sm:$0xff] %vm461, %v577
      %611 = vst.msk [vmem:[%s601 + $0x69] sm:$0xff] %vm461, %v578
      %612 = vst.msk [vmem:[%s601 + $0x79] sm:$0xff] %vm461, %v579
      %613 = vst.msk [vmem:[%s601 + $0x81] sm:$0xff] %vm461, %v580
      %614 = vst.msk [vmem:[%s601 + $0x91] sm:$0xff] %vm461, %v581
      %615 = vst.msk [vmem:[%s601 + $0x99] sm:$0xff] %vm461, %v582
      %616 = vst.msk [vmem:[%s601 + $0xa9] sm:$0xff] %vm461, %v583
      %617 = vst.msk [vmem:[%s601 + $0xb1] sm:$0xff] %vm461, %v584
      %618 = vst.msk [vmem:[%s601 + $0xc1] sm:$0xff] %vm461, %v585
      %619 = vst.msk [vmem:[%s601 + $0xc9] sm:$0xff] %vm461, %v586
      %620 = vst.msk [vmem:[%s601 + $0xd9] sm:$0xff] %vm461, %v587
      %621 = vst.msk [vmem:[%s601 + $0xe1] sm:$0xff] %vm461, %v588
      %622 = vst.msk [vmem:[%s601 + $0xf1] sm:$0xff] %vm461, %v589
      %623 = vst.msk [vmem:[%s601 + $0xf9] sm:$0xff] %vm461, %v590
      %624 = vst.msk [vmem:[%s601 + $0x109] sm:$0xff] %vm461, %v591
      %625 = vst.msk [vmem:[%s601 + $0x111] sm:$0xff] %vm461, %v592
      %626 = vst.msk [vmem:[%s601 + $0x121] sm:$0xff] %vm461, %v593
      %627 = vst.msk [vmem:[%s601 + $0x129] sm:$0xff] %vm461, %v594
      %628 = vst.msk [vmem:[%s601 + $0x139] sm:$0xff] %vm461, %v595
      %629 = vst.msk [vmem:[%s601 + $0x141] sm:$0xff] %vm461, %v596
      %630 = vst.msk [vmem:[%s601 + $0x151] sm:$0xff] %vm461, %v597
      %631 = vst.msk [vmem:[%s601 + $0x159] sm:$0xff] %vm461, %v598
      %632 = vst.msk [vmem:[%s601 + $0x169] sm:$0xff] %vm461, %v599
      %633 = vst.msk [vmem:[%s601 + $0x171] sm:$0xff] %vm461, %v600
      %v634 = vld [vmem:[#allocation2] sm:$0xff]
      %v635 = vld [vmem:[#allocation2 + $0x8] sm:$0xff]
      %v636 = vld [vmem:[#allocation2 + $0x10] sm:$0x3]
      %v637 = vld [vmem:[#allocation2 + $0x18] sm:$0xff]
      %v638 = vld [vmem:[#allocation2 + $0x20] sm:$0xff]
      %v639 = vld [vmem:[#allocation2 + $0x28] sm:$0x3]
      %v640 = vld [vmem:[#allocation2 + $0x30] sm:$0xff]
      %v641 = vld [vmem:[#allocation2 + $0x38] sm:$0xff]
      %v642 = vld [vmem:[#allocation2 + $0x40] sm:$0x3]
      %v643 = vld [vmem:[#allocation2 + $0x48] sm:$0xff]
      %v644 = vld [vmem:[#allocation2 + $0x50] sm:$0xff]
      %v645 = vld [vmem:[#allocation2 + $0x58] sm:$0x3]
      %v646 = vld [vmem:[#allocation2 + $0x60] sm:$0xff]
      %v647 = vld [vmem:[#allocation2 + $0x68] sm:$0xff]
      %v648 = vld [vmem:[#allocation2 + $0x70] sm:$0x3]
      %v649 = vld [vmem:[#allocation2 + $0x78] sm:$0xff]
      %v650 = vld [vmem:[#allocation2 + $0x80] sm:$0xff]
      %v651 = vld [vmem:[#allocation2 + $0x88] sm:$0x3]
      %v652 = vld [vmem:[#allocation2 + $0x90] sm:$0xff]
      %v653 = vld [vmem:[#allocation2 + $0x98] sm:$0xff]
      %v654 = vld [vmem:[#allocation2 + $0xa0] sm:$0x3]
      %v655 = vld [vmem:[#allocation2 + $0xa8] sm:$0xff]
      %v656 = vld [vmem:[#allocation2 + $0xb0] sm:$0xff]
      %v657 = vld [vmem:[#allocation2 + $0xb8] sm:$0x3]
      %v658 = vld [vmem:[#allocation2 + $0xc0] sm:$0xff]
      %v659 = vld [vmem:[#allocation2 + $0xc8] sm:$0xff]
      %v660 = vld [vmem:[#allocation2 + $0xd0] sm:$0x3]
      %v661 = vld [vmem:[#allocation2 + $0xd8] sm:$0xff]
      %v662 = vld [vmem:[#allocation2 + $0xe0] sm:$0xff]
      %v663 = vld [vmem:[#allocation2 + $0xe8] sm:$0x3]
      %v664 = vld [vmem:[#allocation2 + $0xf0] sm:$0xff]
      %v665 = vld [vmem:[#allocation2 + $0xf8] sm:$0xff]
      %v666 = vld [vmem:[#allocation2 + $0x100] sm:$0x3]
      %v667 = vld [vmem:[#allocation2 + $0x108] sm:$0xff]
      %v668 = vld [vmem:[#allocation2 + $0x110] sm:$0xff]
      %v669 = vld [vmem:[#allocation2 + $0x118] sm:$0x3]
      %v670 = vld [vmem:[#allocation2 + $0x120] sm:$0xff]
      %v671 = vld [vmem:[#allocation2 + $0x128] sm:$0xff]
      %v672 = vld [vmem:[#allocation2 + $0x130] sm:$0x3]
      %v673 = vld [vmem:[#allocation2 + $0x138] sm:$0xff]
      %v674 = vld [vmem:[#allocation2 + $0x140] sm:$0xff]
      %v675 = vld [vmem:[#allocation2 + $0x148] sm:$0x3]
      %v676 = vld [vmem:[#allocation2 + $0x150] sm:$0xff]
      %v677 = vld [vmem:[#allocation2 + $0x158] sm:$0xff]
      %v678 = vld [vmem:[#allocation2 + $0x160] sm:$0x3]
      %v679 = vld [vmem:[#allocation2 + $0x168] sm:$0xff]
      %v680 = vld [vmem:[#allocation2 + $0x170] sm:$0xff]
      %v681 = vld [vmem:[#allocation2 + $0x178] sm:$0x3]
      %v682 = vld [vmem:[#allocation2 + $0x180] sm:$0xff]
      %v683 = vld [vmem:[#allocation2 + $0x188] sm:$0xff]
      %v684 = vld [vmem:[#allocation2 + $0x190] sm:$0x3]
      %v685 = vld [vmem:[#allocation2 + $0x198] sm:$0xff]
      %v686 = vld [vmem:[#allocation2 + $0x1a0] sm:$0xff]
      %v687 = vld [vmem:[#allocation2 + $0x1a8] sm:$0x3]
      %vm736 = vcmask 1046528
      %v737 = vrot.slane %v634, 1
      %v738 = vrot.slane %v635, 1
      %v739 = vsel %vm736, %v737, %v738
      %v740 = vrot.slane %v636, 1
      %v741 = vsel %vm736, %v738, %v740
      %v742 = vrot.slane %v637, 1
      %v743 = vrot.slane %v638, 1
      %v744 = vsel %vm736, %v742, %v743
      %v745 = vrot.slane %v639, 1
      %v746 = vsel %vm736, %v743, %v745
      %v747 = vrot.slane %v640, 1
      %v748 = vrot.slane %v641, 1
      %v749 = vsel %vm736, %v747, %v748
      %v750 = vrot.slane %v642, 1
      %v751 = vsel %vm736, %v748, %v750
      %v752 = vrot.slane %v643, 1
      %v753 = vrot.slane %v644, 1
      %v754 = vsel %vm736, %v752, %v753
      %v755 = vrot.slane %v645, 1
      %v756 = vsel %vm736, %v753, %v755
      %v757 = vrot.slane %v646, 1
      %v758 = vrot.slane %v647, 1
      %v759 = vsel %vm736, %v757, %v758
      %v760 = vrot.slane %v648, 1
      %v761 = vsel %vm736, %v758, %v760
      %v762 = vrot.slane %v649, 1
      %v763 = vrot.slane %v650, 1
      %v764 = vsel %vm736, %v762, %v763
      %v765 = vrot.slane %v651, 1
      %v766 = vsel %vm736, %v763, %v765
      %v767 = vrot.slane %v652, 1
      %v768 = vrot.slane %v653, 1
      %v769 = vsel %vm736, %v767, %v768
      %v770 = vrot.slane %v654, 1
      %v771 = vsel %vm736, %v768, %v770
      %v772 = vrot.slane %v655, 1
      %v773 = vrot.slane %v656, 1
      %v774 = vsel %vm736, %v772, %v773
      %v775 = vrot.slane %v657, 1
      %v776 = vsel %vm736, %v773, %v775
      %v777 = vrot.slane %v658, 1
      %v778 = vrot.slane %v659, 1
      %v779 = vsel %vm736, %v777, %v778
      %v780 = vrot.slane %v660, 1
      %v781 = vsel %vm736, %v778, %v780
      %v782 = vrot.slane %v661, 1
      %v783 = vrot.slane %v662, 1
      %v784 = vsel %vm736, %v782, %v783
      %v785 = vrot.slane %v663, 1
      %v786 = vsel %vm736, %v783, %v785
      %v787 = vrot.slane %v664, 1
      %v788 = vrot.slane %v665, 1
      %v789 = vsel %vm736, %v787, %v788
      %v790 = vrot.slane %v666, 1
      %v791 = vsel %vm736, %v788, %v790
      %v792 = vrot.slane %v667, 1
      %v793 = vrot.slane %v668, 1
      %v794 = vsel %vm736, %v792, %v793
      %v795 = vrot.slane %v669, 1
      %v796 = vsel %vm736, %v793, %v795
      %v797 = vrot.slane %v670, 1
      %v798 = vrot.slane %v671, 1
      %v799 = vsel %vm736, %v797, %v798
      %v800 = vrot.slane %v672, 1
      %v801 = vsel %vm736, %v798, %v800
      %v802 = vrot.slane %v673, 1
      %v803 = vrot.slane %v674, 1
      %v804 = vsel %vm736, %v802, %v803
      %v805 = vrot.slane %v675, 1
      %v806 = vsel %vm736, %v803, %v805
      %v807 = vrot.slane %v676, 1
      %v808 = vrot.slane %v677, 1
      %v809 = vsel %vm736, %v807, %v808
      %v810 = vrot.slane %v678, 1
      %v811 = vsel %vm736, %v808, %v810
      %v812 = vrot.slane %v679, 1
      %v813 = vrot.slane %v680, 1
      %v814 = vsel %vm736, %v812, %v813
      %v815 = vrot.slane %v681, 1
      %v816 = vsel %vm736, %v813, %v815
      %v817 = vsel %vm461, %v739, 0
      %v819 = vsel %vm461, %v741, 0
      %v821 = vsel %vm461, %v744, 0
      %v823 = vsel %vm461, %v746, 0
      %v825 = vsel %vm461, %v749, 0
      %v827 = vsel %vm461, %v751, 0
      %v829 = vsel %vm461, %v754, 0
      %v831 = vsel %vm461, %v756, 0
      %v833 = vsel %vm461, %v759, 0
      %v835 = vsel %vm461, %v761, 0
      %v837 = vsel %vm461, %v764, 0
      %v839 = vsel %vm461, %v766, 0
      %v841 = vsel %vm461, %v769, 0
      %v843 = vsel %vm461, %v771, 0
      %v845 = vsel %vm461, %v774, 0
      %v847 = vsel %vm461, %v776, 0
      %v849 = vsel %vm461, %v779, 0
      %v851 = vsel %vm461, %v781, 0
      %v853 = vsel %vm461, %v784, 0
      %v855 = vsel %vm461, %v786, 0
      %v857 = vsel %vm461, %v789, 0
      %v859 = vsel %vm461, %v791, 0
      %v861 = vsel %vm461, %v794, 0
      %v863 = vsel %vm461, %v796, 0
      %v865 = vsel %vm461, %v799, 0
      %v867 = vsel %vm461, %v801, 0
      %v869 = vsel %vm461, %v804, 0
      %v871 = vsel %vm461, %v806, 0
      %v873 = vsel %vm461, %v809, 0
      %v875 = vsel %vm461, %v811, 0
      %v877 = vsel %vm461, %v814, 0
      %v879 = vsel %vm461, %v816, 0
      %881 = vmatpush.msra.mxu0 0.0
      %882 = vmatpush.msra.mxu0 0.0
      %883 = vmatpush.msra.mxu0 0.0
      %884 = vmatpush.msra.mxu0 0.0
      %885 = vmatpush.msra.mxu0 0.0
      %886 = vmatpush.msra.mxu0 0.0
      %887 = vmatpush.msra.mxu0 0.0
      %888 = vmatpush.msra.mxu0 0.0
      %889 = vmatpush.msra.mxu0 0.0
      %890 = vmatpush.msra.mxu0 0.0
      %891 = vmatpush.msra.mxu0 0.0
      %892 = vmatpush.msra.mxu0 0.0
      %893 = vmatpush.msra.mxu0 0.0
      %894 = vmatpush.msra.mxu0 0.0
      %895 = vmatpush.msra.mxu0 0.0
      %896 = vmatpush.msra.mxu0 %v550
      %897 = vmatmul.f32.gmra.mxu0 %v817
      %v898 = vpop.f32.mrf.mxu0
      %v899 = vadd.f32 0.0, %v898
      %900 = vmatmul.f32.gmra.mxu0 %v819
      %v901 = vpop.f32.mrf.mxu0
      %v902 = vadd.f32 0.0, %v901
      %903 = vmatmul.f32.gmra.mxu0 %v821
      %v904 = vpop.f32.mrf.mxu0
      %v905 = vadd.f32 0.0, %v904
      %906 = vmatmul.f32.gmra.mxu0 %v823
      %v907 = vpop.f32.mrf.mxu0
      %v908 = vadd.f32 0.0, %v907
      %909 = vmatmul.f32.gmra.mxu0 %v825
      %v910 = vpop.f32.mrf.mxu0
      %v911 = vadd.f32 0.0, %v910
      %912 = vmatmul.f32.gmra.mxu0 %v827
      %v913 = vpop.f32.mrf.mxu0
      %v914 = vadd.f32 0.0, %v913
      %915 = vmatmul.f32.gmra.mxu0 %v829
      %v916 = vpop.f32.mrf.mxu0
      %v917 = vadd.f32 0.0, %v916
      %918 = vmatmul.f32.gmra.mxu0 %v831
      %v919 = vpop.f32.mrf.mxu0
      %v920 = vadd.f32 0.0, %v919
      %921 = vmatmul.f32.gmra.mxu0 %v833
      %v922 = vpop.f32.mrf.mxu0
      %v923 = vadd.f32 0.0, %v922
      %924 = vmatmul.f32.gmra.mxu0 %v835
      %v925 = vpop.f32.mrf.mxu0
      %v926 = vadd.f32 0.0, %v925
      %927 = vmatmul.f32.gmra.mxu0 %v837
      %v928 = vpop.f32.mrf.mxu0
      %v929 = vadd.f32 0.0, %v928
      %930 = vmatmul.f32.gmra.mxu0 %v839
      %v931 = vpop.f32.mrf.mxu0
      %v932 = vadd.f32 0.0, %v931
      %933 = vmatmul.f32.gmra.mxu0 %v841
      %v934 = vpop.f32.mrf.mxu0
      %v935 = vadd.f32 0.0, %v934
      %936 = vmatmul.f32.gmra.mxu0 %v843
      %v937 = vpop.f32.mrf.mxu0
      %v938 = vadd.f32 0.0, %v937
      %939 = vmatmul.f32.gmra.mxu0 %v845
      %v940 = vpop.f32.mrf.mxu0
      %v941 = vadd.f32 0.0, %v940
      %942 = vmatmul.f32.gmra.mxu0 %v847
      %v943 = vpop.f32.mrf.mxu0
      %v944 = vadd.f32 0.0, %v943
      %945 = vmatmul.f32.gmra.mxu0 %v849
      %v946 = vpop.f32.mrf.mxu0
      %v947 = vadd.f32 0.0, %v946
      %948 = vmatmul.f32.gmra.mxu0 %v851
      %v949 = vpop.f32.mrf.mxu0
      %v950 = vadd.f32 0.0, %v949
      %951 = vmatmul.f32.gmra.mxu0 %v853
      %v952 = vpop.f32.mrf.mxu0
      %v953 = vadd.f32 0.0, %v952
      %954 = vmatmul.f32.gmra.mxu0 %v855
      %v955 = vpop.f32.mrf.mxu0
      %v956 = vadd.f32 0.0, %v955
      %957 = vmatmul.f32.gmra.mxu0 %v857
      %v958 = vpop.f32.mrf.mxu0
      %v959 = vadd.f32 0.0, %v958
      %960 = vmatmul.f32.gmra.mxu0 %v859
      %v961 = vpop.f32.mrf.mxu0
      %v962 = vadd.f32 0.0, %v961
      %963 = vmatmul.f32.gmra.mxu0 %v861
      %v964 = vpop.f32.mrf.mxu0
      %v965 = vadd.f32 0.0, %v964
      %966 = vmatmul.f32.gmra.mxu0 %v863
      %v967 = vpop.f32.mrf.mxu0
      %v968 = vadd.f32 0.0, %v967
      %969 = vmatmul.f32.gmra.mxu0 %v865
      %v970 = vpop.f32.mrf.mxu0
      %v971 = vadd.f32 0.0, %v970
      %972 = vmatmul.f32.gmra.mxu0 %v867
      %v973 = vpop.f32.mrf.mxu0
      %v974 = vadd.f32 0.0, %v973
      %975 = vmatmul.f32.gmra.mxu0 %v869
      %v976 = vpop.f32.mrf.mxu0
      %v977 = vadd.f32 0.0, %v976
      %978 = vmatmul.f32.gmra.mxu0 %v871
      %v979 = vpop.f32.mrf.mxu0
      %v980 = vadd.f32 0.0, %v979
      %981 = vmatmul.f32.gmra.mxu0 %v873
      %v982 = vpop.f32.mrf.mxu0
      %v983 = vadd.f32 0.0, %v982
      %984 = vmatmul.f32.gmra.mxu0 %v875
      %v985 = vpop.f32.mrf.mxu0
      %v986 = vadd.f32 0.0, %v985
      %987 = vmatmul.f32.gmra.mxu0 %v877
      %v988 = vpop.f32.mrf.mxu0
      %v989 = vadd.f32 0.0, %v988
      %990 = vmatmul.f32.gmra.mxu0 %v879
      %v991 = vpop.f32.mrf.mxu0
      %v992 = vadd.f32 0.0, %v991
      %993 = vdwg.mxu0
      %v994 = vsel %vm461, %v634, 0
      %v996 = vsel %vm461, %v635, 0
      %v998 = vsel %vm461, %v637, 0
      %v1000 = vsel %vm461, %v638, 0
      %v1002 = vsel %vm461, %v640, 0
      %v1004 = vsel %vm461, %v641, 0
      %v1006 = vsel %vm461, %v643, 0
      %v1008 = vsel %vm461, %v644, 0
      %v1010 = vsel %vm461, %v646, 0
      %v1012 = vsel %vm461, %v647, 0
      %v1014 = vsel %vm461, %v649, 0
      %v1016 = vsel %vm461, %v650, 0
      %v1018 = vsel %vm461, %v652, 0
      %v1020 = vsel %vm461, %v653, 0
      %v1022 = vsel %vm461, %v655, 0
      %v1024 = vsel %vm461, %v656, 0
      %v1026 = vsel %vm461, %v658, 0
      %v1028 = vsel %vm461, %v659, 0
      %v1030 = vsel %vm461, %v661, 0
      %v1032 = vsel %vm461, %v662, 0
      %v1034 = vsel %vm461, %v664, 0
      %v1036 = vsel %vm461, %v665, 0
      %v1038 = vsel %vm461, %v667, 0
      %v1040 = vsel %vm461, %v668, 0
      %v1042 = vsel %vm461, %v670, 0
      %v1044 = vsel %vm461, %v671, 0
      %v1046 = vsel %vm461, %v673, 0
      %v1048 = vsel %vm461, %v674, 0
      %v1050 = vsel %vm461, %v676, 0
      %v1052 = vsel %vm461, %v677, 0
      %v1054 = vsel %vm461, %v679, 0
      %v1056 = vsel %vm461, %v680, 0
      %1058 = vmatpush.msra.mxu0 0.0
      %1059 = vmatpush.msra.mxu0 0.0
      %1060 = vmatpush.msra.mxu0 0.0
      %1061 = vmatpush.msra.mxu0 0.0
      %1062 = vmatpush.msra.mxu0 0.0
      %1063 = vmatpush.msra.mxu0 0.0
      %1064 = vmatpush.msra.mxu0 0.0
      %1065 = vmatpush.msra.mxu0 0.0
      %1066 = vmatpush.msra.mxu0 0.0
      %1067 = vmatpush.msra.mxu0 0.0
      %1068 = vmatpush.msra.mxu0 0.0
      %1069 = vmatpush.msra.mxu0 0.0
      %1070 = vmatpush.msra.mxu0 0.0
      %1071 = vmatpush.msra.mxu0 0.0
      %1072 = vmatpush.msra.mxu0 0.0
      %1073 = vmatpush.msra.mxu0 %v549
      %1074 = vmatmul.f32.gmra.mxu0 %v994
      %v1075 = vpop.f32.mrf.mxu0
      %v1076 = vadd.f32 %v899, %v1075
      %1077 = vmatmul.f32.gmra.mxu0 %v996
      %v1078 = vpop.f32.mrf.mxu0
      %v1079 = vadd.f32 %v902, %v1078
      %1080 = vmatmul.f32.gmra.mxu0 %v998
      %v1081 = vpop.f32.mrf.mxu0
      %v1082 = vadd.f32 %v905, %v1081
      %1083 = vmatmul.f32.gmra.mxu0 %v1000
      %v1084 = vpop.f32.mrf.mxu0
      %v1085 = vadd.f32 %v908, %v1084
      %1086 = vmatmul.f32.gmra.mxu0 %v1002
      %v1087 = vpop.f32.mrf.mxu0
      %v1088 = vadd.f32 %v911, %v1087
      %1089 = vmatmul.f32.gmra.mxu0 %v1004
      %v1090 = vpop.f32.mrf.mxu0
      %v1091 = vadd.f32 %v914, %v1090
      %1092 = vmatmul.f32.gmra.mxu0 %v1006
      %v1093 = vpop.f32.mrf.mxu0
      %v1094 = vadd.f32 %v917, %v1093
      %1095 = vmatmul.f32.gmra.mxu0 %v1008
      %v1096 = vpop.f32.mrf.mxu0
      %v1097 = vadd.f32 %v920, %v1096
      %1098 = vmatmul.f32.gmra.mxu0 %v1010
      %v1099 = vpop.f32.mrf.mxu0
      %v1100 = vadd.f32 %v923, %v1099
      %1101 = vmatmul.f32.gmra.mxu0 %v1012
      %v1102 = vpop.f32.mrf.mxu0
      %v1103 = vadd.f32 %v926, %v1102
      %1104 = vmatmul.f32.gmra.mxu0 %v1014
      %v1105 = vpop.f32.mrf.mxu0
      %v1106 = vadd.f32 %v929, %v1105
      %1107 = vmatmul.f32.gmra.mxu0 %v1016
      %v1108 = vpop.f32.mrf.mxu0
      %v1109 = vadd.f32 %v932, %v1108
      %1110 = vmatmul.f32.gmra.mxu0 %v1018
      %v1111 = vpop.f32.mrf.mxu0
      %v1112 = vadd.f32 %v935, %v1111
      %1113 = vmatmul.f32.gmra.mxu0 %v1020
      %v1114 = vpop.f32.mrf.mxu0
      %v1115 = vadd.f32 %v938, %v1114
      %1116 = vmatmul.f32.gmra.mxu0 %v1022
      %v1117 = vpop.f32.mrf.mxu0
      %v1118 = vadd.f32 %v941, %v1117
      %1119 = vmatmul.f32.gmra.mxu0 %v1024
      %v1120 = vpop.f32.mrf.mxu0
      %v1121 = vadd.f32 %v944, %v1120
      %1122 = vmatmul.f32.gmra.mxu0 %v1026
      %v1123 = vpop.f32.mrf.mxu0
      %v1124 = vadd.f32 %v947, %v1123
      %1125 = vmatmul.f32.gmra.mxu0 %v1028
      %v1126 = vpop.f32.mrf.mxu0
      %v1127 = vadd.f32 %v950, %v1126
      %1128 = vmatmul.f32.gmra.mxu0 %v1030
      %v1129 = vpop.f32.mrf.mxu0
      %v1130 = vadd.f32 %v953, %v1129
      %1131 = vmatmul.f32.gmra.mxu0 %v1032
      %v1132 = vpop.f32.mrf.mxu0
      %v1133 = vadd.f32 %v956, %v1132
      %1134 = vmatmul.f32.gmra.mxu0 %v1034
      %v1135 = vpop.f32.mrf.mxu0
      %v1136 = vadd.f32 %v959, %v1135
      %1137 = vmatmul.f32.gmra.mxu0 %v1036
      %v1138 = vpop.f32.mrf.mxu0
      %v1139 = vadd.f32 %v962, %v1138
      %1140 = vmatmul.f32.gmra.mxu0 %v1038
      %v1141 = vpop.f32.mrf.mxu0
      %v1142 = vadd.f32 %v965, %v1141
      %1143 = vmatmul.f32.gmra.mxu0 %v1040
      %v1144 = vpop.f32.mrf.mxu0
      %v1145 = vadd.f32 %v968, %v1144
      %1146 = vmatmul.f32.gmra.mxu0 %v1042
      %v1147 = vpop.f32.mrf.mxu0
      %v1148 = vadd.f32 %v971, %v1147
      %1149 = vmatmul.f32.gmra.mxu0 %v1044
      %v1150 = vpop.f32.mrf.mxu0
      %v1151 = vadd.f32 %v974, %v1150
      %1152 = vmatmul.f32.gmra.mxu0 %v1046
      %v1153 = vpop.f32.mrf.mxu0
      %v1154 = vadd.f32 %v977, %v1153
      %1155 = vmatmul.f32.gmra.mxu0 %v1048
      %v1156 = vpop.f32.mrf.mxu0
      %v1157 = vadd.f32 %v980, %v1156
      %1158 = vmatmul.f32.gmra.mxu0 %v1050
      %v1159 = vpop.f32.mrf.mxu0
      %v1160 = vadd.f32 %v983, %v1159
      %1161 = vmatmul.f32.gmra.mxu0 %v1052
      %v1162 = vpop.f32.mrf.mxu0
      %v1163 = vadd.f32 %v986, %v1162
      %1164 = vmatmul.f32.gmra.mxu0 %v1054
      %v1165 = vpop.f32.mrf.mxu0
      %v1166 = vadd.f32 %v989, %v1165
      %1167 = vmatmul.f32.gmra.mxu0 %v1056
      %v1168 = vpop.f32.mrf.mxu0
      %v1169 = vadd.f32 %v992, %v1168
      %1170 = vdwg.mxu0
      %vm1171 = vcmask 1045504
      %v1172 = vrot.slane %v634, 2
      %v1173 = vrot.slane %v635, 2
      %v1174 = vsel %vm1171, %v1172, %v1173
      %v1175 = vrot.slane %v636, 2
      %v1176 = vsel %vm1171, %v1173, %v1175
      %v1177 = vrot.slane %v637, 2
      %v1178 = vrot.slane %v638, 2
      %v1179 = vsel %vm1171, %v1177, %v1178
      %v1180 = vrot.slane %v639, 2
      %v1181 = vsel %vm1171, %v1178, %v1180
      %v1182 = vrot.slane %v640, 2
      %v1183 = vrot.slane %v641, 2
      %v1184 = vsel %vm1171, %v1182, %v1183
      %v1185 = vrot.slane %v642, 2
      %v1186 = vsel %vm1171, %v1183, %v1185
      %v1187 = vrot.slane %v643, 2
      %v1188 = vrot.slane %v644, 2
      %v1189 = vsel %vm1171, %v1187, %v1188
      %v1190 = vrot.slane %v645, 2
      %v1191 = vsel %vm1171, %v1188, %v1190
      %v1192 = vrot.slane %v646, 2
      %v1193 = vrot.slane %v647, 2
      %v1194 = vsel %vm1171, %v1192, %v1193
      %v1195 = vrot.slane %v648, 2
      %v1196 = vsel %vm1171, %v1193, %v1195
      %v1197 = vrot.slane %v649, 2
      %v1198 = vrot.slane %v650, 2
      %v1199 = vsel %vm1171, %v1197, %v1198
      %v1200 = vrot.slane %v651, 2
      %v1201 = vsel %vm1171, %v1198, %v1200
      %v1202 = vrot.slane %v652, 2
      %v1203 = vrot.slane %v653, 2
      %v1204 = vsel %vm1171, %v1202, %v1203
      %v1205 = vrot.slane %v654, 2
      %v1206 = vsel %vm1171, %v1203, %v1205
      %v1207 = vrot.slane %v655, 2
      %v1208 = vrot.slane %v656, 2
      %v1209 = vsel %vm1171, %v1207, %v1208
      %v1210 = vrot.slane %v657, 2
      %v1211 = vsel %vm1171, %v1208, %v1210
      %v1212 = vrot.slane %v658, 2
      %v1213 = vrot.slane %v659, 2
      %v1214 = vsel %vm1171, %v1212, %v1213
      %v1215 = vrot.slane %v660, 2
      %v1216 = vsel %vm1171, %v1213, %v1215
      %v1217 = vrot.slane %v661, 2
      %v1218 = vrot.slane %v662, 2
      %v1219 = vsel %vm1171, %v1217, %v1218
      %v1220 = vrot.slane %v663, 2
      %v1221 = vsel %vm1171, %v1218, %v1220
      %v1222 = vrot.slane %v664, 2
      %v1223 = vrot.slane %v665, 2
      %v1224 = vsel %vm1171, %v1222, %v1223
      %v1225 = vrot.slane %v666, 2
      %v1226 = vsel %vm1171, %v1223, %v1225
      %v1227 = vrot.slane %v667, 2
      %v1228 = vrot.slane %v668, 2
      %v1229 = vsel %vm1171, %v1227, %v1228
      %v1230 = vrot.slane %v669, 2
      %v1231 = vsel %vm1171, %v1228, %v1230
      %v1232 = vrot.slane %v670, 2
      %v1233 = vrot.slane %v671, 2
      %v1234 = vsel %vm1171, %v1232, %v1233
      %v1235 = vrot.slane %v672, 2
      %v1236 = vsel %vm1171, %v1233, %v1235
      %v1237 = vrot.slane %v673, 2
      %v1238 = vrot.slane %v674, 2
      %v1239 = vsel %vm1171, %v1237, %v1238
      %v1240 = vrot.slane %v675, 2
      %v1241 = vsel %vm1171, %v1238, %v1240
      %v1242 = vrot.slane %v676, 2
      %v1243 = vrot.slane %v677, 2
      %v1244 = vsel %vm1171, %v1242, %v1243
      %v1245 = vrot.slane %v678, 2
      %v1246 = vsel %vm1171, %v1243, %v1245
      %v1247 = vrot.slane %v679, 2
      %v1248 = vrot.slane %v680, 2
      %v1249 = vsel %vm1171, %v1247, %v1248
      %v1250 = vrot.slane %v681, 2
      %v1251 = vsel %vm1171, %v1248, %v1250
      %v1252 = vsel %vm461, %v1174, 0
      %v1254 = vsel %vm461, %v1176, 0
      %v1256 = vsel %vm461, %v1179, 0
      %v1258 = vsel %vm461, %v1181, 0
      %v1260 = vsel %vm461, %v1184, 0
      %v1262 = vsel %vm461, %v1186, 0
      %v1264 = vsel %vm461, %v1189, 0
      %v1266 = vsel %vm461, %v1191, 0
      %v1268 = vsel %vm461, %v1194, 0
      %v1270 = vsel %vm461, %v1196, 0
      %v1272 = vsel %vm461, %v1199, 0
      %v1274 = vsel %vm461, %v1201, 0
      %v1276 = vsel %vm461, %v1204, 0
      %v1278 = vsel %vm461, %v1206, 0
      %v1280 = vsel %vm461, %v1209, 0
      %v1282 = vsel %vm461, %v1211, 0
      %v1284 = vsel %vm461, %v1214, 0
      %v1286 = vsel %vm461, %v1216, 0
      %v1288 = vsel %vm461, %v1219, 0
      %v1290 = vsel %vm461, %v1221, 0
      %v1292 = vsel %vm461, %v1224, 0
      %v1294 = vsel %vm461, %v1226, 0
      %v1296 = vsel %vm461, %v1229, 0
      %v1298 = vsel %vm461, %v1231, 0
      %v1300 = vsel %vm461, %v1234, 0
      %v1302 = vsel %vm461, %v1236, 0
      %v1304 = vsel %vm461, %v1239, 0
      %v1306 = vsel %vm461, %v1241, 0
      %v1308 = vsel %vm461, %v1244, 0
      %v1310 = vsel %vm461, %v1246, 0
      %v1312 = vsel %vm461, %v1249, 0
      %v1314 = vsel %vm461, %v1251, 0
      %1316 = vmatpush.msra.mxu0 0.0
      %1317 = vmatpush.msra.mxu0 0.0
      %1318 = vmatpush.msra.mxu0 0.0
      %1319 = vmatpush.msra.mxu0 0.0
      %1320 = vmatpush.msra.mxu0 0.0
      %1321 = vmatpush.msra.mxu0 0.0
      %1322 = vmatpush.msra.mxu0 0.0
      %1323 = vmatpush.msra.mxu0 0.0
      %1324 = vmatpush.msra.mxu0 0.0
      %1325 = vmatpush.msra.mxu0 0.0
      %1326 = vmatpush.msra.mxu0 0.0
      %1327 = vmatpush.msra.mxu0 0.0
      %1328 = vmatpush.msra.mxu0 0.0
      %1329 = vmatpush.msra.mxu0 0.0
      %1330 = vmatpush.msra.mxu0 0.0
      %1331 = vmatpush.msra.mxu0 %v551
      %1332 = vmatmul.f32.gmra.mxu0 %v1252
      %v1333 = vpop.f32.mrf.mxu0
      %v1334 = vadd.f32 0.0, %v1333
      %1335 = vmatmul.f32.gmra.mxu0 %v1254
      %v1336 = vpop.f32.mrf.mxu0
      %v1337 = vadd.f32 0.0, %v1336
      %1338 = vmatmul.f32.gmra.mxu0 %v1256
      %v1339 = vpop.f32.mrf.mxu0
      %v1340 = vadd.f32 0.0, %v1339
      %1341 = vmatmul.f32.gmra.mxu0 %v1258
      %v1342 = vpop.f32.mrf.mxu0
      %v1343 = vadd.f32 0.0, %v1342
      %1344 = vmatmul.f32.gmra.mxu0 %v1260
      %v1345 = vpop.f32.mrf.mxu0
      %v1346 = vadd.f32 0.0, %v1345
      %1347 = vmatmul.f32.gmra.mxu0 %v1262
      %v1348 = vpop.f32.mrf.mxu0
      %v1349 = vadd.f32 0.0, %v1348
      %1350 = vmatmul.f32.gmra.mxu0 %v1264
      %v1351 = vpop.f32.mrf.mxu0
      %v1352 = vadd.f32 0.0, %v1351
      %1353 = vmatmul.f32.gmra.mxu0 %v1266
      %v1354 = vpop.f32.mrf.mxu0
      %v1355 = vadd.f32 0.0, %v1354
      %1356 = vmatmul.f32.gmra.mxu0 %v1268
      %v1357 = vpop.f32.mrf.mxu0
      %v1358 = vadd.f32 0.0, %v1357
      %1359 = vmatmul.f32.gmra.mxu0 %v1270
      %v1360 = vpop.f32.mrf.mxu0
      %v1361 = vadd.f32 0.0, %v1360
      %1362 = vmatmul.f32.gmra.mxu0 %v1272
      %v1363 = vpop.f32.mrf.mxu0
      %v1364 = vadd.f32 0.0, %v1363
      %1365 = vmatmul.f32.gmra.mxu0 %v1274
      %v1366 = vpop.f32.mrf.mxu0
      %v1367 = vadd.f32 0.0, %v1366
      %1368 = vmatmul.f32.gmra.mxu0 %v1276
      %v1369 = vpop.f32.mrf.mxu0
      %v1370 = vadd.f32 0.0, %v1369
      %1371 = vmatmul.f32.gmra.mxu0 %v1278
      %v1372 = vpop.f32.mrf.mxu0
      %v1373 = vadd.f32 0.0, %v1372
      %1374 = vmatmul.f32.gmra.mxu0 %v1280
      %v1375 = vpop.f32.mrf.mxu0
      %v1376 = vadd.f32 0.0, %v1375
      %1377 = vmatmul.f32.gmra.mxu0 %v1282
      %v1378 = vpop.f32.mrf.mxu0
      %v1379 = vadd.f32 0.0, %v1378
      %1380 = vmatmul.f32.gmra.mxu0 %v1284
      %v1381 = vpop.f32.mrf.mxu0
      %v1382 = vadd.f32 0.0, %v1381
      %1383 = vmatmul.f32.gmra.mxu0 %v1286
      %v1384 = vpop.f32.mrf.mxu0
      %v1385 = vadd.f32 0.0, %v1384
      %1386 = vmatmul.f32.gmra.mxu0 %v1288
      %v1387 = vpop.f32.mrf.mxu0
      %v1388 = vadd.f32 0.0, %v1387
      %1389 = vmatmul.f32.gmra.mxu0 %v1290
      %v1390 = vpop.f32.mrf.mxu0
      %v1391 = vadd.f32 0.0, %v1390
      %1392 = vmatmul.f32.gmra.mxu0 %v1292
      %v1393 = vpop.f32.mrf.mxu0
      %v1394 = vadd.f32 0.0, %v1393
      %1395 = vmatmul.f32.gmra.mxu0 %v1294
      %v1396 = vpop.f32.mrf.mxu0
      %v1397 = vadd.f32 0.0, %v1396
      %1398 = vmatmul.f32.gmra.mxu0 %v1296
      %v1399 = vpop.f32.mrf.mxu0
      %v1400 = vadd.f32 0.0, %v1399
      %1401 = vmatmul.f32.gmra.mxu0 %v1298
      %v1402 = vpop.f32.mrf.mxu0
      %v1403 = vadd.f32 0.0, %v1402
      %1404 = vmatmul.f32.gmra.mxu0 %v1300
      %v1405 = vpop.f32.mrf.mxu0
      %v1406 = vadd.f32 0.0, %v1405
      %1407 = vmatmul.f32.gmra.mxu0 %v1302
      %v1408 = vpop.f32.mrf.mxu0
      %v1409 = vadd.f32 0.0, %v1408
      %1410 = vmatmul.f32.gmra.mxu0 %v1304
      %v1411 = vpop.f32.mrf.mxu0
      %v1412 = vadd.f32 0.0, %v1411
      %1413 = vmatmul.f32.gmra.mxu0 %v1306
      %v1414 = vpop.f32.mrf.mxu0
      %v1415 = vadd.f32 0.0, %v1414
      %1416 = vmatmul.f32.gmra.mxu0 %v1308
      %v1417 = vpop.f32.mrf.mxu0
      %v1418 = vadd.f32 0.0, %v1417
      %1419 = vmatmul.f32.gmra.mxu0 %v1310
      %v1420 = vpop.f32.mrf.mxu0
      %v1421 = vadd.f32 0.0, %v1420
      %1422 = vmatmul.f32.gmra.mxu0 %v1312
      %v1423 = vpop.f32.mrf.mxu0
      %v1424 = vadd.f32 0.0, %v1423
      %1425 = vmatmul.f32.gmra.mxu0 %v1314
      %v1426 = vpop.f32.mrf.mxu0
      %v1427 = vadd.f32 0.0, %v1426
      %1428 = vdwg.mxu0
      %v1429 = vadd.f32 %v1076, %v1334
      %v1430 = vadd.f32 %v1079, %v1337
      %v1431 = vadd.f32 %v1082, %v1340
      %v1432 = vadd.f32 %v1085, %v1343
      %v1433 = vadd.f32 %v1088, %v1346
      %v1434 = vadd.f32 %v1091, %v1349
      %v1435 = vadd.f32 %v1094, %v1352
      %v1436 = vadd.f32 %v1097, %v1355
      %v1437 = vadd.f32 %v1100, %v1358
      %v1438 = vadd.f32 %v1103, %v1361
      %v1439 = vadd.f32 %v1106, %v1364
      %v1440 = vadd.f32 %v1109, %v1367
      %v1441 = vadd.f32 %v1112, %v1370
      %v1442 = vadd.f32 %v1115, %v1373
      %v1443 = vadd.f32 %v1118, %v1376
      %v1444 = vadd.f32 %v1121, %v1379
      %v1445 = vadd.f32 %v1124, %v1382
      %v1446 = vadd.f32 %v1127, %v1385
      %v1447 = vadd.f32 %v1130, %v1388
      %v1448 = vadd.f32 %v1133, %v1391
      %v1449 = vadd.f32 %v1136, %v1394
      %v1450 = vadd.f32 %v1139, %v1397
      %v1451 = vadd.f32 %v1142, %v1400
      %v1452 = vadd.f32 %v1145, %v1403
      %v1453 = vadd.f32 %v1148, %v1406
      %v1454 = vadd.f32 %v1151, %v1409
      %v1455 = vadd.f32 %v1154, %v1412
      %v1456 = vadd.f32 %v1157, %v1415
      %v1457 = vadd.f32 %v1160, %v1418
      %v1458 = vadd.f32 %v1163, %v1421
      %v1459 = vadd.f32 %v1166, %v1424
      %v1460 = vadd.f32 %v1169, %v1427
      %v1462 = vsel %vm461, %v682, 0
      %v1465 = vsel %vm461, %v683, 0
      %1467 = vmatpush.msra.mxu0 0.0
      %1468 = vmatpush.msra.mxu0 0.0
      %1469 = vmatpush.msra.mxu0 0.0
      %1470 = vmatpush.msra.mxu0 0.0
      %1471 = vmatpush.msra.mxu0 0.0
      %1472 = vmatpush.msra.mxu0 0.0
      %1473 = vmatpush.msra.mxu0 0.0
      %1474 = vmatpush.msra.mxu0 0.0
      %1475 = vmatpush.msra.mxu0 0.0
      %1476 = vmatpush.msra.mxu0 0.0
      %1477 = vmatpush.msra.mxu0 0.0
      %1478 = vmatpush.msra.mxu0 0.0
      %1479 = vmatpush.msra.mxu0 0.0
      %1480 = vmatpush.msra.mxu0 0.0
      %1481 = vmatpush.msra.mxu0 0.0
      %1482 = vmatpush.msra.mxu0 %v552
      %1483 = vmatmul.f32.gmra.mxu0 %v998
      %v1484 = vpop.f32.mrf.mxu0
      %v1485 = vadd.f32 0.0, %v1484
      %1486 = vmatmul.f32.gmra.mxu0 %v1000
      %v1487 = vpop.f32.mrf.mxu0
      %v1488 = vadd.f32 0.0, %v1487
      %1489 = vmatmul.f32.gmra.mxu0 %v1002
      %v1490 = vpop.f32.mrf.mxu0
      %v1491 = vadd.f32 0.0, %v1490
      %1492 = vmatmul.f32.gmra.mxu0 %v1004
      %v1493 = vpop.f32.mrf.mxu0
      %v1494 = vadd.f32 0.0, %v1493
      %1495 = vmatmul.f32.gmra.mxu0 %v1006
      %v1496 = vpop.f32.mrf.mxu0
      %v1497 = vadd.f32 0.0, %v1496
      %1498 = vmatmul.f32.gmra.mxu0 %v1008
      %v1499 = vpop.f32.mrf.mxu0
      %v1500 = vadd.f32 0.0, %v1499
      %1501 = vmatmul.f32.gmra.mxu0 %v1010
      %v1502 = vpop.f32.mrf.mxu0
      %v1503 = vadd.f32 0.0, %v1502
      %1504 = vmatmul.f32.gmra.mxu0 %v1012
      %v1505 = vpop.f32.mrf.mxu0
      %v1506 = vadd.f32 0.0, %v1505
      %1507 = vmatmul.f32.gmra.mxu0 %v1014
      %v1508 = vpop.f32.mrf.mxu0
      %v1509 = vadd.f32 0.0, %v1508
      %1510 = vmatmul.f32.gmra.mxu0 %v1016
      %v1511 = vpop.f32.mrf.mxu0
      %v1512 = vadd.f32 0.0, %v1511
      %1513 = vmatmul.f32.gmra.mxu0 %v1018
      %v1514 = vpop.f32.mrf.mxu0
      %v1515 = vadd.f32 0.0, %v1514
      %1516 = vmatmul.f32.gmra.mxu0 %v1020
      %v1517 = vpop.f32.mrf.mxu0
      %v1518 = vadd.f32 0.0, %v1517
      %1519 = vmatmul.f32.gmra.mxu0 %v1022
      %v1520 = vpop.f32.mrf.mxu0
      %v1521 = vadd.f32 0.0, %v1520
      %1522 = vmatmul.f32.gmra.mxu0 %v1024
      %v1523 = vpop.f32.mrf.mxu0
      %v1524 = vadd.f32 0.0, %v1523
      %1525 = vmatmul.f32.gmra.mxu0 %v1026
      %v1526 = vpop.f32.mrf.mxu0
      %v1527 = vadd.f32 0.0, %v1526
      %1528 = vmatmul.f32.gmra.mxu0 %v1028
      %v1529 = vpop.f32.mrf.mxu0
      %v1530 = vadd.f32 0.0, %v1529
      %1531 = vmatmul.f32.gmra.mxu0 %v1030
      %v1532 = vpop.f32.mrf.mxu0
      %v1533 = vadd.f32 0.0, %v1532
      %1534 = vmatmul.f32.gmra.mxu0 %v1032
      %v1535 = vpop.f32.mrf.mxu0
      %v1536 = vadd.f32 0.0, %v1535
      %1537 = vmatmul.f32.gmra.mxu0 %v1034
      %v1538 = vpop.f32.mrf.mxu0
      %v1539 = vadd.f32 0.0, %v1538
      %1540 = vmatmul.f32.gmra.mxu0 %v1036
      %v1541 = vpop.f32.mrf.mxu0
      %v1542 = vadd.f32 0.0, %v1541
      %1543 = vmatmul.f32.gmra.mxu0 %v1038
      %v1544 = vpop.f32.mrf.mxu0
      %v1545 = vadd.f32 0.0, %v1544
      %1546 = vmatmul.f32.gmra.mxu0 %v1040
      %v1547 = vpop.f32.mrf.mxu0
      %v1548 = vadd.f32 0.0, %v1547
      %1549 = vmatmul.f32.gmra.mxu0 %v1042
      %v1550 = vpop.f32.mrf.mxu0
      %v1551 = vadd.f32 0.0, %v1550
      %1552 = vmatmul.f32.gmra.mxu0 %v1044
      %v1553 = vpop.f32.mrf.mxu0
      %v1554 = vadd.f32 0.0, %v1553
      %1555 = vmatmul.f32.gmra.mxu0 %v1046
      %v1556 = vpop.f32.mrf.mxu0
      %v1557 = vadd.f32 0.0, %v1556
      %1558 = vmatmul.f32.gmra.mxu0 %v1048
      %v1559 = vpop.f32.mrf.mxu0
      %v1560 = vadd.f32 0.0, %v1559
      %1561 = vmatmul.f32.gmra.mxu0 %v1050
      %v1562 = vpop.f32.mrf.mxu0
      %v1563 = vadd.f32 0.0, %v1562
      %1564 = vmatmul.f32.gmra.mxu0 %v1052
      %v1565 = vpop.f32.mrf.mxu0
      %v1566 = vadd.f32 0.0, %v1565
      %1567 = vmatmul.f32.gmra.mxu0 %v1054
      %v1568 = vpop.f32.mrf.mxu0
      %v1569 = vadd.f32 0.0, %v1568
      %1570 = vmatmul.f32.gmra.mxu0 %v1056
      %v1571 = vpop.f32.mrf.mxu0
      %v1572 = vadd.f32 0.0, %v1571
      %1573 = vmatmul.f32.gmra.mxu0 %v1462
      %v1574 = vpop.f32.mrf.mxu0
      %v1575 = vadd.f32 0.0, %v1574
      %1576 = vmatmul.f32.gmra.mxu0 %v1465
      %v1577 = vpop.f32.mrf.mxu0
      %v1578 = vadd.f32 0.0, %v1577
      %1579 = vdwg.mxu0
      %v1580 = vadd.f32 %v1429, %v1485
      %v1581 = vadd.f32 %v1430, %v1488
      %v1582 = vadd.f32 %v1431, %v1491
      %v1583 = vadd.f32 %v1432, %v1494
      %v1584 = vadd.f32 %v1433, %v1497
      %v1585 = vadd.f32 %v1434, %v1500
      %v1586 = vadd.f32 %v1435, %v1503
      %v1587 = vadd.f32 %v1436, %v1506
      %v1588 = vadd.f32 %v1437, %v1509
      %v1589 = vadd.f32 %v1438, %v1512
      %v1590 = vadd.f32 %v1439, %v1515
      %v1591 = vadd.f32 %v1440, %v1518
      %v1592 = vadd.f32 %v1441, %v1521
      %v1593 = vadd.f32 %v1442, %v1524
      %v1594 = vadd.f32 %v1443, %v1527
      %v1595 = vadd.f32 %v1444, %v1530
      %v1596 = vadd.f32 %v1445, %v1533
      %v1597 = vadd.f32 %v1446, %v1536
      %v1598 = vadd.f32 %v1447, %v1539
      %v1599 = vadd.f32 %v1448, %v1542
      %v1600 = vadd.f32 %v1449, %v1545
      %v1601 = vadd.f32 %v1450, %v1548
      %v1602 = vadd.f32 %v1451, %v1551
      %v1603 = vadd.f32 %v1452, %v1554
      %v1604 = vadd.f32 %v1453, %v1557
      %v1605 = vadd.f32 %v1454, %v1560
      %v1606 = vadd.f32 %v1455, %v1563
      %v1607 = vadd.f32 %v1456, %v1566
      %v1608 = vadd.f32 %v1457, %v1569
      %v1609 = vadd.f32 %v1458, %v1572
      %v1610 = vadd.f32 %v1459, %v1575
      %v1611 = vadd.f32 %v1460, %v1578
      %v1613 = vrot.slane %v682, 1
      %v1614 = vrot.slane %v683, 1
      %v1615 = vsel %vm736, %v1613, %v1614
      %v1616 = vrot.slane %v684, 1
      %v1617 = vsel %vm736, %v1614, %v1616
      %v1618 = vsel %vm461, %v1615, 0
      %v1620 = vsel %vm461, %v1617, 0
      %1622 = vmatpush.msra.mxu0 0.0
      %1623 = vmatpush.msra.mxu0 0.0
      %1624 = vmatpush.msra.mxu0 0.0
      %1625 = vmatpush.msra.mxu0 0.0
      %1626 = vmatpush.msra.mxu0 0.0
      %1627 = vmatpush.msra.mxu0 0.0
      %1628 = vmatpush.msra.mxu0 0.0
      %1629 = vmatpush.msra.mxu0 0.0
      %1630 = vmatpush.msra.mxu0 0.0
      %1631 = vmatpush.msra.mxu0 0.0
      %1632 = vmatpush.msra.mxu0 0.0
      %1633 = vmatpush.msra.mxu0 0.0
      %1634 = vmatpush.msra.mxu0 0.0
      %1635 = vmatpush.msra.mxu0 0.0
      %1636 = vmatpush.msra.mxu0 0.0
      %1637 = vmatpush.msra.mxu0 %v553
      %1638 = vmatmul.f32.gmra.mxu0 %v821
      %v1639 = vpop.f32.mrf.mxu0
      %v1640 = vadd.f32 0.0, %v1639
      %1641 = vmatmul.f32.gmra.mxu0 %v823
      %v1642 = vpop.f32.mrf.mxu0
      %v1643 = vadd.f32 0.0, %v1642
      %1644 = vmatmul.f32.gmra.mxu0 %v825
      %v1645 = vpop.f32.mrf.mxu0
      %v1646 = vadd.f32 0.0, %v1645
      %1647 = vmatmul.f32.gmra.mxu0 %v827
      %v1648 = vpop.f32.mrf.mxu0
      %v1649 = vadd.f32 0.0, %v1648
      %1650 = vmatmul.f32.gmra.mxu0 %v829
      %v1651 = vpop.f32.mrf.mxu0
      %v1652 = vadd.f32 0.0, %v1651
      %1653 = vmatmul.f32.gmra.mxu0 %v831
      %v1654 = vpop.f32.mrf.mxu0
      %v1655 = vadd.f32 0.0, %v1654
      %1656 = vmatmul.f32.gmra.mxu0 %v833
      %v1657 = vpop.f32.mrf.mxu0
      %v1658 = vadd.f32 0.0, %v1657
      %1659 = vmatmul.f32.gmra.mxu0 %v835
      %v1660 = vpop.f32.mrf.mxu0
      %v1661 = vadd.f32 0.0, %v1660
      %1662 = vmatmul.f32.gmra.mxu0 %v837
      %v1663 = vpop.f32.mrf.mxu0
      %v1664 = vadd.f32 0.0, %v1663
      %1665 = vmatmul.f32.gmra.mxu0 %v839
      %v1666 = vpop.f32.mrf.mxu0
      %v1667 = vadd.f32 0.0, %v1666
      %1668 = vmatmul.f32.gmra.mxu0 %v841
      %v1669 = vpop.f32.mrf.mxu0
      %v1670 = vadd.f32 0.0, %v1669
      %1671 = vmatmul.f32.gmra.mxu0 %v843
      %v1672 = vpop.f32.mrf.mxu0
      %v1673 = vadd.f32 0.0, %v1672
      %1674 = vmatmul.f32.gmra.mxu0 %v845
      %v1675 = vpop.f32.mrf.mxu0
      %v1676 = vadd.f32 0.0, %v1675
      %1677 = vmatmul.f32.gmra.mxu0 %v847
      %v1678 = vpop.f32.mrf.mxu0
      %v1679 = vadd.f32 0.0, %v1678
      %1680 = vmatmul.f32.gmra.mxu0 %v849
      %v1681 = vpop.f32.mrf.mxu0
      %v1682 = vadd.f32 0.0, %v1681
      %1683 = vmatmul.f32.gmra.mxu0 %v851
      %v1684 = vpop.f32.mrf.mxu0
      %v1685 = vadd.f32 0.0, %v1684
      %1686 = vmatmul.f32.gmra.mxu0 %v853
      %v1687 = vpop.f32.mrf.mxu0
      %v1688 = vadd.f32 0.0, %v1687
      %1689 = vmatmul.f32.gmra.mxu0 %v855
      %v1690 = vpop.f32.mrf.mxu0
      %v1691 = vadd.f32 0.0, %v1690
      %1692 = vmatmul.f32.gmra.mxu0 %v857
      %v1693 = vpop.f32.mrf.mxu0
      %v1694 = vadd.f32 0.0, %v1693
      %1695 = vmatmul.f32.gmra.mxu0 %v859
      %v1696 = vpop.f32.mrf.mxu0
      %v1697 = vadd.f32 0.0, %v1696
      %1698 = vmatmul.f32.gmra.mxu0 %v861
      %v1699 = vpop.f32.mrf.mxu0
      %v1700 = vadd.f32 0.0, %v1699
      %1701 = vmatmul.f32.gmra.mxu0 %v863
      %v1702 = vpop.f32.mrf.mxu0
      %v1703 = vadd.f32 0.0, %v1702
      %1704 = vmatmul.f32.gmra.mxu0 %v865
      %v1705 = vpop.f32.mrf.mxu0
      %v1706 = vadd.f32 0.0, %v1705
      %1707 = vmatmul.f32.gmra.mxu0 %v867
      %v1708 = vpop.f32.mrf.mxu0
      %v1709 = vadd.f32 0.0, %v1708
      %1710 = vmatmul.f32.gmra.mxu0 %v869
      %v1711 = vpop.f32.mrf.mxu0
      %v1712 = vadd.f32 0.0, %v1711
      %1713 = vmatmul.f32.gmra.mxu0 %v871
      %v1714 = vpop.f32.mrf.mxu0
      %v1715 = vadd.f32 0.0, %v1714
      %1716 = vmatmul.f32.gmra.mxu0 %v873
      %v1717 = vpop.f32.mrf.mxu0
      %v1718 = vadd.f32 0.0, %v1717
      %1719 = vmatmul.f32.gmra.mxu0 %v875
      %v1720 = vpop.f32.mrf.mxu0
      %v1721 = vadd.f32 0.0, %v1720
      %1722 = vmatmul.f32.gmra.mxu0 %v877
      %v1723 = vpop.f32.mrf.mxu0
      %v1724 = vadd.f32 0.0, %v1723
      %1725 = vmatmul.f32.gmra.mxu0 %v879
      %v1726 = vpop.f32.mrf.mxu0
      %v1727 = vadd.f32 0.0, %v1726
      %1728 = vmatmul.f32.gmra.mxu0 %v1618
      %v1729 = vpop.f32.mrf.mxu0
      %v1730 = vadd.f32 0.0, %v1729
      %1731 = vmatmul.f32.gmra.mxu0 %v1620
      %v1732 = vpop.f32.mrf.mxu0
      %v1733 = vadd.f32 0.0, %v1732
      %1734 = vdwg.mxu0
      %v1735 = vadd.f32 %v1580, %v1640
      %v1736 = vadd.f32 %v1581, %v1643
      %v1737 = vadd.f32 %v1582, %v1646
      %v1738 = vadd.f32 %v1583, %v1649
      %v1739 = vadd.f32 %v1584, %v1652
      %v1740 = vadd.f32 %v1585, %v1655
      %v1741 = vadd.f32 %v1586, %v1658
      %v1742 = vadd.f32 %v1587, %v1661
      %v1743 = vadd.f32 %v1588, %v1664
      %v1744 = vadd.f32 %v1589, %v1667
      %v1745 = vadd.f32 %v1590, %v1670
      %v1746 = vadd.f32 %v1591, %v1673
      %v1747 = vadd.f32 %v1592, %v1676
      %v1748 = vadd.f32 %v1593, %v1679
      %v1749 = vadd.f32 %v1594, %v1682
      %v1750 = vadd.f32 %v1595, %v1685
      %v1751 = vadd.f32 %v1596, %v1688
      %v1752 = vadd.f32 %v1597, %v1691
      %v1753 = vadd.f32 %v1598, %v1694
      %v1754 = vadd.f32 %v1599, %v1697
      %v1755 = vadd.f32 %v1600, %v1700
      %v1756 = vadd.f32 %v1601, %v1703
      %v1757 = vadd.f32 %v1602, %v1706
      %v1758 = vadd.f32 %v1603, %v1709
      %v1759 = vadd.f32 %v1604, %v1712
      %v1760 = vadd.f32 %v1605, %v1715
      %v1761 = vadd.f32 %v1606, %v1718
      %v1762 = vadd.f32 %v1607, %v1721
      %v1763 = vadd.f32 %v1608, %v1724
      %v1764 = vadd.f32 %v1609, %v1727
      %v1765 = vadd.f32 %v1610, %v1730
      %v1766 = vadd.f32 %v1611, %v1733
      %v1767 = vrot.slane %v682, 2
      %v1768 = vrot.slane %v683, 2
      %v1769 = vsel %vm1171, %v1767, %v1768
      %v1770 = vrot.slane %v684, 2
      %v1771 = vsel %vm1171, %v1768, %v1770
      %v1772 = vsel %vm461, %v1769, 0
      %v1774 = vsel %vm461, %v1771, 0
      %1776 = vmatpush.msra.mxu0 0.0
      %1777 = vmatpush.msra.mxu0 0.0
      %1778 = vmatpush.msra.mxu0 0.0
      %1779 = vmatpush.msra.mxu0 0.0
      %1780 = vmatpush.msra.mxu0 0.0
      %1781 = vmatpush.msra.mxu0 0.0
      %1782 = vmatpush.msra.mxu0 0.0
      %1783 = vmatpush.msra.mxu0 0.0
      %1784 = vmatpush.msra.mxu0 0.0
      %1785 = vmatpush.msra.mxu0 0.0
      %1786 = vmatpush.msra.mxu0 0.0
      %1787 = vmatpush.msra.mxu0 0.0
      %1788 = vmatpush.msra.mxu0 0.0
      %1789 = vmatpush.msra.mxu0 0.0
      %1790 = vmatpush.msra.mxu0 0.0
      %1791 = vmatpush.msra.mxu0 %v554
      %1792 = vmatmul.f32.gmra.mxu0 %v1256
      %v1793 = vpop.f32.mrf.mxu0
      %v1794 = vadd.f32 0.0, %v1793
      %1795 = vmatmul.f32.gmra.mxu0 %v1258
      %v1796 = vpop.f32.mrf.mxu0
      %v1797 = vadd.f32 0.0, %v1796
      %1798 = vmatmul.f32.gmra.mxu0 %v1260
      %v1799 = vpop.f32.mrf.mxu0
      %v1800 = vadd.f32 0.0, %v1799
      %1801 = vmatmul.f32.gmra.mxu0 %v1262
      %v1802 = vpop.f32.mrf.mxu0
      %v1803 = vadd.f32 0.0, %v1802
      %1804 = vmatmul.f32.gmra.mxu0 %v1264
      %v1805 = vpop.f32.mrf.mxu0
      %v1806 = vadd.f32 0.0, %v1805
      %1807 = vmatmul.f32.gmra.mxu0 %v1266
      %v1808 = vpop.f32.mrf.mxu0
      %v1809 = vadd.f32 0.0, %v1808
      %1810 = vmatmul.f32.gmra.mxu0 %v1268
      %v1811 = vpop.f32.mrf.mxu0
      %v1812 = vadd.f32 0.0, %v1811
      %1813 = vmatmul.f32.gmra.mxu0 %v1270
      %v1814 = vpop.f32.mrf.mxu0
      %v1815 = vadd.f32 0.0, %v1814
      %1816 = vmatmul.f32.gmra.mxu0 %v1272
      %v1817 = vpop.f32.mrf.mxu0
      %v1818 = vadd.f32 0.0, %v1817
      %1819 = vmatmul.f32.gmra.mxu0 %v1274
      %v1820 = vpop.f32.mrf.mxu0
      %v1821 = vadd.f32 0.0, %v1820
      %1822 = vmatmul.f32.gmra.mxu0 %v1276
      %v1823 = vpop.f32.mrf.mxu0
      %v1824 = vadd.f32 0.0, %v1823
      %1825 = vmatmul.f32.gmra.mxu0 %v1278
      %v1826 = vpop.f32.mrf.mxu0
      %v1827 = vadd.f32 0.0, %v1826
      %1828 = vmatmul.f32.gmra.mxu0 %v1280
      %v1829 = vpop.f32.mrf.mxu0
      %v1830 = vadd.f32 0.0, %v1829
      %1831 = vmatmul.f32.gmra.mxu0 %v1282
      %v1832 = vpop.f32.mrf.mxu0
      %v1833 = vadd.f32 0.0, %v1832
      %1834 = vmatmul.f32.gmra.mxu0 %v1284
      %v1835 = vpop.f32.mrf.mxu0
      %v1836 = vadd.f32 0.0, %v1835
      %1837 = vmatmul.f32.gmra.mxu0 %v1286
      %v1838 = vpop.f32.mrf.mxu0
      %v1839 = vadd.f32 0.0, %v1838
      %1840 = vmatmul.f32.gmra.mxu0 %v1288
      %v1841 = vpop.f32.mrf.mxu0
      %v1842 = vadd.f32 0.0, %v1841
      %1843 = vmatmul.f32.gmra.mxu0 %v1290
      %v1844 = vpop.f32.mrf.mxu0
      %v1845 = vadd.f32 0.0, %v1844
      %1846 = vmatmul.f32.gmra.mxu0 %v1292
      %v1847 = vpop.f32.mrf.mxu0
      %v1848 = vadd.f32 0.0, %v1847
      %1849 = vmatmul.f32.gmra.mxu0 %v1294
      %v1850 = vpop.f32.mrf.mxu0
      %v1851 = vadd.f32 0.0, %v1850
      %1852 = vmatmul.f32.gmra.mxu0 %v1296
      %v1853 = vpop.f32.mrf.mxu0
      %v1854 = vadd.f32 0.0, %v1853
      %1855 = vmatmul.f32.gmra.mxu0 %v1298
      %v1856 = vpop.f32.mrf.mxu0
      %v1857 = vadd.f32 0.0, %v1856
      %1858 = vmatmul.f32.gmra.mxu0 %v1300
      %v1859 = vpop.f32.mrf.mxu0
      %v1860 = vadd.f32 0.0, %v1859
      %1861 = vmatmul.f32.gmra.mxu0 %v1302
      %v1862 = vpop.f32.mrf.mxu0
      %v1863 = vadd.f32 0.0, %v1862
      %1864 = vmatmul.f32.gmra.mxu0 %v1304
      %v1865 = vpop.f32.mrf.mxu0
      %v1866 = vadd.f32 0.0, %v1865
      %1867 = vmatmul.f32.gmra.mxu0 %v1306
      %v1868 = vpop.f32.mrf.mxu0
      %v1869 = vadd.f32 0.0, %v1868
      %1870 = vmatmul.f32.gmra.mxu0 %v1308
      %v1871 = vpop.f32.mrf.mxu0
      %v1872 = vadd.f32 0.0, %v1871
      %1873 = vmatmul.f32.gmra.mxu0 %v1310
      %v1874 = vpop.f32.mrf.mxu0
      %v1875 = vadd.f32 0.0, %v1874
      %1876 = vmatmul.f32.gmra.mxu0 %v1312
      %v1877 = vpop.f32.mrf.mxu0
      %v1878 = vadd.f32 0.0, %v1877
      %1879 = vmatmul.f32.gmra.mxu0 %v1314
      %v1880 = vpop.f32.mrf.mxu0
      %v1881 = vadd.f32 0.0, %v1880
      %1882 = vmatmul.f32.gmra.mxu0 %v1772
      %v1883 = vpop.f32.mrf.mxu0
      %v1884 = vadd.f32 0.0, %v1883
      %1885 = vmatmul.f32.gmra.mxu0 %v1774
      %v1886 = vpop.f32.mrf.mxu0
      %v1887 = vadd.f32 0.0, %v1886
      %1888 = vdwg.mxu0
      %v1889 = vadd.f32 %v1735, %v1794
      %v1890 = vadd.f32 %v1736, %v1797
      %v1891 = vadd.f32 %v1737, %v1800
      %v1892 = vadd.f32 %v1738, %v1803
      %v1893 = vadd.f32 %v1739, %v1806
      %v1894 = vadd.f32 %v1740, %v1809
      %v1895 = vadd.f32 %v1741, %v1812
      %v1896 = vadd.f32 %v1742, %v1815
      %v1897 = vadd.f32 %v1743, %v1818
      %v1898 = vadd.f32 %v1744, %v1821
      %v1899 = vadd.f32 %v1745, %v1824
      %v1900 = vadd.f32 %v1746, %v1827
      %v1901 = vadd.f32 %v1747, %v1830
      %v1902 = vadd.f32 %v1748, %v1833
      %v1903 = vadd.f32 %v1749, %v1836
      %v1904 = vadd.f32 %v1750, %v1839
      %v1905 = vadd.f32 %v1751, %v1842
      %v1906 = vadd.f32 %v1752, %v1845
      %v1907 = vadd.f32 %v1753, %v1848
      %v1908 = vadd.f32 %v1754, %v1851
      %v1909 = vadd.f32 %v1755, %v1854
      %v1910 = vadd.f32 %v1756, %v1857
      %v1911 = vadd.f32 %v1757, %v1860
      %v1912 = vadd.f32 %v1758, %v1863
      %v1913 = vadd.f32 %v1759, %v1866
      %v1914 = vadd.f32 %v1760, %v1869
      %v1915 = vadd.f32 %v1761, %v1872
      %v1916 = vadd.f32 %v1762, %v1875
      %v1917 = vadd.f32 %v1763, %v1878
      %v1918 = vadd.f32 %v1764, %v1881
      %v1919 = vadd.f32 %v1765, %v1884
      %v1920 = vadd.f32 %v1766, %v1887
      %v1922 = vsel %vm461, %v685, 0
      %v1925 = vsel %vm461, %v686, 0
      %1927 = vmatpush.msra.mxu0 0.0
      %1928 = vmatpush.msra.mxu0 0.0
      %1929 = vmatpush.msra.mxu0 0.0
      %1930 = vmatpush.msra.mxu0 0.0
      %1931 = vmatpush.msra.mxu0 0.0
      %1932 = vmatpush.msra.mxu0 0.0
      %1933 = vmatpush.msra.mxu0 0.0
      %1934 = vmatpush.msra.mxu0 0.0
      %1935 = vmatpush.msra.mxu0 0.0
      %1936 = vmatpush.msra.mxu0 0.0
      %1937 = vmatpush.msra.mxu0 0.0
      %1938 = vmatpush.msra.mxu0 0.0
      %1939 = vmatpush.msra.mxu0 0.0
      %1940 = vmatpush.msra.mxu0 0.0
      %1941 = vmatpush.msra.mxu0 0.0
      %1942 = vmatpush.msra.mxu0 %v555
      %1943 = vmatmul.f32.gmra.mxu0 %v1002
      %v1944 = vpop.f32.mrf.mxu0
      %v1945 = vadd.f32 0.0, %v1944
      %1946 = vmatmul.f32.gmra.mxu0 %v1004
      %v1947 = vpop.f32.mrf.mxu0
      %v1948 = vadd.f32 0.0, %v1947
      %1949 = vmatmul.f32.gmra.mxu0 %v1006
      %v1950 = vpop.f32.mrf.mxu0
      %v1951 = vadd.f32 0.0, %v1950
      %1952 = vmatmul.f32.gmra.mxu0 %v1008
      %v1953 = vpop.f32.mrf.mxu0
      %v1954 = vadd.f32 0.0, %v1953
      %1955 = vmatmul.f32.gmra.mxu0 %v1010
      %v1956 = vpop.f32.mrf.mxu0
      %v1957 = vadd.f32 0.0, %v1956
      %1958 = vmatmul.f32.gmra.mxu0 %v1012
      %v1959 = vpop.f32.mrf.mxu0
      %v1960 = vadd.f32 0.0, %v1959
      %1961 = vmatmul.f32.gmra.mxu0 %v1014
      %v1962 = vpop.f32.mrf.mxu0
      %v1963 = vadd.f32 0.0, %v1962
      %1964 = vmatmul.f32.gmra.mxu0 %v1016
      %v1965 = vpop.f32.mrf.mxu0
      %v1966 = vadd.f32 0.0, %v1965
      %1967 = vmatmul.f32.gmra.mxu0 %v1018
      %v1968 = vpop.f32.mrf.mxu0
      %v1969 = vadd.f32 0.0, %v1968
      %1970 = vmatmul.f32.gmra.mxu0 %v1020
      %v1971 = vpop.f32.mrf.mxu0
      %v1972 = vadd.f32 0.0, %v1971
      %1973 = vmatmul.f32.gmra.mxu0 %v1022
      %v1974 = vpop.f32.mrf.mxu0
      %v1975 = vadd.f32 0.0, %v1974
      %1976 = vmatmul.f32.gmra.mxu0 %v1024
      %v1977 = vpop.f32.mrf.mxu0
      %v1978 = vadd.f32 0.0, %v1977
      %1979 = vmatmul.f32.gmra.mxu0 %v1026
      %v1980 = vpop.f32.mrf.mxu0
      %v1981 = vadd.f32 0.0, %v1980
      %1982 = vmatmul.f32.gmra.mxu0 %v1028
      %v1983 = vpop.f32.mrf.mxu0
      %v1984 = vadd.f32 0.0, %v1983
      %1985 = vmatmul.f32.gmra.mxu0 %v1030
      %v1986 = vpop.f32.mrf.mxu0
      %v1987 = vadd.f32 0.0, %v1986
      %1988 = vmatmul.f32.gmra.mxu0 %v1032
      %v1989 = vpop.f32.mrf.mxu0
      %v1990 = vadd.f32 0.0, %v1989
      %1991 = vmatmul.f32.gmra.mxu0 %v1034
      %v1992 = vpop.f32.mrf.mxu0
      %v1993 = vadd.f32 0.0, %v1992
      %1994 = vmatmul.f32.gmra.mxu0 %v1036
      %v1995 = vpop.f32.mrf.mxu0
      %v1996 = vadd.f32 0.0, %v1995
      %1997 = vmatmul.f32.gmra.mxu0 %v1038
      %v1998 = vpop.f32.mrf.mxu0
      %v1999 = vadd.f32 0.0, %v1998
      %2000 = vmatmul.f32.gmra.mxu0 %v1040
      %v2001 = vpop.f32.mrf.mxu0
      %v2002 = vadd.f32 0.0, %v2001
      %2003 = vmatmul.f32.gmra.mxu0 %v1042
      %v2004 = vpop.f32.mrf.mxu0
      %v2005 = vadd.f32 0.0, %v2004
      %2006 = vmatmul.f32.gmra.mxu0 %v1044
      %v2007 = vpop.f32.mrf.mxu0
      %v2008 = vadd.f32 0.0, %v2007
      %2009 = vmatmul.f32.gmra.mxu0 %v1046
      %v2010 = vpop.f32.mrf.mxu0
      %v2011 = vadd.f32 0.0, %v2010
      %2012 = vmatmul.f32.gmra.mxu0 %v1048
      %v2013 = vpop.f32.mrf.mxu0
      %v2014 = vadd.f32 0.0, %v2013
      %2015 = vmatmul.f32.gmra.mxu0 %v1050
      %v2016 = vpop.f32.mrf.mxu0
      %v2017 = vadd.f32 0.0, %v2016
      %2018 = vmatmul.f32.gmra.mxu0 %v1052
      %v2019 = vpop.f32.mrf.mxu0
      %v2020 = vadd.f32 0.0, %v2019
      %2021 = vmatmul.f32.gmra.mxu0 %v1054
      %v2022 = vpop.f32.mrf.mxu0
      %v2023 = vadd.f32 0.0, %v2022
      %2024 = vmatmul.f32.gmra.mxu0 %v1056
      %v2025 = vpop.f32.mrf.mxu0
      %v2026 = vadd.f32 0.0, %v2025
      %2027 = vmatmul.f32.gmra.mxu0 %v1462
      %v2028 = vpop.f32.mrf.mxu0
      %v2029 = vadd.f32 0.0, %v2028
      %2030 = vmatmul.f32.gmra.mxu0 %v1465
      %v2031 = vpop.f32.mrf.mxu0
      %v2032 = vadd.f32 0.0, %v2031
      %2033 = vmatmul.f32.gmra.mxu0 %v1922
      %v2034 = vpop.f32.mrf.mxu0
      %v2035 = vadd.f32 0.0, %v2034
      %2036 = vmatmul.f32.gmra.mxu0 %v1925
      %v2037 = vpop.f32.mrf.mxu0
      %v2038 = vadd.f32 0.0, %v2037
      %2039 = vdwg.mxu0
      %v2040 = vadd.f32 %v1889, %v1945
      %v2041 = vadd.f32 %v1890, %v1948
      %v2042 = vadd.f32 %v1891, %v1951
      %v2043 = vadd.f32 %v1892, %v1954
      %v2044 = vadd.f32 %v1893, %v1957
      %v2045 = vadd.f32 %v1894, %v1960
      %v2046 = vadd.f32 %v1895, %v1963
      %v2047 = vadd.f32 %v1896, %v1966
      %v2048 = vadd.f32 %v1897, %v1969
      %v2049 = vadd.f32 %v1898, %v1972
      %v2050 = vadd.f32 %v1899, %v1975
      %v2051 = vadd.f32 %v1900, %v1978
      %v2052 = vadd.f32 %v1901, %v1981
      %v2053 = vadd.f32 %v1902, %v1984
      %v2054 = vadd.f32 %v1903, %v1987
      %v2055 = vadd.f32 %v1904, %v1990
      %v2056 = vadd.f32 %v1905, %v1993
      %v2057 = vadd.f32 %v1906, %v1996
      %v2058 = vadd.f32 %v1907, %v1999
      %v2059 = vadd.f32 %v1908, %v2002
      %v2060 = vadd.f32 %v1909, %v2005
      %v2061 = vadd.f32 %v1910, %v2008
      %v2062 = vadd.f32 %v1911, %v2011
      %v2063 = vadd.f32 %v1912, %v2014
      %v2064 = vadd.f32 %v1913, %v2017
      %v2065 = vadd.f32 %v1914, %v2020
      %v2066 = vadd.f32 %v1915, %v2023
      %v2067 = vadd.f32 %v1916, %v2026
      %v2068 = vadd.f32 %v1917, %v2029
      %v2069 = vadd.f32 %v1918, %v2032
      %v2070 = vadd.f32 %v1919, %v2035
      %v2071 = vadd.f32 %v1920, %v2038
      %v2073 = vrot.slane %v685, 1
      %v2074 = vrot.slane %v686, 1
      %v2075 = vsel %vm736, %v2073, %v2074
      %v2076 = vrot.slane %v687, 1
      %v2077 = vsel %vm736, %v2074, %v2076
      %v2078 = vsel %vm461, %v2075, 0
      %v2080 = vsel %vm461, %v2077, 0
      %2082 = vmatpush.msra.mxu0 0.0
      %2083 = vmatpush.msra.mxu0 0.0
      %2084 = vmatpush.msra.mxu0 0.0
      %2085 = vmatpush.msra.mxu0 0.0
      %2086 = vmatpush.msra.mxu0 0.0
      %2087 = vmatpush.msra.mxu0 0.0
      %2088 = vmatpush.msra.mxu0 0.0
      %2089 = vmatpush.msra.mxu0 0.0
      %2090 = vmatpush.msra.mxu0 0.0
      %2091 = vmatpush.msra.mxu0 0.0
      %2092 = vmatpush.msra.mxu0 0.0
      %2093 = vmatpush.msra.mxu0 0.0
      %2094 = vmatpush.msra.mxu0 0.0
      %2095 = vmatpush.msra.mxu0 0.0
      %2096 = vmatpush.msra.mxu0 0.0
      %2097 = vmatpush.msra.mxu0 %v556
      %2098 = vmatmul.f32.gmra.mxu0 %v825
      %v2099 = vpop.f32.mrf.mxu0
      %v2100 = vadd.f32 0.0, %v2099
      %2101 = vmatmul.f32.gmra.mxu0 %v827
      %v2102 = vpop.f32.mrf.mxu0
      %v2103 = vadd.f32 0.0, %v2102
      %2104 = vmatmul.f32.gmra.mxu0 %v829
      %v2105 = vpop.f32.mrf.mxu0
      %v2106 = vadd.f32 0.0, %v2105
      %2107 = vmatmul.f32.gmra.mxu0 %v831
      %v2108 = vpop.f32.mrf.mxu0
      %v2109 = vadd.f32 0.0, %v2108
      %2110 = vmatmul.f32.gmra.mxu0 %v833
      %v2111 = vpop.f32.mrf.mxu0
      %v2112 = vadd.f32 0.0, %v2111
      %2113 = vmatmul.f32.gmra.mxu0 %v835
      %v2114 = vpop.f32.mrf.mxu0
      %v2115 = vadd.f32 0.0, %v2114
      %2116 = vmatmul.f32.gmra.mxu0 %v837
      %v2117 = vpop.f32.mrf.mxu0
      %v2118 = vadd.f32 0.0, %v2117
      %2119 = vmatmul.f32.gmra.mxu0 %v839
      %v2120 = vpop.f32.mrf.mxu0
      %v2121 = vadd.f32 0.0, %v2120
      %2122 = vmatmul.f32.gmra.mxu0 %v841
      %v2123 = vpop.f32.mrf.mxu0
      %v2124 = vadd.f32 0.0, %v2123
      %2125 = vmatmul.f32.gmra.mxu0 %v843
      %v2126 = vpop.f32.mrf.mxu0
      %v2127 = vadd.f32 0.0, %v2126
      %2128 = vmatmul.f32.gmra.mxu0 %v845
      %v2129 = vpop.f32.mrf.mxu0
      %v2130 = vadd.f32 0.0, %v2129
      %2131 = vmatmul.f32.gmra.mxu0 %v847
      %v2132 = vpop.f32.mrf.mxu0
      %v2133 = vadd.f32 0.0, %v2132
      %2134 = vmatmul.f32.gmra.mxu0 %v849
      %v2135 = vpop.f32.mrf.mxu0
      %v2136 = vadd.f32 0.0, %v2135
      %2137 = vmatmul.f32.gmra.mxu0 %v851
      %v2138 = vpop.f32.mrf.mxu0
      %v2139 = vadd.f32 0.0, %v2138
      %2140 = vmatmul.f32.gmra.mxu0 %v853
      %v2141 = vpop.f32.mrf.mxu0
      %v2142 = vadd.f32 0.0, %v2141
      %2143 = vmatmul.f32.gmra.mxu0 %v855
      %v2144 = vpop.f32.mrf.mxu0
      %v2145 = vadd.f32 0.0, %v2144
      %2146 = vmatmul.f32.gmra.mxu0 %v857
      %v2147 = vpop.f32.mrf.mxu0
      %v2148 = vadd.f32 0.0, %v2147
      %2149 = vmatmul.f32.gmra.mxu0 %v859
      %v2150 = vpop.f32.mrf.mxu0
      %v2151 = vadd.f32 0.0, %v2150
      %2152 = vmatmul.f32.gmra.mxu0 %v861
      %v2153 = vpop.f32.mrf.mxu0
      %v2154 = vadd.f32 0.0, %v2153
      %2155 = vmatmul.f32.gmra.mxu0 %v863
      %v2156 = vpop.f32.mrf.mxu0
      %v2157 = vadd.f32 0.0, %v2156
      %2158 = vmatmul.f32.gmra.mxu0 %v865
      %v2159 = vpop.f32.mrf.mxu0
      %v2160 = vadd.f32 0.0, %v2159
      %2161 = vmatmul.f32.gmra.mxu0 %v867
      %v2162 = vpop.f32.mrf.mxu0
      %v2163 = vadd.f32 0.0, %v2162
      %2164 = vmatmul.f32.gmra.mxu0 %v869
      %v2165 = vpop.f32.mrf.mxu0
      %v2166 = vadd.f32 0.0, %v2165
      %2167 = vmatmul.f32.gmra.mxu0 %v871
      %v2168 = vpop.f32.mrf.mxu0
      %v2169 = vadd.f32 0.0, %v2168
      %2170 = vmatmul.f32.gmra.mxu0 %v873
      %v2171 = vpop.f32.mrf.mxu0
      %v2172 = vadd.f32 0.0, %v2171
      %2173 = vmatmul.f32.gmra.mxu0 %v875
      %v2174 = vpop.f32.mrf.mxu0
      %v2175 = vadd.f32 0.0, %v2174
      %2176 = vmatmul.f32.gmra.mxu0 %v877
      %v2177 = vpop.f32.mrf.mxu0
      %v2178 = vadd.f32 0.0, %v2177
      %2179 = vmatmul.f32.gmra.mxu0 %v879
      %v2180 = vpop.f32.mrf.mxu0
      %v2181 = vadd.f32 0.0, %v2180
      %2182 = vmatmul.f32.gmra.mxu0 %v1618
      %v2183 = vpop.f32.mrf.mxu0
      %v2184 = vadd.f32 0.0, %v2183
      %2185 = vmatmul.f32.gmra.mxu0 %v1620
      %v2186 = vpop.f32.mrf.mxu0
      %v2187 = vadd.f32 0.0, %v2186
      %2188 = vmatmul.f32.gmra.mxu0 %v2078
      %v2189 = vpop.f32.mrf.mxu0
      %v2190 = vadd.f32 0.0, %v2189
      %2191 = vmatmul.f32.gmra.mxu0 %v2080
      %v2192 = vpop.f32.mrf.mxu0
      %v2193 = vadd.f32 0.0, %v2192
      %2194 = vdwg.mxu0
      %v2195 = vadd.f32 %v2040, %v2100
      %v2196 = vadd.f32 %v2041, %v2103
      %v2197 = vadd.f32 %v2042, %v2106
      %v2198 = vadd.f32 %v2043, %v2109
      %v2199 = vadd.f32 %v2044, %v2112
      %v2200 = vadd.f32 %v2045, %v2115
      %v2201 = vadd.f32 %v2046, %v2118
      %v2202 = vadd.f32 %v2047, %v2121
      %v2203 = vadd.f32 %v2048, %v2124
      %v2204 = vadd.f32 %v2049, %v2127
      %v2205 = vadd.f32 %v2050, %v2130
      %v2206 = vadd.f32 %v2051, %v2133
      %v2207 = vadd.f32 %v2052, %v2136
      %v2208 = vadd.f32 %v2053, %v2139
      %v2209 = vadd.f32 %v2054, %v2142
      %v2210 = vadd.f32 %v2055, %v2145
      %v2211 = vadd.f32 %v2056, %v2148
      %v2212 = vadd.f32 %v2057, %v2151
      %v2213 = vadd.f32 %v2058, %v2154
      %v2214 = vadd.f32 %v2059, %v2157
      %v2215 = vadd.f32 %v2060, %v2160
      %v2216 = vadd.f32 %v2061, %v2163
      %v2217 = vadd.f32 %v2062, %v2166
      %v2218 = vadd.f32 %v2063, %v2169
      %v2219 = vadd.f32 %v2064, %v2172
      %v2220 = vadd.f32 %v2065, %v2175
      %v2221 = vadd.f32 %v2066, %v2178
      %v2222 = vadd.f32 %v2067, %v2181
      %v2223 = vadd.f32 %v2068, %v2184
      %v2224 = vadd.f32 %v2069, %v2187
      %v2225 = vadd.f32 %v2070, %v2190
      %v2226 = vadd.f32 %v2071, %v2193
      %v2227 = vrot.slane %v685, 2
      %v2228 = vrot.slane %v686, 2
      %v2229 = vsel %vm1171, %v2227, %v2228
      %v2230 = vrot.slane %v687, 2
      %v2231 = vsel %vm1171, %v2228, %v2230
      %v2232 = vsel %vm461, %v2229, 0
      %v2234 = vsel %vm461, %v2231, 0
      %2236 = vmatpush.msra.mxu0 0.0
      %2237 = vmatpush.msra.mxu0 0.0
      %2238 = vmatpush.msra.mxu0 0.0
      %2239 = vmatpush.msra.mxu0 0.0
      %2240 = vmatpush.msra.mxu0 0.0
      %2241 = vmatpush.msra.mxu0 0.0
      %2242 = vmatpush.msra.mxu0 0.0
      %2243 = vmatpush.msra.mxu0 0.0
      %2244 = vmatpush.msra.mxu0 0.0
      %2245 = vmatpush.msra.mxu0 0.0
      %2246 = vmatpush.msra.mxu0 0.0
      %2247 = vmatpush.msra.mxu0 0.0
      %2248 = vmatpush.msra.mxu0 0.0
      %2249 = vmatpush.msra.mxu0 0.0
      %2250 = vmatpush.msra.mxu0 0.0
      %2251 = vmatpush.msra.mxu0 %v557
      %2252 = vmatmul.f32.gmra.mxu0 %v1260
      %v2253 = vpop.f32.mrf.mxu0
      %v2254 = vadd.f32 0.0, %v2253
      %2255 = vmatmul.f32.gmra.mxu0 %v1262
      %v2256 = vpop.f32.mrf.mxu0
      %v2257 = vadd.f32 0.0, %v2256
      %2258 = vmatmul.f32.gmra.mxu0 %v1264
      %v2259 = vpop.f32.mrf.mxu0
      %v2260 = vadd.f32 0.0, %v2259
      %2261 = vmatmul.f32.gmra.mxu0 %v1266
      %v2262 = vpop.f32.mrf.mxu0
      %v2263 = vadd.f32 0.0, %v2262
      %2264 = vmatmul.f32.gmra.mxu0 %v1268
      %v2265 = vpop.f32.mrf.mxu0
      %v2266 = vadd.f32 0.0, %v2265
      %2267 = vmatmul.f32.gmra.mxu0 %v1270
      %v2268 = vpop.f32.mrf.mxu0
      %v2269 = vadd.f32 0.0, %v2268
      %2270 = vmatmul.f32.gmra.mxu0 %v1272
      %v2271 = vpop.f32.mrf.mxu0
      %v2272 = vadd.f32 0.0, %v2271
      %2273 = vmatmul.f32.gmra.mxu0 %v1274
      %v2274 = vpop.f32.mrf.mxu0
      %v2275 = vadd.f32 0.0, %v2274
      %2276 = vmatmul.f32.gmra.mxu0 %v1276
      %v2277 = vpop.f32.mrf.mxu0
      %v2278 = vadd.f32 0.0, %v2277
      %2279 = vmatmul.f32.gmra.mxu0 %v1278
      %v2280 = vpop.f32.mrf.mxu0
      %v2281 = vadd.f32 0.0, %v2280
      %2282 = vmatmul.f32.gmra.mxu0 %v1280
      %v2283 = vpop.f32.mrf.mxu0
      %v2284 = vadd.f32 0.0, %v2283
      %2285 = vmatmul.f32.gmra.mxu0 %v1282
      %v2286 = vpop.f32.mrf.mxu0
      %v2287 = vadd.f32 0.0, %v2286
      %2288 = vmatmul.f32.gmra.mxu0 %v1284
      %v2289 = vpop.f32.mrf.mxu0
      %v2290 = vadd.f32 0.0, %v2289
      %2291 = vmatmul.f32.gmra.mxu0 %v1286
      %v2292 = vpop.f32.mrf.mxu0
      %v2293 = vadd.f32 0.0, %v2292
      %2294 = vmatmul.f32.gmra.mxu0 %v1288
      %v2295 = vpop.f32.mrf.mxu0
      %v2296 = vadd.f32 0.0, %v2295
      %2297 = vmatmul.f32.gmra.mxu0 %v1290
      %v2298 = vpop.f32.mrf.mxu0
      %v2299 = vadd.f32 0.0, %v2298
      %2300 = vmatmul.f32.gmra.mxu0 %v1292
      %v2301 = vpop.f32.mrf.mxu0
      %v2302 = vadd.f32 0.0, %v2301
      %2303 = vmatmul.f32.gmra.mxu0 %v1294
      %v2304 = vpop.f32.mrf.mxu0
      %v2305 = vadd.f32 0.0, %v2304
      %2306 = vmatmul.f32.gmra.mxu0 %v1296
      %v2307 = vpop.f32.mrf.mxu0
      %v2308 = vadd.f32 0.0, %v2307
      %2309 = vmatmul.f32.gmra.mxu0 %v1298
      %v2310 = vpop.f32.mrf.mxu0
      %v2311 = vadd.f32 0.0, %v2310
      %2312 = vmatmul.f32.gmra.mxu0 %v1300
      %v2313 = vpop.f32.mrf.mxu0
      %v2314 = vadd.f32 0.0, %v2313
      %2315 = vmatmul.f32.gmra.mxu0 %v1302
      %v2316 = vpop.f32.mrf.mxu0
      %v2317 = vadd.f32 0.0, %v2316
      %2318 = vmatmul.f32.gmra.mxu0 %v1304
      %v2319 = vpop.f32.mrf.mxu0
      %v2320 = vadd.f32 0.0, %v2319
      %2321 = vmatmul.f32.gmra.mxu0 %v1306
      %v2322 = vpop.f32.mrf.mxu0
      %v2323 = vadd.f32 0.0, %v2322
      %2324 = vmatmul.f32.gmra.mxu0 %v1308
      %v2325 = vpop.f32.mrf.mxu0
      %v2326 = vadd.f32 0.0, %v2325
      %2327 = vmatmul.f32.gmra.mxu0 %v1310
      %v2328 = vpop.f32.mrf.mxu0
      %v2329 = vadd.f32 0.0, %v2328
      %2330 = vmatmul.f32.gmra.mxu0 %v1312
      %v2331 = vpop.f32.mrf.mxu0
      %v2332 = vadd.f32 0.0, %v2331
      %2333 = vmatmul.f32.gmra.mxu0 %v1314
      %v2334 = vpop.f32.mrf.mxu0
      %v2335 = vadd.f32 0.0, %v2334
      %2336 = vmatmul.f32.gmra.mxu0 %v1772
      %v2337 = vpop.f32.mrf.mxu0
      %v2338 = vadd.f32 0.0, %v2337
      %2339 = vmatmul.f32.gmra.mxu0 %v1774
      %v2340 = vpop.f32.mrf.mxu0
      %v2341 = vadd.f32 0.0, %v2340
      %2342 = vmatmul.f32.gmra.mxu0 %v2232
      %v2343 = vpop.f32.mrf.mxu0
      %v2344 = vadd.f32 0.0, %v2343
      %2345 = vmatmul.f32.gmra.mxu0 %v2234
      %v2346 = vpop.f32.mrf.mxu0
      %v2347 = vadd.f32 0.0, %v2346
      %2348 = vdwg.mxu0
      %v2349 = vadd.f32 %v2195, %v2254
      %v2350 = vadd.f32 %v2196, %v2257
      %v2351 = vadd.f32 %v2197, %v2260
      %v2352 = vadd.f32 %v2198, %v2263
      %v2353 = vadd.f32 %v2199, %v2266
      %v2354 = vadd.f32 %v2200, %v2269
      %v2355 = vadd.f32 %v2201, %v2272
      %v2356 = vadd.f32 %v2202, %v2275
      %v2357 = vadd.f32 %v2203, %v2278
      %v2358 = vadd.f32 %v2204, %v2281
      %v2359 = vadd.f32 %v2205, %v2284
      %v2360 = vadd.f32 %v2206, %v2287
      %v2361 = vadd.f32 %v2207, %v2290
      %v2362 = vadd.f32 %v2208, %v2293
      %v2363 = vadd.f32 %v2209, %v2296
      %v2364 = vadd.f32 %v2210, %v2299
      %v2365 = vadd.f32 %v2211, %v2302
      %v2366 = vadd.f32 %v2212, %v2305
      %v2367 = vadd.f32 %v2213, %v2308
      %v2368 = vadd.f32 %v2214, %v2311
      %v2369 = vadd.f32 %v2215, %v2314
      %v2370 = vadd.f32 %v2216, %v2317
      %v2371 = vadd.f32 %v2217, %v2320
      %v2372 = vadd.f32 %v2218, %v2323
      %v2373 = vadd.f32 %v2219, %v2326
      %v2374 = vadd.f32 %v2220, %v2329
      %v2375 = vadd.f32 %v2221, %v2332
      %v2376 = vadd.f32 %v2222, %v2335
      %v2377 = vadd.f32 %v2223, %v2338
      %v2378 = vadd.f32 %v2224, %v2341
      %v2379 = vadd.f32 %v2225, %v2344
      %v2380 = vadd.f32 %v2226, %v2347
      %v2382 = vperm.slane %v558, 0
      %v2384 = vadd.f32 %v2349, %v2382
      %v2385 = vadd.f32 %v2350, %v2382
      %v2386 = vadd.f32 %v2351, %v2382
      %v2387 = vadd.f32 %v2352, %v2382
      %v2388 = vadd.f32 %v2353, %v2382
      %v2389 = vadd.f32 %v2354, %v2382
      %v2390 = vadd.f32 %v2355, %v2382
      %v2391 = vadd.f32 %v2356, %v2382
      %v2392 = vadd.f32 %v2357, %v2382
      %v2393 = vadd.f32 %v2358, %v2382
      %v2394 = vadd.f32 %v2359, %v2382
      %v2395 = vadd.f32 %v2360, %v2382
      %v2396 = vadd.f32 %v2361, %v2382
      %v2397 = vadd.f32 %v2362, %v2382
      %v2398 = vadd.f32 %v2363, %v2382
      %v2399 = vadd.f32 %v2364, %v2382
      %v2400 = vadd.f32 %v2365, %v2382
      %v2401 = vadd.f32 %v2366, %v2382
      %v2402 = vadd.f32 %v2367, %v2382
      %v2403 = vadd.f32 %v2368, %v2382
      %v2404 = vadd.f32 %v2369, %v2382
      %v2405 = vadd.f32 %v2370, %v2382
      %v2406 = vadd.f32 %v2371, %v2382
      %v2407 = vadd.f32 %v2372, %v2382
      %v2408 = vadd.f32 %v2373, %v2382
      %v2409 = vadd.f32 %v2374, %v2382
      %v2410 = vadd.f32 %v2375, %v2382
      %v2411 = vadd.f32 %v2376, %v2382
      %v2412 = vadd.f32 %v2377, %v2382
      %v2413 = vadd.f32 %v2378, %v2382
      %v2414 = vadd.f32 %v2379, %v2382
      %v2415 = vadd.f32 %v2380, %v2382
      %v2416 = vmax.f32 %v2384, 0.0
      %v2417 = vmax.f32 %v2385, 0.0
      %v2418 = vmax.f32 %v2386, 0.0
      %v2419 = vmax.f32 %v2387, 0.0
      %v2420 = vmax.f32 %v2388, 0.0
      %v2421 = vmax.f32 %v2389, 0.0
      %v2422 = vmax.f32 %v2390, 0.0
      %v2423 = vmax.f32 %v2391, 0.0
      %v2424 = vmax.f32 %v2392, 0.0
      %v2425 = vmax.f32 %v2393, 0.0
      %v2426 = vmax.f32 %v2394, 0.0
      %v2427 = vmax.f32 %v2395, 0.0
      %v2428 = vmax.f32 %v2396, 0.0
      %v2429 = vmax.f32 %v2397, 0.0
      %v2430 = vmax.f32 %v2398, 0.0
      %v2431 = vmax.f32 %v2399, 0.0
      %v2432 = vmax.f32 %v2400, 0.0
      %v2433 = vmax.f32 %v2401, 0.0
      %v2434 = vmax.f32 %v2402, 0.0
      %v2435 = vmax.f32 %v2403, 0.0
      %v2436 = vmax.f32 %v2404, 0.0
      %v2437 = vmax.f32 %v2405, 0.0
      %v2438 = vmax.f32 %v2406, 0.0
      %v2439 = vmax.f32 %v2407, 0.0
      %v2440 = vmax.f32 %v2408, 0.0
      %v2441 = vmax.f32 %v2409, 0.0
      %v2442 = vmax.f32 %v2410, 0.0
      %v2443 = vmax.f32 %v2411, 0.0
      %v2444 = vmax.f32 %v2412, 0.0
      %v2445 = vmax.f32 %v2413, 0.0
      %v2446 = vmax.f32 %v2414, 0.0
      %v2447 = vmax.f32 %v2415, 0.0
      %2448 = vst.msk [vmem:[%s601 + $0x1] sm:$0xff] %vm461, %v2416
      %2449 = vst.msk [vmem:[%s601 + $0x9] sm:$0xff] %vm461, %v2417
      %2450 = vst.msk [vmem:[%s601 + $0x19] sm:$0xff] %vm461, %v2418
      %2451 = vst.msk [vmem:[%s601 + $0x21] sm:$0xff] %vm461, %v2419
      %2452 = vst.msk [vmem:[%s601 + $0x31] sm:$0xff] %vm461, %v2420
      %2453 = vst.msk [vmem:[%s601 + $0x39] sm:$0xff] %vm461, %v2421
      %2454 = vst.msk [vmem:[%s601 + $0x49] sm:$0xff] %vm461, %v2422
      %2455 = vst.msk [vmem:[%s601 + $0x51] sm:$0xff] %vm461, %v2423
      %2456 = vst.msk [vmem:[%s601 + $0x61] sm:$0xff] %vm461, %v2424
      %2457 = vst.msk [vmem:[%s601 + $0x69] sm:$0xff] %vm461, %v2425
      %2458 = vst.msk [vmem:[%s601 + $0x79] sm:$0xff] %vm461, %v2426
      %2459 = vst.msk [vmem:[%s601 + $0x81] sm:$0xff] %vm461, %v2427
      %2460 = vst.msk [vmem:[%s601 + $0x91] sm:$0xff] %vm461, %v2428
      %2461 = vst.msk [vmem:[%s601 + $0x99] sm:$0xff] %vm461, %v2429
      %2462 = vst.msk [vmem:[%s601 + $0xa9] sm:$0xff] %vm461, %v2430
      %2463 = vst.msk [vmem:[%s601 + $0xb1] sm:$0xff] %vm461, %v2431
      %2464 = vst.msk [vmem:[%s601 + $0xc1] sm:$0xff] %vm461, %v2432
      %2465 = vst.msk [vmem:[%s601 + $0xc9] sm:$0xff] %vm461, %v2433
      %2466 = vst.msk [vmem:[%s601 + $0xd9] sm:$0xff] %vm461, %v2434
      %2467 = vst.msk [vmem:[%s601 + $0xe1] sm:$0xff] %vm461, %v2435
      %2468 = vst.msk [vmem:[%s601 + $0xf1] sm:$0xff] %vm461, %v2436
      %2469 = vst.msk [vmem:[%s601 + $0xf9] sm:$0xff] %vm461, %v2437
      %2470 = vst.msk [vmem:[%s601 + $0x109] sm:$0xff] %vm461, %v2438
      %2471 = vst.msk [vmem:[%s601 + $0x111] sm:$0xff] %vm461, %v2439
      %2472 = vst.msk [vmem:[%s601 + $0x121] sm:$0xff] %vm461, %v2440
      %2473 = vst.msk [vmem:[%s601 + $0x129] sm:$0xff] %vm461, %v2441
      %2474 = vst.msk [vmem:[%s601 + $0x139] sm:$0xff] %vm461, %v2442
      %2475 = vst.msk [vmem:[%s601 + $0x141] sm:$0xff] %vm461, %v2443
      %2476 = vst.msk [vmem:[%s601 + $0x151] sm:$0xff] %vm461, %v2444
      %2477 = vst.msk [vmem:[%s601 + $0x159] sm:$0xff] %vm461, %v2445
      %2478 = vst.msk [vmem:[%s601 + $0x169] sm:$0xff] %vm461, %v2446
      %2479 = vst.msk [vmem:[%s601 + $0x171] sm:$0xff] %vm461, %v2447
      %v2480 = vld [vmem:[#allocation2] sm:$0xff]
      %v2481 = vld [vmem:[#allocation2 + $0x8] sm:$0xff]
      %v2482 = vld [vmem:[#allocation2 + $0x10] sm:$0x3]
      %v2483 = vld [vmem:[#allocation2 + $0x18] sm:$0xff]
      %v2484 = vld [vmem:[#allocation2 + $0x20] sm:$0xff]
      %v2485 = vld [vmem:[#allocation2 + $0x28] sm:$0x3]
      %v2486 = vld [vmem:[#allocation2 + $0x30] sm:$0xff]
      %v2487 = vld [vmem:[#allocation2 + $0x38] sm:$0xff]
      %v2488 = vld [vmem:[#allocation2 + $0x40] sm:$0x3]
      %v2489 = vld [vmem:[#allocation2 + $0x48] sm:$0xff]
      %v2490 = vld [vmem:[#allocation2 + $0x50] sm:$0xff]
      %v2491 = vld [vmem:[#allocation2 + $0x58] sm:$0x3]
      %v2492 = vld [vmem:[#allocation2 + $0x60] sm:$0xff]
      %v2493 = vld [vmem:[#allocation2 + $0x68] sm:$0xff]
      %v2494 = vld [vmem:[#allocation2 + $0x70] sm:$0x3]
      %v2495 = vld [vmem:[#allocation2 + $0x78] sm:$0xff]
      %v2496 = vld [vmem:[#allocation2 + $0x80] sm:$0xff]
      %v2497 = vld [vmem:[#allocation2 + $0x88] sm:$0x3]
      %v2498 = vld [vmem:[#allocation2 + $0x90] sm:$0xff]
      %v2499 = vld [vmem:[#allocation2 + $0x98] sm:$0xff]
      %v2500 = vld [vmem:[#allocation2 + $0xa0] sm:$0x3]
      %v2501 = vld [vmem:[#allocation2 + $0xa8] sm:$0xff]
      %v2502 = vld [vmem:[#allocation2 + $0xb0] sm:$0xff]
      %v2503 = vld [vmem:[#allocation2 + $0xb8] sm:$0x3]
      %v2504 = vld [vmem:[#allocation2 + $0xc0] sm:$0xff]
      %v2505 = vld [vmem:[#allocation2 + $0xc8] sm:$0xff]
      %v2506 = vld [vmem:[#allocation2 + $0xd0] sm:$0x3]
      %v2507 = vld [vmem:[#allocation2 + $0xd8] sm:$0xff]
      %v2508 = vld [vmem:[#allocation2 + $0xe0] sm:$0xff]
      %v2509 = vld [vmem:[#allocation2 + $0xe8] sm:$0x3]
      %v2510 = vld [vmem:[#allocation2 + $0xf0] sm:$0xff]
      %v2511 = vld [vmem:[#allocation2 + $0xf8] sm:$0xff]
      %v2512 = vld [vmem:[#allocation2 + $0x100] sm:$0x3]
      %v2513 = vld [vmem:[#allocation2 + $0x108] sm:$0xff]
      %v2514 = vld [vmem:[#allocation2 + $0x110] sm:$0xff]
      %v2515 = vld [vmem:[#allocation2 + $0x118] sm:$0x3]
      %v2516 = vld [vmem:[#allocation2 + $0x120] sm:$0xff]
      %v2517 = vld [vmem:[#allocation2 + $0x128] sm:$0xff]
      %v2518 = vld [vmem:[#allocation2 + $0x130] sm:$0x3]
      %v2519 = vld [vmem:[#allocation2 + $0x138] sm:$0xff]
      %v2520 = vld [vmem:[#allocation2 + $0x140] sm:$0xff]
      %v2521 = vld [vmem:[#allocation2 + $0x148] sm:$0x3]
      %v2522 = vld [vmem:[#allocation2 + $0x150] sm:$0xff]
      %v2523 = vld [vmem:[#allocation2 + $0x158] sm:$0xff]
      %v2524 = vld [vmem:[#allocation2 + $0x160] sm:$0x3]
      %v2525 = vld [vmem:[#allocation2 + $0x168] sm:$0xff]
      %v2526 = vld [vmem:[#allocation2 + $0x170] sm:$0xff]
      %v2527 = vld [vmem:[#allocation2 + $0x178] sm:$0x3]
      %v2528 = vld [vmem:[#allocation2 + $0x180] sm:$0xff]
      %v2529 = vld [vmem:[#allocation2 + $0x188] sm:$0xff]
      %v2530 = vld [vmem:[#allocation2 + $0x190] sm:$0x3]
      %v2531 = vld [vmem:[#allocation2 + $0x198] sm:$0xff]
      %v2532 = vld [vmem:[#allocation2 + $0x1a0] sm:$0xff]
      %v2533 = vld [vmem:[#allocation2 + $0x1a8] sm:$0x3]
      %v2582 = vrot.slane %v2480, 1
      %v2583 = vrot.slane %v2481, 1
      %v2584 = vsel %vm736, %v2582, %v2583
      %v2585 = vrot.slane %v2482, 1
      %v2586 = vsel %vm736, %v2583, %v2585
      %v2587 = vrot.slane %v2483, 1
      %v2588 = vrot.slane %v2484, 1
      %v2589 = vsel %vm736, %v2587, %v2588
      %v2590 = vrot.slane %v2485, 1
      %v2591 = vsel %vm736, %v2588, %v2590
      %v2592 = vrot.slane %v2486, 1
      %v2593 = vrot.slane %v2487, 1
      %v2594 = vsel %vm736, %v2592, %v2593
      %v2595 = vrot.slane %v2488, 1
      %v2596 = vsel %vm736, %v2593, %v2595
      %v2597 = vrot.slane %v2489, 1
      %v2598 = vrot.slane %v2490, 1
      %v2599 = vsel %vm736, %v2597, %v2598
      %v2600 = vrot.slane %v2491, 1
      %v2601 = vsel %vm736, %v2598, %v2600
      %v2602 = vrot.slane %v2492, 1
      %v2603 = vrot.slane %v2493, 1
      %v2604 = vsel %vm736, %v2602, %v2603
      %v2605 = vrot.slane %v2494, 1
      %v2606 = vsel %vm736, %v2603, %v2605
      %v2607 = vrot.slane %v2495, 1
      %v2608 = vrot.slane %v2496, 1
      %v2609 = vsel %vm736, %v2607, %v2608
      %v2610 = vrot.slane %v2497, 1
      %v2611 = vsel %vm736, %v2608, %v2610
      %v2612 = vrot.slane %v2498, 1
      %v2613 = vrot.slane %v2499, 1
      %v2614 = vsel %vm736, %v2612, %v2613
      %v2615 = vrot.slane %v2500, 1
      %v2616 = vsel %vm736, %v2613, %v2615
      %v2617 = vrot.slane %v2501, 1
      %v2618 = vrot.slane %v2502, 1
      %v2619 = vsel %vm736, %v2617, %v2618
      %v2620 = vrot.slane %v2503, 1
      %v2621 = vsel %vm736, %v2618, %v2620
      %v2622 = vrot.slane %v2504, 1
      %v2623 = vrot.slane %v2505, 1
      %v2624 = vsel %vm736, %v2622, %v2623
      %v2625 = vrot.slane %v2506, 1
      %v2626 = vsel %vm736, %v2623, %v2625
      %v2627 = vrot.slane %v2507, 1
      %v2628 = vrot.slane %v2508, 1
      %v2629 = vsel %vm736, %v2627, %v2628
      %v2630 = vrot.slane %v2509, 1
      %v2631 = vsel %vm736, %v2628, %v2630
      %v2632 = vrot.slane %v2510, 1
      %v2633 = vrot.slane %v2511, 1
      %v2634 = vsel %vm736, %v2632, %v2633
      %v2635 = vrot.slane %v2512, 1
      %v2636 = vsel %vm736, %v2633, %v2635
      %v2637 = vrot.slane %v2513, 1
      %v2638 = vrot.slane %v2514, 1
      %v2639 = vsel %vm736, %v2637, %v2638
      %v2640 = vrot.slane %v2515, 1
      %v2641 = vsel %vm736, %v2638, %v2640
      %v2642 = vrot.slane %v2516, 1
      %v2643 = vrot.slane %v2517, 1
      %v2644 = vsel %vm736, %v2642, %v2643
      %v2645 = vrot.slane %v2518, 1
      %v2646 = vsel %vm736, %v2643, %v2645
      %v2647 = vrot.slane %v2519, 1
      %v2648 = vrot.slane %v2520, 1
      %v2649 = vsel %vm736, %v2647, %v2648
      %v2650 = vrot.slane %v2521, 1
      %v2651 = vsel %vm736, %v2648, %v2650
      %v2652 = vrot.slane %v2522, 1
      %v2653 = vrot.slane %v2523, 1
      %v2654 = vsel %vm736, %v2652, %v2653
      %v2655 = vrot.slane %v2524, 1
      %v2656 = vsel %vm736, %v2653, %v2655
      %v2657 = vrot.slane %v2525, 1
      %v2658 = vrot.slane %v2526, 1
      %v2659 = vsel %vm736, %v2657, %v2658
      %v2660 = vrot.slane %v2527, 1
      %v2661 = vsel %vm736, %v2658, %v2660
      %v2662 = vsel %vm461, %v2584, 0
      %v2664 = vsel %vm461, %v2586, 0
      %v2666 = vsel %vm461, %v2589, 0
      %v2668 = vsel %vm461, %v2591, 0
      %v2670 = vsel %vm461, %v2594, 0
      %v2672 = vsel %vm461, %v2596, 0
      %v2674 = vsel %vm461, %v2599, 0
      %v2676 = vsel %vm461, %v2601, 0
      %v2678 = vsel %vm461, %v2604, 0
      %v2680 = vsel %vm461, %v2606, 0
      %v2682 = vsel %vm461, %v2609, 0
      %v2684 = vsel %vm461, %v2611, 0
      %v2686 = vsel %vm461, %v2614, 0
      %v2688 = vsel %vm461, %v2616, 0
      %v2690 = vsel %vm461, %v2619, 0
      %v2692 = vsel %vm461, %v2621, 0
      %v2694 = vsel %vm461, %v2624, 0
      %v2696 = vsel %vm461, %v2626, 0
      %v2698 = vsel %vm461, %v2629, 0
      %v2700 = vsel %vm461, %v2631, 0
      %v2702 = vsel %vm461, %v2634, 0
      %v2704 = vsel %vm461, %v2636, 0
      %v2706 = vsel %vm461, %v2639, 0
      %v2708 = vsel %vm461, %v2641, 0
      %v2710 = vsel %vm461, %v2644, 0
      %v2712 = vsel %vm461, %v2646, 0
      %v2714 = vsel %vm461, %v2649, 0
      %v2716 = vsel %vm461, %v2651, 0
      %v2718 = vsel %vm461, %v2654, 0
      %v2720 = vsel %vm461, %v2656, 0
      %v2722 = vsel %vm461, %v2659, 0
      %v2724 = vsel %vm461, %v2661, 0
      %2726 = vmatpush.msra.mxu0 0.0
      %2727 = vmatpush.msra.mxu0 0.0
      %2728 = vmatpush.msra.mxu0 0.0
      %2729 = vmatpush.msra.mxu0 0.0
      %2730 = vmatpush.msra.mxu0 0.0
      %2731 = vmatpush.msra.mxu0 0.0
      %2732 = vmatpush.msra.mxu0 0.0
      %2733 = vmatpush.msra.mxu0 0.0
      %2734 = vmatpush.msra.mxu0 0.0
      %2735 = vmatpush.msra.mxu0 0.0
      %2736 = vmatpush.msra.mxu0 0.0
      %2737 = vmatpush.msra.mxu0 0.0
      %2738 = vmatpush.msra.mxu0 0.0
      %2739 = vmatpush.msra.mxu0 0.0
      %2740 = vmatpush.msra.mxu0 0.0
      %2741 = vmatpush.msra.mxu0 %v560
      %2742 = vmatmul.f32.gmra.mxu0 %v2662
      %v2743 = vpop.f32.mrf.mxu0
      %v2744 = vadd.f32 0.0, %v2743
      %2745 = vmatmul.f32.gmra.mxu0 %v2664
      %v2746 = vpop.f32.mrf.mxu0
      %v2747 = vadd.f32 0.0, %v2746
      %2748 = vmatmul.f32.gmra.mxu0 %v2666
      %v2749 = vpop.f32.mrf.mxu0
      %v2750 = vadd.f32 0.0, %v2749
      %2751 = vmatmul.f32.gmra.mxu0 %v2668
      %v2752 = vpop.f32.mrf.mxu0
      %v2753 = vadd.f32 0.0, %v2752
      %2754 = vmatmul.f32.gmra.mxu0 %v2670
      %v2755 = vpop.f32.mrf.mxu0
      %v2756 = vadd.f32 0.0, %v2755
      %2757 = vmatmul.f32.gmra.mxu0 %v2672
      %v2758 = vpop.f32.mrf.mxu0
      %v2759 = vadd.f32 0.0, %v2758
      %2760 = vmatmul.f32.gmra.mxu0 %v2674
      %v2761 = vpop.f32.mrf.mxu0
      %v2762 = vadd.f32 0.0, %v2761
      %2763 = vmatmul.f32.gmra.mxu0 %v2676
      %v2764 = vpop.f32.mrf.mxu0
      %v2765 = vadd.f32 0.0, %v2764
      %2766 = vmatmul.f32.gmra.mxu0 %v2678
      %v2767 = vpop.f32.mrf.mxu0
      %v2768 = vadd.f32 0.0, %v2767
      %2769 = vmatmul.f32.gmra.mxu0 %v2680
      %v2770 = vpop.f32.mrf.mxu0
      %v2771 = vadd.f32 0.0, %v2770
      %2772 = vmatmul.f32.gmra.mxu0 %v2682
      %v2773 = vpop.f32.mrf.mxu0
      %v2774 = vadd.f32 0.0, %v2773
      %2775 = vmatmul.f32.gmra.mxu0 %v2684
      %v2776 = vpop.f32.mrf.mxu0
      %v2777 = vadd.f32 0.0, %v2776
      %2778 = vmatmul.f32.gmra.mxu0 %v2686
      %v2779 = vpop.f32.mrf.mxu0
      %v2780 = vadd.f32 0.0, %v2779
      %2781 = vmatmul.f32.gmra.mxu0 %v2688
      %v2782 = vpop.f32.mrf.mxu0
      %v2783 = vadd.f32 0.0, %v2782
      %2784 = vmatmul.f32.gmra.mxu0 %v2690
      %v2785 = vpop.f32.mrf.mxu0
      %v2786 = vadd.f32 0.0, %v2785
      %2787 = vmatmul.f32.gmra.mxu0 %v2692
      %v2788 = vpop.f32.mrf.mxu0
      %v2789 = vadd.f32 0.0, %v2788
      %2790 = vmatmul.f32.gmra.mxu0 %v2694
      %v2791 = vpop.f32.mrf.mxu0
      %v2792 = vadd.f32 0.0, %v2791
      %2793 = vmatmul.f32.gmra.mxu0 %v2696
      %v2794 = vpop.f32.mrf.mxu0
      %v2795 = vadd.f32 0.0, %v2794
      %2796 = vmatmul.f32.gmra.mxu0 %v2698
      %v2797 = vpop.f32.mrf.mxu0
      %v2798 = vadd.f32 0.0, %v2797
      %2799 = vmatmul.f32.gmra.mxu0 %v2700
      %v2800 = vpop.f32.mrf.mxu0
      %v2801 = vadd.f32 0.0, %v2800
      %2802 = vmatmul.f32.gmra.mxu0 %v2702
      %v2803 = vpop.f32.mrf.mxu0
      %v2804 = vadd.f32 0.0, %v2803
      %2805 = vmatmul.f32.gmra.mxu0 %v2704
      %v2806 = vpop.f32.mrf.mxu0
      %v2807 = vadd.f32 0.0, %v2806
      %2808 = vmatmul.f32.gmra.mxu0 %v2706
      %v2809 = vpop.f32.mrf.mxu0
      %v2810 = vadd.f32 0.0, %v2809
      %2811 = vmatmul.f32.gmra.mxu0 %v2708
      %v2812 = vpop.f32.mrf.mxu0
      %v2813 = vadd.f32 0.0, %v2812
      %2814 = vmatmul.f32.gmra.mxu0 %v2710
      %v2815 = vpop.f32.mrf.mxu0
      %v2816 = vadd.f32 0.0, %v2815
      %2817 = vmatmul.f32.gmra.mxu0 %v2712
      %v2818 = vpop.f32.mrf.mxu0
      %v2819 = vadd.f32 0.0, %v2818
      %2820 = vmatmul.f32.gmra.mxu0 %v2714
      %v2821 = vpop.f32.mrf.mxu0
      %v2822 = vadd.f32 0.0, %v2821
      %2823 = vmatmul.f32.gmra.mxu0 %v2716
      %v2824 = vpop.f32.mrf.mxu0
      %v2825 = vadd.f32 0.0, %v2824
      %2826 = vmatmul.f32.gmra.mxu0 %v2718
      %v2827 = vpop.f32.mrf.mxu0
      %v2828 = vadd.f32 0.0, %v2827
      %2829 = vmatmul.f32.gmra.mxu0 %v2720
      %v2830 = vpop.f32.mrf.mxu0
      %v2831 = vadd.f32 0.0, %v2830
      %2832 = vmatmul.f32.gmra.mxu0 %v2722
      %v2833 = vpop.f32.mrf.mxu0
      %v2834 = vadd.f32 0.0, %v2833
      %2835 = vmatmul.f32.gmra.mxu0 %v2724
      %v2836 = vpop.f32.mrf.mxu0
      %v2837 = vadd.f32 0.0, %v2836
      %2838 = vdwg.mxu0
      %v2839 = vsel %vm461, %v2480, 0
      %v2841 = vsel %vm461, %v2481, 0
      %v2843 = vsel %vm461, %v2483, 0
      %v2845 = vsel %vm461, %v2484, 0
      %v2847 = vsel %vm461, %v2486, 0
      %v2849 = vsel %vm461, %v2487, 0
      %v2851 = vsel %vm461, %v2489, 0
      %v2853 = vsel %vm461, %v2490, 0
      %v2855 = vsel %vm461, %v2492, 0
      %v2857 = vsel %vm461, %v2493, 0
      %v2859 = vsel %vm461, %v2495, 0
      %v2861 = vsel %vm461, %v2496, 0
      %v2863 = vsel %vm461, %v2498, 0
      %v2865 = vsel %vm461, %v2499, 0
      %v2867 = vsel %vm461, %v2501, 0
      %v2869 = vsel %vm461, %v2502, 0
      %v2871 = vsel %vm461, %v2504, 0
      %v2873 = vsel %vm461, %v2505, 0
      %v2875 = vsel %vm461, %v2507, 0
      %v2877 = vsel %vm461, %v2508, 0
      %v2879 = vsel %vm461, %v2510, 0
      %v2881 = vsel %vm461, %v2511, 0
      %v2883 = vsel %vm461, %v2513, 0
      %v2885 = vsel %vm461, %v2514, 0
      %v2887 = vsel %vm461, %v2516, 0
      %v2889 = vsel %vm461, %v2517, 0
      %v2891 = vsel %vm461, %v2519, 0
      %v2893 = vsel %vm461, %v2520, 0
      %v2895 = vsel %vm461, %v2522, 0
      %v2897 = vsel %vm461, %v2523, 0
      %v2899 = vsel %vm461, %v2525, 0
      %v2901 = vsel %vm461, %v2526, 0
      %2903 = vmatpush.msra.mxu0 0.0
      %2904 = vmatpush.msra.mxu0 0.0
      %2905 = vmatpush.msra.mxu0 0.0
      %2906 = vmatpush.msra.mxu0 0.0
      %2907 = vmatpush.msra.mxu0 0.0
      %2908 = vmatpush.msra.mxu0 0.0
      %2909 = vmatpush.msra.mxu0 0.0
      %2910 = vmatpush.msra.mxu0 0.0
      %2911 = vmatpush.msra.mxu0 0.0
      %2912 = vmatpush.msra.mxu0 0.0
      %2913 = vmatpush.msra.mxu0 0.0
      %2914 = vmatpush.msra.mxu0 0.0
      %2915 = vmatpush.msra.mxu0 0.0
      %2916 = vmatpush.msra.mxu0 0.0
      %2917 = vmatpush.msra.mxu0 0.0
      %2918 = vmatpush.msra.mxu0 %v559
      %2919 = vmatmul.f32.gmra.mxu0 %v2839
      %v2920 = vpop.f32.mrf.mxu0
      %v2921 = vadd.f32 %v2744, %v2920
      %2922 = vmatmul.f32.gmra.mxu0 %v2841
      %v2923 = vpop.f32.mrf.mxu0
      %v2924 = vadd.f32 %v2747, %v2923
      %2925 = vmatmul.f32.gmra.mxu0 %v2843
      %v2926 = vpop.f32.mrf.mxu0
      %v2927 = vadd.f32 %v2750, %v2926
      %2928 = vmatmul.f32.gmra.mxu0 %v2845
      %v2929 = vpop.f32.mrf.mxu0
      %v2930 = vadd.f32 %v2753, %v2929
      %2931 = vmatmul.f32.gmra.mxu0 %v2847
      %v2932 = vpop.f32.mrf.mxu0
      %v2933 = vadd.f32 %v2756, %v2932
      %2934 = vmatmul.f32.gmra.mxu0 %v2849
      %v2935 = vpop.f32.mrf.mxu0
      %v2936 = vadd.f32 %v2759, %v2935
      %2937 = vmatmul.f32.gmra.mxu0 %v2851
      %v2938 = vpop.f32.mrf.mxu0
      %v2939 = vadd.f32 %v2762, %v2938
      %2940 = vmatmul.f32.gmra.mxu0 %v2853
      %v2941 = vpop.f32.mrf.mxu0
      %v2942 = vadd.f32 %v2765, %v2941
      %2943 = vmatmul.f32.gmra.mxu0 %v2855
      %v2944 = vpop.f32.mrf.mxu0
      %v2945 = vadd.f32 %v2768, %v2944
      %2946 = vmatmul.f32.gmra.mxu0 %v2857
      %v2947 = vpop.f32.mrf.mxu0
      %v2948 = vadd.f32 %v2771, %v2947
      %2949 = vmatmul.f32.gmra.mxu0 %v2859
      %v2950 = vpop.f32.mrf.mxu0
      %v2951 = vadd.f32 %v2774, %v2950
      %2952 = vmatmul.f32.gmra.mxu0 %v2861
      %v2953 = vpop.f32.mrf.mxu0
      %v2954 = vadd.f32 %v2777, %v2953
      %2955 = vmatmul.f32.gmra.mxu0 %v2863
      %v2956 = vpop.f32.mrf.mxu0
      %v2957 = vadd.f32 %v2780, %v2956
      %2958 = vmatmul.f32.gmra.mxu0 %v2865
      %v2959 = vpop.f32.mrf.mxu0
      %v2960 = vadd.f32 %v2783, %v2959
      %2961 = vmatmul.f32.gmra.mxu0 %v2867
      %v2962 = vpop.f32.mrf.mxu0
      %v2963 = vadd.f32 %v2786, %v2962
      %2964 = vmatmul.f32.gmra.mxu0 %v2869
      %v2965 = vpop.f32.mrf.mxu0
      %v2966 = vadd.f32 %v2789, %v2965
      %2967 = vmatmul.f32.gmra.mxu0 %v2871
      %v2968 = vpop.f32.mrf.mxu0
      %v2969 = vadd.f32 %v2792, %v2968
      %2970 = vmatmul.f32.gmra.mxu0 %v2873
      %v2971 = vpop.f32.mrf.mxu0
      %v2972 = vadd.f32 %v2795, %v2971
      %2973 = vmatmul.f32.gmra.mxu0 %v2875
      %v2974 = vpop.f32.mrf.mxu0
      %v2975 = vadd.f32 %v2798, %v2974
      %2976 = vmatmul.f32.gmra.mxu0 %v2877
      %v2977 = vpop.f32.mrf.mxu0
      %v2978 = vadd.f32 %v2801, %v2977
      %2979 = vmatmul.f32.gmra.mxu0 %v2879
      %v2980 = vpop.f32.mrf.mxu0
      %v2981 = vadd.f32 %v2804, %v2980
      %2982 = vmatmul.f32.gmra.mxu0 %v2881
      %v2983 = vpop.f32.mrf.mxu0
      %v2984 = vadd.f32 %v2807, %v2983
      %2985 = vmatmul.f32.gmra.mxu0 %v2883
      %v2986 = vpop.f32.mrf.mxu0
      %v2987 = vadd.f32 %v2810, %v2986
      %2988 = vmatmul.f32.gmra.mxu0 %v2885
      %v2989 = vpop.f32.mrf.mxu0
      %v2990 = vadd.f32 %v2813, %v2989
      %2991 = vmatmul.f32.gmra.mxu0 %v2887
      %v2992 = vpop.f32.mrf.mxu0
      %v2993 = vadd.f32 %v2816, %v2992
      %2994 = vmatmul.f32.gmra.mxu0 %v2889
      %v2995 = vpop.f32.mrf.mxu0
      %v2996 = vadd.f32 %v2819, %v2995
      %2997 = vmatmul.f32.gmra.mxu0 %v2891
      %v2998 = vpop.f32.mrf.mxu0
      %v2999 = vadd.f32 %v2822, %v2998
      %3000 = vmatmul.f32.gmra.mxu0 %v2893
      %v3001 = vpop.f32.mrf.mxu0
      %v3002 = vadd.f32 %v2825, %v3001
      %3003 = vmatmul.f32.gmra.mxu0 %v2895
      %v3004 = vpop.f32.mrf.mxu0
      %v3005 = vadd.f32 %v2828, %v3004
      %3006 = vmatmul.f32.gmra.mxu0 %v2897
      %v3007 = vpop.f32.mrf.mxu0
      %v3008 = vadd.f32 %v2831, %v3007
      %3009 = vmatmul.f32.gmra.mxu0 %v2899
      %v3010 = vpop.f32.mrf.mxu0
      %v3011 = vadd.f32 %v2834, %v3010
      %3012 = vmatmul.f32.gmra.mxu0 %v2901
      %v3013 = vpop.f32.mrf.mxu0
      %v3014 = vadd.f32 %v2837, %v3013
      %3015 = vdwg.mxu0
      %v3016 = vrot.slane %v2480, 2
      %v3017 = vrot.slane %v2481, 2
      %v3018 = vsel %vm1171, %v3016, %v3017
      %v3019 = vrot.slane %v2482, 2
      %v3020 = vsel %vm1171, %v3017, %v3019
      %v3021 = vrot.slane %v2483, 2
      %v3022 = vrot.slane %v2484, 2
      %v3023 = vsel %vm1171, %v3021, %v3022
      %v3024 = vrot.slane %v2485, 2
      %v3025 = vsel %vm1171, %v3022, %v3024
      %v3026 = vrot.slane %v2486, 2
      %v3027 = vrot.slane %v2487, 2
      %v3028 = vsel %vm1171, %v3026, %v3027
      %v3029 = vrot.slane %v2488, 2
      %v3030 = vsel %vm1171, %v3027, %v3029
      %v3031 = vrot.slane %v2489, 2
      %v3032 = vrot.slane %v2490, 2
      %v3033 = vsel %vm1171, %v3031, %v3032
      %v3034 = vrot.slane %v2491, 2
      %v3035 = vsel %vm1171, %v3032, %v3034
      %v3036 = vrot.slane %v2492, 2
      %v3037 = vrot.slane %v2493, 2
      %v3038 = vsel %vm1171, %v3036, %v3037
      %v3039 = vrot.slane %v2494, 2
      %v3040 = vsel %vm1171, %v3037, %v3039
      %v3041 = vrot.slane %v2495, 2
      %v3042 = vrot.slane %v2496, 2
      %v3043 = vsel %vm1171, %v3041, %v3042
      %v3044 = vrot.slane %v2497, 2
      %v3045 = vsel %vm1171, %v3042, %v3044
      %v3046 = vrot.slane %v2498, 2
      %v3047 = vrot.slane %v2499, 2
      %v3048 = vsel %vm1171, %v3046, %v3047
      %v3049 = vrot.slane %v2500, 2
      %v3050 = vsel %vm1171, %v3047, %v3049
      %v3051 = vrot.slane %v2501, 2
      %v3052 = vrot.slane %v2502, 2
      %v3053 = vsel %vm1171, %v3051, %v3052
      %v3054 = vrot.slane %v2503, 2
      %v3055 = vsel %vm1171, %v3052, %v3054
      %v3056 = vrot.slane %v2504, 2
      %v3057 = vrot.slane %v2505, 2
      %v3058 = vsel %vm1171, %v3056, %v3057
      %v3059 = vrot.slane %v2506, 2
      %v3060 = vsel %vm1171, %v3057, %v3059
      %v3061 = vrot.slane %v2507, 2
      %v3062 = vrot.slane %v2508, 2
      %v3063 = vsel %vm1171, %v3061, %v3062
      %v3064 = vrot.slane %v2509, 2
      %v3065 = vsel %vm1171, %v3062, %v3064
      %v3066 = vrot.slane %v2510, 2
      %v3067 = vrot.slane %v2511, 2
      %v3068 = vsel %vm1171, %v3066, %v3067
      %v3069 = vrot.slane %v2512, 2
      %v3070 = vsel %vm1171, %v3067, %v3069
      %v3071 = vrot.slane %v2513, 2
      %v3072 = vrot.slane %v2514, 2
      %v3073 = vsel %vm1171, %v3071, %v3072
      %v3074 = vrot.slane %v2515, 2
      %v3075 = vsel %vm1171, %v3072, %v3074
      %v3076 = vrot.slane %v2516, 2
      %v3077 = vrot.slane %v2517, 2
      %v3078 = vsel %vm1171, %v3076, %v3077
      %v3079 = vrot.slane %v2518, 2
      %v3080 = vsel %vm1171, %v3077, %v3079
      %v3081 = vrot.slane %v2519, 2
      %v3082 = vrot.slane %v2520, 2
      %v3083 = vsel %vm1171, %v3081, %v3082
      %v3084 = vrot.slane %v2521, 2
      %v3085 = vsel %vm1171, %v3082, %v3084
      %v3086 = vrot.slane %v2522, 2
      %v3087 = vrot.slane %v2523, 2
      %v3088 = vsel %vm1171, %v3086, %v3087
      %v3089 = vrot.slane %v2524, 2
      %v3090 = vsel %vm1171, %v3087, %v3089
      %v3091 = vrot.slane %v2525, 2
      %v3092 = vrot.slane %v2526, 2
      %v3093 = vsel %vm1171, %v3091, %v3092
      %v3094 = vrot.slane %v2527, 2
      %v3095 = vsel %vm1171, %v3092, %v3094
      %v3096 = vsel %vm461, %v3018, 0
      %v3098 = vsel %vm461, %v3020, 0
      %v3100 = vsel %vm461, %v3023, 0
      %v3102 = vsel %vm461, %v3025, 0
      %v3104 = vsel %vm461, %v3028, 0
      %v3106 = vsel %vm461, %v3030, 0
      %v3108 = vsel %vm461, %v3033, 0
      %v3110 = vsel %vm461, %v3035, 0
      %v3112 = vsel %vm461, %v3038, 0
      %v3114 = vsel %vm461, %v3040, 0
      %v3116 = vsel %vm461, %v3043, 0
      %v3118 = vsel %vm461, %v3045, 0
      %v3120 = vsel %vm461, %v3048, 0
      %v3122 = vsel %vm461, %v3050, 0
      %v3124 = vsel %vm461, %v3053, 0
      %v3126 = vsel %vm461, %v3055, 0
      %v3128 = vsel %vm461, %v3058, 0
      %v3130 = vsel %vm461, %v3060, 0
      %v3132 = vsel %vm461, %v3063, 0
      %v3134 = vsel %vm461, %v3065, 0
      %v3136 = vsel %vm461, %v3068, 0
      %v3138 = vsel %vm461, %v3070, 0
      %v3140 = vsel %vm461, %v3073, 0
      %v3142 = vsel %vm461, %v3075, 0
      %v3144 = vsel %vm461, %v3078, 0
      %v3146 = vsel %vm461, %v3080, 0
      %v3148 = vsel %vm461, %v3083, 0
      %v3150 = vsel %vm461, %v3085, 0
      %v3152 = vsel %vm461, %v3088, 0
      %v3154 = vsel %vm461, %v3090, 0
      %v3156 = vsel %vm461, %v3093, 0
      %v3158 = vsel %vm461, %v3095, 0
      %3160 = vmatpush.msra.mxu0 0.0
      %3161 = vmatpush.msra.mxu0 0.0
      %3162 = vmatpush.msra.mxu0 0.0
      %3163 = vmatpush.msra.mxu0 0.0
      %3164 = vmatpush.msra.mxu0 0.0
      %3165 = vmatpush.msra.mxu0 0.0
      %3166 = vmatpush.msra.mxu0 0.0
      %3167 = vmatpush.msra.mxu0 0.0
      %3168 = vmatpush.msra.mxu0 0.0
      %3169 = vmatpush.msra.mxu0 0.0
      %3170 = vmatpush.msra.mxu0 0.0
      %3171 = vmatpush.msra.mxu0 0.0
      %3172 = vmatpush.msra.mxu0 0.0
      %3173 = vmatpush.msra.mxu0 0.0
      %3174 = vmatpush.msra.mxu0 0.0
      %3175 = vmatpush.msra.mxu0 %v561
      %3176 = vmatmul.f32.gmra.mxu0 %v3096
      %v3177 = vpop.f32.mrf.mxu0
      %v3178 = vadd.f32 0.0, %v3177
      %3179 = vmatmul.f32.gmra.mxu0 %v3098
      %v3180 = vpop.f32.mrf.mxu0
      %v3181 = vadd.f32 0.0, %v3180
      %3182 = vmatmul.f32.gmra.mxu0 %v3100
      %v3183 = vpop.f32.mrf.mxu0
      %v3184 = vadd.f32 0.0, %v3183
      %3185 = vmatmul.f32.gmra.mxu0 %v3102
      %v3186 = vpop.f32.mrf.mxu0
      %v3187 = vadd.f32 0.0, %v3186
      %3188 = vmatmul.f32.gmra.mxu0 %v3104
      %v3189 = vpop.f32.mrf.mxu0
      %v3190 = vadd.f32 0.0, %v3189
      %3191 = vmatmul.f32.gmra.mxu0 %v3106
      %v3192 = vpop.f32.mrf.mxu0
      %v3193 = vadd.f32 0.0, %v3192
      %3194 = vmatmul.f32.gmra.mxu0 %v3108
      %v3195 = vpop.f32.mrf.mxu0
      %v3196 = vadd.f32 0.0, %v3195
      %3197 = vmatmul.f32.gmra.mxu0 %v3110
      %v3198 = vpop.f32.mrf.mxu0
      %v3199 = vadd.f32 0.0, %v3198
      %3200 = vmatmul.f32.gmra.mxu0 %v3112
      %v3201 = vpop.f32.mrf.mxu0
      %v3202 = vadd.f32 0.0, %v3201
      %3203 = vmatmul.f32.gmra.mxu0 %v3114
      %v3204 = vpop.f32.mrf.mxu0
      %v3205 = vadd.f32 0.0, %v3204
      %3206 = vmatmul.f32.gmra.mxu0 %v3116
      %v3207 = vpop.f32.mrf.mxu0
      %v3208 = vadd.f32 0.0, %v3207
      %3209 = vmatmul.f32.gmra.mxu0 %v3118
      %v3210 = vpop.f32.mrf.mxu0
      %v3211 = vadd.f32 0.0, %v3210
      %3212 = vmatmul.f32.gmra.mxu0 %v3120
      %v3213 = vpop.f32.mrf.mxu0
      %v3214 = vadd.f32 0.0, %v3213
      %3215 = vmatmul.f32.gmra.mxu0 %v3122
      %v3216 = vpop.f32.mrf.mxu0
      %v3217 = vadd.f32 0.0, %v3216
      %3218 = vmatmul.f32.gmra.mxu0 %v3124
      %v3219 = vpop.f32.mrf.mxu0
      %v3220 = vadd.f32 0.0, %v3219
      %3221 = vmatmul.f32.gmra.mxu0 %v3126
      %v3222 = vpop.f32.mrf.mxu0
      %v3223 = vadd.f32 0.0, %v3222
      %3224 = vmatmul.f32.gmra.mxu0 %v3128
      %v3225 = vpop.f32.mrf.mxu0
      %v3226 = vadd.f32 0.0, %v3225
      %3227 = vmatmul.f32.gmra.mxu0 %v3130
      %v3228 = vpop.f32.mrf.mxu0
      %v3229 = vadd.f32 0.0, %v3228
      %3230 = vmatmul.f32.gmra.mxu0 %v3132
      %v3231 = vpop.f32.mrf.mxu0
      %v3232 = vadd.f32 0.0, %v3231
      %3233 = vmatmul.f32.gmra.mxu0 %v3134
      %v3234 = vpop.f32.mrf.mxu0
      %v3235 = vadd.f32 0.0, %v3234
      %3236 = vmatmul.f32.gmra.mxu0 %v3136
      %v3237 = vpop.f32.mrf.mxu0
      %v3238 = vadd.f32 0.0, %v3237
      %3239 = vmatmul.f32.gmra.mxu0 %v3138
      %v3240 = vpop.f32.mrf.mxu0
      %v3241 = vadd.f32 0.0, %v3240
      %3242 = vmatmul.f32.gmra.mxu0 %v3140
      %v3243 = vpop.f32.mrf.mxu0
      %v3244 = vadd.f32 0.0, %v3243
      %3245 = vmatmul.f32.gmra.mxu0 %v3142
      %v3246 = vpop.f32.mrf.mxu0
      %v3247 = vadd.f32 0.0, %v3246
      %3248 = vmatmul.f32.gmra.mxu0 %v3144
      %v3249 = vpop.f32.mrf.mxu0
      %v3250 = vadd.f32 0.0, %v3249
      %3251 = vmatmul.f32.gmra.mxu0 %v3146
      %v3252 = vpop.f32.mrf.mxu0
      %v3253 = vadd.f32 0.0, %v3252
      %3254 = vmatmul.f32.gmra.mxu0 %v3148
      %v3255 = vpop.f32.mrf.mxu0
      %v3256 = vadd.f32 0.0, %v3255
      %3257 = vmatmul.f32.gmra.mxu0 %v3150
      %v3258 = vpop.f32.mrf.mxu0
      %v3259 = vadd.f32 0.0, %v3258
      %3260 = vmatmul.f32.gmra.mxu0 %v3152
      %v3261 = vpop.f32.mrf.mxu0
      %v3262 = vadd.f32 0.0, %v3261
      %3263 = vmatmul.f32.gmra.mxu0 %v3154
      %v3264 = vpop.f32.mrf.mxu0
      %v3265 = vadd.f32 0.0, %v3264
      %3266 = vmatmul.f32.gmra.mxu0 %v3156
      %v3267 = vpop.f32.mrf.mxu0
      %v3268 = vadd.f32 0.0, %v3267
      %3269 = vmatmul.f32.gmra.mxu0 %v3158
      %v3270 = vpop.f32.mrf.mxu0
      %v3271 = vadd.f32 0.0, %v3270
      %3272 = vdwg.mxu0
      %v3273 = vadd.f32 %v2921, %v3178
      %v3274 = vadd.f32 %v2924, %v3181
      %v3275 = vadd.f32 %v2927, %v3184
      %v3276 = vadd.f32 %v2930, %v3187
      %v3277 = vadd.f32 %v2933, %v3190
      %v3278 = vadd.f32 %v2936, %v3193
      %v3279 = vadd.f32 %v2939, %v3196
      %v3280 = vadd.f32 %v2942, %v3199
      %v3281 = vadd.f32 %v2945, %v3202
      %v3282 = vadd.f32 %v2948, %v3205
      %v3283 = vadd.f32 %v2951, %v3208
      %v3284 = vadd.f32 %v2954, %v3211
      %v3285 = vadd.f32 %v2957, %v3214
      %v3286 = vadd.f32 %v2960, %v3217
      %v3287 = vadd.f32 %v2963, %v3220
      %v3288 = vadd.f32 %v2966, %v3223
      %v3289 = vadd.f32 %v2969, %v3226
      %v3290 = vadd.f32 %v2972, %v3229
      %v3291 = vadd.f32 %v2975, %v3232
      %v3292 = vadd.f32 %v2978, %v3235
      %v3293 = vadd.f32 %v2981, %v3238
      %v3294 = vadd.f32 %v2984, %v3241
      %v3295 = vadd.f32 %v2987, %v3244
      %v3296 = vadd.f32 %v2990, %v3247
      %v3297 = vadd.f32 %v2993, %v3250
      %v3298 = vadd.f32 %v2996, %v3253
      %v3299 = vadd.f32 %v2999, %v3256
      %v3300 = vadd.f32 %v3002, %v3259
      %v3301 = vadd.f32 %v3005, %v3262
      %v3302 = vadd.f32 %v3008, %v3265
      %v3303 = vadd.f32 %v3011, %v3268
      %v3304 = vadd.f32 %v3014, %v3271
      %v3306 = vsel %vm461, %v2528, 0
      %v3309 = vsel %vm461, %v2529, 0
      %3311 = vmatpush.msra.mxu0 0.0
      %3312 = vmatpush.msra.mxu0 0.0
      %3313 = vmatpush.msra.mxu0 0.0
      %3314 = vmatpush.msra.mxu0 0.0
      %3315 = vmatpush.msra.mxu0 0.0
      %3316 = vmatpush.msra.mxu0 0.0
      %3317 = vmatpush.msra.mxu0 0.0
      %3318 = vmatpush.msra.mxu0 0.0
      %3319 = vmatpush.msra.mxu0 0.0
      %3320 = vmatpush.msra.mxu0 0.0
      %3321 = vmatpush.msra.mxu0 0.0
      %3322 = vmatpush.msra.mxu0 0.0
      %3323 = vmatpush.msra.mxu0 0.0
      %3324 = vmatpush.msra.mxu0 0.0
      %3325 = vmatpush.msra.mxu0 0.0
      %3326 = vmatpush.msra.mxu0 %v562
      %3327 = vmatmul.f32.gmra.mxu0 %v2843
      %v3328 = vpop.f32.mrf.mxu0
      %v3329 = vadd.f32 0.0, %v3328
      %3330 = vmatmul.f32.gmra.mxu0 %v2845
      %v3331 = vpop.f32.mrf.mxu0
      %v3332 = vadd.f32 0.0, %v3331
      %3333 = vmatmul.f32.gmra.mxu0 %v2847
      %v3334 = vpop.f32.mrf.mxu0
      %v3335 = vadd.f32 0.0, %v3334
      %3336 = vmatmul.f32.gmra.mxu0 %v2849
      %v3337 = vpop.f32.mrf.mxu0
      %v3338 = vadd.f32 0.0, %v3337
      %3339 = vmatmul.f32.gmra.mxu0 %v2851
      %v3340 = vpop.f32.mrf.mxu0
      %v3341 = vadd.f32 0.0, %v3340
      %3342 = vmatmul.f32.gmra.mxu0 %v2853
      %v3343 = vpop.f32.mrf.mxu0
      %v3344 = vadd.f32 0.0, %v3343
      %3345 = vmatmul.f32.gmra.mxu0 %v2855
      %v3346 = vpop.f32.mrf.mxu0
      %v3347 = vadd.f32 0.0, %v3346
      %3348 = vmatmul.f32.gmra.mxu0 %v2857
      %v3349 = vpop.f32.mrf.mxu0
      %v3350 = vadd.f32 0.0, %v3349
      %3351 = vmatmul.f32.gmra.mxu0 %v2859
      %v3352 = vpop.f32.mrf.mxu0
      %v3353 = vadd.f32 0.0, %v3352
      %3354 = vmatmul.f32.gmra.mxu0 %v2861
      %v3355 = vpop.f32.mrf.mxu0
      %v3356 = vadd.f32 0.0, %v3355
      %3357 = vmatmul.f32.gmra.mxu0 %v2863
      %v3358 = vpop.f32.mrf.mxu0
      %v3359 = vadd.f32 0.0, %v3358
      %3360 = vmatmul.f32.gmra.mxu0 %v2865
      %v3361 = vpop.f32.mrf.mxu0
      %v3362 = vadd.f32 0.0, %v3361
      %3363 = vmatmul.f32.gmra.mxu0 %v2867
      %v3364 = vpop.f32.mrf.mxu0
      %v3365 = vadd.f32 0.0, %v3364
      %3366 = vmatmul.f32.gmra.mxu0 %v2869
      %v3367 = vpop.f32.mrf.mxu0
      %v3368 = vadd.f32 0.0, %v3367
      %3369 = vmatmul.f32.gmra.mxu0 %v2871
      %v3370 = vpop.f32.mrf.mxu0
      %v3371 = vadd.f32 0.0, %v3370
      %3372 = vmatmul.f32.gmra.mxu0 %v2873
      %v3373 = vpop.f32.mrf.mxu0
      %v3374 = vadd.f32 0.0, %v3373
      %3375 = vmatmul.f32.gmra.mxu0 %v2875
      %v3376 = vpop.f32.mrf.mxu0
      %v3377 = vadd.f32 0.0, %v3376
      %3378 = vmatmul.f32.gmra.mxu0 %v2877
      %v3379 = vpop.f32.mrf.mxu0
      %v3380 = vadd.f32 0.0, %v3379
      %3381 = vmatmul.f32.gmra.mxu0 %v2879
      %v3382 = vpop.f32.mrf.mxu0
      %v3383 = vadd.f32 0.0, %v3382
      %3384 = vmatmul.f32.gmra.mxu0 %v2881
      %v3385 = vpop.f32.mrf.mxu0
      %v3386 = vadd.f32 0.0, %v3385
      %3387 = vmatmul.f32.gmra.mxu0 %v2883
      %v3388 = vpop.f32.mrf.mxu0
      %v3389 = vadd.f32 0.0, %v3388
      %3390 = vmatmul.f32.gmra.mxu0 %v2885
      %v3391 = vpop.f32.mrf.mxu0
      %v3392 = vadd.f32 0.0, %v3391
      %3393 = vmatmul.f32.gmra.mxu0 %v2887
      %v3394 = vpop.f32.mrf.mxu0
      %v3395 = vadd.f32 0.0, %v3394
      %3396 = vmatmul.f32.gmra.mxu0 %v2889
      %v3397 = vpop.f32.mrf.mxu0
      %v3398 = vadd.f32 0.0, %v3397
      %3399 = vmatmul.f32.gmra.mxu0 %v2891
      %v3400 = vpop.f32.mrf.mxu0
      %v3401 = vadd.f32 0.0, %v3400
      %3402 = vmatmul.f32.gmra.mxu0 %v2893
      %v3403 = vpop.f32.mrf.mxu0
      %v3404 = vadd.f32 0.0, %v3403
      %3405 = vmatmul.f32.gmra.mxu0 %v2895
      %v3406 = vpop.f32.mrf.mxu0
      %v3407 = vadd.f32 0.0, %v3406
      %3408 = vmatmul.f32.gmra.mxu0 %v2897
      %v3409 = vpop.f32.mrf.mxu0
      %v3410 = vadd.f32 0.0, %v3409
      %3411 = vmatmul.f32.gmra.mxu0 %v2899
      %v3412 = vpop.f32.mrf.mxu0
      %v3413 = vadd.f32 0.0, %v3412
      %3414 = vmatmul.f32.gmra.mxu0 %v2901
      %v3415 = vpop.f32.mrf.mxu0
      %v3416 = vadd.f32 0.0, %v3415
      %3417 = vmatmul.f32.gmra.mxu0 %v3306
      %v3418 = vpop.f32.mrf.mxu0
      %v3419 = vadd.f32 0.0, %v3418
      %3420 = vmatmul.f32.gmra.mxu0 %v3309
      %v3421 = vpop.f32.mrf.mxu0
      %v3422 = vadd.f32 0.0, %v3421
      %3423 = vdwg.mxu0
      %v3424 = vadd.f32 %v3273, %v3329
      %v3425 = vadd.f32 %v3274, %v3332
      %v3426 = vadd.f32 %v3275, %v3335
      %v3427 = vadd.f32 %v3276, %v3338
      %v3428 = vadd.f32 %v3277, %v3341
      %v3429 = vadd.f32 %v3278, %v3344
      %v3430 = vadd.f32 %v3279, %v3347
      %v3431 = vadd.f32 %v3280, %v3350
      %v3432 = vadd.f32 %v3281, %v3353
      %v3433 = vadd.f32 %v3282, %v3356
      %v3434 = vadd.f32 %v3283, %v3359
      %v3435 = vadd.f32 %v3284, %v3362
      %v3436 = vadd.f32 %v3285, %v3365
      %v3437 = vadd.f32 %v3286, %v3368
      %v3438 = vadd.f32 %v3287, %v3371
      %v3439 = vadd.f32 %v3288, %v3374
      %v3440 = vadd.f32 %v3289, %v3377
      %v3441 = vadd.f32 %v3290, %v3380
      %v3442 = vadd.f32 %v3291, %v3383
      %v3443 = vadd.f32 %v3292, %v3386
      %v3444 = vadd.f32 %v3293, %v3389
      %v3445 = vadd.f32 %v3294, %v3392
      %v3446 = vadd.f32 %v3295, %v3395
      %v3447 = vadd.f32 %v3296, %v3398
      %v3448 = vadd.f32 %v3297, %v3401
      %v3449 = vadd.f32 %v3298, %v3404
      %v3450 = vadd.f32 %v3299, %v3407
      %v3451 = vadd.f32 %v3300, %v3410
      %v3452 = vadd.f32 %v3301, %v3413
      %v3453 = vadd.f32 %v3302, %v3416
      %v3454 = vadd.f32 %v3303, %v3419
      %v3455 = vadd.f32 %v3304, %v3422
      %v3457 = vrot.slane %v2528, 1
      %v3458 = vrot.slane %v2529, 1
      %v3459 = vsel %vm736, %v3457, %v3458
      %v3460 = vrot.slane %v2530, 1
      %v3461 = vsel %vm736, %v3458, %v3460
      %v3462 = vsel %vm461, %v3459, 0
      %v3464 = vsel %vm461, %v3461, 0
      %3466 = vmatpush.msra.mxu0 0.0
      %3467 = vmatpush.msra.mxu0 0.0
      %3468 = vmatpush.msra.mxu0 0.0
      %3469 = vmatpush.msra.mxu0 0.0
      %3470 = vmatpush.msra.mxu0 0.0
      %3471 = vmatpush.msra.mxu0 0.0
      %3472 = vmatpush.msra.mxu0 0.0
      %3473 = vmatpush.msra.mxu0 0.0
      %3474 = vmatpush.msra.mxu0 0.0
      %3475 = vmatpush.msra.mxu0 0.0
      %3476 = vmatpush.msra.mxu0 0.0
      %3477 = vmatpush.msra.mxu0 0.0
      %3478 = vmatpush.msra.mxu0 0.0
      %3479 = vmatpush.msra.mxu0 0.0
      %3480 = vmatpush.msra.mxu0 0.0
      %3481 = vmatpush.msra.mxu0 %v563
      %3482 = vmatmul.f32.gmra.mxu0 %v2666
      %v3483 = vpop.f32.mrf.mxu0
      %v3484 = vadd.f32 0.0, %v3483
      %3485 = vmatmul.f32.gmra.mxu0 %v2668
      %v3486 = vpop.f32.mrf.mxu0
      %v3487 = vadd.f32 0.0, %v3486
      %3488 = vmatmul.f32.gmra.mxu0 %v2670
      %v3489 = vpop.f32.mrf.mxu0
      %v3490 = vadd.f32 0.0, %v3489
      %3491 = vmatmul.f32.gmra.mxu0 %v2672
      %v3492 = vpop.f32.mrf.mxu0
      %v3493 = vadd.f32 0.0, %v3492
      %3494 = vmatmul.f32.gmra.mxu0 %v2674
      %v3495 = vpop.f32.mrf.mxu0
      %v3496 = vadd.f32 0.0, %v3495
      %3497 = vmatmul.f32.gmra.mxu0 %v2676
      %v3498 = vpop.f32.mrf.mxu0
      %v3499 = vadd.f32 0.0, %v3498
      %3500 = vmatmul.f32.gmra.mxu0 %v2678
      %v3501 = vpop.f32.mrf.mxu0
      %v3502 = vadd.f32 0.0, %v3501
      %3503 = vmatmul.f32.gmra.mxu0 %v2680
      %v3504 = vpop.f32.mrf.mxu0
      %v3505 = vadd.f32 0.0, %v3504
      %3506 = vmatmul.f32.gmra.mxu0 %v2682
      %v3507 = vpop.f32.mrf.mxu0
      %v3508 = vadd.f32 0.0, %v3507
      %3509 = vmatmul.f32.gmra.mxu0 %v2684
      %v3510 = vpop.f32.mrf.mxu0
      %v3511 = vadd.f32 0.0, %v3510
      %3512 = vmatmul.f32.gmra.mxu0 %v2686
      %v3513 = vpop.f32.mrf.mxu0
      %v3514 = vadd.f32 0.0, %v3513
      %3515 = vmatmul.f32.gmra.mxu0 %v2688
      %v3516 = vpop.f32.mrf.mxu0
      %v3517 = vadd.f32 0.0, %v3516
      %3518 = vmatmul.f32.gmra.mxu0 %v2690
      %v3519 = vpop.f32.mrf.mxu0
      %v3520 = vadd.f32 0.0, %v3519
      %3521 = vmatmul.f32.gmra.mxu0 %v2692
      %v3522 = vpop.f32.mrf.mxu0
      %v3523 = vadd.f32 0.0, %v3522
      %3524 = vmatmul.f32.gmra.mxu0 %v2694
      %v3525 = vpop.f32.mrf.mxu0
      %v3526 = vadd.f32 0.0, %v3525
      %3527 = vmatmul.f32.gmra.mxu0 %v2696
      %v3528 = vpop.f32.mrf.mxu0
      %v3529 = vadd.f32 0.0, %v3528
      %3530 = vmatmul.f32.gmra.mxu0 %v2698
      %v3531 = vpop.f32.mrf.mxu0
      %v3532 = vadd.f32 0.0, %v3531
      %3533 = vmatmul.f32.gmra.mxu0 %v2700
      %v3534 = vpop.f32.mrf.mxu0
      %v3535 = vadd.f32 0.0, %v3534
      %3536 = vmatmul.f32.gmra.mxu0 %v2702
      %v3537 = vpop.f32.mrf.mxu0
      %v3538 = vadd.f32 0.0, %v3537
      %3539 = vmatmul.f32.gmra.mxu0 %v2704
      %v3540 = vpop.f32.mrf.mxu0
      %v3541 = vadd.f32 0.0, %v3540
      %3542 = vmatmul.f32.gmra.mxu0 %v2706
      %v3543 = vpop.f32.mrf.mxu0
      %v3544 = vadd.f32 0.0, %v3543
      %3545 = vmatmul.f32.gmra.mxu0 %v2708
      %v3546 = vpop.f32.mrf.mxu0
      %v3547 = vadd.f32 0.0, %v3546
      %3548 = vmatmul.f32.gmra.mxu0 %v2710
      %v3549 = vpop.f32.mrf.mxu0
      %v3550 = vadd.f32 0.0, %v3549
      %3551 = vmatmul.f32.gmra.mxu0 %v2712
      %v3552 = vpop.f32.mrf.mxu0
      %v3553 = vadd.f32 0.0, %v3552
      %3554 = vmatmul.f32.gmra.mxu0 %v2714
      %v3555 = vpop.f32.mrf.mxu0
      %v3556 = vadd.f32 0.0, %v3555
      %3557 = vmatmul.f32.gmra.mxu0 %v2716
      %v3558 = vpop.f32.mrf.mxu0
      %v3559 = vadd.f32 0.0, %v3558
      %3560 = vmatmul.f32.gmra.mxu0 %v2718
      %v3561 = vpop.f32.mrf.mxu0
      %v3562 = vadd.f32 0.0, %v3561
      %3563 = vmatmul.f32.gmra.mxu0 %v2720
      %v3564 = vpop.f32.mrf.mxu0
      %v3565 = vadd.f32 0.0, %v3564
      %3566 = vmatmul.f32.gmra.mxu0 %v2722
      %v3567 = vpop.f32.mrf.mxu0
      %v3568 = vadd.f32 0.0, %v3567
      %3569 = vmatmul.f32.gmra.mxu0 %v2724
      %v3570 = vpop.f32.mrf.mxu0
      %v3571 = vadd.f32 0.0, %v3570
      %3572 = vmatmul.f32.gmra.mxu0 %v3462
      %v3573 = vpop.f32.mrf.mxu0
      %v3574 = vadd.f32 0.0, %v3573
      %3575 = vmatmul.f32.gmra.mxu0 %v3464
      %v3576 = vpop.f32.mrf.mxu0
      %v3577 = vadd.f32 0.0, %v3576
      %3578 = vdwg.mxu0
      %v3579 = vadd.f32 %v3424, %v3484
      %v3580 = vadd.f32 %v3425, %v3487
      %v3581 = vadd.f32 %v3426, %v3490
      %v3582 = vadd.f32 %v3427, %v3493
      %v3583 = vadd.f32 %v3428, %v3496
      %v3584 = vadd.f32 %v3429, %v3499
      %v3585 = vadd.f32 %v3430, %v3502
      %v3586 = vadd.f32 %v3431, %v3505
      %v3587 = vadd.f32 %v3432, %v3508
      %v3588 = vadd.f32 %v3433, %v3511
      %v3589 = vadd.f32 %v3434, %v3514
      %v3590 = vadd.f32 %v3435, %v3517
      %v3591 = vadd.f32 %v3436, %v3520
      %v3592 = vadd.f32 %v3437, %v3523
      %v3593 = vadd.f32 %v3438, %v3526
      %v3594 = vadd.f32 %v3439, %v3529
      %v3595 = vadd.f32 %v3440, %v3532
      %v3596 = vadd.f32 %v3441, %v3535
      %v3597 = vadd.f32 %v3442, %v3538
      %v3598 = vadd.f32 %v3443, %v3541
      %v3599 = vadd.f32 %v3444, %v3544
      %v3600 = vadd.f32 %v3445, %v3547
      %v3601 = vadd.f32 %v3446, %v3550
      %v3602 = vadd.f32 %v3447, %v3553
      %v3603 = vadd.f32 %v3448, %v3556
      %v3604 = vadd.f32 %v3449, %v3559
      %v3605 = vadd.f32 %v3450, %v3562
      %v3606 = vadd.f32 %v3451, %v3565
      %v3607 = vadd.f32 %v3452, %v3568
      %v3608 = vadd.f32 %v3453, %v3571
      %v3609 = vadd.f32 %v3454, %v3574
      %v3610 = vadd.f32 %v3455, %v3577
      %v3611 = vrot.slane %v2528, 2
      %v3612 = vrot.slane %v2529, 2
      %v3613 = vsel %vm1171, %v3611, %v3612
      %v3614 = vrot.slane %v2530, 2
      %v3615 = vsel %vm1171, %v3612, %v3614
      %v3616 = vsel %vm461, %v3613, 0
      %v3618 = vsel %vm461, %v3615, 0
      %3620 = vmatpush.msra.mxu0 0.0
      %3621 = vmatpush.msra.mxu0 0.0
      %3622 = vmatpush.msra.mxu0 0.0
      %3623 = vmatpush.msra.mxu0 0.0
      %3624 = vmatpush.msra.mxu0 0.0
      %3625 = vmatpush.msra.mxu0 0.0
      %3626 = vmatpush.msra.mxu0 0.0
      %3627 = vmatpush.msra.mxu0 0.0
      %3628 = vmatpush.msra.mxu0 0.0
      %3629 = vmatpush.msra.mxu0 0.0
      %3630 = vmatpush.msra.mxu0 0.0
      %3631 = vmatpush.msra.mxu0 0.0
      %3632 = vmatpush.msra.mxu0 0.0
      %3633 = vmatpush.msra.mxu0 0.0
      %3634 = vmatpush.msra.mxu0 0.0
      %3635 = vmatpush.msra.mxu0 %v564
      %3636 = vmatmul.f32.gmra.mxu0 %v3100
      %v3637 = vpop.f32.mrf.mxu0
      %v3638 = vadd.f32 0.0, %v3637
      %3639 = vmatmul.f32.gmra.mxu0 %v3102
      %v3640 = vpop.f32.mrf.mxu0
      %v3641 = vadd.f32 0.0, %v3640
      %3642 = vmatmul.f32.gmra.mxu0 %v3104
      %v3643 = vpop.f32.mrf.mxu0
      %v3644 = vadd.f32 0.0, %v3643
      %3645 = vmatmul.f32.gmra.mxu0 %v3106
      %v3646 = vpop.f32.mrf.mxu0
      %v3647 = vadd.f32 0.0, %v3646
      %3648 = vmatmul.f32.gmra.mxu0 %v3108
      %v3649 = vpop.f32.mrf.mxu0
      %v3650 = vadd.f32 0.0, %v3649
      %3651 = vmatmul.f32.gmra.mxu0 %v3110
      %v3652 = vpop.f32.mrf.mxu0
      %v3653 = vadd.f32 0.0, %v3652
      %3654 = vmatmul.f32.gmra.mxu0 %v3112
      %v3655 = vpop.f32.mrf.mxu0
      %v3656 = vadd.f32 0.0, %v3655
      %3657 = vmatmul.f32.gmra.mxu0 %v3114
      %v3658 = vpop.f32.mrf.mxu0
      %v3659 = vadd.f32 0.0, %v3658
      %3660 = vmatmul.f32.gmra.mxu0 %v3116
      %v3661 = vpop.f32.mrf.mxu0
      %v3662 = vadd.f32 0.0, %v3661
      %3663 = vmatmul.f32.gmra.mxu0 %v3118
      %v3664 = vpop.f32.mrf.mxu0
      %v3665 = vadd.f32 0.0, %v3664
      %3666 = vmatmul.f32.gmra.mxu0 %v3120
      %v3667 = vpop.f32.mrf.mxu0
      %v3668 = vadd.f32 0.0, %v3667
      %3669 = vmatmul.f32.gmra.mxu0 %v3122
      %v3670 = vpop.f32.mrf.mxu0
      %v3671 = vadd.f32 0.0, %v3670
      %3672 = vmatmul.f32.gmra.mxu0 %v3124
      %v3673 = vpop.f32.mrf.mxu0
      %v3674 = vadd.f32 0.0, %v3673
      %3675 = vmatmul.f32.gmra.mxu0 %v3126
      %v3676 = vpop.f32.mrf.mxu0
      %v3677 = vadd.f32 0.0, %v3676
      %3678 = vmatmul.f32.gmra.mxu0 %v3128
      %v3679 = vpop.f32.mrf.mxu0
      %v3680 = vadd.f32 0.0, %v3679
      %3681 = vmatmul.f32.gmra.mxu0 %v3130
      %v3682 = vpop.f32.mrf.mxu0
      %v3683 = vadd.f32 0.0, %v3682
      %3684 = vmatmul.f32.gmra.mxu0 %v3132
      %v3685 = vpop.f32.mrf.mxu0
      %v3686 = vadd.f32 0.0, %v3685
      %3687 = vmatmul.f32.gmra.mxu0 %v3134
      %v3688 = vpop.f32.mrf.mxu0
      %v3689 = vadd.f32 0.0, %v3688
      %3690 = vmatmul.f32.gmra.mxu0 %v3136
      %v3691 = vpop.f32.mrf.mxu0
      %v3692 = vadd.f32 0.0, %v3691
      %3693 = vmatmul.f32.gmra.mxu0 %v3138
      %v3694 = vpop.f32.mrf.mxu0
      %v3695 = vadd.f32 0.0, %v3694
      %3696 = vmatmul.f32.gmra.mxu0 %v3140
      %v3697 = vpop.f32.mrf.mxu0
      %v3698 = vadd.f32 0.0, %v3697
      %3699 = vmatmul.f32.gmra.mxu0 %v3142
      %v3700 = vpop.f32.mrf.mxu0
      %v3701 = vadd.f32 0.0, %v3700
      %3702 = vmatmul.f32.gmra.mxu0 %v3144
      %v3703 = vpop.f32.mrf.mxu0
      %v3704 = vadd.f32 0.0, %v3703
      %3705 = vmatmul.f32.gmra.mxu0 %v3146
      %v3706 = vpop.f32.mrf.mxu0
      %v3707 = vadd.f32 0.0, %v3706
      %3708 = vmatmul.f32.gmra.mxu0 %v3148
      %v3709 = vpop.f32.mrf.mxu0
      %v3710 = vadd.f32 0.0, %v3709
      %3711 = vmatmul.f32.gmra.mxu0 %v3150
      %v3712 = vpop.f32.mrf.mxu0
      %v3713 = vadd.f32 0.0, %v3712
      %3714 = vmatmul.f32.gmra.mxu0 %v3152
      %v3715 = vpop.f32.mrf.mxu0
      %v3716 = vadd.f32 0.0, %v3715
      %3717 = vmatmul.f32.gmra.mxu0 %v3154
      %v3718 = vpop.f32.mrf.mxu0
      %v3719 = vadd.f32 0.0, %v3718
      %3720 = vmatmul.f32.gmra.mxu0 %v3156
      %v3721 = vpop.f32.mrf.mxu0
      %v3722 = vadd.f32 0.0, %v3721
      %3723 = vmatmul.f32.gmra.mxu0 %v3158
      %v3724 = vpop.f32.mrf.mxu0
      %v3725 = vadd.f32 0.0, %v3724
      %3726 = vmatmul.f32.gmra.mxu0 %v3616
      %v3727 = vpop.f32.mrf.mxu0
      %v3728 = vadd.f32 0.0, %v3727
      %3729 = vmatmul.f32.gmra.mxu0 %v3618
      %v3730 = vpop.f32.mrf.mxu0
      %v3731 = vadd.f32 0.0, %v3730
      %3732 = vdwg.mxu0
      %v3733 = vadd.f32 %v3579, %v3638
      %v3734 = vadd.f32 %v3580, %v3641
      %v3735 = vadd.f32 %v3581, %v3644
      %v3736 = vadd.f32 %v3582, %v3647
      %v3737 = vadd.f32 %v3583, %v3650
      %v3738 = vadd.f32 %v3584, %v3653
      %v3739 = vadd.f32 %v3585, %v3656
      %v3740 = vadd.f32 %v3586, %v3659
      %v3741 = vadd.f32 %v3587, %v3662
      %v3742 = vadd.f32 %v3588, %v3665
      %v3743 = vadd.f32 %v3589, %v3668
      %v3744 = vadd.f32 %v3590, %v3671
      %v3745 = vadd.f32 %v3591, %v3674
      %v3746 = vadd.f32 %v3592, %v3677
      %v3747 = vadd.f32 %v3593, %v3680
      %v3748 = vadd.f32 %v3594, %v3683
      %v3749 = vadd.f32 %v3595, %v3686
      %v3750 = vadd.f32 %v3596, %v3689
      %v3751 = vadd.f32 %v3597, %v3692
      %v3752 = vadd.f32 %v3598, %v3695
      %v3753 = vadd.f32 %v3599, %v3698
      %v3754 = vadd.f32 %v3600, %v3701
      %v3755 = vadd.f32 %v3601, %v3704
      %v3756 = vadd.f32 %v3602, %v3707
      %v3757 = vadd.f32 %v3603, %v3710
      %v3758 = vadd.f32 %v3604, %v3713
      %v3759 = vadd.f32 %v3605, %v3716
      %v3760 = vadd.f32 %v3606, %v3719
      %v3761 = vadd.f32 %v3607, %v3722
      %v3762 = vadd.f32 %v3608, %v3725
      %v3763 = vadd.f32 %v3609, %v3728
      %v3764 = vadd.f32 %v3610, %v3731
      %v3766 = vsel %vm461, %v2531, 0
      %v3769 = vsel %vm461, %v2532, 0
      %3771 = vmatpush.msra.mxu0 0.0
      %3772 = vmatpush.msra.mxu0 0.0
      %3773 = vmatpush.msra.mxu0 0.0
      %3774 = vmatpush.msra.mxu0 0.0
      %3775 = vmatpush.msra.mxu0 0.0
      %3776 = vmatpush.msra.mxu0 0.0
      %3777 = vmatpush.msra.mxu0 0.0
      %3778 = vmatpush.msra.mxu0 0.0
      %3779 = vmatpush.msra.mxu0 0.0
      %3780 = vmatpush.msra.mxu0 0.0
      %3781 = vmatpush.msra.mxu0 0.0
      %3782 = vmatpush.msra.mxu0 0.0
      %3783 = vmatpush.msra.mxu0 0.0
      %3784 = vmatpush.msra.mxu0 0.0
      %3785 = vmatpush.msra.mxu0 0.0
      %3786 = vmatpush.msra.mxu0 %v565
      %3787 = vmatmul.f32.gmra.mxu0 %v2847
      %v3788 = vpop.f32.mrf.mxu0
      %v3789 = vadd.f32 0.0, %v3788
      %3790 = vmatmul.f32.gmra.mxu0 %v2849
      %v3791 = vpop.f32.mrf.mxu0
      %v3792 = vadd.f32 0.0, %v3791
      %3793 = vmatmul.f32.gmra.mxu0 %v2851
      %v3794 = vpop.f32.mrf.mxu0
      %v3795 = vadd.f32 0.0, %v3794
      %3796 = vmatmul.f32.gmra.mxu0 %v2853
      %v3797 = vpop.f32.mrf.mxu0
      %v3798 = vadd.f32 0.0, %v3797
      %3799 = vmatmul.f32.gmra.mxu0 %v2855
      %v3800 = vpop.f32.mrf.mxu0
      %v3801 = vadd.f32 0.0, %v3800
      %3802 = vmatmul.f32.gmra.mxu0 %v2857
      %v3803 = vpop.f32.mrf.mxu0
      %v3804 = vadd.f32 0.0, %v3803
      %3805 = vmatmul.f32.gmra.mxu0 %v2859
      %v3806 = vpop.f32.mrf.mxu0
      %v3807 = vadd.f32 0.0, %v3806
      %3808 = vmatmul.f32.gmra.mxu0 %v2861
      %v3809 = vpop.f32.mrf.mxu0
      %v3810 = vadd.f32 0.0, %v3809
      %3811 = vmatmul.f32.gmra.mxu0 %v2863
      %v3812 = vpop.f32.mrf.mxu0
      %v3813 = vadd.f32 0.0, %v3812
      %3814 = vmatmul.f32.gmra.mxu0 %v2865
      %v3815 = vpop.f32.mrf.mxu0
      %v3816 = vadd.f32 0.0, %v3815
      %3817 = vmatmul.f32.gmra.mxu0 %v2867
      %v3818 = vpop.f32.mrf.mxu0
      %v3819 = vadd.f32 0.0, %v3818
      %3820 = vmatmul.f32.gmra.mxu0 %v2869
      %v3821 = vpop.f32.mrf.mxu0
      %v3822 = vadd.f32 0.0, %v3821
      %3823 = vmatmul.f32.gmra.mxu0 %v2871
      %v3824 = vpop.f32.mrf.mxu0
      %v3825 = vadd.f32 0.0, %v3824
      %3826 = vmatmul.f32.gmra.mxu0 %v2873
      %v3827 = vpop.f32.mrf.mxu0
      %v3828 = vadd.f32 0.0, %v3827
      %3829 = vmatmul.f32.gmra.mxu0 %v2875
      %v3830 = vpop.f32.mrf.mxu0
      %v3831 = vadd.f32 0.0, %v3830
      %3832 = vmatmul.f32.gmra.mxu0 %v2877
      %v3833 = vpop.f32.mrf.mxu0
      %v3834 = vadd.f32 0.0, %v3833
      %3835 = vmatmul.f32.gmra.mxu0 %v2879
      %v3836 = vpop.f32.mrf.mxu0
      %v3837 = vadd.f32 0.0, %v3836
      %3838 = vmatmul.f32.gmra.mxu0 %v2881
      %v3839 = vpop.f32.mrf.mxu0
      %v3840 = vadd.f32 0.0, %v3839
      %3841 = vmatmul.f32.gmra.mxu0 %v2883
      %v3842 = vpop.f32.mrf.mxu0
      %v3843 = vadd.f32 0.0, %v3842
      %3844 = vmatmul.f32.gmra.mxu0 %v2885
      %v3845 = vpop.f32.mrf.mxu0
      %v3846 = vadd.f32 0.0, %v3845
      %3847 = vmatmul.f32.gmra.mxu0 %v2887
      %v3848 = vpop.f32.mrf.mxu0
      %v3849 = vadd.f32 0.0, %v3848
      %3850 = vmatmul.f32.gmra.mxu0 %v2889
      %v3851 = vpop.f32.mrf.mxu0
      %v3852 = vadd.f32 0.0, %v3851
      %3853 = vmatmul.f32.gmra.mxu0 %v2891
      %v3854 = vpop.f32.mrf.mxu0
      %v3855 = vadd.f32 0.0, %v3854
      %3856 = vmatmul.f32.gmra.mxu0 %v2893
      %v3857 = vpop.f32.mrf.mxu0
      %v3858 = vadd.f32 0.0, %v3857
      %3859 = vmatmul.f32.gmra.mxu0 %v2895
      %v3860 = vpop.f32.mrf.mxu0
      %v3861 = vadd.f32 0.0, %v3860
      %3862 = vmatmul.f32.gmra.mxu0 %v2897
      %v3863 = vpop.f32.mrf.mxu0
      %v3864 = vadd.f32 0.0, %v3863
      %3865 = vmatmul.f32.gmra.mxu0 %v2899
      %v3866 = vpop.f32.mrf.mxu0
      %v3867 = vadd.f32 0.0, %v3866
      %3868 = vmatmul.f32.gmra.mxu0 %v2901
      %v3869 = vpop.f32.mrf.mxu0
      %v3870 = vadd.f32 0.0, %v3869
      %3871 = vmatmul.f32.gmra.mxu0 %v3306
      %v3872 = vpop.f32.mrf.mxu0
      %v3873 = vadd.f32 0.0, %v3872
      %3874 = vmatmul.f32.gmra.mxu0 %v3309
      %v3875 = vpop.f32.mrf.mxu0
      %v3876 = vadd.f32 0.0, %v3875
      %3877 = vmatmul.f32.gmra.mxu0 %v3766
      %v3878 = vpop.f32.mrf.mxu0
      %v3879 = vadd.f32 0.0, %v3878
      %3880 = vmatmul.f32.gmra.mxu0 %v3769
      %v3881 = vpop.f32.mrf.mxu0
      %v3882 = vadd.f32 0.0, %v3881
      %3883 = vdwg.mxu0
      %v3884 = vadd.f32 %v3733, %v3789
      %v3885 = vadd.f32 %v3734, %v3792
      %v3886 = vadd.f32 %v3735, %v3795
      %v3887 = vadd.f32 %v3736, %v3798
      %v3888 = vadd.f32 %v3737, %v3801
      %v3889 = vadd.f32 %v3738, %v3804
      %v3890 = vadd.f32 %v3739, %v3807
      %v3891 = vadd.f32 %v3740, %v3810
      %v3892 = vadd.f32 %v3741, %v3813
      %v3893 = vadd.f32 %v3742, %v3816
      %v3894 = vadd.f32 %v3743, %v3819
      %v3895 = vadd.f32 %v3744, %v3822
      %v3896 = vadd.f32 %v3745, %v3825
      %v3897 = vadd.f32 %v3746, %v3828
      %v3898 = vadd.f32 %v3747, %v3831
      %v3899 = vadd.f32 %v3748, %v3834
      %v3900 = vadd.f32 %v3749, %v3837
      %v3901 = vadd.f32 %v3750, %v3840
      %v3902 = vadd.f32 %v3751, %v3843
      %v3903 = vadd.f32 %v3752, %v3846
      %v3904 = vadd.f32 %v3753, %v3849
      %v3905 = vadd.f32 %v3754, %v3852
      %v3906 = vadd.f32 %v3755, %v3855
      %v3907 = vadd.f32 %v3756, %v3858
      %v3908 = vadd.f32 %v3757, %v3861
      %v3909 = vadd.f32 %v3758, %v3864
      %v3910 = vadd.f32 %v3759, %v3867
      %v3911 = vadd.f32 %v3760, %v3870
      %v3912 = vadd.f32 %v3761, %v3873
      %v3913 = vadd.f32 %v3762, %v3876
      %v3914 = vadd.f32 %v3763, %v3879
      %v3915 = vadd.f32 %v3764, %v3882
      %v3917 = vrot.slane %v2531, 1
      %v3918 = vrot.slane %v2532, 1
      %v3919 = vsel %vm736, %v3917, %v3918
      %v3920 = vrot.slane %v2533, 1
      %v3921 = vsel %vm736, %v3918, %v3920
      %v3922 = vsel %vm461, %v3919, 0
      %v3924 = vsel %vm461, %v3921, 0
      %3926 = vmatpush.msra.mxu0 0.0
      %3927 = vmatpush.msra.mxu0 0.0
      %3928 = vmatpush.msra.mxu0 0.0
      %3929 = vmatpush.msra.mxu0 0.0
      %3930 = vmatpush.msra.mxu0 0.0
      %3931 = vmatpush.msra.mxu0 0.0
      %3932 = vmatpush.msra.mxu0 0.0
      %3933 = vmatpush.msra.mxu0 0.0
      %3934 = vmatpush.msra.mxu0 0.0
      %3935 = vmatpush.msra.mxu0 0.0
      %3936 = vmatpush.msra.mxu0 0.0
      %3937 = vmatpush.msra.mxu0 0.0
      %3938 = vmatpush.msra.mxu0 0.0
      %3939 = vmatpush.msra.mxu0 0.0
      %3940 = vmatpush.msra.mxu0 0.0
      %3941 = vmatpush.msra.mxu0 %v566
      %3942 = vmatmul.f32.gmra.mxu0 %v2670
      %v3943 = vpop.f32.mrf.mxu0
      %v3944 = vadd.f32 0.0, %v3943
      %3945 = vmatmul.f32.gmra.mxu0 %v2672
      %v3946 = vpop.f32.mrf.mxu0
      %v3947 = vadd.f32 0.0, %v3946
      %3948 = vmatmul.f32.gmra.mxu0 %v2674
      %v3949 = vpop.f32.mrf.mxu0
      %v3950 = vadd.f32 0.0, %v3949
      %3951 = vmatmul.f32.gmra.mxu0 %v2676
      %v3952 = vpop.f32.mrf.mxu0
      %v3953 = vadd.f32 0.0, %v3952
      %3954 = vmatmul.f32.gmra.mxu0 %v2678
      %v3955 = vpop.f32.mrf.mxu0
      %v3956 = vadd.f32 0.0, %v3955
      %3957 = vmatmul.f32.gmra.mxu0 %v2680
      %v3958 = vpop.f32.mrf.mxu0
      %v3959 = vadd.f32 0.0, %v3958
      %3960 = vmatmul.f32.gmra.mxu0 %v2682
      %v3961 = vpop.f32.mrf.mxu0
      %v3962 = vadd.f32 0.0, %v3961
      %3963 = vmatmul.f32.gmra.mxu0 %v2684
      %v3964 = vpop.f32.mrf.mxu0
      %v3965 = vadd.f32 0.0, %v3964
      %3966 = vmatmul.f32.gmra.mxu0 %v2686
      %v3967 = vpop.f32.mrf.mxu0
      %v3968 = vadd.f32 0.0, %v3967
      %3969 = vmatmul.f32.gmra.mxu0 %v2688
      %v3970 = vpop.f32.mrf.mxu0
      %v3971 = vadd.f32 0.0, %v3970
      %3972 = vmatmul.f32.gmra.mxu0 %v2690
      %v3973 = vpop.f32.mrf.mxu0
      %v3974 = vadd.f32 0.0, %v3973
      %3975 = vmatmul.f32.gmra.mxu0 %v2692
      %v3976 = vpop.f32.mrf.mxu0
      %v3977 = vadd.f32 0.0, %v3976
      %3978 = vmatmul.f32.gmra.mxu0 %v2694
      %v3979 = vpop.f32.mrf.mxu0
      %v3980 = vadd.f32 0.0, %v3979
      %3981 = vmatmul.f32.gmra.mxu0 %v2696
      %v3982 = vpop.f32.mrf.mxu0
      %v3983 = vadd.f32 0.0, %v3982
      %3984 = vmatmul.f32.gmra.mxu0 %v2698
      %v3985 = vpop.f32.mrf.mxu0
      %v3986 = vadd.f32 0.0, %v3985
      %3987 = vmatmul.f32.gmra.mxu0 %v2700
      %v3988 = vpop.f32.mrf.mxu0
      %v3989 = vadd.f32 0.0, %v3988
      %3990 = vmatmul.f32.gmra.mxu0 %v2702
      %v3991 = vpop.f32.mrf.mxu0
      %v3992 = vadd.f32 0.0, %v3991
      %3993 = vmatmul.f32.gmra.mxu0 %v2704
      %v3994 = vpop.f32.mrf.mxu0
      %v3995 = vadd.f32 0.0, %v3994
      %3996 = vmatmul.f32.gmra.mxu0 %v2706
      %v3997 = vpop.f32.mrf.mxu0
      %v3998 = vadd.f32 0.0, %v3997
      %3999 = vmatmul.f32.gmra.mxu0 %v2708
      %v4000 = vpop.f32.mrf.mxu0
      %v4001 = vadd.f32 0.0, %v4000
      %4002 = vmatmul.f32.gmra.mxu0 %v2710
      %v4003 = vpop.f32.mrf.mxu0
      %v4004 = vadd.f32 0.0, %v4003
      %4005 = vmatmul.f32.gmra.mxu0 %v2712
      %v4006 = vpop.f32.mrf.mxu0
      %v4007 = vadd.f32 0.0, %v4006
      %4008 = vmatmul.f32.gmra.mxu0 %v2714
      %v4009 = vpop.f32.mrf.mxu0
      %v4010 = vadd.f32 0.0, %v4009
      %4011 = vmatmul.f32.gmra.mxu0 %v2716
      %v4012 = vpop.f32.mrf.mxu0
      %v4013 = vadd.f32 0.0, %v4012
      %4014 = vmatmul.f32.gmra.mxu0 %v2718
      %v4015 = vpop.f32.mrf.mxu0
      %v4016 = vadd.f32 0.0, %v4015
      %4017 = vmatmul.f32.gmra.mxu0 %v2720
      %v4018 = vpop.f32.mrf.mxu0
      %v4019 = vadd.f32 0.0, %v4018
      %4020 = vmatmul.f32.gmra.mxu0 %v2722
      %v4021 = vpop.f32.mrf.mxu0
      %v4022 = vadd.f32 0.0, %v4021
      %4023 = vmatmul.f32.gmra.mxu0 %v2724
      %v4024 = vpop.f32.mrf.mxu0
      %v4025 = vadd.f32 0.0, %v4024
      %4026 = vmatmul.f32.gmra.mxu0 %v3462
      %v4027 = vpop.f32.mrf.mxu0
      %v4028 = vadd.f32 0.0, %v4027
      %4029 = vmatmul.f32.gmra.mxu0 %v3464
      %v4030 = vpop.f32.mrf.mxu0
      %v4031 = vadd.f32 0.0, %v4030
      %4032 = vmatmul.f32.gmra.mxu0 %v3922
      %v4033 = vpop.f32.mrf.mxu0
      %v4034 = vadd.f32 0.0, %v4033
      %4035 = vmatmul.f32.gmra.mxu0 %v3924
      %v4036 = vpop.f32.mrf.mxu0
      %v4037 = vadd.f32 0.0, %v4036
      %4038 = vdwg.mxu0
      %v4039 = vadd.f32 %v3884, %v3944
      %v4040 = vadd.f32 %v3885, %v3947
      %v4041 = vadd.f32 %v3886, %v3950
      %v4042 = vadd.f32 %v3887, %v3953
      %v4043 = vadd.f32 %v3888, %v3956
      %v4044 = vadd.f32 %v3889, %v3959
      %v4045 = vadd.f32 %v3890, %v3962
      %v4046 = vadd.f32 %v3891, %v3965
      %v4047 = vadd.f32 %v3892, %v3968
      %v4048 = vadd.f32 %v3893, %v3971
      %v4049 = vadd.f32 %v3894, %v3974
      %v4050 = vadd.f32 %v3895, %v3977
      %v4051 = vadd.f32 %v3896, %v3980
      %v4052 = vadd.f32 %v3897, %v3983
      %v4053 = vadd.f32 %v3898, %v3986
      %v4054 = vadd.f32 %v3899, %v3989
      %v4055 = vadd.f32 %v3900, %v3992
      %v4056 = vadd.f32 %v3901, %v3995
      %v4057 = vadd.f32 %v3902, %v3998
      %v4058 = vadd.f32 %v3903, %v4001
      %v4059 = vadd.f32 %v3904, %v4004
      %v4060 = vadd.f32 %v3905, %v4007
      %v4061 = vadd.f32 %v3906, %v4010
      %v4062 = vadd.f32 %v3907, %v4013
      %v4063 = vadd.f32 %v3908, %v4016
      %v4064 = vadd.f32 %v3909, %v4019
      %v4065 = vadd.f32 %v3910, %v4022
      %v4066 = vadd.f32 %v3911, %v4025
      %v4067 = vadd.f32 %v3912, %v4028
      %v4068 = vadd.f32 %v3913, %v4031
      %v4069 = vadd.f32 %v3914, %v4034
      %v4070 = vadd.f32 %v3915, %v4037
      %v4071 = vrot.slane %v2531, 2
      %v4072 = vrot.slane %v2532, 2
      %v4073 = vsel %vm1171, %v4071, %v4072
      %v4074 = vrot.slane %v2533, 2
      %v4075 = vsel %vm1171, %v4072, %v4074
      %v4076 = vsel %vm461, %v4073, 0
      %v4078 = vsel %vm461, %v4075, 0
      %4080 = vmatpush.msra.mxu0 0.0
      %4081 = vmatpush.msra.mxu0 0.0
      %4082 = vmatpush.msra.mxu0 0.0
      %4083 = vmatpush.msra.mxu0 0.0
      %4084 = vmatpush.msra.mxu0 0.0
      %4085 = vmatpush.msra.mxu0 0.0
      %4086 = vmatpush.msra.mxu0 0.0
      %4087 = vmatpush.msra.mxu0 0.0
      %4088 = vmatpush.msra.mxu0 0.0
      %4089 = vmatpush.msra.mxu0 0.0
      %4090 = vmatpush.msra.mxu0 0.0
      %4091 = vmatpush.msra.mxu0 0.0
      %4092 = vmatpush.msra.mxu0 0.0
      %4093 = vmatpush.msra.mxu0 0.0
      %4094 = vmatpush.msra.mxu0 0.0
      %4095 = vmatpush.msra.mxu0 %v567
      %4096 = vmatmul.f32.gmra.mxu0 %v3104
      %v4097 = vpop.f32.mrf.mxu0
      %v4098 = vadd.f32 0.0, %v4097
      %4099 = vmatmul.f32.gmra.mxu0 %v3106
      %v4100 = vpop.f32.mrf.mxu0
      %v4101 = vadd.f32 0.0, %v4100
      %4102 = vmatmul.f32.gmra.mxu0 %v3108
      %v4103 = vpop.f32.mrf.mxu0
      %v4104 = vadd.f32 0.0, %v4103
      %4105 = vmatmul.f32.gmra.mxu0 %v3110
      %v4106 = vpop.f32.mrf.mxu0
      %v4107 = vadd.f32 0.0, %v4106
      %4108 = vmatmul.f32.gmra.mxu0 %v3112
      %v4109 = vpop.f32.mrf.mxu0
      %v4110 = vadd.f32 0.0, %v4109
      %4111 = vmatmul.f32.gmra.mxu0 %v3114
      %v4112 = vpop.f32.mrf.mxu0
      %v4113 = vadd.f32 0.0, %v4112
      %4114 = vmatmul.f32.gmra.mxu0 %v3116
      %v4115 = vpop.f32.mrf.mxu0
      %v4116 = vadd.f32 0.0, %v4115
      %4117 = vmatmul.f32.gmra.mxu0 %v3118
      %v4118 = vpop.f32.mrf.mxu0
      %v4119 = vadd.f32 0.0, %v4118
      %4120 = vmatmul.f32.gmra.mxu0 %v3120
      %v4121 = vpop.f32.mrf.mxu0
      %v4122 = vadd.f32 0.0, %v4121
      %4123 = vmatmul.f32.gmra.mxu0 %v3122
      %v4124 = vpop.f32.mrf.mxu0
      %v4125 = vadd.f32 0.0, %v4124
      %4126 = vmatmul.f32.gmra.mxu0 %v3124
      %v4127 = vpop.f32.mrf.mxu0
      %v4128 = vadd.f32 0.0, %v4127
      %4129 = vmatmul.f32.gmra.mxu0 %v3126
      %v4130 = vpop.f32.mrf.mxu0
      %v4131 = vadd.f32 0.0, %v4130
      %4132 = vmatmul.f32.gmra.mxu0 %v3128
      %v4133 = vpop.f32.mrf.mxu0
      %v4134 = vadd.f32 0.0, %v4133
      %4135 = vmatmul.f32.gmra.mxu0 %v3130
      %v4136 = vpop.f32.mrf.mxu0
      %v4137 = vadd.f32 0.0, %v4136
      %4138 = vmatmul.f32.gmra.mxu0 %v3132
      %v4139 = vpop.f32.mrf.mxu0
      %v4140 = vadd.f32 0.0, %v4139
      %4141 = vmatmul.f32.gmra.mxu0 %v3134
      %v4142 = vpop.f32.mrf.mxu0
      %v4143 = vadd.f32 0.0, %v4142
      %4144 = vmatmul.f32.gmra.mxu0 %v3136
      %v4145 = vpop.f32.mrf.mxu0
      %v4146 = vadd.f32 0.0, %v4145
      %4147 = vmatmul.f32.gmra.mxu0 %v3138
      %v4148 = vpop.f32.mrf.mxu0
      %v4149 = vadd.f32 0.0, %v4148
      %4150 = vmatmul.f32.gmra.mxu0 %v3140
      %v4151 = vpop.f32.mrf.mxu0
      %v4152 = vadd.f32 0.0, %v4151
      %4153 = vmatmul.f32.gmra.mxu0 %v3142
      %v4154 = vpop.f32.mrf.mxu0
      %v4155 = vadd.f32 0.0, %v4154
      %4156 = vmatmul.f32.gmra.mxu0 %v3144
      %v4157 = vpop.f32.mrf.mxu0
      %v4158 = vadd.f32 0.0, %v4157
      %4159 = vmatmul.f32.gmra.mxu0 %v3146
      %v4160 = vpop.f32.mrf.mxu0
      %v4161 = vadd.f32 0.0, %v4160
      %4162 = vmatmul.f32.gmra.mxu0 %v3148
      %v4163 = vpop.f32.mrf.mxu0
      %v4164 = vadd.f32 0.0, %v4163
      %4165 = vmatmul.f32.gmra.mxu0 %v3150
      %v4166 = vpop.f32.mrf.mxu0
      %v4167 = vadd.f32 0.0, %v4166
      %4168 = vmatmul.f32.gmra.mxu0 %v3152
      %v4169 = vpop.f32.mrf.mxu0
      %v4170 = vadd.f32 0.0, %v4169
      %4171 = vmatmul.f32.gmra.mxu0 %v3154
      %v4172 = vpop.f32.mrf.mxu0
      %v4173 = vadd.f32 0.0, %v4172
      %4174 = vmatmul.f32.gmra.mxu0 %v3156
      %v4175 = vpop.f32.mrf.mxu0
      %v4176 = vadd.f32 0.0, %v4175
      %4177 = vmatmul.f32.gmra.mxu0 %v3158
      %v4178 = vpop.f32.mrf.mxu0
      %v4179 = vadd.f32 0.0, %v4178
      %4180 = vmatmul.f32.gmra.mxu0 %v3616
      %v4181 = vpop.f32.mrf.mxu0
      %v4182 = vadd.f32 0.0, %v4181
      %4183 = vmatmul.f32.gmra.mxu0 %v3618
      %v4184 = vpop.f32.mrf.mxu0
      %v4185 = vadd.f32 0.0, %v4184
      %4186 = vmatmul.f32.gmra.mxu0 %v4076
      %v4187 = vpop.f32.mrf.mxu0
      %v4188 = vadd.f32 0.0, %v4187
      %4189 = vmatmul.f32.gmra.mxu0 %v4078
      %v4190 = vpop.f32.mrf.mxu0
      %v4191 = vadd.f32 0.0, %v4190
      %4192 = vdwg.mxu0
      %v4193 = vadd.f32 %v4039, %v4098
      %v4194 = vadd.f32 %v4040, %v4101
      %v4195 = vadd.f32 %v4041, %v4104
      %v4196 = vadd.f32 %v4042, %v4107
      %v4197 = vadd.f32 %v4043, %v4110
      %v4198 = vadd.f32 %v4044, %v4113
      %v4199 = vadd.f32 %v4045, %v4116
      %v4200 = vadd.f32 %v4046, %v4119
      %v4201 = vadd.f32 %v4047, %v4122
      %v4202 = vadd.f32 %v4048, %v4125
      %v4203 = vadd.f32 %v4049, %v4128
      %v4204 = vadd.f32 %v4050, %v4131
      %v4205 = vadd.f32 %v4051, %v4134
      %v4206 = vadd.f32 %v4052, %v4137
      %v4207 = vadd.f32 %v4053, %v4140
      %v4208 = vadd.f32 %v4054, %v4143
      %v4209 = vadd.f32 %v4055, %v4146
      %v4210 = vadd.f32 %v4056, %v4149
      %v4211 = vadd.f32 %v4057, %v4152
      %v4212 = vadd.f32 %v4058, %v4155
      %v4213 = vadd.f32 %v4059, %v4158
      %v4214 = vadd.f32 %v4060, %v4161
      %v4215 = vadd.f32 %v4061, %v4164
      %v4216 = vadd.f32 %v4062, %v4167
      %v4217 = vadd.f32 %v4063, %v4170
      %v4218 = vadd.f32 %v4064, %v4173
      %v4219 = vadd.f32 %v4065, %v4176
      %v4220 = vadd.f32 %v4066, %v4179
      %v4221 = vadd.f32 %v4067, %v4182
      %v4222 = vadd.f32 %v4068, %v4185
      %v4223 = vadd.f32 %v4069, %v4188
      %v4224 = vadd.f32 %v4070, %v4191
      %v4226 = vperm.slane %v568, 0
      %v4228 = vadd.f32 %v4193, %v4226
      %v4229 = vadd.f32 %v4194, %v4226
      %v4230 = vadd.f32 %v4195, %v4226
      %v4231 = vadd.f32 %v4196, %v4226
      %v4232 = vadd.f32 %v4197, %v4226
      %v4233 = vadd.f32 %v4198, %v4226
      %v4234 = vadd.f32 %v4199, %v4226
      %v4235 = vadd.f32 %v4200, %v4226
      %v4236 = vadd.f32 %v4201, %v4226
      %v4237 = vadd.f32 %v4202, %v4226
      %v4238 = vadd.f32 %v4203, %v4226
      %v4239 = vadd.f32 %v4204, %v4226
      %v4240 = vadd.f32 %v4205, %v4226
      %v4241 = vadd.f32 %v4206, %v4226
      %v4242 = vadd.f32 %v4207, %v4226
      %v4243 = vadd.f32 %v4208, %v4226
      %v4244 = vadd.f32 %v4209, %v4226
      %v4245 = vadd.f32 %v4210, %v4226
      %v4246 = vadd.f32 %v4211, %v4226
      %v4247 = vadd.f32 %v4212, %v4226
      %v4248 = vadd.f32 %v4213, %v4226
      %v4249 = vadd.f32 %v4214, %v4226
      %v4250 = vadd.f32 %v4215, %v4226
      %v4251 = vadd.f32 %v4216, %v4226
      %v4252 = vadd.f32 %v4217, %v4226
      %v4253 = vadd.f32 %v4218, %v4226
      %v4254 = vadd.f32 %v4219, %v4226
      %v4255 = vadd.f32 %v4220, %v4226
      %v4256 = vadd.f32 %v4221, %v4226
      %v4257 = vadd.f32 %v4222, %v4226
      %v4258 = vadd.f32 %v4223, %v4226
      %v4259 = vadd.f32 %v4224, %v4226
      %v4260 = vadd.f32 %v4228, %v517
      %v4261 = vadd.f32 %v4229, %v518
      %v4262 = vadd.f32 %v4230, %v519
      %v4263 = vadd.f32 %v4231, %v520
      %v4264 = vadd.f32 %v4232, %v521
      %v4265 = vadd.f32 %v4233, %v522
      %v4266 = vadd.f32 %v4234, %v523
      %v4267 = vadd.f32 %v4235, %v524
      %v4268 = vadd.f32 %v4236, %v525
      %v4269 = vadd.f32 %v4237, %v526
      %v4270 = vadd.f32 %v4238, %v527
      %v4271 = vadd.f32 %v4239, %v528
      %v4272 = vadd.f32 %v4240, %v529
      %v4273 = vadd.f32 %v4241, %v530
      %v4274 = vadd.f32 %v4242, %v531
      %v4275 = vadd.f32 %v4243, %v532
      %v4276 = vadd.f32 %v4244, %v533
      %v4277 = vadd.f32 %v4245, %v534
      %v4278 = vadd.f32 %v4246, %v535
      %v4279 = vadd.f32 %v4247, %v536
      %v4280 = vadd.f32 %v4248, %v537
      %v4281 = vadd.f32 %v4249, %v538
      %v4282 = vadd.f32 %v4250, %v539
      %v4283 = vadd.f32 %v4251, %v540
      %v4284 = vadd.f32 %v4252, %v541
      %v4285 = vadd.f32 %v4253, %v542
      %v4286 = vadd.f32 %v4254, %v543
      %v4287 = vadd.f32 %v4255, %v544
      %v4288 = vadd.f32 %v4256, %v545
      %v4289 = vadd.f32 %v4257, %v546
      %v4290 = vadd.f32 %v4258, %v547
      %v4291 = vadd.f32 %v4259, %v548
      %v4292 = vld [vmem:[%s450] sm:$0xff]
      %v4293 = vld [vmem:[%s450 + $0x8] sm:$0xff]
      %v4294 = vld [vmem:[%s450 + $0x10] sm:$0xff]
      %v4295 = vld [vmem:[%s450 + $0x18] sm:$0xff]
      %v4296 = vld [vmem:[%s450 + $0x20] sm:$0xff]
      %v4297 = vld [vmem:[%s450 + $0x28] sm:$0xff]
      %v4298 = vld [vmem:[%s450 + $0x30] sm:$0xff]
      %v4299 = vld [vmem:[%s450 + $0x38] sm:$0xff]
      %v4300 = vld [vmem:[%s450 + $0x40] sm:$0xff]
      %v4301 = vld [vmem:[%s450 + $0x48] sm:$0xff]
      %v4302 = vld [vmem:[%s450 + $0x50] sm:$0xff]
      %v4303 = vld [vmem:[%s450 + $0x58] sm:$0xff]
      %v4304 = vld [vmem:[%s450 + $0x60] sm:$0xff]
      %v4305 = vld [vmem:[%s450 + $0x68] sm:$0xff]
      %v4306 = vld [vmem:[%s450 + $0x70] sm:$0xff]
      %v4307 = vld [vmem:[%s450 + $0x78] sm:$0xff]
      %v4308 = vld [vmem:[%s450 + $0x80] sm:$0xff]
      %v4309 = vld [vmem:[%s450 + $0x88] sm:$0xff]
      %v4310 = vld [vmem:[%s450 + $0x90] sm:$0xff]
      %v4311 = vld [vmem:[%s450 + $0x98] sm:$0xff]
      %v4312 = vld [vmem:[%s450 + $0xa0] sm:$0xff]
      %v4313 = vld [vmem:[%s450 + $0xa8] sm:$0xff]
      %v4314 = vld [vmem:[%s450 + $0xb0] sm:$0xff]
      %v4315 = vld [vmem:[%s450 + $0xb8] sm:$0xff]
      %v4316 = vld [vmem:[%s450 + $0xc0] sm:$0xff]
      %v4317 = vld [vmem:[%s450 + $0xc8] sm:$0xff]
      %v4318 = vld [vmem:[%s450 + $0xd0] sm:$0xff]
      %v4319 = vld [vmem:[%s450 + $0xd8] sm:$0xff]
      %v4320 = vld [vmem:[%s450 + $0xe0] sm:$0xff]
      %v4321 = vld [vmem:[%s450 + $0xe8] sm:$0xff]
      %v4322 = vld [vmem:[%s450 + $0xf0] sm:$0xff]
      %v4323 = vld [vmem:[%s450 + $0xf8] sm:$0xff]
      %v4324 = vadd.f32 %v4292, %v4260
      %v4325 = vadd.f32 %v4293, %v4261
      %v4326 = vadd.f32 %v4294, %v4262
      %v4327 = vadd.f32 %v4295, %v4263
      %v4328 = vadd.f32 %v4296, %v4264
      %v4329 = vadd.f32 %v4297, %v4265
      %v4330 = vadd.f32 %v4298, %v4266
      %v4331 = vadd.f32 %v4299, %v4267
      %v4332 = vadd.f32 %v4300, %v4268
      %v4333 = vadd.f32 %v4301, %v4269
      %v4334 = vadd.f32 %v4302, %v4270
      %v4335 = vadd.f32 %v4303, %v4271
      %v4336 = vadd.f32 %v4304, %v4272
      %v4337 = vadd.f32 %v4305, %v4273
      %v4338 = vadd.f32 %v4306, %v4274
      %v4339 = vadd.f32 %v4307, %v4275
      %v4340 = vadd.f32 %v4308, %v4276
      %v4341 = vadd.f32 %v4309, %v4277
      %v4342 = vadd.f32 %v4310, %v4278
      %v4343 = vadd.f32 %v4311, %v4279
      %v4344 = vadd.f32 %v4312, %v4280
      %v4345 = vadd.f32 %v4313, %v4281
      %v4346 = vadd.f32 %v4314, %v4282
      %v4347 = vadd.f32 %v4315, %v4283
      %v4348 = vadd.f32 %v4316, %v4284
      %v4349 = vadd.f32 %v4317, %v4285
      %v4350 = vadd.f32 %v4318, %v4286
      %v4351 = vadd.f32 %v4319, %v4287
      %v4352 = vadd.f32 %v4320, %v4288
      %v4353 = vadd.f32 %v4321, %v4289
      %v4354 = vadd.f32 %v4322, %v4290
      %v4355 = vadd.f32 %v4323, %v4291
      %v4356 = vld [vmem:[%s6] sm:$0xff]
      %v4357 = vld [vmem:[%s6 + $0x8] sm:$0xff]
      %v4358 = vld [vmem:[%s6 + $0x10] sm:$0xff]
      %v4359 = vld [vmem:[%s6 + $0x18] sm:$0xff]
      %v4360 = vld [vmem:[%s6 + $0x20] sm:$0xff]
      %v4361 = vld [vmem:[%s6 + $0x28] sm:$0xff]
      %v4362 = vld [vmem:[%s6 + $0x30] sm:$0xff]
      %v4363 = vld [vmem:[%s6 + $0x38] sm:$0xff]
      %v4364 = vld [vmem:[%s6 + $0x40] sm:$0xff]
      %v4365 = vld [vmem:[%s7] sm:$0x1]
      %v4366 = vld [vmem:[%s8] sm:$0xff]
      %v4367 = vld [vmem:[%s8 + $0x8] sm:$0xff]
      %v4368 = vld [vmem:[%s8 + $0x10] sm:$0xff]
      %v4369 = vld [vmem:[%s8 + $0x18] sm:$0xff]
      %v4370 = vld [vmem:[%s8 + $0x20] sm:$0xff]
      %v4371 = vld [vmem:[%s8 + $0x28] sm:$0xff]
      %v4372 = vld [vmem:[%s8 + $0x30] sm:$0xff]
      %v4373 = vld [vmem:[%s8 + $0x38] sm:$0xff]
      %v4374 = vld [vmem:[%s8 + $0x40] sm:$0xff]
      %v4375 = vld [vmem:[%s9] sm:$0x1]
      %v4376 = vmax.f32 %v4324, 0.0
      %v4377 = vmax.f32 %v4325, 0.0
      %v4378 = vmax.f32 %v4326, 0.0
      %v4379 = vmax.f32 %v4327, 0.0
      %v4380 = vmax.f32 %v4328, 0.0
      %v4381 = vmax.f32 %v4329, 0.0
      %v4382 = vmax.f32 %v4330, 0.0
      %v4383 = vmax.f32 %v4331, 0.0
      %v4384 = vmax.f32 %v4332, 0.0
      %v4385 = vmax.f32 %v4333, 0.0
      %v4386 = vmax.f32 %v4334, 0.0
      %v4387 = vmax.f32 %v4335, 0.0
      %v4388 = vmax.f32 %v4336, 0.0
      %v4389 = vmax.f32 %v4337, 0.0
      %v4390 = vmax.f32 %v4338, 0.0
      %v4391 = vmax.f32 %v4339, 0.0
      %v4392 = vmax.f32 %v4340, 0.0
      %v4393 = vmax.f32 %v4341, 0.0
      %v4394 = vmax.f32 %v4342, 0.0
      %v4395 = vmax.f32 %v4343, 0.0
      %v4396 = vmax.f32 %v4344, 0.0
      %v4397 = vmax.f32 %v4345, 0.0
      %v4398 = vmax.f32 %v4346, 0.0
      %v4399 = vmax.f32 %v4347, 0.0
      %v4400 = vmax.f32 %v4348, 0.0
      %v4401 = vmax.f32 %v4349, 0.0
      %v4402 = vmax.f32 %v4350, 0.0
      %v4403 = vmax.f32 %v4351, 0.0
      %v4404 = vmax.f32 %v4352, 0.0
      %v4405 = vmax.f32 %v4353, 0.0
      %v4406 = vmax.f32 %v4354, 0.0
      %v4407 = vmax.f32 %v4355, 0.0
      %4408 = vst.msk [vmem:[%s601 + $0x1] sm:$0xff] %vm461, %v4376
      %4409 = vst.msk [vmem:[%s601 + $0x9] sm:$0xff] %vm461, %v4377
      %4410 = vst.msk [vmem:[%s601 + $0x19] sm:$0xff] %vm461, %v4378
      %4411 = vst.msk [vmem:[%s601 + $0x21] sm:$0xff] %vm461, %v4379
      %4412 = vst.msk [vmem:[%s601 + $0x31] sm:$0xff] %vm461, %v4380
      %4413 = vst.msk [vmem:[%s601 + $0x39] sm:$0xff] %vm461, %v4381
      %4414 = vst.msk [vmem:[%s601 + $0x49] sm:$0xff] %vm461, %v4382
      %4415 = vst.msk [vmem:[%s601 + $0x51] sm:$0xff] %vm461, %v4383
      %4416 = vst.msk [vmem:[%s601 + $0x61] sm:$0xff] %vm461, %v4384
      %4417 = vst.msk [vmem:[%s601 + $0x69] sm:$0xff] %vm461, %v4385
      %4418 = vst.msk [vmem:[%s601 + $0x79] sm:$0xff] %vm461, %v4386
      %4419 = vst.msk [vmem:[%s601 + $0x81] sm:$0xff] %vm461, %v4387
      %4420 = vst.msk [vmem:[%s601 + $0x91] sm:$0xff] %vm461, %v4388
      %4421 = vst.msk [vmem:[%s601 + $0x99] sm:$0xff] %vm461, %v4389
      %4422 = vst.msk [vmem:[%s601 + $0xa9] sm:$0xff] %vm461, %v4390
      %4423 = vst.msk [vmem:[%s601 + $0xb1] sm:$0xff] %vm461, %v4391
      %4424 = vst.msk [vmem:[%s601 + $0xc1] sm:$0xff] %vm461, %v4392
      %4425 = vst.msk [vmem:[%s601 + $0xc9] sm:$0xff] %vm461, %v4393
      %4426 = vst.msk [vmem:[%s601 + $0xd9] sm:$0xff] %vm461, %v4394
      %4427 = vst.msk [vmem:[%s601 + $0xe1] sm:$0xff] %vm461, %v4395
      %4428 = vst.msk [vmem:[%s601 + $0xf1] sm:$0xff] %vm461, %v4396
      %4429 = vst.msk [vmem:[%s601 + $0xf9] sm:$0xff] %vm461, %v4397
      %4430 = vst.msk [vmem:[%s601 + $0x109] sm:$0xff] %vm461, %v4398
      %4431 = vst.msk [vmem:[%s601 + $0x111] sm:$0xff] %vm461, %v4399
      %4432 = vst.msk [vmem:[%s601 + $0x121] sm:$0xff] %vm461, %v4400
      %4433 = vst.msk [vmem:[%s601 + $0x129] sm:$0xff] %vm461, %v4401
      %4434 = vst.msk [vmem:[%s601 + $0x139] sm:$0xff] %vm461, %v4402
      %4435 = vst.msk [vmem:[%s601 + $0x141] sm:$0xff] %vm461, %v4403
      %4436 = vst.msk [vmem:[%s601 + $0x151] sm:$0xff] %vm461, %v4404
      %4437 = vst.msk [vmem:[%s601 + $0x159] sm:$0xff] %vm461, %v4405
      %4438 = vst.msk [vmem:[%s601 + $0x169] sm:$0xff] %vm461, %v4406
      %4439 = vst.msk [vmem:[%s601 + $0x171] sm:$0xff] %vm461, %v4407
      %v4440 = vld [vmem:[#allocation2] sm:$0xff]
      %v4441 = vld [vmem:[#allocation2 + $0x8] sm:$0xff]
      %v4442 = vld [vmem:[#allocation2 + $0x10] sm:$0x3]
      %v4443 = vld [vmem:[#allocation2 + $0x18] sm:$0xff]
      %v4444 = vld [vmem:[#allocation2 + $0x20] sm:$0xff]
      %v4445 = vld [vmem:[#allocation2 + $0x28] sm:$0x3]
      %v4446 = vld [vmem:[#allocation2 + $0x30] sm:$0xff]
      %v4447 = vld [vmem:[#allocation2 + $0x38] sm:$0xff]
      %v4448 = vld [vmem:[#allocation2 + $0x40] sm:$0x3]
      %v4449 = vld [vmem:[#allocation2 + $0x48] sm:$0xff]
      %v4450 = vld [vmem:[#allocation2 + $0x50] sm:$0xff]
      %v4451 = vld [vmem:[#allocation2 + $0x58] sm:$0x3]
      %v4452 = vld [vmem:[#allocation2 + $0x60] sm:$0xff]
      %v4453 = vld [vmem:[#allocation2 + $0x68] sm:$0xff]
      %v4454 = vld [vmem:[#allocation2 + $0x70] sm:$0x3]
      %v4455 = vld [vmem:[#allocation2 + $0x78] sm:$0xff]
      %v4456 = vld [vmem:[#allocation2 + $0x80] sm:$0xff]
      %v4457 = vld [vmem:[#allocation2 + $0x88] sm:$0x3]
      %v4458 = vld [vmem:[#allocation2 + $0x90] sm:$0xff]
      %v4459 = vld [vmem:[#allocation2 + $0x98] sm:$0xff]
      %v4460 = vld [vmem:[#allocation2 + $0xa0] sm:$0x3]
      %v4461 = vld [vmem:[#allocation2 + $0xa8] sm:$0xff]
      %v4462 = vld [vmem:[#allocation2 + $0xb0] sm:$0xff]
      %v4463 = vld [vmem:[#allocation2 + $0xb8] sm:$0x3]
      %v4464 = vld [vmem:[#allocation2 + $0xc0] sm:$0xff]
      %v4465 = vld [vmem:[#allocation2 + $0xc8] sm:$0xff]
      %v4466 = vld [vmem:[#allocation2 + $0xd0] sm:$0x3]
      %v4467 = vld [vmem:[#allocation2 + $0xd8] sm:$0xff]
      %v4468 = vld [vmem:[#allocation2 + $0xe0] sm:$0xff]
      %v4469 = vld [vmem:[#allocation2 + $0xe8] sm:$0x3]
      %v4470 = vld [vmem:[#allocation2 + $0xf0] sm:$0xff]
      %v4471 = vld [vmem:[#allocation2 + $0xf8] sm:$0xff]
      %v4472 = vld [vmem:[#allocation2 + $0x100] sm:$0x3]
      %v4473 = vld [vmem:[#allocation2 + $0x108] sm:$0xff]
      %v4474 = vld [vmem:[#allocation2 + $0x110] sm:$0xff]
      %v4475 = vld [vmem:[#allocation2 + $0x118] sm:$0x3]
      %v4476 = vld [vmem:[#allocation2 + $0x120] sm:$0xff]
      %v4477 = vld [vmem:[#allocation2 + $0x128] sm:$0xff]
      %v4478 = vld [vmem:[#allocation2 + $0x130] sm:$0x3]
      %v4479 = vld [vmem:[#allocation2 + $0x138] sm:$0xff]
      %v4480 = vld [vmem:[#allocation2 + $0x140] sm:$0xff]
      %v4481 = vld [vmem:[#allocation2 + $0x148] sm:$0x3]
      %v4482 = vld [vmem:[#allocation2 + $0x150] sm:$0xff]
      %v4483 = vld [vmem:[#allocation2 + $0x158] sm:$0xff]
      %v4484 = vld [vmem:[#allocation2 + $0x160] sm:$0x3]
      %v4485 = vld [vmem:[#allocation2 + $0x168] sm:$0xff]
      %v4486 = vld [vmem:[#allocation2 + $0x170] sm:$0xff]
      %v4487 = vld [vmem:[#allocation2 + $0x178] sm:$0x3]
      %v4488 = vld [vmem:[#allocation2 + $0x180] sm:$0xff]
      %v4489 = vld [vmem:[#allocation2 + $0x188] sm:$0xff]
      %v4490 = vld [vmem:[#allocation2 + $0x190] sm:$0x3]
      %v4491 = vld [vmem:[#allocation2 + $0x198] sm:$0xff]
      %v4492 = vld [vmem:[#allocation2 + $0x1a0] sm:$0xff]
      %v4493 = vld [vmem:[#allocation2 + $0x1a8] sm:$0x3]
      %v4542 = vrot.slane %v4440, 1
      %v4543 = vrot.slane %v4441, 1
      %v4544 = vsel %vm736, %v4542, %v4543
      %v4545 = vrot.slane %v4442, 1
      %v4546 = vsel %vm736, %v4543, %v4545
      %v4547 = vrot.slane %v4443, 1
      %v4548 = vrot.slane %v4444, 1
      %v4549 = vsel %vm736, %v4547, %v4548
      %v4550 = vrot.slane %v4445, 1
      %v4551 = vsel %vm736, %v4548, %v4550
      %v4552 = vrot.slane %v4446, 1
      %v4553 = vrot.slane %v4447, 1
      %v4554 = vsel %vm736, %v4552, %v4553
      %v4555 = vrot.slane %v4448, 1
      %v4556 = vsel %vm736, %v4553, %v4555
      %v4557 = vrot.slane %v4449, 1
      %v4558 = vrot.slane %v4450, 1
      %v4559 = vsel %vm736, %v4557, %v4558
      %v4560 = vrot.slane %v4451, 1
      %v4561 = vsel %vm736, %v4558, %v4560
      %v4562 = vrot.slane %v4452, 1
      %v4563 = vrot.slane %v4453, 1
      %v4564 = vsel %vm736, %v4562, %v4563
      %v4565 = vrot.slane %v4454, 1
      %v4566 = vsel %vm736, %v4563, %v4565
      %v4567 = vrot.slane %v4455, 1
      %v4568 = vrot.slane %v4456, 1
      %v4569 = vsel %vm736, %v4567, %v4568
      %v4570 = vrot.slane %v4457, 1
      %v4571 = vsel %vm736, %v4568, %v4570
      %v4572 = vrot.slane %v4458, 1
      %v4573 = vrot.slane %v4459, 1
      %v4574 = vsel %vm736, %v4572, %v4573
      %v4575 = vrot.slane %v4460, 1
      %v4576 = vsel %vm736, %v4573, %v4575
      %v4577 = vrot.slane %v4461, 1
      %v4578 = vrot.slane %v4462, 1
      %v4579 = vsel %vm736, %v4577, %v4578
      %v4580 = vrot.slane %v4463, 1
      %v4581 = vsel %vm736, %v4578, %v4580
      %v4582 = vrot.slane %v4464, 1
      %v4583 = vrot.slane %v4465, 1
      %v4584 = vsel %vm736, %v4582, %v4583
      %v4585 = vrot.slane %v4466, 1
      %v4586 = vsel %vm736, %v4583, %v4585
      %v4587 = vrot.slane %v4467, 1
      %v4588 = vrot.slane %v4468, 1
      %v4589 = vsel %vm736, %v4587, %v4588
      %v4590 = vrot.slane %v4469, 1
      %v4591 = vsel %vm736, %v4588, %v4590
      %v4592 = vrot.slane %v4470, 1
      %v4593 = vrot.slane %v4471, 1
      %v4594 = vsel %vm736, %v4592, %v4593
      %v4595 = vrot.slane %v4472, 1
      %v4596 = vsel %vm736, %v4593, %v4595
      %v4597 = vrot.slane %v4473, 1
      %v4598 = vrot.slane %v4474, 1
      %v4599 = vsel %vm736, %v4597, %v4598
      %v4600 = vrot.slane %v4475, 1
      %v4601 = vsel %vm736, %v4598, %v4600
      %v4602 = vrot.slane %v4476, 1
      %v4603 = vrot.slane %v4477, 1
      %v4604 = vsel %vm736, %v4602, %v4603
      %v4605 = vrot.slane %v4478, 1
      %v4606 = vsel %vm736, %v4603, %v4605
      %v4607 = vrot.slane %v4479, 1
      %v4608 = vrot.slane %v4480, 1
      %v4609 = vsel %vm736, %v4607, %v4608
      %v4610 = vrot.slane %v4481, 1
      %v4611 = vsel %vm736, %v4608, %v4610
      %v4612 = vrot.slane %v4482, 1
      %v4613 = vrot.slane %v4483, 1
      %v4614 = vsel %vm736, %v4612, %v4613
      %v4615 = vrot.slane %v4484, 1
      %v4616 = vsel %vm736, %v4613, %v4615
      %v4617 = vrot.slane %v4485, 1
      %v4618 = vrot.slane %v4486, 1
      %v4619 = vsel %vm736, %v4617, %v4618
      %v4620 = vrot.slane %v4487, 1
      %v4621 = vsel %vm736, %v4618, %v4620
      %v4622 = vsel %vm461, %v4544, 0
      %v4624 = vsel %vm461, %v4546, 0
      %v4626 = vsel %vm461, %v4549, 0
      %v4628 = vsel %vm461, %v4551, 0
      %v4630 = vsel %vm461, %v4554, 0
      %v4632 = vsel %vm461, %v4556, 0
      %v4634 = vsel %vm461, %v4559, 0
      %v4636 = vsel %vm461, %v4561, 0
      %v4638 = vsel %vm461, %v4564, 0
      %v4640 = vsel %vm461, %v4566, 0
      %v4642 = vsel %vm461, %v4569, 0
      %v4644 = vsel %vm461, %v4571, 0
      %v4646 = vsel %vm461, %v4574, 0
      %v4648 = vsel %vm461, %v4576, 0
      %v4650 = vsel %vm461, %v4579, 0
      %v4652 = vsel %vm461, %v4581, 0
      %v4654 = vsel %vm461, %v4584, 0
      %v4656 = vsel %vm461, %v4586, 0
      %v4658 = vsel %vm461, %v4589, 0
      %v4660 = vsel %vm461, %v4591, 0
      %v4662 = vsel %vm461, %v4594, 0
      %v4664 = vsel %vm461, %v4596, 0
      %v4666 = vsel %vm461, %v4599, 0
      %v4668 = vsel %vm461, %v4601, 0
      %v4670 = vsel %vm461, %v4604, 0
      %v4672 = vsel %vm461, %v4606, 0
      %v4674 = vsel %vm461, %v4609, 0
      %v4676 = vsel %vm461, %v4611, 0
      %v4678 = vsel %vm461, %v4614, 0
      %v4680 = vsel %vm461, %v4616, 0
      %v4682 = vsel %vm461, %v4619, 0
      %v4684 = vsel %vm461, %v4621, 0
      %4686 = vmatpush.msra.mxu0 0.0
      %4687 = vmatpush.msra.mxu0 0.0
      %4688 = vmatpush.msra.mxu0 0.0
      %4689 = vmatpush.msra.mxu0 0.0
      %4690 = vmatpush.msra.mxu0 0.0
      %4691 = vmatpush.msra.mxu0 0.0
      %4692 = vmatpush.msra.mxu0 0.0
      %4693 = vmatpush.msra.mxu0 0.0
      %4694 = vmatpush.msra.mxu0 0.0
      %4695 = vmatpush.msra.mxu0 0.0
      %4696 = vmatpush.msra.mxu0 0.0
      %4697 = vmatpush.msra.mxu0 0.0
      %4698 = vmatpush.msra.mxu0 0.0
      %4699 = vmatpush.msra.mxu0 0.0
      %4700 = vmatpush.msra.mxu0 0.0
      %4701 = vmatpush.msra.mxu0 %v4357
      %4702 = vmatmul.f32.gmra.mxu0 %v4622
      %v4703 = vpop.f32.mrf.mxu0
      %v4704 = vadd.f32 0.0, %v4703
      %4705 = vmatmul.f32.gmra.mxu0 %v4624
      %v4706 = vpop.f32.mrf.mxu0
      %v4707 = vadd.f32 0.0, %v4706
      %4708 = vmatmul.f32.gmra.mxu0 %v4626
      %v4709 = vpop.f32.mrf.mxu0
      %v4710 = vadd.f32 0.0, %v4709
      %4711 = vmatmul.f32.gmra.mxu0 %v4628
      %v4712 = vpop.f32.mrf.mxu0
      %v4713 = vadd.f32 0.0, %v4712
      %4714 = vmatmul.f32.gmra.mxu0 %v4630
      %v4715 = vpop.f32.mrf.mxu0
      %v4716 = vadd.f32 0.0, %v4715
      %4717 = vmatmul.f32.gmra.mxu0 %v4632
      %v4718 = vpop.f32.mrf.mxu0
      %v4719 = vadd.f32 0.0, %v4718
      %4720 = vmatmul.f32.gmra.mxu0 %v4634
      %v4721 = vpop.f32.mrf.mxu0
      %v4722 = vadd.f32 0.0, %v4721
      %4723 = vmatmul.f32.gmra.mxu0 %v4636
      %v4724 = vpop.f32.mrf.mxu0
      %v4725 = vadd.f32 0.0, %v4724
      %4726 = vmatmul.f32.gmra.mxu0 %v4638
      %v4727 = vpop.f32.mrf.mxu0
      %v4728 = vadd.f32 0.0, %v4727
      %4729 = vmatmul.f32.gmra.mxu0 %v4640
      %v4730 = vpop.f32.mrf.mxu0
      %v4731 = vadd.f32 0.0, %v4730
      %4732 = vmatmul.f32.gmra.mxu0 %v4642
      %v4733 = vpop.f32.mrf.mxu0
      %v4734 = vadd.f32 0.0, %v4733
      %4735 = vmatmul.f32.gmra.mxu0 %v4644
      %v4736 = vpop.f32.mrf.mxu0
      %v4737 = vadd.f32 0.0, %v4736
      %4738 = vmatmul.f32.gmra.mxu0 %v4646
      %v4739 = vpop.f32.mrf.mxu0
      %v4740 = vadd.f32 0.0, %v4739
      %4741 = vmatmul.f32.gmra.mxu0 %v4648
      %v4742 = vpop.f32.mrf.mxu0
      %v4743 = vadd.f32 0.0, %v4742
      %4744 = vmatmul.f32.gmra.mxu0 %v4650
      %v4745 = vpop.f32.mrf.mxu0
      %v4746 = vadd.f32 0.0, %v4745
      %4747 = vmatmul.f32.gmra.mxu0 %v4652
      %v4748 = vpop.f32.mrf.mxu0
      %v4749 = vadd.f32 0.0, %v4748
      %4750 = vmatmul.f32.gmra.mxu0 %v4654
      %v4751 = vpop.f32.mrf.mxu0
      %v4752 = vadd.f32 0.0, %v4751
      %4753 = vmatmul.f32.gmra.mxu0 %v4656
      %v4754 = vpop.f32.mrf.mxu0
      %v4755 = vadd.f32 0.0, %v4754
      %4756 = vmatmul.f32.gmra.mxu0 %v4658
      %v4757 = vpop.f32.mrf.mxu0
      %v4758 = vadd.f32 0.0, %v4757
      %4759 = vmatmul.f32.gmra.mxu0 %v4660
      %v4760 = vpop.f32.mrf.mxu0
      %v4761 = vadd.f32 0.0, %v4760
      %4762 = vmatmul.f32.gmra.mxu0 %v4662
      %v4763 = vpop.f32.mrf.mxu0
      %v4764 = vadd.f32 0.0, %v4763
      %4765 = vmatmul.f32.gmra.mxu0 %v4664
      %v4766 = vpop.f32.mrf.mxu0
      %v4767 = vadd.f32 0.0, %v4766
      %4768 = vmatmul.f32.gmra.mxu0 %v4666
      %v4769 = vpop.f32.mrf.mxu0
      %v4770 = vadd.f32 0.0, %v4769
      %4771 = vmatmul.f32.gmra.mxu0 %v4668
      %v4772 = vpop.f32.mrf.mxu0
      %v4773 = vadd.f32 0.0, %v4772
      %4774 = vmatmul.f32.gmra.mxu0 %v4670
      %v4775 = vpop.f32.mrf.mxu0
      %v4776 = vadd.f32 0.0, %v4775
      %4777 = vmatmul.f32.gmra.mxu0 %v4672
      %v4778 = vpop.f32.mrf.mxu0
      %v4779 = vadd.f32 0.0, %v4778
      %4780 = vmatmul.f32.gmra.mxu0 %v4674
      %v4781 = vpop.f32.mrf.mxu0
      %v4782 = vadd.f32 0.0, %v4781
      %4783 = vmatmul.f32.gmra.mxu0 %v4676
      %v4784 = vpop.f32.mrf.mxu0
      %v4785 = vadd.f32 0.0, %v4784
      %4786 = vmatmul.f32.gmra.mxu0 %v4678
      %v4787 = vpop.f32.mrf.mxu0
      %v4788 = vadd.f32 0.0, %v4787
      %4789 = vmatmul.f32.gmra.mxu0 %v4680
      %v4790 = vpop.f32.mrf.mxu0
      %v4791 = vadd.f32 0.0, %v4790
      %4792 = vmatmul.f32.gmra.mxu0 %v4682
      %v4793 = vpop.f32.mrf.mxu0
      %v4794 = vadd.f32 0.0, %v4793
      %4795 = vmatmul.f32.gmra.mxu0 %v4684
      %v4796 = vpop.f32.mrf.mxu0
      %v4797 = vadd.f32 0.0, %v4796
      %4798 = vdwg.mxu0
      %v4799 = vsel %vm461, %v4440, 0
      %v4801 = vsel %vm461, %v4441, 0
      %v4803 = vsel %vm461, %v4443, 0
      %v4805 = vsel %vm461, %v4444, 0
      %v4807 = vsel %vm461, %v4446, 0
      %v4809 = vsel %vm461, %v4447, 0
      %v4811 = vsel %vm461, %v4449, 0
      %v4813 = vsel %vm461, %v4450, 0
      %v4815 = vsel %vm461, %v4452, 0
      %v4817 = vsel %vm461, %v4453, 0
      %v4819 = vsel %vm461, %v4455, 0
      %v4821 = vsel %vm461, %v4456, 0
      %v4823 = vsel %vm461, %v4458, 0
      %v4825 = vsel %vm461, %v4459, 0
      %v4827 = vsel %vm461, %v4461, 0
      %v4829 = vsel %vm461, %v4462, 0
      %v4831 = vsel %vm461, %v4464, 0
      %v4833 = vsel %vm461, %v4465, 0
      %v4835 = vsel %vm461, %v4467, 0
      %v4837 = vsel %vm461, %v4468, 0
      %v4839 = vsel %vm461, %v4470, 0
      %v4841 = vsel %vm461, %v4471, 0
      %v4843 = vsel %vm461, %v4473, 0
      %v4845 = vsel %vm461, %v4474, 0
      %v4847 = vsel %vm461, %v4476, 0
      %v4849 = vsel %vm461, %v4477, 0
      %v4851 = vsel %vm461, %v4479, 0
      %v4853 = vsel %vm461, %v4480, 0
      %v4855 = vsel %vm461, %v4482, 0
      %v4857 = vsel %vm461, %v4483, 0
      %v4859 = vsel %vm461, %v4485, 0
      %v4861 = vsel %vm461, %v4486, 0
      %4863 = vmatpush.msra.mxu0 0.0
      %4864 = vmatpush.msra.mxu0 0.0
      %4865 = vmatpush.msra.mxu0 0.0
      %4866 = vmatpush.msra.mxu0 0.0
      %4867 = vmatpush.msra.mxu0 0.0
      %4868 = vmatpush.msra.mxu0 0.0
      %4869 = vmatpush.msra.mxu0 0.0
      %4870 = vmatpush.msra.mxu0 0.0
      %4871 = vmatpush.msra.mxu0 0.0
      %4872 = vmatpush.msra.mxu0 0.0
      %4873 = vmatpush.msra.mxu0 0.0
      %4874 = vmatpush.msra.mxu0 0.0
      %4875 = vmatpush.msra.mxu0 0.0
      %4876 = vmatpush.msra.mxu0 0.0
      %4877 = vmatpush.msra.mxu0 0.0
      %4878 = vmatpush.msra.mxu0 %v4356
      %4879 = vmatmul.f32.gmra.mxu0 %v4799
      %v4880 = vpop.f32.mrf.mxu0
      %v4881 = vadd.f32 %v4704, %v4880
      %4882 = vmatmul.f32.gmra.mxu0 %v4801
      %v4883 = vpop.f32.mrf.mxu0
      %v4884 = vadd.f32 %v4707, %v4883
      %4885 = vmatmul.f32.gmra.mxu0 %v4803
      %v4886 = vpop.f32.mrf.mxu0
      %v4887 = vadd.f32 %v4710, %v4886
      %4888 = vmatmul.f32.gmra.mxu0 %v4805
      %v4889 = vpop.f32.mrf.mxu0
      %v4890 = vadd.f32 %v4713, %v4889
      %4891 = vmatmul.f32.gmra.mxu0 %v4807
      %v4892 = vpop.f32.mrf.mxu0
      %v4893 = vadd.f32 %v4716, %v4892
      %4894 = vmatmul.f32.gmra.mxu0 %v4809
      %v4895 = vpop.f32.mrf.mxu0
      %v4896 = vadd.f32 %v4719, %v4895
      %4897 = vmatmul.f32.gmra.mxu0 %v4811
      %v4898 = vpop.f32.mrf.mxu0
      %v4899 = vadd.f32 %v4722, %v4898
      %4900 = vmatmul.f32.gmra.mxu0 %v4813
      %v4901 = vpop.f32.mrf.mxu0
      %v4902 = vadd.f32 %v4725, %v4901
      %4903 = vmatmul.f32.gmra.mxu0 %v4815
      %v4904 = vpop.f32.mrf.mxu0
      %v4905 = vadd.f32 %v4728, %v4904
      %4906 = vmatmul.f32.gmra.mxu0 %v4817
      %v4907 = vpop.f32.mrf.mxu0
      %v4908 = vadd.f32 %v4731, %v4907
      %4909 = vmatmul.f32.gmra.mxu0 %v4819
      %v4910 = vpop.f32.mrf.mxu0
      %v4911 = vadd.f32 %v4734, %v4910
      %4912 = vmatmul.f32.gmra.mxu0 %v4821
      %v4913 = vpop.f32.mrf.mxu0
      %v4914 = vadd.f32 %v4737, %v4913
      %4915 = vmatmul.f32.gmra.mxu0 %v4823
      %v4916 = vpop.f32.mrf.mxu0
      %v4917 = vadd.f32 %v4740, %v4916
      %4918 = vmatmul.f32.gmra.mxu0 %v4825
      %v4919 = vpop.f32.mrf.mxu0
      %v4920 = vadd.f32 %v4743, %v4919
      %4921 = vmatmul.f32.gmra.mxu0 %v4827
      %v4922 = vpop.f32.mrf.mxu0
      %v4923 = vadd.f32 %v4746, %v4922
      %4924 = vmatmul.f32.gmra.mxu0 %v4829
      %v4925 = vpop.f32.mrf.mxu0
      %v4926 = vadd.f32 %v4749, %v4925
      %4927 = vmatmul.f32.gmra.mxu0 %v4831
      %v4928 = vpop.f32.mrf.mxu0
      %v4929 = vadd.f32 %v4752, %v4928
      %4930 = vmatmul.f32.gmra.mxu0 %v4833
      %v4931 = vpop.f32.mrf.mxu0
      %v4932 = vadd.f32 %v4755, %v4931
      %4933 = vmatmul.f32.gmra.mxu0 %v4835
      %v4934 = vpop.f32.mrf.mxu0
      %v4935 = vadd.f32 %v4758, %v4934
      %4936 = vmatmul.f32.gmra.mxu0 %v4837
      %v4937 = vpop.f32.mrf.mxu0
      %v4938 = vadd.f32 %v4761, %v4937
      %4939 = vmatmul.f32.gmra.mxu0 %v4839
      %v4940 = vpop.f32.mrf.mxu0
      %v4941 = vadd.f32 %v4764, %v4940
      %4942 = vmatmul.f32.gmra.mxu0 %v4841
      %v4943 = vpop.f32.mrf.mxu0
      %v4944 = vadd.f32 %v4767, %v4943
      %4945 = vmatmul.f32.gmra.mxu0 %v4843
      %v4946 = vpop.f32.mrf.mxu0
      %v4947 = vadd.f32 %v4770, %v4946
      %4948 = vmatmul.f32.gmra.mxu0 %v4845
      %v4949 = vpop.f32.mrf.mxu0
      %v4950 = vadd.f32 %v4773, %v4949
      %4951 = vmatmul.f32.gmra.mxu0 %v4847
      %v4952 = vpop.f32.mrf.mxu0
      %v4953 = vadd.f32 %v4776, %v4952
      %4954 = vmatmul.f32.gmra.mxu0 %v4849
      %v4955 = vpop.f32.mrf.mxu0
      %v4956 = vadd.f32 %v4779, %v4955
      %4957 = vmatmul.f32.gmra.mxu0 %v4851
      %v4958 = vpop.f32.mrf.mxu0
      %v4959 = vadd.f32 %v4782, %v4958
      %4960 = vmatmul.f32.gmra.mxu0 %v4853
      %v4961 = vpop.f32.mrf.mxu0
      %v4962 = vadd.f32 %v4785, %v4961
      %4963 = vmatmul.f32.gmra.mxu0 %v4855
      %v4964 = vpop.f32.mrf.mxu0
      %v4965 = vadd.f32 %v4788, %v4964
      %4966 = vmatmul.f32.gmra.mxu0 %v4857
      %v4967 = vpop.f32.mrf.mxu0
      %v4968 = vadd.f32 %v4791, %v4967
      %4969 = vmatmul.f32.gmra.mxu0 %v4859
      %v4970 = vpop.f32.mrf.mxu0
      %v4971 = vadd.f32 %v4794, %v4970
      %4972 = vmatmul.f32.gmra.mxu0 %v4861
      %v4973 = vpop.f32.mrf.mxu0
      %v4974 = vadd.f32 %v4797, %v4973
      %4975 = vdwg.mxu0
      %v4976 = vrot.slane %v4440, 2
      %v4977 = vrot.slane %v4441, 2
      %v4978 = vsel %vm1171, %v4976, %v4977
      %v4979 = vrot.slane %v4442, 2
      %v4980 = vsel %vm1171, %v4977, %v4979
      %v4981 = vrot.slane %v4443, 2
      %v4982 = vrot.slane %v4444, 2
      %v4983 = vsel %vm1171, %v4981, %v4982
      %v4984 = vrot.slane %v4445, 2
      %v4985 = vsel %vm1171, %v4982, %v4984
      %v4986 = vrot.slane %v4446, 2
      %v4987 = vrot.slane %v4447, 2
      %v4988 = vsel %vm1171, %v4986, %v4987
      %v4989 = vrot.slane %v4448, 2
      %v4990 = vsel %vm1171, %v4987, %v4989
      %v4991 = vrot.slane %v4449, 2
      %v4992 = vrot.slane %v4450, 2
      %v4993 = vsel %vm1171, %v4991, %v4992
      %v4994 = vrot.slane %v4451, 2
      %v4995 = vsel %vm1171, %v4992, %v4994
      %v4996 = vrot.slane %v4452, 2
      %v4997 = vrot.slane %v4453, 2
      %v4998 = vsel %vm1171, %v4996, %v4997
      %v4999 = vrot.slane %v4454, 2
      %v5000 = vsel %vm1171, %v4997, %v4999
      %v5001 = vrot.slane %v4455, 2
      %v5002 = vrot.slane %v4456, 2
      %v5003 = vsel %vm1171, %v5001, %v5002
      %v5004 = vrot.slane %v4457, 2
      %v5005 = vsel %vm1171, %v5002, %v5004
      %v5006 = vrot.slane %v4458, 2
      %v5007 = vrot.slane %v4459, 2
      %v5008 = vsel %vm1171, %v5006, %v5007
      %v5009 = vrot.slane %v4460, 2
      %v5010 = vsel %vm1171, %v5007, %v5009
      %v5011 = vrot.slane %v4461, 2
      %v5012 = vrot.slane %v4462, 2
      %v5013 = vsel %vm1171, %v5011, %v5012
      %v5014 = vrot.slane %v4463, 2
      %v5015 = vsel %vm1171, %v5012, %v5014
      %v5016 = vrot.slane %v4464, 2
      %v5017 = vrot.slane %v4465, 2
      %v5018 = vsel %vm1171, %v5016, %v5017
      %v5019 = vrot.slane %v4466, 2
      %v5020 = vsel %vm1171, %v5017, %v5019
      %v5021 = vrot.slane %v4467, 2
      %v5022 = vrot.slane %v4468, 2
      %v5023 = vsel %vm1171, %v5021, %v5022
      %v5024 = vrot.slane %v4469, 2
      %v5025 = vsel %vm1171, %v5022, %v5024
      %v5026 = vrot.slane %v4470, 2
      %v5027 = vrot.slane %v4471, 2
      %v5028 = vsel %vm1171, %v5026, %v5027
      %v5029 = vrot.slane %v4472, 2
      %v5030 = vsel %vm1171, %v5027, %v5029
      %v5031 = vrot.slane %v4473, 2
      %v5032 = vrot.slane %v4474, 2
      %v5033 = vsel %vm1171, %v5031, %v5032
      %v5034 = vrot.slane %v4475, 2
      %v5035 = vsel %vm1171, %v5032, %v5034
      %v5036 = vrot.slane %v4476, 2
      %v5037 = vrot.slane %v4477, 2
      %v5038 = vsel %vm1171, %v5036, %v5037
      %v5039 = vrot.slane %v4478, 2
      %v5040 = vsel %vm1171, %v5037, %v5039
      %v5041 = vrot.slane %v4479, 2
      %v5042 = vrot.slane %v4480, 2
      %v5043 = vsel %vm1171, %v5041, %v5042
      %v5044 = vrot.slane %v4481, 2
      %v5045 = vsel %vm1171, %v5042, %v5044
      %v5046 = vrot.slane %v4482, 2
      %v5047 = vrot.slane %v4483, 2
      %v5048 = vsel %vm1171, %v5046, %v5047
      %v5049 = vrot.slane %v4484, 2
      %v5050 = vsel %vm1171, %v5047, %v5049
      %v5051 = vrot.slane %v4485, 2
      %v5052 = vrot.slane %v4486, 2
      %v5053 = vsel %vm1171, %v5051, %v5052
      %v5054 = vrot.slane %v4487, 2
      %v5055 = vsel %vm1171, %v5052, %v5054
      %v5056 = vsel %vm461, %v4978, 0
      %v5058 = vsel %vm461, %v4980, 0
      %v5060 = vsel %vm461, %v4983, 0
      %v5062 = vsel %vm461, %v4985, 0
      %v5064 = vsel %vm461, %v4988, 0
      %v5066 = vsel %vm461, %v4990, 0
      %v5068 = vsel %vm461, %v4993, 0
      %v5070 = vsel %vm461, %v4995, 0
      %v5072 = vsel %vm461, %v4998, 0
      %v5074 = vsel %vm461, %v5000, 0
      %v5076 = vsel %vm461, %v5003, 0
      %v5078 = vsel %vm461, %v5005, 0
      %v5080 = vsel %vm461, %v5008, 0
      %v5082 = vsel %vm461, %v5010, 0
      %v5084 = vsel %vm461, %v5013, 0
      %v5086 = vsel %vm461, %v5015, 0
      %v5088 = vsel %vm461, %v5018, 0
      %v5090 = vsel %vm461, %v5020, 0
      %v5092 = vsel %vm461, %v5023, 0
      %v5094 = vsel %vm461, %v5025, 0
      %v5096 = vsel %vm461, %v5028, 0
      %v5098 = vsel %vm461, %v5030, 0
      %v5100 = vsel %vm461, %v5033, 0
      %v5102 = vsel %vm461, %v5035, 0
      %v5104 = vsel %vm461, %v5038, 0
      %v5106 = vsel %vm461, %v5040, 0
      %v5108 = vsel %vm461, %v5043, 0
      %v5110 = vsel %vm461, %v5045, 0
      %v5112 = vsel %vm461, %v5048, 0
      %v5114 = vsel %vm461, %v5050, 0
      %v5116 = vsel %vm461, %v5053, 0
      %v5118 = vsel %vm461, %v5055, 0
      %5120 = vmatpush.msra.mxu0 0.0
      %5121 = vmatpush.msra.mxu0 0.0
      %5122 = vmatpush.msra.mxu0 0.0
      %5123 = vmatpush.msra.mxu0 0.0
      %5124 = vmatpush.msra.mxu0 0.0
      %5125 = vmatpush.msra.mxu0 0.0
      %5126 = vmatpush.msra.mxu0 0.0
      %5127 = vmatpush.msra.mxu0 0.0
      %5128 = vmatpush.msra.mxu0 0.0
      %5129 = vmatpush.msra.mxu0 0.0
      %5130 = vmatpush.msra.mxu0 0.0
      %5131 = vmatpush.msra.mxu0 0.0
      %5132 = vmatpush.msra.mxu0 0.0
      %5133 = vmatpush.msra.mxu0 0.0
      %5134 = vmatpush.msra.mxu0 0.0
      %5135 = vmatpush.msra.mxu0 %v4358
      %5136 = vmatmul.f32.gmra.mxu0 %v5056
      %v5137 = vpop.f32.mrf.mxu0
      %v5138 = vadd.f32 0.0, %v5137
      %5139 = vmatmul.f32.gmra.mxu0 %v5058
      %v5140 = vpop.f32.mrf.mxu0
      %v5141 = vadd.f32 0.0, %v5140
      %5142 = vmatmul.f32.gmra.mxu0 %v5060
      %v5143 = vpop.f32.mrf.mxu0
      %v5144 = vadd.f32 0.0, %v5143
      %5145 = vmatmul.f32.gmra.mxu0 %v5062
      %v5146 = vpop.f32.mrf.mxu0
      %v5147 = vadd.f32 0.0, %v5146
      %5148 = vmatmul.f32.gmra.mxu0 %v5064
      %v5149 = vpop.f32.mrf.mxu0
      %v5150 = vadd.f32 0.0, %v5149
      %5151 = vmatmul.f32.gmra.mxu0 %v5066
      %v5152 = vpop.f32.mrf.mxu0
      %v5153 = vadd.f32 0.0, %v5152
      %5154 = vmatmul.f32.gmra.mxu0 %v5068
      %v5155 = vpop.f32.mrf.mxu0
      %v5156 = vadd.f32 0.0, %v5155
      %5157 = vmatmul.f32.gmra.mxu0 %v5070
      %v5158 = vpop.f32.mrf.mxu0
      %v5159 = vadd.f32 0.0, %v5158
      %5160 = vmatmul.f32.gmra.mxu0 %v5072
      %v5161 = vpop.f32.mrf.mxu0
      %v5162 = vadd.f32 0.0, %v5161
      %5163 = vmatmul.f32.gmra.mxu0 %v5074
      %v5164 = vpop.f32.mrf.mxu0
      %v5165 = vadd.f32 0.0, %v5164
      %5166 = vmatmul.f32.gmra.mxu0 %v5076
      %v5167 = vpop.f32.mrf.mxu0
      %v5168 = vadd.f32 0.0, %v5167
      %5169 = vmatmul.f32.gmra.mxu0 %v5078
      %v5170 = vpop.f32.mrf.mxu0
      %v5171 = vadd.f32 0.0, %v5170
      %5172 = vmatmul.f32.gmra.mxu0 %v5080
      %v5173 = vpop.f32.mrf.mxu0
      %v5174 = vadd.f32 0.0, %v5173
      %5175 = vmatmul.f32.gmra.mxu0 %v5082
      %v5176 = vpop.f32.mrf.mxu0
      %v5177 = vadd.f32 0.0, %v5176
      %5178 = vmatmul.f32.gmra.mxu0 %v5084
      %v5179 = vpop.f32.mrf.mxu0
      %v5180 = vadd.f32 0.0, %v5179
      %5181 = vmatmul.f32.gmra.mxu0 %v5086
      %v5182 = vpop.f32.mrf.mxu0
      %v5183 = vadd.f32 0.0, %v5182
      %5184 = vmatmul.f32.gmra.mxu0 %v5088
      %v5185 = vpop.f32.mrf.mxu0
      %v5186 = vadd.f32 0.0, %v5185
      %5187 = vmatmul.f32.gmra.mxu0 %v5090
      %v5188 = vpop.f32.mrf.mxu0
      %v5189 = vadd.f32 0.0, %v5188
      %5190 = vmatmul.f32.gmra.mxu0 %v5092
      %v5191 = vpop.f32.mrf.mxu0
      %v5192 = vadd.f32 0.0, %v5191
      %5193 = vmatmul.f32.gmra.mxu0 %v5094
      %v5194 = vpop.f32.mrf.mxu0
      %v5195 = vadd.f32 0.0, %v5194
      %5196 = vmatmul.f32.gmra.mxu0 %v5096
      %v5197 = vpop.f32.mrf.mxu0
      %v5198 = vadd.f32 0.0, %v5197
      %5199 = vmatmul.f32.gmra.mxu0 %v5098
      %v5200 = vpop.f32.mrf.mxu0
      %v5201 = vadd.f32 0.0, %v5200
      %5202 = vmatmul.f32.gmra.mxu0 %v5100
      %v5203 = vpop.f32.mrf.mxu0
      %v5204 = vadd.f32 0.0, %v5203
      %5205 = vmatmul.f32.gmra.mxu0 %v5102
      %v5206 = vpop.f32.mrf.mxu0
      %v5207 = vadd.f32 0.0, %v5206
      %5208 = vmatmul.f32.gmra.mxu0 %v5104
      %v5209 = vpop.f32.mrf.mxu0
      %v5210 = vadd.f32 0.0, %v5209
      %5211 = vmatmul.f32.gmra.mxu0 %v5106
      %v5212 = vpop.f32.mrf.mxu0
      %v5213 = vadd.f32 0.0, %v5212
      %5214 = vmatmul.f32.gmra.mxu0 %v5108
      %v5215 = vpop.f32.mrf.mxu0
      %v5216 = vadd.f32 0.0, %v5215
      %5217 = vmatmul.f32.gmra.mxu0 %v5110
      %v5218 = vpop.f32.mrf.mxu0
      %v5219 = vadd.f32 0.0, %v5218
      %5220 = vmatmul.f32.gmra.mxu0 %v5112
      %v5221 = vpop.f32.mrf.mxu0
      %v5222 = vadd.f32 0.0, %v5221
      %5223 = vmatmul.f32.gmra.mxu0 %v5114
      %v5224 = vpop.f32.mrf.mxu0
      %v5225 = vadd.f32 0.0, %v5224
      %5226 = vmatmul.f32.gmra.mxu0 %v5116
      %v5227 = vpop.f32.mrf.mxu0
      %v5228 = vadd.f32 0.0, %v5227
      %5229 = vmatmul.f32.gmra.mxu0 %v5118
      %v5230 = vpop.f32.mrf.mxu0
      %v5231 = vadd.f32 0.0, %v5230
      %5232 = vdwg.mxu0
      %v5233 = vadd.f32 %v4881, %v5138
      %v5234 = vadd.f32 %v4884, %v5141
      %v5235 = vadd.f32 %v4887, %v5144
      %v5236 = vadd.f32 %v4890, %v5147
      %v5237 = vadd.f32 %v4893, %v5150
      %v5238 = vadd.f32 %v4896, %v5153
      %v5239 = vadd.f32 %v4899, %v5156
      %v5240 = vadd.f32 %v4902, %v5159
      %v5241 = vadd.f32 %v4905, %v5162
      %v5242 = vadd.f32 %v4908, %v5165
      %v5243 = vadd.f32 %v4911, %v5168
      %v5244 = vadd.f32 %v4914, %v5171
      %v5245 = vadd.f32 %v4917, %v5174
      %v5246 = vadd.f32 %v4920, %v5177
      %v5247 = vadd.f32 %v4923, %v5180
      %v5248 = vadd.f32 %v4926, %v5183
      %v5249 = vadd.f32 %v4929, %v5186
      %v5250 = vadd.f32 %v4932, %v5189
      %v5251 = vadd.f32 %v4935, %v5192
      %v5252 = vadd.f32 %v4938, %v5195
      %v5253 = vadd.f32 %v4941, %v5198
      %v5254 = vadd.f32 %v4944, %v5201
      %v5255 = vadd.f32 %v4947, %v5204
      %v5256 = vadd.f32 %v4950, %v5207
      %v5257 = vadd.f32 %v4953, %v5210
      %v5258 = vadd.f32 %v4956, %v5213
      %v5259 = vadd.f32 %v4959, %v5216
      %v5260 = vadd.f32 %v4962, %v5219
      %v5261 = vadd.f32 %v4965, %v5222
      %v5262 = vadd.f32 %v4968, %v5225
      %v5263 = vadd.f32 %v4971, %v5228
      %v5264 = vadd.f32 %v4974, %v5231
      %v5266 = vsel %vm461, %v4488, 0
      %v5269 = vsel %vm461, %v4489, 0
      %5271 = vmatpush.msra.mxu0 0.0
      %5272 = vmatpush.msra.mxu0 0.0
      %5273 = vmatpush.msra.mxu0 0.0
      %5274 = vmatpush.msra.mxu0 0.0
      %5275 = vmatpush.msra.mxu0 0.0
      %5276 = vmatpush.msra.mxu0 0.0
      %5277 = vmatpush.msra.mxu0 0.0
      %5278 = vmatpush.msra.mxu0 0.0
      %5279 = vmatpush.msra.mxu0 0.0
      %5280 = vmatpush.msra.mxu0 0.0
      %5281 = vmatpush.msra.mxu0 0.0
      %5282 = vmatpush.msra.mxu0 0.0
      %5283 = vmatpush.msra.mxu0 0.0
      %5284 = vmatpush.msra.mxu0 0.0
      %5285 = vmatpush.msra.mxu0 0.0
      %5286 = vmatpush.msra.mxu0 %v4359
      %5287 = vmatmul.f32.gmra.mxu0 %v4803
      %v5288 = vpop.f32.mrf.mxu0
      %v5289 = vadd.f32 0.0, %v5288
      %5290 = vmatmul.f32.gmra.mxu0 %v4805
      %v5291 = vpop.f32.mrf.mxu0
      %v5292 = vadd.f32 0.0, %v5291
      %5293 = vmatmul.f32.gmra.mxu0 %v4807
      %v5294 = vpop.f32.mrf.mxu0
      %v5295 = vadd.f32 0.0, %v5294
      %5296 = vmatmul.f32.gmra.mxu0 %v4809
      %v5297 = vpop.f32.mrf.mxu0
      %v5298 = vadd.f32 0.0, %v5297
      %5299 = vmatmul.f32.gmra.mxu0 %v4811
      %v5300 = vpop.f32.mrf.mxu0
      %v5301 = vadd.f32 0.0, %v5300
      %5302 = vmatmul.f32.gmra.mxu0 %v4813
      %v5303 = vpop.f32.mrf.mxu0
      %v5304 = vadd.f32 0.0, %v5303
      %5305 = vmatmul.f32.gmra.mxu0 %v4815
      %v5306 = vpop.f32.mrf.mxu0
      %v5307 = vadd.f32 0.0, %v5306
      %5308 = vmatmul.f32.gmra.mxu0 %v4817
      %v5309 = vpop.f32.mrf.mxu0
      %v5310 = vadd.f32 0.0, %v5309
      %5311 = vmatmul.f32.gmra.mxu0 %v4819
      %v5312 = vpop.f32.mrf.mxu0
      %v5313 = vadd.f32 0.0, %v5312
      %5314 = vmatmul.f32.gmra.mxu0 %v4821
      %v5315 = vpop.f32.mrf.mxu0
      %v5316 = vadd.f32 0.0, %v5315
      %5317 = vmatmul.f32.gmra.mxu0 %v4823
      %v5318 = vpop.f32.mrf.mxu0
      %v5319 = vadd.f32 0.0, %v5318
      %5320 = vmatmul.f32.gmra.mxu0 %v4825
      %v5321 = vpop.f32.mrf.mxu0
      %v5322 = vadd.f32 0.0, %v5321
      %5323 = vmatmul.f32.gmra.mxu0 %v4827
      %v5324 = vpop.f32.mrf.mxu0
      %v5325 = vadd.f32 0.0, %v5324
      %5326 = vmatmul.f32.gmra.mxu0 %v4829
      %v5327 = vpop.f32.mrf.mxu0
      %v5328 = vadd.f32 0.0, %v5327
      %5329 = vmatmul.f32.gmra.mxu0 %v4831
      %v5330 = vpop.f32.mrf.mxu0
      %v5331 = vadd.f32 0.0, %v5330
      %5332 = vmatmul.f32.gmra.mxu0 %v4833
      %v5333 = vpop.f32.mrf.mxu0
      %v5334 = vadd.f32 0.0, %v5333
      %5335 = vmatmul.f32.gmra.mxu0 %v4835
      %v5336 = vpop.f32.mrf.mxu0
      %v5337 = vadd.f32 0.0, %v5336
      %5338 = vmatmul.f32.gmra.mxu0 %v4837
      %v5339 = vpop.f32.mrf.mxu0
      %v5340 = vadd.f32 0.0, %v5339
      %5341 = vmatmul.f32.gmra.mxu0 %v4839
      %v5342 = vpop.f32.mrf.mxu0
      %v5343 = vadd.f32 0.0, %v5342
      %5344 = vmatmul.f32.gmra.mxu0 %v4841
      %v5345 = vpop.f32.mrf.mxu0
      %v5346 = vadd.f32 0.0, %v5345
      %5347 = vmatmul.f32.gmra.mxu0 %v4843
      %v5348 = vpop.f32.mrf.mxu0
      %v5349 = vadd.f32 0.0, %v5348
      %5350 = vmatmul.f32.gmra.mxu0 %v4845
      %v5351 = vpop.f32.mrf.mxu0
      %v5352 = vadd.f32 0.0, %v5351
      %5353 = vmatmul.f32.gmra.mxu0 %v4847
      %v5354 = vpop.f32.mrf.mxu0
      %v5355 = vadd.f32 0.0, %v5354
      %5356 = vmatmul.f32.gmra.mxu0 %v4849
      %v5357 = vpop.f32.mrf.mxu0
      %v5358 = vadd.f32 0.0, %v5357
      %5359 = vmatmul.f32.gmra.mxu0 %v4851
      %v5360 = vpop.f32.mrf.mxu0
      %v5361 = vadd.f32 0.0, %v5360
      %5362 = vmatmul.f32.gmra.mxu0 %v4853
      %v5363 = vpop.f32.mrf.mxu0
      %v5364 = vadd.f32 0.0, %v5363
      %5365 = vmatmul.f32.gmra.mxu0 %v4855
      %v5366 = vpop.f32.mrf.mxu0
      %v5367 = vadd.f32 0.0, %v5366
      %5368 = vmatmul.f32.gmra.mxu0 %v4857
      %v5369 = vpop.f32.mrf.mxu0
      %v5370 = vadd.f32 0.0, %v5369
      %5371 = vmatmul.f32.gmra.mxu0 %v4859
      %v5372 = vpop.f32.mrf.mxu0
      %v5373 = vadd.f32 0.0, %v5372
      %5374 = vmatmul.f32.gmra.mxu0 %v4861
      %v5375 = vpop.f32.mrf.mxu0
      %v5376 = vadd.f32 0.0, %v5375
      %5377 = vmatmul.f32.gmra.mxu0 %v5266
      %v5378 = vpop.f32.mrf.mxu0
      %v5379 = vadd.f32 0.0, %v5378
      %5380 = vmatmul.f32.gmra.mxu0 %v5269
      %v5381 = vpop.f32.mrf.mxu0
      %v5382 = vadd.f32 0.0, %v5381
      %5383 = vdwg.mxu0
      %v5384 = vadd.f32 %v5233, %v5289
      %v5385 = vadd.f32 %v5234, %v5292
      %v5386 = vadd.f32 %v5235, %v5295
      %v5387 = vadd.f32 %v5236, %v5298
      %v5388 = vadd.f32 %v5237, %v5301
      %v5389 = vadd.f32 %v5238, %v5304
      %v5390 = vadd.f32 %v5239, %v5307
      %v5391 = vadd.f32 %v5240, %v5310
      %v5392 = vadd.f32 %v5241, %v5313
      %v5393 = vadd.f32 %v5242, %v5316
      %v5394 = vadd.f32 %v5243, %v5319
      %v5395 = vadd.f32 %v5244, %v5322
      %v5396 = vadd.f32 %v5245, %v5325
      %v5397 = vadd.f32 %v5246, %v5328
      %v5398 = vadd.f32 %v5247, %v5331
      %v5399 = vadd.f32 %v5248, %v5334
      %v5400 = vadd.f32 %v5249, %v5337
      %v5401 = vadd.f32 %v5250, %v5340
      %v5402 = vadd.f32 %v5251, %v5343
      %v5403 = vadd.f32 %v5252, %v5346
      %v5404 = vadd.f32 %v5253, %v5349
      %v5405 = vadd.f32 %v5254, %v5352
      %v5406 = vadd.f32 %v5255, %v5355
      %v5407 = vadd.f32 %v5256, %v5358
      %v5408 = vadd.f32 %v5257, %v5361
      %v5409 = vadd.f32 %v5258, %v5364
      %v5410 = vadd.f32 %v5259, %v5367
      %v5411 = vadd.f32 %v5260, %v5370
      %v5412 = vadd.f32 %v5261, %v5373
      %v5413 = vadd.f32 %v5262, %v5376
      %v5414 = vadd.f32 %v5263, %v5379
      %v5415 = vadd.f32 %v5264, %v5382
      %v5417 = vrot.slane %v4488, 1
      %v5418 = vrot.slane %v4489, 1
      %v5419 = vsel %vm736, %v5417, %v5418
      %v5420 = vrot.slane %v4490, 1
      %v5421 = vsel %vm736, %v5418, %v5420
      %v5422 = vsel %vm461, %v5419, 0
      %v5424 = vsel %vm461, %v5421, 0
      %5426 = vmatpush.msra.mxu0 0.0
      %5427 = vmatpush.msra.mxu0 0.0
      %5428 = vmatpush.msra.mxu0 0.0
      %5429 = vmatpush.msra.mxu0 0.0
      %5430 = vmatpush.msra.mxu0 0.0
      %5431 = vmatpush.msra.mxu0 0.0
      %5432 = vmatpush.msra.mxu0 0.0
      %5433 = vmatpush.msra.mxu0 0.0
      %5434 = vmatpush.msra.mxu0 0.0
      %5435 = vmatpush.msra.mxu0 0.0
      %5436 = vmatpush.msra.mxu0 0.0
      %5437 = vmatpush.msra.mxu0 0.0
      %5438 = vmatpush.msra.mxu0 0.0
      %5439 = vmatpush.msra.mxu0 0.0
      %5440 = vmatpush.msra.mxu0 0.0
      %5441 = vmatpush.msra.mxu0 %v4360
      %5442 = vmatmul.f32.gmra.mxu0 %v4626
      %v5443 = vpop.f32.mrf.mxu0
      %v5444 = vadd.f32 0.0, %v5443
      %5445 = vmatmul.f32.gmra.mxu0 %v4628
      %v5446 = vpop.f32.mrf.mxu0
      %v5447 = vadd.f32 0.0, %v5446
      %5448 = vmatmul.f32.gmra.mxu0 %v4630
      %v5449 = vpop.f32.mrf.mxu0
      %v5450 = vadd.f32 0.0, %v5449
      %5451 = vmatmul.f32.gmra.mxu0 %v4632
      %v5452 = vpop.f32.mrf.mxu0
      %v5453 = vadd.f32 0.0, %v5452
      %5454 = vmatmul.f32.gmra.mxu0 %v4634
      %v5455 = vpop.f32.mrf.mxu0
      %v5456 = vadd.f32 0.0, %v5455
      %5457 = vmatmul.f32.gmra.mxu0 %v4636
      %v5458 = vpop.f32.mrf.mxu0
      %v5459 = vadd.f32 0.0, %v5458
      %5460 = vmatmul.f32.gmra.mxu0 %v4638
      %v5461 = vpop.f32.mrf.mxu0
      %v5462 = vadd.f32 0.0, %v5461
      %5463 = vmatmul.f32.gmra.mxu0 %v4640
      %v5464 = vpop.f32.mrf.mxu0
      %v5465 = vadd.f32 0.0, %v5464
      %5466 = vmatmul.f32.gmra.mxu0 %v4642
      %v5467 = vpop.f32.mrf.mxu0
      %v5468 = vadd.f32 0.0, %v5467
      %5469 = vmatmul.f32.gmra.mxu0 %v4644
      %v5470 = vpop.f32.mrf.mxu0
      %v5471 = vadd.f32 0.0, %v5470
      %5472 = vmatmul.f32.gmra.mxu0 %v4646
      %v5473 = vpop.f32.mrf.mxu0
      %v5474 = vadd.f32 0.0, %v5473
      %5475 = vmatmul.f32.gmra.mxu0 %v4648
      %v5476 = vpop.f32.mrf.mxu0
      %v5477 = vadd.f32 0.0, %v5476
      %5478 = vmatmul.f32.gmra.mxu0 %v4650
      %v5479 = vpop.f32.mrf.mxu0
      %v5480 = vadd.f32 0.0, %v5479
      %5481 = vmatmul.f32.gmra.mxu0 %v4652
      %v5482 = vpop.f32.mrf.mxu0
      %v5483 = vadd.f32 0.0, %v5482
      %5484 = vmatmul.f32.gmra.mxu0 %v4654
      %v5485 = vpop.f32.mrf.mxu0
      %v5486 = vadd.f32 0.0, %v5485
      %5487 = vmatmul.f32.gmra.mxu0 %v4656
      %v5488 = vpop.f32.mrf.mxu0
      %v5489 = vadd.f32 0.0, %v5488
      %5490 = vmatmul.f32.gmra.mxu0 %v4658
      %v5491 = vpop.f32.mrf.mxu0
      %v5492 = vadd.f32 0.0, %v5491
      %5493 = vmatmul.f32.gmra.mxu0 %v4660
      %v5494 = vpop.f32.mrf.mxu0
      %v5495 = vadd.f32 0.0, %v5494
      %5496 = vmatmul.f32.gmra.mxu0 %v4662
      %v5497 = vpop.f32.mrf.mxu0
      %v5498 = vadd.f32 0.0, %v5497
      %5499 = vmatmul.f32.gmra.mxu0 %v4664
      %v5500 = vpop.f32.mrf.mxu0
      %v5501 = vadd.f32 0.0, %v5500
      %5502 = vmatmul.f32.gmra.mxu0 %v4666
      %v5503 = vpop.f32.mrf.mxu0
      %v5504 = vadd.f32 0.0, %v5503
      %5505 = vmatmul.f32.gmra.mxu0 %v4668
      %v5506 = vpop.f32.mrf.mxu0
      %v5507 = vadd.f32 0.0, %v5506
      %5508 = vmatmul.f32.gmra.mxu0 %v4670
      %v5509 = vpop.f32.mrf.mxu0
      %v5510 = vadd.f32 0.0, %v5509
      %5511 = vmatmul.f32.gmra.mxu0 %v4672
      %v5512 = vpop.f32.mrf.mxu0
      %v5513 = vadd.f32 0.0, %v5512
      %5514 = vmatmul.f32.gmra.mxu0 %v4674
      %v5515 = vpop.f32.mrf.mxu0
      %v5516 = vadd.f32 0.0, %v5515
      %5517 = vmatmul.f32.gmra.mxu0 %v4676
      %v5518 = vpop.f32.mrf.mxu0
      %v5519 = vadd.f32 0.0, %v5518
      %5520 = vmatmul.f32.gmra.mxu0 %v4678
      %v5521 = vpop.f32.mrf.mxu0
      %v5522 = vadd.f32 0.0, %v5521
      %5523 = vmatmul.f32.gmra.mxu0 %v4680
      %v5524 = vpop.f32.mrf.mxu0
      %v5525 = vadd.f32 0.0, %v5524
      %5526 = vmatmul.f32.gmra.mxu0 %v4682
      %v5527 = vpop.f32.mrf.mxu0
      %v5528 = vadd.f32 0.0, %v5527
      %5529 = vmatmul.f32.gmra.mxu0 %v4684
      %v5530 = vpop.f32.mrf.mxu0
      %v5531 = vadd.f32 0.0, %v5530
      %5532 = vmatmul.f32.gmra.mxu0 %v5422
      %v5533 = vpop.f32.mrf.mxu0
      %v5534 = vadd.f32 0.0, %v5533
      %5535 = vmatmul.f32.gmra.mxu0 %v5424
      %v5536 = vpop.f32.mrf.mxu0
      %v5537 = vadd.f32 0.0, %v5536
      %5538 = vdwg.mxu0
      %v5539 = vadd.f32 %v5384, %v5444
      %v5540 = vadd.f32 %v5385, %v5447
      %v5541 = vadd.f32 %v5386, %v5450
      %v5542 = vadd.f32 %v5387, %v5453
      %v5543 = vadd.f32 %v5388, %v5456
      %v5544 = vadd.f32 %v5389, %v5459
      %v5545 = vadd.f32 %v5390, %v5462
      %v5546 = vadd.f32 %v5391, %v5465
      %v5547 = vadd.f32 %v5392, %v5468
      %v5548 = vadd.f32 %v5393, %v5471
      %v5549 = vadd.f32 %v5394, %v5474
      %v5550 = vadd.f32 %v5395, %v5477
      %v5551 = vadd.f32 %v5396, %v5480
      %v5552 = vadd.f32 %v5397, %v5483
      %v5553 = vadd.f32 %v5398, %v5486
      %v5554 = vadd.f32 %v5399, %v5489
      %v5555 = vadd.f32 %v5400, %v5492
      %v5556 = vadd.f32 %v5401, %v5495
      %v5557 = vadd.f32 %v5402, %v5498
      %v5558 = vadd.f32 %v5403, %v5501
      %v5559 = vadd.f32 %v5404, %v5504
      %v5560 = vadd.f32 %v5405, %v5507
      %v5561 = vadd.f32 %v5406, %v5510
      %v5562 = vadd.f32 %v5407, %v5513
      %v5563 = vadd.f32 %v5408, %v5516
      %v5564 = vadd.f32 %v5409, %v5519
      %v5565 = vadd.f32 %v5410, %v5522
      %v5566 = vadd.f32 %v5411, %v5525
      %v5567 = vadd.f32 %v5412, %v5528
      %v5568 = vadd.f32 %v5413, %v5531
      %v5569 = vadd.f32 %v5414, %v5534
      %v5570 = vadd.f32 %v5415, %v5537
      %v5571 = vrot.slane %v4488, 2
      %v5572 = vrot.slane %v4489, 2
      %v5573 = vsel %vm1171, %v5571, %v5572
      %v5574 = vrot.slane %v4490, 2
      %v5575 = vsel %vm1171, %v5572, %v5574
      %v5576 = vsel %vm461, %v5573, 0
      %v5578 = vsel %vm461, %v5575, 0
      %5580 = vmatpush.msra.mxu0 0.0
      %5581 = vmatpush.msra.mxu0 0.0
      %5582 = vmatpush.msra.mxu0 0.0
      %5583 = vmatpush.msra.mxu0 0.0
      %5584 = vmatpush.msra.mxu0 0.0
      %5585 = vmatpush.msra.mxu0 0.0
      %5586 = vmatpush.msra.mxu0 0.0
      %5587 = vmatpush.msra.mxu0 0.0
      %5588 = vmatpush.msra.mxu0 0.0
      %5589 = vmatpush.msra.mxu0 0.0
      %5590 = vmatpush.msra.mxu0 0.0
      %5591 = vmatpush.msra.mxu0 0.0
      %5592 = vmatpush.msra.mxu0 0.0
      %5593 = vmatpush.msra.mxu0 0.0
      %5594 = vmatpush.msra.mxu0 0.0
      %5595 = vmatpush.msra.mxu0 %v4361
      %5596 = vmatmul.f32.gmra.mxu0 %v5060
      %v5597 = vpop.f32.mrf.mxu0
      %v5598 = vadd.f32 0.0, %v5597
      %5599 = vmatmul.f32.gmra.mxu0 %v5062
      %v5600 = vpop.f32.mrf.mxu0
      %v5601 = vadd.f32 0.0, %v5600
      %5602 = vmatmul.f32.gmra.mxu0 %v5064
      %v5603 = vpop.f32.mrf.mxu0
      %v5604 = vadd.f32 0.0, %v5603
      %5605 = vmatmul.f32.gmra.mxu0 %v5066
      %v5606 = vpop.f32.mrf.mxu0
      %v5607 = vadd.f32 0.0, %v5606
      %5608 = vmatmul.f32.gmra.mxu0 %v5068
      %v5609 = vpop.f32.mrf.mxu0
      %v5610 = vadd.f32 0.0, %v5609
      %5611 = vmatmul.f32.gmra.mxu0 %v5070
      %v5612 = vpop.f32.mrf.mxu0
      %v5613 = vadd.f32 0.0, %v5612
      %5614 = vmatmul.f32.gmra.mxu0 %v5072
      %v5615 = vpop.f32.mrf.mxu0
      %v5616 = vadd.f32 0.0, %v5615
      %5617 = vmatmul.f32.gmra.mxu0 %v5074
      %v5618 = vpop.f32.mrf.mxu0
      %v5619 = vadd.f32 0.0, %v5618
      %5620 = vmatmul.f32.gmra.mxu0 %v5076
      %v5621 = vpop.f32.mrf.mxu0
      %v5622 = vadd.f32 0.0, %v5621
      %5623 = vmatmul.f32.gmra.mxu0 %v5078
      %v5624 = vpop.f32.mrf.mxu0
      %v5625 = vadd.f32 0.0, %v5624
      %5626 = vmatmul.f32.gmra.mxu0 %v5080
      %v5627 = vpop.f32.mrf.mxu0
      %v5628 = vadd.f32 0.0, %v5627
      %5629 = vmatmul.f32.gmra.mxu0 %v5082
      %v5630 = vpop.f32.mrf.mxu0
      %v5631 = vadd.f32 0.0, %v5630
      %5632 = vmatmul.f32.gmra.mxu0 %v5084
      %v5633 = vpop.f32.mrf.mxu0
      %v5634 = vadd.f32 0.0, %v5633
      %5635 = vmatmul.f32.gmra.mxu0 %v5086
      %v5636 = vpop.f32.mrf.mxu0
      %v5637 = vadd.f32 0.0, %v5636
      %5638 = vmatmul.f32.gmra.mxu0 %v5088
      %v5639 = vpop.f32.mrf.mxu0
      %v5640 = vadd.f32 0.0, %v5639
      %5641 = vmatmul.f32.gmra.mxu0 %v5090
      %v5642 = vpop.f32.mrf.mxu0
      %v5643 = vadd.f32 0.0, %v5642
      %5644 = vmatmul.f32.gmra.mxu0 %v5092
      %v5645 = vpop.f32.mrf.mxu0
      %v5646 = vadd.f32 0.0, %v5645
      %5647 = vmatmul.f32.gmra.mxu0 %v5094
      %v5648 = vpop.f32.mrf.mxu0
      %v5649 = vadd.f32 0.0, %v5648
      %5650 = vmatmul.f32.gmra.mxu0 %v5096
      %v5651 = vpop.f32.mrf.mxu0
      %v5652 = vadd.f32 0.0, %v5651
      %5653 = vmatmul.f32.gmra.mxu0 %v5098
      %v5654 = vpop.f32.mrf.mxu0
      %v5655 = vadd.f32 0.0, %v5654
      %5656 = vmatmul.f32.gmra.mxu0 %v5100
      %v5657 = vpop.f32.mrf.mxu0
      %v5658 = vadd.f32 0.0, %v5657
      %5659 = vmatmul.f32.gmra.mxu0 %v5102
      %v5660 = vpop.f32.mrf.mxu0
      %v5661 = vadd.f32 0.0, %v5660
      %5662 = vmatmul.f32.gmra.mxu0 %v5104
      %v5663 = vpop.f32.mrf.mxu0
      %v5664 = vadd.f32 0.0, %v5663
      %5665 = vmatmul.f32.gmra.mxu0 %v5106
      %v5666 = vpop.f32.mrf.mxu0
      %v5667 = vadd.f32 0.0, %v5666
      %5668 = vmatmul.f32.gmra.mxu0 %v5108
      %v5669 = vpop.f32.mrf.mxu0
      %v5670 = vadd.f32 0.0, %v5669
      %5671 = vmatmul.f32.gmra.mxu0 %v5110
      %v5672 = vpop.f32.mrf.mxu0
      %v5673 = vadd.f32 0.0, %v5672
      %5674 = vmatmul.f32.gmra.mxu0 %v5112
      %v5675 = vpop.f32.mrf.mxu0
      %v5676 = vadd.f32 0.0, %v5675
      %5677 = vmatmul.f32.gmra.mxu0 %v5114
      %v5678 = vpop.f32.mrf.mxu0
      %v5679 = vadd.f32 0.0, %v5678
      %5680 = vmatmul.f32.gmra.mxu0 %v5116
      %v5681 = vpop.f32.mrf.mxu0
      %v5682 = vadd.f32 0.0, %v5681
      %5683 = vmatmul.f32.gmra.mxu0 %v5118
      %v5684 = vpop.f32.mrf.mxu0
      %v5685 = vadd.f32 0.0, %v5684
      %5686 = vmatmul.f32.gmra.mxu0 %v5576
      %v5687 = vpop.f32.mrf.mxu0
      %v5688 = vadd.f32 0.0, %v5687
      %5689 = vmatmul.f32.gmra.mxu0 %v5578
      %v5690 = vpop.f32.mrf.mxu0
      %v5691 = vadd.f32 0.0, %v5690
      %5692 = vdwg.mxu0
      %v5693 = vadd.f32 %v5539, %v5598
      %v5694 = vadd.f32 %v5540, %v5601
      %v5695 = vadd.f32 %v5541, %v5604
      %v5696 = vadd.f32 %v5542, %v5607
      %v5697 = vadd.f32 %v5543, %v5610
      %v5698 = vadd.f32 %v5544, %v5613
      %v5699 = vadd.f32 %v5545, %v5616
      %v5700 = vadd.f32 %v5546, %v5619
      %v5701 = vadd.f32 %v5547, %v5622
      %v5702 = vadd.f32 %v5548, %v5625
      %v5703 = vadd.f32 %v5549, %v5628
      %v5704 = vadd.f32 %v5550, %v5631
      %v5705 = vadd.f32 %v5551, %v5634
      %v5706 = vadd.f32 %v5552, %v5637
      %v5707 = vadd.f32 %v5553, %v5640
      %v5708 = vadd.f32 %v5554, %v5643
      %v5709 = vadd.f32 %v5555, %v5646
      %v5710 = vadd.f32 %v5556, %v5649
      %v5711 = vadd.f32 %v5557, %v5652
      %v5712 = vadd.f32 %v5558, %v5655
      %v5713 = vadd.f32 %v5559, %v5658
      %v5714 = vadd.f32 %v5560, %v5661
      %v5715 = vadd.f32 %v5561, %v5664
      %v5716 = vadd.f32 %v5562, %v5667
      %v5717 = vadd.f32 %v5563, %v5670
      %v5718 = vadd.f32 %v5564, %v5673
      %v5719 = vadd.f32 %v5565, %v5676
      %v5720 = vadd.f32 %v5566, %v5679
      %v5721 = vadd.f32 %v5567, %v5682
      %v5722 = vadd.f32 %v5568, %v5685
      %v5723 = vadd.f32 %v5569, %v5688
      %v5724 = vadd.f32 %v5570, %v5691
      %v5726 = vsel %vm461, %v4491, 0
      %v5729 = vsel %vm461, %v4492, 0
      %5731 = vmatpush.msra.mxu0 0.0
      %5732 = vmatpush.msra.mxu0 0.0
      %5733 = vmatpush.msra.mxu0 0.0
      %5734 = vmatpush.msra.mxu0 0.0
      %5735 = vmatpush.msra.mxu0 0.0
      %5736 = vmatpush.msra.mxu0 0.0
      %5737 = vmatpush.msra.mxu0 0.0
      %5738 = vmatpush.msra.mxu0 0.0
      %5739 = vmatpush.msra.mxu0 0.0
      %5740 = vmatpush.msra.mxu0 0.0
      %5741 = vmatpush.msra.mxu0 0.0
      %5742 = vmatpush.msra.mxu0 0.0
      %5743 = vmatpush.msra.mxu0 0.0
      %5744 = vmatpush.msra.mxu0 0.0
      %5745 = vmatpush.msra.mxu0 0.0
      %5746 = vmatpush.msra.mxu0 %v4362
      %5747 = vmatmul.f32.gmra.mxu0 %v4807
      %v5748 = vpop.f32.mrf.mxu0
      %v5749 = vadd.f32 0.0, %v5748
      %5750 = vmatmul.f32.gmra.mxu0 %v4809
      %v5751 = vpop.f32.mrf.mxu0
      %v5752 = vadd.f32 0.0, %v5751
      %5753 = vmatmul.f32.gmra.mxu0 %v4811
      %v5754 = vpop.f32.mrf.mxu0
      %v5755 = vadd.f32 0.0, %v5754
      %5756 = vmatmul.f32.gmra.mxu0 %v4813
      %v5757 = vpop.f32.mrf.mxu0
      %v5758 = vadd.f32 0.0, %v5757
      %5759 = vmatmul.f32.gmra.mxu0 %v4815
      %v5760 = vpop.f32.mrf.mxu0
      %v5761 = vadd.f32 0.0, %v5760
      %5762 = vmatmul.f32.gmra.mxu0 %v4817
      %v5763 = vpop.f32.mrf.mxu0
      %v5764 = vadd.f32 0.0, %v5763
      %5765 = vmatmul.f32.gmra.mxu0 %v4819
      %v5766 = vpop.f32.mrf.mxu0
      %v5767 = vadd.f32 0.0, %v5766
      %5768 = vmatmul.f32.gmra.mxu0 %v4821
      %v5769 = vpop.f32.mrf.mxu0
      %v5770 = vadd.f32 0.0, %v5769
      %5771 = vmatmul.f32.gmra.mxu0 %v4823
      %v5772 = vpop.f32.mrf.mxu0
      %v5773 = vadd.f32 0.0, %v5772
      %5774 = vmatmul.f32.gmra.mxu0 %v4825
      %v5775 = vpop.f32.mrf.mxu0
      %v5776 = vadd.f32 0.0, %v5775
      %5777 = vmatmul.f32.gmra.mxu0 %v4827
      %v5778 = vpop.f32.mrf.mxu0
      %v5779 = vadd.f32 0.0, %v5778
      %5780 = vmatmul.f32.gmra.mxu0 %v4829
      %v5781 = vpop.f32.mrf.mxu0
      %v5782 = vadd.f32 0.0, %v5781
      %5783 = vmatmul.f32.gmra.mxu0 %v4831
      %v5784 = vpop.f32.mrf.mxu0
      %v5785 = vadd.f32 0.0, %v5784
      %5786 = vmatmul.f32.gmra.mxu0 %v4833
      %v5787 = vpop.f32.mrf.mxu0
      %v5788 = vadd.f32 0.0, %v5787
      %5789 = vmatmul.f32.gmra.mxu0 %v4835
      %v5790 = vpop.f32.mrf.mxu0
      %v5791 = vadd.f32 0.0, %v5790
      %5792 = vmatmul.f32.gmra.mxu0 %v4837
      %v5793 = vpop.f32.mrf.mxu0
      %v5794 = vadd.f32 0.0, %v5793
      %5795 = vmatmul.f32.gmra.mxu0 %v4839
      %v5796 = vpop.f32.mrf.mxu0
      %v5797 = vadd.f32 0.0, %v5796
      %5798 = vmatmul.f32.gmra.mxu0 %v4841
      %v5799 = vpop.f32.mrf.mxu0
      %v5800 = vadd.f32 0.0, %v5799
      %5801 = vmatmul.f32.gmra.mxu0 %v4843
      %v5802 = vpop.f32.mrf.mxu0
      %v5803 = vadd.f32 0.0, %v5802
      %5804 = vmatmul.f32.gmra.mxu0 %v4845
      %v5805 = vpop.f32.mrf.mxu0
      %v5806 = vadd.f32 0.0, %v5805
      %5807 = vmatmul.f32.gmra.mxu0 %v4847
      %v5808 = vpop.f32.mrf.mxu0
      %v5809 = vadd.f32 0.0, %v5808
      %5810 = vmatmul.f32.gmra.mxu0 %v4849
      %v5811 = vpop.f32.mrf.mxu0
      %v5812 = vadd.f32 0.0, %v5811
      %5813 = vmatmul.f32.gmra.mxu0 %v4851
      %v5814 = vpop.f32.mrf.mxu0
      %v5815 = vadd.f32 0.0, %v5814
      %5816 = vmatmul.f32.gmra.mxu0 %v4853
      %v5817 = vpop.f32.mrf.mxu0
      %v5818 = vadd.f32 0.0, %v5817
      %5819 = vmatmul.f32.gmra.mxu0 %v4855
      %v5820 = vpop.f32.mrf.mxu0
      %v5821 = vadd.f32 0.0, %v5820
      %5822 = vmatmul.f32.gmra.mxu0 %v4857
      %v5823 = vpop.f32.mrf.mxu0
      %v5824 = vadd.f32 0.0, %v5823
      %5825 = vmatmul.f32.gmra.mxu0 %v4859
      %v5826 = vpop.f32.mrf.mxu0
      %v5827 = vadd.f32 0.0, %v5826
      %5828 = vmatmul.f32.gmra.mxu0 %v4861
      %v5829 = vpop.f32.mrf.mxu0
      %v5830 = vadd.f32 0.0, %v5829
      %5831 = vmatmul.f32.gmra.mxu0 %v5266
      %v5832 = vpop.f32.mrf.mxu0
      %v5833 = vadd.f32 0.0, %v5832
      %5834 = vmatmul.f32.gmra.mxu0 %v5269
      %v5835 = vpop.f32.mrf.mxu0
      %v5836 = vadd.f32 0.0, %v5835
      %5837 = vmatmul.f32.gmra.mxu0 %v5726
      %v5838 = vpop.f32.mrf.mxu0
      %v5839 = vadd.f32 0.0, %v5838
      %5840 = vmatmul.f32.gmra.mxu0 %v5729
      %v5841 = vpop.f32.mrf.mxu0
      %v5842 = vadd.f32 0.0, %v5841
      %5843 = vdwg.mxu0
      %v5844 = vadd.f32 %v5693, %v5749
      %v5845 = vadd.f32 %v5694, %v5752
      %v5846 = vadd.f32 %v5695, %v5755
      %v5847 = vadd.f32 %v5696, %v5758
      %v5848 = vadd.f32 %v5697, %v5761
      %v5849 = vadd.f32 %v5698, %v5764
      %v5850 = vadd.f32 %v5699, %v5767
      %v5851 = vadd.f32 %v5700, %v5770
      %v5852 = vadd.f32 %v5701, %v5773
      %v5853 = vadd.f32 %v5702, %v5776
      %v5854 = vadd.f32 %v5703, %v5779
      %v5855 = vadd.f32 %v5704, %v5782
      %v5856 = vadd.f32 %v5705, %v5785
      %v5857 = vadd.f32 %v5706, %v5788
      %v5858 = vadd.f32 %v5707, %v5791
      %v5859 = vadd.f32 %v5708, %v5794
      %v5860 = vadd.f32 %v5709, %v5797
      %v5861 = vadd.f32 %v5710, %v5800
      %v5862 = vadd.f32 %v5711, %v5803
      %v5863 = vadd.f32 %v5712, %v5806
      %v5864 = vadd.f32 %v5713, %v5809
      %v5865 = vadd.f32 %v5714, %v5812
      %v5866 = vadd.f32 %v5715, %v5815
      %v5867 = vadd.f32 %v5716, %v5818
      %v5868 = vadd.f32 %v5717, %v5821
      %v5869 = vadd.f32 %v5718, %v5824
      %v5870 = vadd.f32 %v5719, %v5827
      %v5871 = vadd.f32 %v5720, %v5830
      %v5872 = vadd.f32 %v5721, %v5833
      %v5873 = vadd.f32 %v5722, %v5836
      %v5874 = vadd.f32 %v5723, %v5839
      %v5875 = vadd.f32 %v5724, %v5842
      %v5877 = vrot.slane %v4491, 1
      %v5878 = vrot.slane %v4492, 1
      %v5879 = vsel %vm736, %v5877, %v5878
      %v5880 = vrot.slane %v4493, 1
      %v5881 = vsel %vm736, %v5878, %v5880
      %v5882 = vsel %vm461, %v5879, 0
      %v5884 = vsel %vm461, %v5881, 0
      %5886 = vmatpush.msra.mxu0 0.0
      %5887 = vmatpush.msra.mxu0 0.0
      %5888 = vmatpush.msra.mxu0 0.0
      %5889 = vmatpush.msra.mxu0 0.0
      %5890 = vmatpush.msra.mxu0 0.0
      %5891 = vmatpush.msra.mxu0 0.0
      %5892 = vmatpush.msra.mxu0 0.0
      %5893 = vmatpush.msra.mxu0 0.0
      %5894 = vmatpush.msra.mxu0 0.0
      %5895 = vmatpush.msra.mxu0 0.0
      %5896 = vmatpush.msra.mxu0 0.0
      %5897 = vmatpush.msra.mxu0 0.0
      %5898 = vmatpush.msra.mxu0 0.0
      %5899 = vmatpush.msra.mxu0 0.0
      %5900 = vmatpush.msra.mxu0 0.0
      %5901 = vmatpush.msra.mxu0 %v4363
      %5902 = vmatmul.f32.gmra.mxu0 %v4630
      %v5903 = vpop.f32.mrf.mxu0
      %v5904 = vadd.f32 0.0, %v5903
      %5905 = vmatmul.f32.gmra.mxu0 %v4632
      %v5906 = vpop.f32.mrf.mxu0
      %v5907 = vadd.f32 0.0, %v5906
      %5908 = vmatmul.f32.gmra.mxu0 %v4634
      %v5909 = vpop.f32.mrf.mxu0
      %v5910 = vadd.f32 0.0, %v5909
      %5911 = vmatmul.f32.gmra.mxu0 %v4636
      %v5912 = vpop.f32.mrf.mxu0
      %v5913 = vadd.f32 0.0, %v5912
      %5914 = vmatmul.f32.gmra.mxu0 %v4638
      %v5915 = vpop.f32.mrf.mxu0
      %v5916 = vadd.f32 0.0, %v5915
      %5917 = vmatmul.f32.gmra.mxu0 %v4640
      %v5918 = vpop.f32.mrf.mxu0
      %v5919 = vadd.f32 0.0, %v5918
      %5920 = vmatmul.f32.gmra.mxu0 %v4642
      %v5921 = vpop.f32.mrf.mxu0
      %v5922 = vadd.f32 0.0, %v5921
      %5923 = vmatmul.f32.gmra.mxu0 %v4644
      %v5924 = vpop.f32.mrf.mxu0
      %v5925 = vadd.f32 0.0, %v5924
      %5926 = vmatmul.f32.gmra.mxu0 %v4646
      %v5927 = vpop.f32.mrf.mxu0
      %v5928 = vadd.f32 0.0, %v5927
      %5929 = vmatmul.f32.gmra.mxu0 %v4648
      %v5930 = vpop.f32.mrf.mxu0
      %v5931 = vadd.f32 0.0, %v5930
      %5932 = vmatmul.f32.gmra.mxu0 %v4650
      %v5933 = vpop.f32.mrf.mxu0
      %v5934 = vadd.f32 0.0, %v5933
      %5935 = vmatmul.f32.gmra.mxu0 %v4652
      %v5936 = vpop.f32.mrf.mxu0
      %v5937 = vadd.f32 0.0, %v5936
      %5938 = vmatmul.f32.gmra.mxu0 %v4654
      %v5939 = vpop.f32.mrf.mxu0
      %v5940 = vadd.f32 0.0, %v5939
      %5941 = vmatmul.f32.gmra.mxu0 %v4656
      %v5942 = vpop.f32.mrf.mxu0
      %v5943 = vadd.f32 0.0, %v5942
      %5944 = vmatmul.f32.gmra.mxu0 %v4658
      %v5945 = vpop.f32.mrf.mxu0
      %v5946 = vadd.f32 0.0, %v5945
      %5947 = vmatmul.f32.gmra.mxu0 %v4660
      %v5948 = vpop.f32.mrf.mxu0
      %v5949 = vadd.f32 0.0, %v5948
      %5950 = vmatmul.f32.gmra.mxu0 %v4662
      %v5951 = vpop.f32.mrf.mxu0
      %v5952 = vadd.f32 0.0, %v5951
      %5953 = vmatmul.f32.gmra.mxu0 %v4664
      %v5954 = vpop.f32.mrf.mxu0
      %v5955 = vadd.f32 0.0, %v5954
      %5956 = vmatmul.f32.gmra.mxu0 %v4666
      %v5957 = vpop.f32.mrf.mxu0
      %v5958 = vadd.f32 0.0, %v5957
      %5959 = vmatmul.f32.gmra.mxu0 %v4668
      %v5960 = vpop.f32.mrf.mxu0
      %v5961 = vadd.f32 0.0, %v5960
      %5962 = vmatmul.f32.gmra.mxu0 %v4670
      %v5963 = vpop.f32.mrf.mxu0
      %v5964 = vadd.f32 0.0, %v5963
      %5965 = vmatmul.f32.gmra.mxu0 %v4672
      %v5966 = vpop.f32.mrf.mxu0
      %v5967 = vadd.f32 0.0, %v5966
      %5968 = vmatmul.f32.gmra.mxu0 %v4674
      %v5969 = vpop.f32.mrf.mxu0
      %v5970 = vadd.f32 0.0, %v5969
      %5971 = vmatmul.f32.gmra.mxu0 %v4676
      %v5972 = vpop.f32.mrf.mxu0
      %v5973 = vadd.f32 0.0, %v5972
      %5974 = vmatmul.f32.gmra.mxu0 %v4678
      %v5975 = vpop.f32.mrf.mxu0
      %v5976 = vadd.f32 0.0, %v5975
      %5977 = vmatmul.f32.gmra.mxu0 %v4680
      %v5978 = vpop.f32.mrf.mxu0
      %v5979 = vadd.f32 0.0, %v5978
      %5980 = vmatmul.f32.gmra.mxu0 %v4682
      %v5981 = vpop.f32.mrf.mxu0
      %v5982 = vadd.f32 0.0, %v5981
      %5983 = vmatmul.f32.gmra.mxu0 %v4684
      %v5984 = vpop.f32.mrf.mxu0
      %v5985 = vadd.f32 0.0, %v5984
      %5986 = vmatmul.f32.gmra.mxu0 %v5422
      %v5987 = vpop.f32.mrf.mxu0
      %v5988 = vadd.f32 0.0, %v5987
      %5989 = vmatmul.f32.gmra.mxu0 %v5424
      %v5990 = vpop.f32.mrf.mxu0
      %v5991 = vadd.f32 0.0, %v5990
      %5992 = vmatmul.f32.gmra.mxu0 %v5882
      %v5993 = vpop.f32.mrf.mxu0
      %v5994 = vadd.f32 0.0, %v5993
      %5995 = vmatmul.f32.gmra.mxu0 %v5884
      %v5996 = vpop.f32.mrf.mxu0
      %v5997 = vadd.f32 0.0, %v5996
      %5998 = vdwg.mxu0
      %v5999 = vadd.f32 %v5844, %v5904
      %v6000 = vadd.f32 %v5845, %v5907
      %v6001 = vadd.f32 %v5846, %v5910
      %v6002 = vadd.f32 %v5847, %v5913
      %v6003 = vadd.f32 %v5848, %v5916
      %v6004 = vadd.f32 %v5849, %v5919
      %v6005 = vadd.f32 %v5850, %v5922
      %v6006 = vadd.f32 %v5851, %v5925
      %v6007 = vadd.f32 %v5852, %v5928
      %v6008 = vadd.f32 %v5853, %v5931
      %v6009 = vadd.f32 %v5854, %v5934
      %v6010 = vadd.f32 %v5855, %v5937
      %v6011 = vadd.f32 %v5856, %v5940
      %v6012 = vadd.f32 %v5857, %v5943
      %v6013 = vadd.f32 %v5858, %v5946
      %v6014 = vadd.f32 %v5859, %v5949
      %v6015 = vadd.f32 %v5860, %v5952
      %v6016 = vadd.f32 %v5861, %v5955
      %v6017 = vadd.f32 %v5862, %v5958
      %v6018 = vadd.f32 %v5863, %v5961
      %v6019 = vadd.f32 %v5864, %v5964
      %v6020 = vadd.f32 %v5865, %v5967
      %v6021 = vadd.f32 %v5866, %v5970
      %v6022 = vadd.f32 %v5867, %v5973
      %v6023 = vadd.f32 %v5868, %v5976
      %v6024 = vadd.f32 %v5869, %v5979
      %v6025 = vadd.f32 %v5870, %v5982
      %v6026 = vadd.f32 %v5871, %v5985
      %v6027 = vadd.f32 %v5872, %v5988
      %v6028 = vadd.f32 %v5873, %v5991
      %v6029 = vadd.f32 %v5874, %v5994
      %v6030 = vadd.f32 %v5875, %v5997
      %v6031 = vrot.slane %v4491, 2
      %v6032 = vrot.slane %v4492, 2
      %v6033 = vsel %vm1171, %v6031, %v6032
      %v6034 = vrot.slane %v4493, 2
      %v6035 = vsel %vm1171, %v6032, %v6034
      %v6036 = vsel %vm461, %v6033, 0
      %v6038 = vsel %vm461, %v6035, 0
      %6040 = vmatpush.msra.mxu0 0.0
      %6041 = vmatpush.msra.mxu0 0.0
      %6042 = vmatpush.msra.mxu0 0.0
      %6043 = vmatpush.msra.mxu0 0.0
      %6044 = vmatpush.msra.mxu0 0.0
      %6045 = vmatpush.msra.mxu0 0.0
      %6046 = vmatpush.msra.mxu0 0.0
      %6047 = vmatpush.msra.mxu0 0.0
      %6048 = vmatpush.msra.mxu0 0.0
      %6049 = vmatpush.msra.mxu0 0.0
      %6050 = vmatpush.msra.mxu0 0.0
      %6051 = vmatpush.msra.mxu0 0.0
      %6052 = vmatpush.msra.mxu0 0.0
      %6053 = vmatpush.msra.mxu0 0.0
      %6054 = vmatpush.msra.mxu0 0.0
      %6055 = vmatpush.msra.mxu0 %v4364
      %6056 = vmatmul.f32.gmra.mxu0 %v5064
      %v6057 = vpop.f32.mrf.mxu0
      %v6058 = vadd.f32 0.0, %v6057
      %6059 = vmatmul.f32.gmra.mxu0 %v5066
      %v6060 = vpop.f32.mrf.mxu0
      %v6061 = vadd.f32 0.0, %v6060
      %6062 = vmatmul.f32.gmra.mxu0 %v5068
      %v6063 = vpop.f32.mrf.mxu0
      %v6064 = vadd.f32 0.0, %v6063
      %6065 = vmatmul.f32.gmra.mxu0 %v5070
      %v6066 = vpop.f32.mrf.mxu0
      %v6067 = vadd.f32 0.0, %v6066
      %6068 = vmatmul.f32.gmra.mxu0 %v5072
      %v6069 = vpop.f32.mrf.mxu0
      %v6070 = vadd.f32 0.0, %v6069
      %6071 = vmatmul.f32.gmra.mxu0 %v5074
      %v6072 = vpop.f32.mrf.mxu0
      %v6073 = vadd.f32 0.0, %v6072
      %6074 = vmatmul.f32.gmra.mxu0 %v5076
      %v6075 = vpop.f32.mrf.mxu0
      %v6076 = vadd.f32 0.0, %v6075
      %6077 = vmatmul.f32.gmra.mxu0 %v5078
      %v6078 = vpop.f32.mrf.mxu0
      %v6079 = vadd.f32 0.0, %v6078
      %6080 = vmatmul.f32.gmra.mxu0 %v5080
      %v6081 = vpop.f32.mrf.mxu0
      %v6082 = vadd.f32 0.0, %v6081
      %6083 = vmatmul.f32.gmra.mxu0 %v5082
      %v6084 = vpop.f32.mrf.mxu0
      %v6085 = vadd.f32 0.0, %v6084
      %6086 = vmatmul.f32.gmra.mxu0 %v5084
      %v6087 = vpop.f32.mrf.mxu0
      %v6088 = vadd.f32 0.0, %v6087
      %6089 = vmatmul.f32.gmra.mxu0 %v5086
      %v6090 = vpop.f32.mrf.mxu0
      %v6091 = vadd.f32 0.0, %v6090
      %6092 = vmatmul.f32.gmra.mxu0 %v5088
      %v6093 = vpop.f32.mrf.mxu0
      %v6094 = vadd.f32 0.0, %v6093
      %6095 = vmatmul.f32.gmra.mxu0 %v5090
      %v6096 = vpop.f32.mrf.mxu0
      %v6097 = vadd.f32 0.0, %v6096
      %6098 = vmatmul.f32.gmra.mxu0 %v5092
      %v6099 = vpop.f32.mrf.mxu0
      %v6100 = vadd.f32 0.0, %v6099
      %6101 = vmatmul.f32.gmra.mxu0 %v5094
      %v6102 = vpop.f32.mrf.mxu0
      %v6103 = vadd.f32 0.0, %v6102
      %6104 = vmatmul.f32.gmra.mxu0 %v5096
      %v6105 = vpop.f32.mrf.mxu0
      %v6106 = vadd.f32 0.0, %v6105
      %6107 = vmatmul.f32.gmra.mxu0 %v5098
      %v6108 = vpop.f32.mrf.mxu0
      %v6109 = vadd.f32 0.0, %v6108
      %6110 = vmatmul.f32.gmra.mxu0 %v5100
      %v6111 = vpop.f32.mrf.mxu0
      %v6112 = vadd.f32 0.0, %v6111
      %6113 = vmatmul.f32.gmra.mxu0 %v5102
      %v6114 = vpop.f32.mrf.mxu0
      %v6115 = vadd.f32 0.0, %v6114
      %6116 = vmatmul.f32.gmra.mxu0 %v5104
      %v6117 = vpop.f32.mrf.mxu0
      %v6118 = vadd.f32 0.0, %v6117
      %6119 = vmatmul.f32.gmra.mxu0 %v5106
      %v6120 = vpop.f32.mrf.mxu0
      %v6121 = vadd.f32 0.0, %v6120
      %6122 = vmatmul.f32.gmra.mxu0 %v5108
      %v6123 = vpop.f32.mrf.mxu0
      %v6124 = vadd.f32 0.0, %v6123
      %6125 = vmatmul.f32.gmra.mxu0 %v5110
      %v6126 = vpop.f32.mrf.mxu0
      %v6127 = vadd.f32 0.0, %v6126
      %6128 = vmatmul.f32.gmra.mxu0 %v5112
      %v6129 = vpop.f32.mrf.mxu0
      %v6130 = vadd.f32 0.0, %v6129
      %6131 = vmatmul.f32.gmra.mxu0 %v5114
      %v6132 = vpop.f32.mrf.mxu0
      %v6133 = vadd.f32 0.0, %v6132
      %6134 = vmatmul.f32.gmra.mxu0 %v5116
      %v6135 = vpop.f32.mrf.mxu0
      %v6136 = vadd.f32 0.0, %v6135
      %6137 = vmatmul.f32.gmra.mxu0 %v5118
      %v6138 = vpop.f32.mrf.mxu0
      %v6139 = vadd.f32 0.0, %v6138
      %6140 = vmatmul.f32.gmra.mxu0 %v5576
      %v6141 = vpop.f32.mrf.mxu0
      %v6142 = vadd.f32 0.0, %v6141
      %6143 = vmatmul.f32.gmra.mxu0 %v5578
      %v6144 = vpop.f32.mrf.mxu0
      %v6145 = vadd.f32 0.0, %v6144
      %6146 = vmatmul.f32.gmra.mxu0 %v6036
      %v6147 = vpop.f32.mrf.mxu0
      %v6148 = vadd.f32 0.0, %v6147
      %6149 = vmatmul.f32.gmra.mxu0 %v6038
      %v6150 = vpop.f32.mrf.mxu0
      %v6151 = vadd.f32 0.0, %v6150
      %6152 = vdwg.mxu0
      %v6153 = vadd.f32 %v5999, %v6058
      %v6154 = vadd.f32 %v6000, %v6061
      %v6155 = vadd.f32 %v6001, %v6064
      %v6156 = vadd.f32 %v6002, %v6067
      %v6157 = vadd.f32 %v6003, %v6070
      %v6158 = vadd.f32 %v6004, %v6073
      %v6159 = vadd.f32 %v6005, %v6076
      %v6160 = vadd.f32 %v6006, %v6079
      %v6161 = vadd.f32 %v6007, %v6082
      %v6162 = vadd.f32 %v6008, %v6085
      %v6163 = vadd.f32 %v6009, %v6088
      %v6164 = vadd.f32 %v6010, %v6091
      %v6165 = vadd.f32 %v6011, %v6094
      %v6166 = vadd.f32 %v6012, %v6097
      %v6167 = vadd.f32 %v6013, %v6100
      %v6168 = vadd.f32 %v6014, %v6103
      %v6169 = vadd.f32 %v6015, %v6106
      %v6170 = vadd.f32 %v6016, %v6109
      %v6171 = vadd.f32 %v6017, %v6112
      %v6172 = vadd.f32 %v6018, %v6115
      %v6173 = vadd.f32 %v6019, %v6118
      %v6174 = vadd.f32 %v6020, %v6121
      %v6175 = vadd.f32 %v6021, %v6124
      %v6176 = vadd.f32 %v6022, %v6127
      %v6177 = vadd.f32 %v6023, %v6130
      %v6178 = vadd.f32 %v6024, %v6133
      %v6179 = vadd.f32 %v6025, %v6136
      %v6180 = vadd.f32 %v6026, %v6139
      %v6181 = vadd.f32 %v6027, %v6142
      %v6182 = vadd.f32 %v6028, %v6145
      %v6183 = vadd.f32 %v6029, %v6148
      %v6184 = vadd.f32 %v6030, %v6151
      %v6186 = vperm.slane %v4365, 0
      %v6188 = vadd.f32 %v6153, %v6186
      %v6189 = vadd.f32 %v6154, %v6186
      %v6190 = vadd.f32 %v6155, %v6186
      %v6191 = vadd.f32 %v6156, %v6186
      %v6192 = vadd.f32 %v6157, %v6186
      %v6193 = vadd.f32 %v6158, %v6186
      %v6194 = vadd.f32 %v6159, %v6186
      %v6195 = vadd.f32 %v6160, %v6186
      %v6196 = vadd.f32 %v6161, %v6186
      %v6197 = vadd.f32 %v6162, %v6186
      %v6198 = vadd.f32 %v6163, %v6186
      %v6199 = vadd.f32 %v6164, %v6186
      %v6200 = vadd.f32 %v6165, %v6186
      %v6201 = vadd.f32 %v6166, %v6186
      %v6202 = vadd.f32 %v6167, %v6186
      %v6203 = vadd.f32 %v6168, %v6186
      %v6204 = vadd.f32 %v6169, %v6186
      %v6205 = vadd.f32 %v6170, %v6186
      %v6206 = vadd.f32 %v6171, %v6186
      %v6207 = vadd.f32 %v6172, %v6186
      %v6208 = vadd.f32 %v6173, %v6186
      %v6209 = vadd.f32 %v6174, %v6186
      %v6210 = vadd.f32 %v6175, %v6186
      %v6211 = vadd.f32 %v6176, %v6186
      %v6212 = vadd.f32 %v6177, %v6186
      %v6213 = vadd.f32 %v6178, %v6186
      %v6214 = vadd.f32 %v6179, %v6186
      %v6215 = vadd.f32 %v6180, %v6186
      %v6216 = vadd.f32 %v6181, %v6186
      %v6217 = vadd.f32 %v6182, %v6186
      %v6218 = vadd.f32 %v6183, %v6186
      %v6219 = vadd.f32 %v6184, %v6186
      %v6220 = vmax.f32 %v6188, 0.0
      %v6221 = vmax.f32 %v6189, 0.0
      %v6222 = vmax.f32 %v6190, 0.0
      %v6223 = vmax.f32 %v6191, 0.0
      %v6224 = vmax.f32 %v6192, 0.0
      %v6225 = vmax.f32 %v6193, 0.0
      %v6226 = vmax.f32 %v6194, 0.0
      %v6227 = vmax.f32 %v6195, 0.0
      %v6228 = vmax.f32 %v6196, 0.0
      %v6229 = vmax.f32 %v6197, 0.0
      %v6230 = vmax.f32 %v6198, 0.0
      %v6231 = vmax.f32 %v6199, 0.0
      %v6232 = vmax.f32 %v6200, 0.0
      %v6233 = vmax.f32 %v6201, 0.0
      %v6234 = vmax.f32 %v6202, 0.0
      %v6235 = vmax.f32 %v6203, 0.0
      %v6236 = vmax.f32 %v6204, 0.0
      %v6237 = vmax.f32 %v6205, 0.0
      %v6238 = vmax.f32 %v6206, 0.0
      %v6239 = vmax.f32 %v6207, 0.0
      %v6240 = vmax.f32 %v6208, 0.0
      %v6241 = vmax.f32 %v6209, 0.0
      %v6242 = vmax.f32 %v6210, 0.0
      %v6243 = vmax.f32 %v6211, 0.0
      %v6244 = vmax.f32 %v6212, 0.0
      %v6245 = vmax.f32 %v6213, 0.0
      %v6246 = vmax.f32 %v6214, 0.0
      %v6247 = vmax.f32 %v6215, 0.0
      %v6248 = vmax.f32 %v6216, 0.0
      %v6249 = vmax.f32 %v6217, 0.0
      %v6250 = vmax.f32 %v6218, 0.0
      %v6251 = vmax.f32 %v6219, 0.0
      %6252 = vst.msk [vmem:[%s601 + $0x1] sm:$0xff] %vm461, %v6220
      %6253 = vst.msk [vmem:[%s601 + $0x9] sm:$0xff] %vm461, %v6221
      %6254 = vst.msk [vmem:[%s601 + $0x19] sm:$0xff] %vm461, %v6222
      %6255 = vst.msk [vmem:[%s601 + $0x21] sm:$0xff] %vm461, %v6223
      %6256 = vst.msk [vmem:[%s601 + $0x31] sm:$0xff] %vm461, %v6224
      %6257 = vst.msk [vmem:[%s601 + $0x39] sm:$0xff] %vm461, %v6225
      %6258 = vst.msk [vmem:[%s601 + $0x49] sm:$0xff] %vm461, %v6226
      %6259 = vst.msk [vmem:[%s601 + $0x51] sm:$0xff] %vm461, %v6227
      %6260 = vst.msk [vmem:[%s601 + $0x61] sm:$0xff] %vm461, %v6228
      %6261 = vst.msk [vmem:[%s601 + $0x69] sm:$0xff] %vm461, %v6229
      %6262 = vst.msk [vmem:[%s601 + $0x79] sm:$0xff] %vm461, %v6230
      %6263 = vst.msk [vmem:[%s601 + $0x81] sm:$0xff] %vm461, %v6231
      %6264 = vst.msk [vmem:[%s601 + $0x91] sm:$0xff] %vm461, %v6232
      %6265 = vst.msk [vmem:[%s601 + $0x99] sm:$0xff] %vm461, %v6233
      %6266 = vst.msk [vmem:[%s601 + $0xa9] sm:$0xff] %vm461, %v6234
      %6267 = vst.msk [vmem:[%s601 + $0xb1] sm:$0xff] %vm461, %v6235
      %6268 = vst.msk [vmem:[%s601 + $0xc1] sm:$0xff] %vm461, %v6236
      %6269 = vst.msk [vmem:[%s601 + $0xc9] sm:$0xff] %vm461, %v6237
      %6270 = vst.msk [vmem:[%s601 + $0xd9] sm:$0xff] %vm461, %v6238
      %6271 = vst.msk [vmem:[%s601 + $0xe1] sm:$0xff] %vm461, %v6239
      %6272 = vst.msk [vmem:[%s601 + $0xf1] sm:$0xff] %vm461, %v6240
      %6273 = vst.msk [vmem:[%s601 + $0xf9] sm:$0xff] %vm461, %v6241
      %6274 = vst.msk [vmem:[%s601 + $0x109] sm:$0xff] %vm461, %v6242
      %6275 = vst.msk [vmem:[%s601 + $0x111] sm:$0xff] %vm461, %v6243
      %6276 = vst.msk [vmem:[%s601 + $0x121] sm:$0xff] %vm461, %v6244
      %6277 = vst.msk [vmem:[%s601 + $0x129] sm:$0xff] %vm461, %v6245
      %6278 = vst.msk [vmem:[%s601 + $0x139] sm:$0xff] %vm461, %v6246
      %6279 = vst.msk [vmem:[%s601 + $0x141] sm:$0xff] %vm461, %v6247
      %6280 = vst.msk [vmem:[%s601 + $0x151] sm:$0xff] %vm461, %v6248
      %6281 = vst.msk [vmem:[%s601 + $0x159] sm:$0xff] %vm461, %v6249
      %6282 = vst.msk [vmem:[%s601 + $0x169] sm:$0xff] %vm461, %v6250
      %6283 = vst.msk [vmem:[%s601 + $0x171] sm:$0xff] %vm461, %v6251
      %v6284 = vld [vmem:[#allocation2] sm:$0xff]
      %v6285 = vld [vmem:[#allocation2 + $0x8] sm:$0xff]
      %v6286 = vld [vmem:[#allocation2 + $0x10] sm:$0x3]
      %v6287 = vld [vmem:[#allocation2 + $0x18] sm:$0xff]
      %v6288 = vld [vmem:[#allocation2 + $0x20] sm:$0xff]
      %v6289 = vld [vmem:[#allocation2 + $0x28] sm:$0x3]
      %v6290 = vld [vmem:[#allocation2 + $0x30] sm:$0xff]
      %v6291 = vld [vmem:[#allocation2 + $0x38] sm:$0xff]
      %v6292 = vld [vmem:[#allocation2 + $0x40] sm:$0x3]
      %v6293 = vld [vmem:[#allocation2 + $0x48] sm:$0xff]
      %v6294 = vld [vmem:[#allocation2 + $0x50] sm:$0xff]
      %v6295 = vld [vmem:[#allocation2 + $0x58] sm:$0x3]
      %v6296 = vld [vmem:[#allocation2 + $0x60] sm:$0xff]
      %v6297 = vld [vmem:[#allocation2 + $0x68] sm:$0xff]
      %v6298 = vld [vmem:[#allocation2 + $0x70] sm:$0x3]
      %v6299 = vld [vmem:[#allocation2 + $0x78] sm:$0xff]
      %v6300 = vld [vmem:[#allocation2 + $0x80] sm:$0xff]
      %v6301 = vld [vmem:[#allocation2 + $0x88] sm:$0x3]
      %v6302 = vld [vmem:[#allocation2 + $0x90] sm:$0xff]
      %v6303 = vld [vmem:[#allocation2 + $0x98] sm:$0xff]
      %v6304 = vld [vmem:[#allocation2 + $0xa0] sm:$0x3]
      %v6305 = vld [vmem:[#allocation2 + $0xa8] sm:$0xff]
      %v6306 = vld [vmem:[#allocation2 + $0xb0] sm:$0xff]
      %v6307 = vld [vmem:[#allocation2 + $0xb8] sm:$0x3]
      %v6308 = vld [vmem:[#allocation2 + $0xc0] sm:$0xff]
      %v6309 = vld [vmem:[#allocation2 + $0xc8] sm:$0xff]
      %v6310 = vld [vmem:[#allocation2 + $0xd0] sm:$0x3]
      %v6311 = vld [vmem:[#allocation2 + $0xd8] sm:$0xff]
      %v6312 = vld [vmem:[#allocation2 + $0xe0] sm:$0xff]
      %v6313 = vld [vmem:[#allocation2 + $0xe8] sm:$0x3]
      %v6314 = vld [vmem:[#allocation2 + $0xf0] sm:$0xff]
      %v6315 = vld [vmem:[#allocation2 + $0xf8] sm:$0xff]
      %v6316 = vld [vmem:[#allocation2 + $0x100] sm:$0x3]
      %v6317 = vld [vmem:[#allocation2 + $0x108] sm:$0xff]
      %v6318 = vld [vmem:[#allocation2 + $0x110] sm:$0xff]
      %v6319 = vld [vmem:[#allocation2 + $0x118] sm:$0x3]
      %v6320 = vld [vmem:[#allocation2 + $0x120] sm:$0xff]
      %v6321 = vld [vmem:[#allocation2 + $0x128] sm:$0xff]
      %v6322 = vld [vmem:[#allocation2 + $0x130] sm:$0x3]
      %v6323 = vld [vmem:[#allocation2 + $0x138] sm:$0xff]
      %v6324 = vld [vmem:[#allocation2 + $0x140] sm:$0xff]
      %v6325 = vld [vmem:[#allocation2 + $0x148] sm:$0x3]
      %v6326 = vld [vmem:[#allocation2 + $0x150] sm:$0xff]
      %v6327 = vld [vmem:[#allocation2 + $0x158] sm:$0xff]
      %v6328 = vld [vmem:[#allocation2 + $0x160] sm:$0x3]
      %v6329 = vld [vmem:[#allocation2 + $0x168] sm:$0xff]
      %v6330 = vld [vmem:[#allocation2 + $0x170] sm:$0xff]
      %v6331 = vld [vmem:[#allocation2 + $0x178] sm:$0x3]
      %v6332 = vld [vmem:[#allocation2 + $0x180] sm:$0xff]
      %v6333 = vld [vmem:[#allocation2 + $0x188] sm:$0xff]
      %v6334 = vld [vmem:[#allocation2 + $0x190] sm:$0x3]
      %v6335 = vld [vmem:[#allocation2 + $0x198] sm:$0xff]
      %v6336 = vld [vmem:[#allocation2 + $0x1a0] sm:$0xff]
      %v6337 = vld [vmem:[#allocation2 + $0x1a8] sm:$0x3]
      %v6386 = vrot.slane %v6284, 1
      %v6387 = vrot.slane %v6285, 1
      %v6388 = vsel %vm736, %v6386, %v6387
      %v6389 = vrot.slane %v6286, 1
      %v6390 = vsel %vm736, %v6387, %v6389
      %v6391 = vrot.slane %v6287, 1
      %v6392 = vrot.slane %v6288, 1
      %v6393 = vsel %vm736, %v6391, %v6392
      %v6394 = vrot.slane %v6289, 1
      %v6395 = vsel %vm736, %v6392, %v6394
      %v6396 = vrot.slane %v6290, 1
      %v6397 = vrot.slane %v6291, 1
      %v6398 = vsel %vm736, %v6396, %v6397
      %v6399 = vrot.slane %v6292, 1
      %v6400 = vsel %vm736, %v6397, %v6399
      %v6401 = vrot.slane %v6293, 1
      %v6402 = vrot.slane %v6294, 1
      %v6403 = vsel %vm736, %v6401, %v6402
      %v6404 = vrot.slane %v6295, 1
      %v6405 = vsel %vm736, %v6402, %v6404
      %v6406 = vrot.slane %v6296, 1
      %v6407 = vrot.slane %v6297, 1
      %v6408 = vsel %vm736, %v6406, %v6407
      %v6409 = vrot.slane %v6298, 1
      %v6410 = vsel %vm736, %v6407, %v6409
      %v6411 = vrot.slane %v6299, 1
      %v6412 = vrot.slane %v6300, 1
      %v6413 = vsel %vm736, %v6411, %v6412
      %v6414 = vrot.slane %v6301, 1
      %v6415 = vsel %vm736, %v6412, %v6414
      %v6416 = vrot.slane %v6302, 1
      %v6417 = vrot.slane %v6303, 1
      %v6418 = vsel %vm736, %v6416, %v6417
      %v6419 = vrot.slane %v6304, 1
      %v6420 = vsel %vm736, %v6417, %v6419
      %v6421 = vrot.slane %v6305, 1
      %v6422 = vrot.slane %v6306, 1
      %v6423 = vsel %vm736, %v6421, %v6422
      %v6424 = vrot.slane %v6307, 1
      %v6425 = vsel %vm736, %v6422, %v6424
      %v6426 = vrot.slane %v6308, 1
      %v6427 = vrot.slane %v6309, 1
      %v6428 = vsel %vm736, %v6426, %v6427
      %v6429 = vrot.slane %v6310, 1
      %v6430 = vsel %vm736, %v6427, %v6429
      %v6431 = vrot.slane %v6311, 1
      %v6432 = vrot.slane %v6312, 1
      %v6433 = vsel %vm736, %v6431, %v6432
      %v6434 = vrot.slane %v6313, 1
      %v6435 = vsel %vm736, %v6432, %v6434
      %v6436 = vrot.slane %v6314, 1
      %v6437 = vrot.slane %v6315, 1
      %v6438 = vsel %vm736, %v6436, %v6437
      %v6439 = vrot.slane %v6316, 1
      %v6440 = vsel %vm736, %v6437, %v6439
      %v6441 = vrot.slane %v6317, 1
      %v6442 = vrot.slane %v6318, 1
      %v6443 = vsel %vm736, %v6441, %v6442
      %v6444 = vrot.slane %v6319, 1
      %v6445 = vsel %vm736, %v6442, %v6444
      %v6446 = vrot.slane %v6320, 1
      %v6447 = vrot.slane %v6321, 1
      %v6448 = vsel %vm736, %v6446, %v6447
      %v6449 = vrot.slane %v6322, 1
      %v6450 = vsel %vm736, %v6447, %v6449
      %v6451 = vrot.slane %v6323, 1
      %v6452 = vrot.slane %v6324, 1
      %v6453 = vsel %vm736, %v6451, %v6452
      %v6454 = vrot.slane %v6325, 1
      %v6455 = vsel %vm736, %v6452, %v6454
      %v6456 = vrot.slane %v6326, 1
      %v6457 = vrot.slane %v6327, 1
      %v6458 = vsel %vm736, %v6456, %v6457
      %v6459 = vrot.slane %v6328, 1
      %v6460 = vsel %vm736, %v6457, %v6459
      %v6461 = vrot.slane %v6329, 1
      %v6462 = vrot.slane %v6330, 1
      %v6463 = vsel %vm736, %v6461, %v6462
      %v6464 = vrot.slane %v6331, 1
      %v6465 = vsel %vm736, %v6462, %v6464
      %v6466 = vsel %vm461, %v6388, 0
      %v6468 = vsel %vm461, %v6390, 0
      %v6470 = vsel %vm461, %v6393, 0
      %v6472 = vsel %vm461, %v6395, 0
      %v6474 = vsel %vm461, %v6398, 0
      %v6476 = vsel %vm461, %v6400, 0
      %v6478 = vsel %vm461, %v6403, 0
      %v6480 = vsel %vm461, %v6405, 0
      %v6482 = vsel %vm461, %v6408, 0
      %v6484 = vsel %vm461, %v6410, 0
      %v6486 = vsel %vm461, %v6413, 0
      %v6488 = vsel %vm461, %v6415, 0
      %v6490 = vsel %vm461, %v6418, 0
      %v6492 = vsel %vm461, %v6420, 0
      %v6494 = vsel %vm461, %v6423, 0
      %v6496 = vsel %vm461, %v6425, 0
      %v6498 = vsel %vm461, %v6428, 0
      %v6500 = vsel %vm461, %v6430, 0
      %v6502 = vsel %vm461, %v6433, 0
      %v6504 = vsel %vm461, %v6435, 0
      %v6506 = vsel %vm461, %v6438, 0
      %v6508 = vsel %vm461, %v6440, 0
      %v6510 = vsel %vm461, %v6443, 0
      %v6512 = vsel %vm461, %v6445, 0
      %v6514 = vsel %vm461, %v6448, 0
      %v6516 = vsel %vm461, %v6450, 0
      %v6518 = vsel %vm461, %v6453, 0
      %v6520 = vsel %vm461, %v6455, 0
      %v6522 = vsel %vm461, %v6458, 0
      %v6524 = vsel %vm461, %v6460, 0
      %v6526 = vsel %vm461, %v6463, 0
      %v6528 = vsel %vm461, %v6465, 0
      %6530 = vmatpush.msra.mxu0 0.0
      %6531 = vmatpush.msra.mxu0 0.0
      %6532 = vmatpush.msra.mxu0 0.0
      %6533 = vmatpush.msra.mxu0 0.0
      %6534 = vmatpush.msra.mxu0 0.0
      %6535 = vmatpush.msra.mxu0 0.0
      %6536 = vmatpush.msra.mxu0 0.0
      %6537 = vmatpush.msra.mxu0 0.0
      %6538 = vmatpush.msra.mxu0 0.0
      %6539 = vmatpush.msra.mxu0 0.0
      %6540 = vmatpush.msra.mxu0 0.0
      %6541 = vmatpush.msra.mxu0 0.0
      %6542 = vmatpush.msra.mxu0 0.0
      %6543 = vmatpush.msra.mxu0 0.0
      %6544 = vmatpush.msra.mxu0 0.0
      %6545 = vmatpush.msra.mxu0 %v4367
      %6546 = vmatmul.f32.gmra.mxu0 %v6466
      %v6547 = vpop.f32.mrf.mxu0
      %v6548 = vadd.f32 0.0, %v6547
      %6549 = vmatmul.f32.gmra.mxu0 %v6468
      %v6550 = vpop.f32.mrf.mxu0
      %v6551 = vadd.f32 0.0, %v6550
      %6552 = vmatmul.f32.gmra.mxu0 %v6470
      %v6553 = vpop.f32.mrf.mxu0
      %v6554 = vadd.f32 0.0, %v6553
      %6555 = vmatmul.f32.gmra.mxu0 %v6472
      %v6556 = vpop.f32.mrf.mxu0
      %v6557 = vadd.f32 0.0, %v6556
      %6558 = vmatmul.f32.gmra.mxu0 %v6474
      %v6559 = vpop.f32.mrf.mxu0
      %v6560 = vadd.f32 0.0, %v6559
      %6561 = vmatmul.f32.gmra.mxu0 %v6476
      %v6562 = vpop.f32.mrf.mxu0
      %v6563 = vadd.f32 0.0, %v6562
      %6564 = vmatmul.f32.gmra.mxu0 %v6478
      %v6565 = vpop.f32.mrf.mxu0
      %v6566 = vadd.f32 0.0, %v6565
      %6567 = vmatmul.f32.gmra.mxu0 %v6480
      %v6568 = vpop.f32.mrf.mxu0
      %v6569 = vadd.f32 0.0, %v6568
      %6570 = vmatmul.f32.gmra.mxu0 %v6482
      %v6571 = vpop.f32.mrf.mxu0
      %v6572 = vadd.f32 0.0, %v6571
      %6573 = vmatmul.f32.gmra.mxu0 %v6484
      %v6574 = vpop.f32.mrf.mxu0
      %v6575 = vadd.f32 0.0, %v6574
      %6576 = vmatmul.f32.gmra.mxu0 %v6486
      %v6577 = vpop.f32.mrf.mxu0
      %v6578 = vadd.f32 0.0, %v6577
      %6579 = vmatmul.f32.gmra.mxu0 %v6488
      %v6580 = vpop.f32.mrf.mxu0
      %v6581 = vadd.f32 0.0, %v6580
      %6582 = vmatmul.f32.gmra.mxu0 %v6490
      %v6583 = vpop.f32.mrf.mxu0
      %v6584 = vadd.f32 0.0, %v6583
      %6585 = vmatmul.f32.gmra.mxu0 %v6492
      %v6586 = vpop.f32.mrf.mxu0
      %v6587 = vadd.f32 0.0, %v6586
      %6588 = vmatmul.f32.gmra.mxu0 %v6494
      %v6589 = vpop.f32.mrf.mxu0
      %v6590 = vadd.f32 0.0, %v6589
      %6591 = vmatmul.f32.gmra.mxu0 %v6496
      %v6592 = vpop.f32.mrf.mxu0
      %v6593 = vadd.f32 0.0, %v6592
      %6594 = vmatmul.f32.gmra.mxu0 %v6498
      %v6595 = vpop.f32.mrf.mxu0
      %v6596 = vadd.f32 0.0, %v6595
      %6597 = vmatmul.f32.gmra.mxu0 %v6500
      %v6598 = vpop.f32.mrf.mxu0
      %v6599 = vadd.f32 0.0, %v6598
      %6600 = vmatmul.f32.gmra.mxu0 %v6502
      %v6601 = vpop.f32.mrf.mxu0
      %v6602 = vadd.f32 0.0, %v6601
      %6603 = vmatmul.f32.gmra.mxu0 %v6504
      %v6604 = vpop.f32.mrf.mxu0
      %v6605 = vadd.f32 0.0, %v6604
      %6606 = vmatmul.f32.gmra.mxu0 %v6506
      %v6607 = vpop.f32.mrf.mxu0
      %v6608 = vadd.f32 0.0, %v6607
      %6609 = vmatmul.f32.gmra.mxu0 %v6508
      %v6610 = vpop.f32.mrf.mxu0
      %v6611 = vadd.f32 0.0, %v6610
      %6612 = vmatmul.f32.gmra.mxu0 %v6510
      %v6613 = vpop.f32.mrf.mxu0
      %v6614 = vadd.f32 0.0, %v6613
      %6615 = vmatmul.f32.gmra.mxu0 %v6512
      %v6616 = vpop.f32.mrf.mxu0
      %v6617 = vadd.f32 0.0, %v6616
      %6618 = vmatmul.f32.gmra.mxu0 %v6514
      %v6619 = vpop.f32.mrf.mxu0
      %v6620 = vadd.f32 0.0, %v6619
      %6621 = vmatmul.f32.gmra.mxu0 %v6516
      %v6622 = vpop.f32.mrf.mxu0
      %v6623 = vadd.f32 0.0, %v6622
      %6624 = vmatmul.f32.gmra.mxu0 %v6518
      %v6625 = vpop.f32.mrf.mxu0
      %v6626 = vadd.f32 0.0, %v6625
      %6627 = vmatmul.f32.gmra.mxu0 %v6520
      %v6628 = vpop.f32.mrf.mxu0
      %v6629 = vadd.f32 0.0, %v6628
      %6630 = vmatmul.f32.gmra.mxu0 %v6522
      %v6631 = vpop.f32.mrf.mxu0
      %v6632 = vadd.f32 0.0, %v6631
      %6633 = vmatmul.f32.gmra.mxu0 %v6524
      %v6634 = vpop.f32.mrf.mxu0
      %v6635 = vadd.f32 0.0, %v6634
      %6636 = vmatmul.f32.gmra.mxu0 %v6526
      %v6637 = vpop.f32.mrf.mxu0
      %v6638 = vadd.f32 0.0, %v6637
      %6639 = vmatmul.f32.gmra.mxu0 %v6528
      %v6640 = vpop.f32.mrf.mxu0
      %v6641 = vadd.f32 0.0, %v6640
      %6642 = vdwg.mxu0
      %v6643 = vsel %vm461, %v6284, 0
      %v6645 = vsel %vm461, %v6285, 0
      %v6647 = vsel %vm461, %v6287, 0
      %v6649 = vsel %vm461, %v6288, 0
      %v6651 = vsel %vm461, %v6290, 0
      %v6653 = vsel %vm461, %v6291, 0
      %v6655 = vsel %vm461, %v6293, 0
      %v6657 = vsel %vm461, %v6294, 0
      %v6659 = vsel %vm461, %v6296, 0
      %v6661 = vsel %vm461, %v6297, 0
      %v6663 = vsel %vm461, %v6299, 0
      %v6665 = vsel %vm461, %v6300, 0
      %v6667 = vsel %vm461, %v6302, 0
      %v6669 = vsel %vm461, %v6303, 0
      %v6671 = vsel %vm461, %v6305, 0
      %v6673 = vsel %vm461, %v6306, 0
      %v6675 = vsel %vm461, %v6308, 0
      %v6677 = vsel %vm461, %v6309, 0
      %v6679 = vsel %vm461, %v6311, 0
      %v6681 = vsel %vm461, %v6312, 0
      %v6683 = vsel %vm461, %v6314, 0
      %v6685 = vsel %vm461, %v6315, 0
      %v6687 = vsel %vm461, %v6317, 0
      %v6689 = vsel %vm461, %v6318, 0
      %v6691 = vsel %vm461, %v6320, 0
      %v6693 = vsel %vm461, %v6321, 0
      %v6695 = vsel %vm461, %v6323, 0
      %v6697 = vsel %vm461, %v6324, 0
      %v6699 = vsel %vm461, %v6326, 0
      %v6701 = vsel %vm461, %v6327, 0
      %v6703 = vsel %vm461, %v6329, 0
      %v6705 = vsel %vm461, %v6330, 0
      %6707 = vmatpush.msra.mxu0 0.0
      %6708 = vmatpush.msra.mxu0 0.0
      %6709 = vmatpush.msra.mxu0 0.0
      %6710 = vmatpush.msra.mxu0 0.0
      %6711 = vmatpush.msra.mxu0 0.0
      %6712 = vmatpush.msra.mxu0 0.0
      %6713 = vmatpush.msra.mxu0 0.0
      %6714 = vmatpush.msra.mxu0 0.0
      %6715 = vmatpush.msra.mxu0 0.0
      %6716 = vmatpush.msra.mxu0 0.0
      %6717 = vmatpush.msra.mxu0 0.0
      %6718 = vmatpush.msra.mxu0 0.0
      %6719 = vmatpush.msra.mxu0 0.0
      %6720 = vmatpush.msra.mxu0 0.0
      %6721 = vmatpush.msra.mxu0 0.0
      %6722 = vmatpush.msra.mxu0 %v4366
      %6723 = vmatmul.f32.gmra.mxu0 %v6643
      %v6724 = vpop.f32.mrf.mxu0
      %v6725 = vadd.f32 %v6548, %v6724
      %6726 = vmatmul.f32.gmra.mxu0 %v6645
      %v6727 = vpop.f32.mrf.mxu0
      %v6728 = vadd.f32 %v6551, %v6727
      %6729 = vmatmul.f32.gmra.mxu0 %v6647
      %v6730 = vpop.f32.mrf.mxu0
      %v6731 = vadd.f32 %v6554, %v6730
      %6732 = vmatmul.f32.gmra.mxu0 %v6649
      %v6733 = vpop.f32.mrf.mxu0
      %v6734 = vadd.f32 %v6557, %v6733
      %6735 = vmatmul.f32.gmra.mxu0 %v6651
      %v6736 = vpop.f32.mrf.mxu0
      %v6737 = vadd.f32 %v6560, %v6736
      %6738 = vmatmul.f32.gmra.mxu0 %v6653
      %v6739 = vpop.f32.mrf.mxu0
      %v6740 = vadd.f32 %v6563, %v6739
      %6741 = vmatmul.f32.gmra.mxu0 %v6655
      %v6742 = vpop.f32.mrf.mxu0
      %v6743 = vadd.f32 %v6566, %v6742
      %6744 = vmatmul.f32.gmra.mxu0 %v6657
      %v6745 = vpop.f32.mrf.mxu0
      %v6746 = vadd.f32 %v6569, %v6745
      %6747 = vmatmul.f32.gmra.mxu0 %v6659
      %v6748 = vpop.f32.mrf.mxu0
      %v6749 = vadd.f32 %v6572, %v6748
      %6750 = vmatmul.f32.gmra.mxu0 %v6661
      %v6751 = vpop.f32.mrf.mxu0
      %v6752 = vadd.f32 %v6575, %v6751
      %6753 = vmatmul.f32.gmra.mxu0 %v6663
      %v6754 = vpop.f32.mrf.mxu0
      %v6755 = vadd.f32 %v6578, %v6754
      %6756 = vmatmul.f32.gmra.mxu0 %v6665
      %v6757 = vpop.f32.mrf.mxu0
      %v6758 = vadd.f32 %v6581, %v6757
      %6759 = vmatmul.f32.gmra.mxu0 %v6667
      %v6760 = vpop.f32.mrf.mxu0
      %v6761 = vadd.f32 %v6584, %v6760
      %6762 = vmatmul.f32.gmra.mxu0 %v6669
      %v6763 = vpop.f32.mrf.mxu0
      %v6764 = vadd.f32 %v6587, %v6763
      %6765 = vmatmul.f32.gmra.mxu0 %v6671
      %v6766 = vpop.f32.mrf.mxu0
      %v6767 = vadd.f32 %v6590, %v6766
      %6768 = vmatmul.f32.gmra.mxu0 %v6673
      %v6769 = vpop.f32.mrf.mxu0
      %v6770 = vadd.f32 %v6593, %v6769
      %6771 = vmatmul.f32.gmra.mxu0 %v6675
      %v6772 = vpop.f32.mrf.mxu0
      %v6773 = vadd.f32 %v6596, %v6772
      %6774 = vmatmul.f32.gmra.mxu0 %v6677
      %v6775 = vpop.f32.mrf.mxu0
      %v6776 = vadd.f32 %v6599, %v6775
      %6777 = vmatmul.f32.gmra.mxu0 %v6679
      %v6778 = vpop.f32.mrf.mxu0
      %v6779 = vadd.f32 %v6602, %v6778
      %6780 = vmatmul.f32.gmra.mxu0 %v6681
      %v6781 = vpop.f32.mrf.mxu0
      %v6782 = vadd.f32 %v6605, %v6781
      %6783 = vmatmul.f32.gmra.mxu0 %v6683
      %v6784 = vpop.f32.mrf.mxu0
      %v6785 = vadd.f32 %v6608, %v6784
      %6786 = vmatmul.f32.gmra.mxu0 %v6685
      %v6787 = vpop.f32.mrf.mxu0
      %v6788 = vadd.f32 %v6611, %v6787
      %6789 = vmatmul.f32.gmra.mxu0 %v6687
      %v6790 = vpop.f32.mrf.mxu0
      %v6791 = vadd.f32 %v6614, %v6790
      %6792 = vmatmul.f32.gmra.mxu0 %v6689
      %v6793 = vpop.f32.mrf.mxu0
      %v6794 = vadd.f32 %v6617, %v6793
      %6795 = vmatmul.f32.gmra.mxu0 %v6691
      %v6796 = vpop.f32.mrf.mxu0
      %v6797 = vadd.f32 %v6620, %v6796
      %6798 = vmatmul.f32.gmra.mxu0 %v6693
      %v6799 = vpop.f32.mrf.mxu0
      %v6800 = vadd.f32 %v6623, %v6799
      %6801 = vmatmul.f32.gmra.mxu0 %v6695
      %v6802 = vpop.f32.mrf.mxu0
      %v6803 = vadd.f32 %v6626, %v6802
      %6804 = vmatmul.f32.gmra.mxu0 %v6697
      %v6805 = vpop.f32.mrf.mxu0
      %v6806 = vadd.f32 %v6629, %v6805
      %6807 = vmatmul.f32.gmra.mxu0 %v6699
      %v6808 = vpop.f32.mrf.mxu0
      %v6809 = vadd.f32 %v6632, %v6808
      %6810 = vmatmul.f32.gmra.mxu0 %v6701
      %v6811 = vpop.f32.mrf.mxu0
      %v6812 = vadd.f32 %v6635, %v6811
      %6813 = vmatmul.f32.gmra.mxu0 %v6703
      %v6814 = vpop.f32.mrf.mxu0
      %v6815 = vadd.f32 %v6638, %v6814
      %6816 = vmatmul.f32.gmra.mxu0 %v6705
      %v6817 = vpop.f32.mrf.mxu0
      %v6818 = vadd.f32 %v6641, %v6817
      %6819 = vdwg.mxu0
      %v6820 = vrot.slane %v6284, 2
      %v6821 = vrot.slane %v6285, 2
      %v6822 = vsel %vm1171, %v6820, %v6821
      %v6823 = vrot.slane %v6286, 2
      %v6824 = vsel %vm1171, %v6821, %v6823
      %v6825 = vrot.slane %v6287, 2
      %v6826 = vrot.slane %v6288, 2
      %v6827 = vsel %vm1171, %v6825, %v6826
      %v6828 = vrot.slane %v6289, 2
      %v6829 = vsel %vm1171, %v6826, %v6828
      %v6830 = vrot.slane %v6290, 2
      %v6831 = vrot.slane %v6291, 2
      %v6832 = vsel %vm1171, %v6830, %v6831
      %v6833 = vrot.slane %v6292, 2
      %v6834 = vsel %vm1171, %v6831, %v6833
      %v6835 = vrot.slane %v6293, 2
      %v6836 = vrot.slane %v6294, 2
      %v6837 = vsel %vm1171, %v6835, %v6836
      %v6838 = vrot.slane %v6295, 2
      %v6839 = vsel %vm1171, %v6836, %v6838
      %v6840 = vrot.slane %v6296, 2
      %v6841 = vrot.slane %v6297, 2
      %v6842 = vsel %vm1171, %v6840, %v6841
      %v6843 = vrot.slane %v6298, 2
      %v6844 = vsel %vm1171, %v6841, %v6843
      %v6845 = vrot.slane %v6299, 2
      %v6846 = vrot.slane %v6300, 2
      %v6847 = vsel %vm1171, %v6845, %v6846
      %v6848 = vrot.slane %v6301, 2
      %v6849 = vsel %vm1171, %v6846, %v6848
      %v6850 = vrot.slane %v6302, 2
      %v6851 = vrot.slane %v6303, 2
      %v6852 = vsel %vm1171, %v6850, %v6851
      %v6853 = vrot.slane %v6304, 2
      %v6854 = vsel %vm1171, %v6851, %v6853
      %v6855 = vrot.slane %v6305, 2
      %v6856 = vrot.slane %v6306, 2
      %v6857 = vsel %vm1171, %v6855, %v6856
      %v6858 = vrot.slane %v6307, 2
      %v6859 = vsel %vm1171, %v6856, %v6858
      %v6860 = vrot.slane %v6308, 2
      %v6861 = vrot.slane %v6309, 2
      %v6862 = vsel %vm1171, %v6860, %v6861
      %v6863 = vrot.slane %v6310, 2
      %v6864 = vsel %vm1171, %v6861, %v6863
      %v6865 = vrot.slane %v6311, 2
      %v6866 = vrot.slane %v6312, 2
      %v6867 = vsel %vm1171, %v6865, %v6866
      %v6868 = vrot.slane %v6313, 2
      %v6869 = vsel %vm1171, %v6866, %v6868
      %v6870 = vrot.slane %v6314, 2
      %v6871 = vrot.slane %v6315, 2
      %v6872 = vsel %vm1171, %v6870, %v6871
      %v6873 = vrot.slane %v6316, 2
      %v6874 = vsel %vm1171, %v6871, %v6873
      %v6875 = vrot.slane %v6317, 2
      %v6876 = vrot.slane %v6318, 2
      %v6877 = vsel %vm1171, %v6875, %v6876
      %v6878 = vrot.slane %v6319, 2
      %v6879 = vsel %vm1171, %v6876, %v6878
      %v6880 = vrot.slane %v6320, 2
      %v6881 = vrot.slane %v6321, 2
      %v6882 = vsel %vm1171, %v6880, %v6881
      %v6883 = vrot.slane %v6322, 2
      %v6884 = vsel %vm1171, %v6881, %v6883
      %v6885 = vrot.slane %v6323, 2
      %v6886 = vrot.slane %v6324, 2
      %v6887 = vsel %vm1171, %v6885, %v6886
      %v6888 = vrot.slane %v6325, 2
      %v6889 = vsel %vm1171, %v6886, %v6888
      %v6890 = vrot.slane %v6326, 2
      %v6891 = vrot.slane %v6327, 2
      %v6892 = vsel %vm1171, %v6890, %v6891
      %v6893 = vrot.slane %v6328, 2
      %v6894 = vsel %vm1171, %v6891, %v6893
      %v6895 = vrot.slane %v6329, 2
      %v6896 = vrot.slane %v6330, 2
      %v6897 = vsel %vm1171, %v6895, %v6896
      %v6898 = vrot.slane %v6331, 2
      %v6899 = vsel %vm1171, %v6896, %v6898
      %v6900 = vsel %vm461, %v6822, 0
      %v6902 = vsel %vm461, %v6824, 0
      %v6904 = vsel %vm461, %v6827, 0
      %v6906 = vsel %vm461, %v6829, 0
      %v6908 = vsel %vm461, %v6832, 0
      %v6910 = vsel %vm461, %v6834, 0
      %v6912 = vsel %vm461, %v6837, 0
      %v6914 = vsel %vm461, %v6839, 0
      %v6916 = vsel %vm461, %v6842, 0
      %v6918 = vsel %vm461, %v6844, 0
      %v6920 = vsel %vm461, %v6847, 0
      %v6922 = vsel %vm461, %v6849, 0
      %v6924 = vsel %vm461, %v6852, 0
      %v6926 = vsel %vm461, %v6854, 0
      %v6928 = vsel %vm461, %v6857, 0
      %v6930 = vsel %vm461, %v6859, 0
      %v6932 = vsel %vm461, %v6862, 0
      %v6934 = vsel %vm461, %v6864, 0
      %v6936 = vsel %vm461, %v6867, 0
      %v6938 = vsel %vm461, %v6869, 0
      %v6940 = vsel %vm461, %v6872, 0
      %v6942 = vsel %vm461, %v6874, 0
      %v6944 = vsel %vm461, %v6877, 0
      %v6946 = vsel %vm461, %v6879, 0
      %v6948 = vsel %vm461, %v6882, 0
      %v6950 = vsel %vm461, %v6884, 0
      %v6952 = vsel %vm461, %v6887, 0
      %v6954 = vsel %vm461, %v6889, 0
      %v6956 = vsel %vm461, %v6892, 0
      %v6958 = vsel %vm461, %v6894, 0
      %v6960 = vsel %vm461, %v6897, 0
      %v6962 = vsel %vm461, %v6899, 0
      %6964 = vmatpush.msra.mxu0 0.0
      %6965 = vmatpush.msra.mxu0 0.0
      %6966 = vmatpush.msra.mxu0 0.0
      %6967 = vmatpush.msra.mxu0 0.0
      %6968 = vmatpush.msra.mxu0 0.0
      %6969 = vmatpush.msra.mxu0 0.0
      %6970 = vmatpush.msra.mxu0 0.0
      %6971 = vmatpush.msra.mxu0 0.0
      %6972 = vmatpush.msra.mxu0 0.0
      %6973 = vmatpush.msra.mxu0 0.0
      %6974 = vmatpush.msra.mxu0 0.0
      %6975 = vmatpush.msra.mxu0 0.0
      %6976 = vmatpush.msra.mxu0 0.0
      %6977 = vmatpush.msra.mxu0 0.0
      %6978 = vmatpush.msra.mxu0 0.0
      %6979 = vmatpush.msra.mxu0 %v4368
      %6980 = vmatmul.f32.gmra.mxu0 %v6900
      %v6981 = vpop.f32.mrf.mxu0
      %v6982 = vadd.f32 0.0, %v6981
      %6983 = vmatmul.f32.gmra.mxu0 %v6902
      %v6984 = vpop.f32.mrf.mxu0
      %v6985 = vadd.f32 0.0, %v6984
      %6986 = vmatmul.f32.gmra.mxu0 %v6904
      %v6987 = vpop.f32.mrf.mxu0
      %v6988 = vadd.f32 0.0, %v6987
      %6989 = vmatmul.f32.gmra.mxu0 %v6906
      %v6990 = vpop.f32.mrf.mxu0
      %v6991 = vadd.f32 0.0, %v6990
      %6992 = vmatmul.f32.gmra.mxu0 %v6908
      %v6993 = vpop.f32.mrf.mxu0
      %v6994 = vadd.f32 0.0, %v6993
      %6995 = vmatmul.f32.gmra.mxu0 %v6910
      %v6996 = vpop.f32.mrf.mxu0
      %v6997 = vadd.f32 0.0, %v6996
      %6998 = vmatmul.f32.gmra.mxu0 %v6912
      %v6999 = vpop.f32.mrf.mxu0
      %v7000 = vadd.f32 0.0, %v6999
      %7001 = vmatmul.f32.gmra.mxu0 %v6914
      %v7002 = vpop.f32.mrf.mxu0
      %v7003 = vadd.f32 0.0, %v7002
      %7004 = vmatmul.f32.gmra.mxu0 %v6916
      %v7005 = vpop.f32.mrf.mxu0
      %v7006 = vadd.f32 0.0, %v7005
      %7007 = vmatmul.f32.gmra.mxu0 %v6918
      %v7008 = vpop.f32.mrf.mxu0
      %v7009 = vadd.f32 0.0, %v7008
      %7010 = vmatmul.f32.gmra.mxu0 %v6920
      %v7011 = vpop.f32.mrf.mxu0
      %v7012 = vadd.f32 0.0, %v7011
      %7013 = vmatmul.f32.gmra.mxu0 %v6922
      %v7014 = vpop.f32.mrf.mxu0
      %v7015 = vadd.f32 0.0, %v7014
      %7016 = vmatmul.f32.gmra.mxu0 %v6924
      %v7017 = vpop.f32.mrf.mxu0
      %v7018 = vadd.f32 0.0, %v7017
      %7019 = vmatmul.f32.gmra.mxu0 %v6926
      %v7020 = vpop.f32.mrf.mxu0
      %v7021 = vadd.f32 0.0, %v7020
      %7022 = vmatmul.f32.gmra.mxu0 %v6928
      %v7023 = vpop.f32.mrf.mxu0
      %v7024 = vadd.f32 0.0, %v7023
      %7025 = vmatmul.f32.gmra.mxu0 %v6930
      %v7026 = vpop.f32.mrf.mxu0
      %v7027 = vadd.f32 0.0, %v7026
      %7028 = vmatmul.f32.gmra.mxu0 %v6932
      %v7029 = vpop.f32.mrf.mxu0
      %v7030 = vadd.f32 0.0, %v7029
      %7031 = vmatmul.f32.gmra.mxu0 %v6934
      %v7032 = vpop.f32.mrf.mxu0
      %v7033 = vadd.f32 0.0, %v7032
      %7034 = vmatmul.f32.gmra.mxu0 %v6936
      %v7035 = vpop.f32.mrf.mxu0
      %v7036 = vadd.f32 0.0, %v7035
      %7037 = vmatmul.f32.gmra.mxu0 %v6938
      %v7038 = vpop.f32.mrf.mxu0
      %v7039 = vadd.f32 0.0, %v7038
      %7040 = vmatmul.f32.gmra.mxu0 %v6940
      %v7041 = vpop.f32.mrf.mxu0
      %v7042 = vadd.f32 0.0, %v7041
      %7043 = vmatmul.f32.gmra.mxu0 %v6942
      %v7044 = vpop.f32.mrf.mxu0
      %v7045 = vadd.f32 0.0, %v7044
      %7046 = vmatmul.f32.gmra.mxu0 %v6944
      %v7047 = vpop.f32.mrf.mxu0
      %v7048 = vadd.f32 0.0, %v7047
      %7049 = vmatmul.f32.gmra.mxu0 %v6946
      %v7050 = vpop.f32.mrf.mxu0
      %v7051 = vadd.f32 0.0, %v7050
      %7052 = vmatmul.f32.gmra.mxu0 %v6948
      %v7053 = vpop.f32.mrf.mxu0
      %v7054 = vadd.f32 0.0, %v7053
      %7055 = vmatmul.f32.gmra.mxu0 %v6950
      %v7056 = vpop.f32.mrf.mxu0
      %v7057 = vadd.f32 0.0, %v7056
      %7058 = vmatmul.f32.gmra.mxu0 %v6952
      %v7059 = vpop.f32.mrf.mxu0
      %v7060 = vadd.f32 0.0, %v7059
      %7061 = vmatmul.f32.gmra.mxu0 %v6954
      %v7062 = vpop.f32.mrf.mxu0
      %v7063 = vadd.f32 0.0, %v7062
      %7064 = vmatmul.f32.gmra.mxu0 %v6956
      %v7065 = vpop.f32.mrf.mxu0
      %v7066 = vadd.f32 0.0, %v7065
      %7067 = vmatmul.f32.gmra.mxu0 %v6958
      %v7068 = vpop.f32.mrf.mxu0
      %v7069 = vadd.f32 0.0, %v7068
      %7070 = vmatmul.f32.gmra.mxu0 %v6960
      %v7071 = vpop.f32.mrf.mxu0
      %v7072 = vadd.f32 0.0, %v7071
      %7073 = vmatmul.f32.gmra.mxu0 %v6962
      %v7074 = vpop.f32.mrf.mxu0
      %v7075 = vadd.f32 0.0, %v7074
      %7076 = vdwg.mxu0
      %v7077 = vadd.f32 %v6725, %v6982
      %v7078 = vadd.f32 %v6728, %v6985
      %v7079 = vadd.f32 %v6731, %v6988
      %v7080 = vadd.f32 %v6734, %v6991
      %v7081 = vadd.f32 %v6737, %v6994
      %v7082 = vadd.f32 %v6740, %v6997
      %v7083 = vadd.f32 %v6743, %v7000
      %v7084 = vadd.f32 %v6746, %v7003
      %v7085 = vadd.f32 %v6749, %v7006
      %v7086 = vadd.f32 %v6752, %v7009
      %v7087 = vadd.f32 %v6755, %v7012
      %v7088 = vadd.f32 %v6758, %v7015
      %v7089 = vadd.f32 %v6761, %v7018
      %v7090 = vadd.f32 %v6764, %v7021
      %v7091 = vadd.f32 %v6767, %v7024
      %v7092 = vadd.f32 %v6770, %v7027
      %v7093 = vadd.f32 %v6773, %v7030
      %v7094 = vadd.f32 %v6776, %v7033
      %v7095 = vadd.f32 %v6779, %v7036
      %v7096 = vadd.f32 %v6782, %v7039
      %v7097 = vadd.f32 %v6785, %v7042
      %v7098 = vadd.f32 %v6788, %v7045
      %v7099 = vadd.f32 %v6791, %v7048
      %v7100 = vadd.f32 %v6794, %v7051
      %v7101 = vadd.f32 %v6797, %v7054
      %v7102 = vadd.f32 %v6800, %v7057
      %v7103 = vadd.f32 %v6803, %v7060
      %v7104 = vadd.f32 %v6806, %v7063
      %v7105 = vadd.f32 %v6809, %v7066
      %v7106 = vadd.f32 %v6812, %v7069
      %v7107 = vadd.f32 %v6815, %v7072
      %v7108 = vadd.f32 %v6818, %v7075
      %v7110 = vsel %vm461, %v6332, 0
      %v7113 = vsel %vm461, %v6333, 0
      %7115 = vmatpush.msra.mxu0 0.0
      %7116 = vmatpush.msra.mxu0 0.0
      %7117 = vmatpush.msra.mxu0 0.0
      %7118 = vmatpush.msra.mxu0 0.0
      %7119 = vmatpush.msra.mxu0 0.0
      %7120 = vmatpush.msra.mxu0 0.0
      %7121 = vmatpush.msra.mxu0 0.0
      %7122 = vmatpush.msra.mxu0 0.0
      %7123 = vmatpush.msra.mxu0 0.0
      %7124 = vmatpush.msra.mxu0 0.0
      %7125 = vmatpush.msra.mxu0 0.0
      %7126 = vmatpush.msra.mxu0 0.0
      %7127 = vmatpush.msra.mxu0 0.0
      %7128 = vmatpush.msra.mxu0 0.0
      %7129 = vmatpush.msra.mxu0 0.0
      %7130 = vmatpush.msra.mxu0 %v4369
      %7131 = vmatmul.f32.gmra.mxu0 %v6647
      %v7132 = vpop.f32.mrf.mxu0
      %v7133 = vadd.f32 0.0, %v7132
      %7134 = vmatmul.f32.gmra.mxu0 %v6649
      %v7135 = vpop.f32.mrf.mxu0
      %v7136 = vadd.f32 0.0, %v7135
      %7137 = vmatmul.f32.gmra.mxu0 %v6651
      %v7138 = vpop.f32.mrf.mxu0
      %v7139 = vadd.f32 0.0, %v7138
      %7140 = vmatmul.f32.gmra.mxu0 %v6653
      %v7141 = vpop.f32.mrf.mxu0
      %v7142 = vadd.f32 0.0, %v7141
      %7143 = vmatmul.f32.gmra.mxu0 %v6655
      %v7144 = vpop.f32.mrf.mxu0
      %v7145 = vadd.f32 0.0, %v7144
      %7146 = vmatmul.f32.gmra.mxu0 %v6657
      %v7147 = vpop.f32.mrf.mxu0
      %v7148 = vadd.f32 0.0, %v7147
      %7149 = vmatmul.f32.gmra.mxu0 %v6659
      %v7150 = vpop.f32.mrf.mxu0
      %v7151 = vadd.f32 0.0, %v7150
      %7152 = vmatmul.f32.gmra.mxu0 %v6661
      %v7153 = vpop.f32.mrf.mxu0
      %v7154 = vadd.f32 0.0, %v7153
      %7155 = vmatmul.f32.gmra.mxu0 %v6663
      %v7156 = vpop.f32.mrf.mxu0
      %v7157 = vadd.f32 0.0, %v7156
      %7158 = vmatmul.f32.gmra.mxu0 %v6665
      %v7159 = vpop.f32.mrf.mxu0
      %v7160 = vadd.f32 0.0, %v7159
      %7161 = vmatmul.f32.gmra.mxu0 %v6667
      %v7162 = vpop.f32.mrf.mxu0
      %v7163 = vadd.f32 0.0, %v7162
      %7164 = vmatmul.f32.gmra.mxu0 %v6669
      %v7165 = vpop.f32.mrf.mxu0
      %v7166 = vadd.f32 0.0, %v7165
      %7167 = vmatmul.f32.gmra.mxu0 %v6671
      %v7168 = vpop.f32.mrf.mxu0
      %v7169 = vadd.f32 0.0, %v7168
      %7170 = vmatmul.f32.gmra.mxu0 %v6673
      %v7171 = vpop.f32.mrf.mxu0
      %v7172 = vadd.f32 0.0, %v7171
      %7173 = vmatmul.f32.gmra.mxu0 %v6675
      %v7174 = vpop.f32.mrf.mxu0
      %v7175 = vadd.f32 0.0, %v7174
      %7176 = vmatmul.f32.gmra.mxu0 %v6677
      %v7177 = vpop.f32.mrf.mxu0
      %v7178 = vadd.f32 0.0, %v7177
      %7179 = vmatmul.f32.gmra.mxu0 %v6679
      %v7180 = vpop.f32.mrf.mxu0
      %v7181 = vadd.f32 0.0, %v7180
      %7182 = vmatmul.f32.gmra.mxu0 %v6681
      %v7183 = vpop.f32.mrf.mxu0
      %v7184 = vadd.f32 0.0, %v7183
      %7185 = vmatmul.f32.gmra.mxu0 %v6683
      %v7186 = vpop.f32.mrf.mxu0
      %v7187 = vadd.f32 0.0, %v7186
      %7188 = vmatmul.f32.gmra.mxu0 %v6685
      %v7189 = vpop.f32.mrf.mxu0
      %v7190 = vadd.f32 0.0, %v7189
      %7191 = vmatmul.f32.gmra.mxu0 %v6687
      %v7192 = vpop.f32.mrf.mxu0
      %v7193 = vadd.f32 0.0, %v7192
      %7194 = vmatmul.f32.gmra.mxu0 %v6689
      %v7195 = vpop.f32.mrf.mxu0
      %v7196 = vadd.f32 0.0, %v7195
      %7197 = vmatmul.f32.gmra.mxu0 %v6691
      %v7198 = vpop.f32.mrf.mxu0
      %v7199 = vadd.f32 0.0, %v7198
      %7200 = vmatmul.f32.gmra.mxu0 %v6693
      %v7201 = vpop.f32.mrf.mxu0
      %v7202 = vadd.f32 0.0, %v7201
      %7203 = vmatmul.f32.gmra.mxu0 %v6695
      %v7204 = vpop.f32.mrf.mxu0
      %v7205 = vadd.f32 0.0, %v7204
      %7206 = vmatmul.f32.gmra.mxu0 %v6697
      %v7207 = vpop.f32.mrf.mxu0
      %v7208 = vadd.f32 0.0, %v7207
      %7209 = vmatmul.f32.gmra.mxu0 %v6699
      %v7210 = vpop.f32.mrf.mxu0
      %v7211 = vadd.f32 0.0, %v7210
      %7212 = vmatmul.f32.gmra.mxu0 %v6701
      %v7213 = vpop.f32.mrf.mxu0
      %v7214 = vadd.f32 0.0, %v7213
      %7215 = vmatmul.f32.gmra.mxu0 %v6703
      %v7216 = vpop.f32.mrf.mxu0
      %v7217 = vadd.f32 0.0, %v7216
      %7218 = vmatmul.f32.gmra.mxu0 %v6705
      %v7219 = vpop.f32.mrf.mxu0
      %v7220 = vadd.f32 0.0, %v7219
      %7221 = vmatmul.f32.gmra.mxu0 %v7110
      %v7222 = vpop.f32.mrf.mxu0
      %v7223 = vadd.f32 0.0, %v7222
      %7224 = vmatmul.f32.gmra.mxu0 %v7113
      %v7225 = vpop.f32.mrf.mxu0
      %v7226 = vadd.f32 0.0, %v7225
      %7227 = vdwg.mxu0
      %v7228 = vadd.f32 %v7077, %v7133
      %v7229 = vadd.f32 %v7078, %v7136
      %v7230 = vadd.f32 %v7079, %v7139
      %v7231 = vadd.f32 %v7080, %v7142
      %v7232 = vadd.f32 %v7081, %v7145
      %v7233 = vadd.f32 %v7082, %v7148
      %v7234 = vadd.f32 %v7083, %v7151
      %v7235 = vadd.f32 %v7084, %v7154
      %v7236 = vadd.f32 %v7085, %v7157
      %v7237 = vadd.f32 %v7086, %v7160
      %v7238 = vadd.f32 %v7087, %v7163
      %v7239 = vadd.f32 %v7088, %v7166
      %v7240 = vadd.f32 %v7089, %v7169
      %v7241 = vadd.f32 %v7090, %v7172
      %v7242 = vadd.f32 %v7091, %v7175
      %v7243 = vadd.f32 %v7092, %v7178
      %v7244 = vadd.f32 %v7093, %v7181
      %v7245 = vadd.f32 %v7094, %v7184
      %v7246 = vadd.f32 %v7095, %v7187
      %v7247 = vadd.f32 %v7096, %v7190
      %v7248 = vadd.f32 %v7097, %v7193
      %v7249 = vadd.f32 %v7098, %v7196
      %v7250 = vadd.f32 %v7099, %v7199
      %v7251 = vadd.f32 %v7100, %v7202
      %v7252 = vadd.f32 %v7101, %v7205
      %v7253 = vadd.f32 %v7102, %v7208
      %v7254 = vadd.f32 %v7103, %v7211
      %v7255 = vadd.f32 %v7104, %v7214
      %v7256 = vadd.f32 %v7105, %v7217
      %v7257 = vadd.f32 %v7106, %v7220
      %v7258 = vadd.f32 %v7107, %v7223
      %v7259 = vadd.f32 %v7108, %v7226
      %v7261 = vrot.slane %v6332, 1
      %v7262 = vrot.slane %v6333, 1
      %v7263 = vsel %vm736, %v7261, %v7262
      %v7264 = vrot.slane %v6334, 1
      %v7265 = vsel %vm736, %v7262, %v7264
      %v7266 = vsel %vm461, %v7263, 0
      %v7268 = vsel %vm461, %v7265, 0
      %7270 = vmatpush.msra.mxu0 0.0
      %7271 = vmatpush.msra.mxu0 0.0
      %7272 = vmatpush.msra.mxu0 0.0
      %7273 = vmatpush.msra.mxu0 0.0
      %7274 = vmatpush.msra.mxu0 0.0
      %7275 = vmatpush.msra.mxu0 0.0
      %7276 = vmatpush.msra.mxu0 0.0
      %7277 = vmatpush.msra.mxu0 0.0
      %7278 = vmatpush.msra.mxu0 0.0
      %7279 = vmatpush.msra.mxu0 0.0
      %7280 = vmatpush.msra.mxu0 0.0
      %7281 = vmatpush.msra.mxu0 0.0
      %7282 = vmatpush.msra.mxu0 0.0
      %7283 = vmatpush.msra.mxu0 0.0
      %7284 = vmatpush.msra.mxu0 0.0
      %7285 = vmatpush.msra.mxu0 %v4370
      %7286 = vmatmul.f32.gmra.mxu0 %v6470
      %v7287 = vpop.f32.mrf.mxu0
      %v7288 = vadd.f32 0.0, %v7287
      %7289 = vmatmul.f32.gmra.mxu0 %v6472
      %v7290 = vpop.f32.mrf.mxu0
      %v7291 = vadd.f32 0.0, %v7290
      %7292 = vmatmul.f32.gmra.mxu0 %v6474
      %v7293 = vpop.f32.mrf.mxu0
      %v7294 = vadd.f32 0.0, %v7293
      %7295 = vmatmul.f32.gmra.mxu0 %v6476
      %v7296 = vpop.f32.mrf.mxu0
      %v7297 = vadd.f32 0.0, %v7296
      %7298 = vmatmul.f32.gmra.mxu0 %v6478
      %v7299 = vpop.f32.mrf.mxu0
      %v7300 = vadd.f32 0.0, %v7299
      %7301 = vmatmul.f32.gmra.mxu0 %v6480
      %v7302 = vpop.f32.mrf.mxu0
      %v7303 = vadd.f32 0.0, %v7302
      %7304 = vmatmul.f32.gmra.mxu0 %v6482
      %v7305 = vpop.f32.mrf.mxu0
      %v7306 = vadd.f32 0.0, %v7305
      %7307 = vmatmul.f32.gmra.mxu0 %v6484
      %v7308 = vpop.f32.mrf.mxu0
      %v7309 = vadd.f32 0.0, %v7308
      %7310 = vmatmul.f32.gmra.mxu0 %v6486
      %v7311 = vpop.f32.mrf.mxu0
      %v7312 = vadd.f32 0.0, %v7311
      %7313 = vmatmul.f32.gmra.mxu0 %v6488
      %v7314 = vpop.f32.mrf.mxu0
      %v7315 = vadd.f32 0.0, %v7314
      %7316 = vmatmul.f32.gmra.mxu0 %v6490
      %v7317 = vpop.f32.mrf.mxu0
      %v7318 = vadd.f32 0.0, %v7317
      %7319 = vmatmul.f32.gmra.mxu0 %v6492
      %v7320 = vpop.f32.mrf.mxu0
      %v7321 = vadd.f32 0.0, %v7320
      %7322 = vmatmul.f32.gmra.mxu0 %v6494
      %v7323 = vpop.f32.mrf.mxu0
      %v7324 = vadd.f32 0.0, %v7323
      %7325 = vmatmul.f32.gmra.mxu0 %v6496
      %v7326 = vpop.f32.mrf.mxu0
      %v7327 = vadd.f32 0.0, %v7326
      %7328 = vmatmul.f32.gmra.mxu0 %v6498
      %v7329 = vpop.f32.mrf.mxu0
      %v7330 = vadd.f32 0.0, %v7329
      %7331 = vmatmul.f32.gmra.mxu0 %v6500
      %v7332 = vpop.f32.mrf.mxu0
      %v7333 = vadd.f32 0.0, %v7332
      %7334 = vmatmul.f32.gmra.mxu0 %v6502
      %v7335 = vpop.f32.mrf.mxu0
      %v7336 = vadd.f32 0.0, %v7335
      %7337 = vmatmul.f32.gmra.mxu0 %v6504
      %v7338 = vpop.f32.mrf.mxu0
      %v7339 = vadd.f32 0.0, %v7338
      %7340 = vmatmul.f32.gmra.mxu0 %v6506
      %v7341 = vpop.f32.mrf.mxu0
      %v7342 = vadd.f32 0.0, %v7341
      %7343 = vmatmul.f32.gmra.mxu0 %v6508
      %v7344 = vpop.f32.mrf.mxu0
      %v7345 = vadd.f32 0.0, %v7344
      %7346 = vmatmul.f32.gmra.mxu0 %v6510
      %v7347 = vpop.f32.mrf.mxu0
      %v7348 = vadd.f32 0.0, %v7347
      %7349 = vmatmul.f32.gmra.mxu0 %v6512
      %v7350 = vpop.f32.mrf.mxu0
      %v7351 = vadd.f32 0.0, %v7350
      %7352 = vmatmul.f32.gmra.mxu0 %v6514
      %v7353 = vpop.f32.mrf.mxu0
      %v7354 = vadd.f32 0.0, %v7353
      %7355 = vmatmul.f32.gmra.mxu0 %v6516
      %v7356 = vpop.f32.mrf.mxu0
      %v7357 = vadd.f32 0.0, %v7356
      %7358 = vmatmul.f32.gmra.mxu0 %v6518
      %v7359 = vpop.f32.mrf.mxu0
      %v7360 = vadd.f32 0.0, %v7359
      %7361 = vmatmul.f32.gmra.mxu0 %v6520
      %v7362 = vpop.f32.mrf.mxu0
      %v7363 = vadd.f32 0.0, %v7362
      %7364 = vmatmul.f32.gmra.mxu0 %v6522
      %v7365 = vpop.f32.mrf.mxu0
      %v7366 = vadd.f32 0.0, %v7365
      %7367 = vmatmul.f32.gmra.mxu0 %v6524
      %v7368 = vpop.f32.mrf.mxu0
      %v7369 = vadd.f32 0.0, %v7368
      %7370 = vmatmul.f32.gmra.mxu0 %v6526
      %v7371 = vpop.f32.mrf.mxu0
      %v7372 = vadd.f32 0.0, %v7371
      %7373 = vmatmul.f32.gmra.mxu0 %v6528
      %v7374 = vpop.f32.mrf.mxu0
      %v7375 = vadd.f32 0.0, %v7374
      %7376 = vmatmul.f32.gmra.mxu0 %v7266
      %v7377 = vpop.f32.mrf.mxu0
      %v7378 = vadd.f32 0.0, %v7377
      %7379 = vmatmul.f32.gmra.mxu0 %v7268
      %v7380 = vpop.f32.mrf.mxu0
      %v7381 = vadd.f32 0.0, %v7380
      %7382 = vdwg.mxu0
      %v7383 = vadd.f32 %v7228, %v7288
      %v7384 = vadd.f32 %v7229, %v7291
      %v7385 = vadd.f32 %v7230, %v7294
      %v7386 = vadd.f32 %v7231, %v7297
      %v7387 = vadd.f32 %v7232, %v7300
      %v7388 = vadd.f32 %v7233, %v7303
      %v7389 = vadd.f32 %v7234, %v7306
      %v7390 = vadd.f32 %v7235, %v7309
      %v7391 = vadd.f32 %v7236, %v7312
      %v7392 = vadd.f32 %v7237, %v7315
      %v7393 = vadd.f32 %v7238, %v7318
      %v7394 = vadd.f32 %v7239, %v7321
      %v7395 = vadd.f32 %v7240, %v7324
      %v7396 = vadd.f32 %v7241, %v7327
      %v7397 = vadd.f32 %v7242, %v7330
      %v7398 = vadd.f32 %v7243, %v7333
      %v7399 = vadd.f32 %v7244, %v7336
      %v7400 = vadd.f32 %v7245, %v7339
      %v7401 = vadd.f32 %v7246, %v7342
      %v7402 = vadd.f32 %v7247, %v7345
      %v7403 = vadd.f32 %v7248, %v7348
      %v7404 = vadd.f32 %v7249, %v7351
      %v7405 = vadd.f32 %v7250, %v7354
      %v7406 = vadd.f32 %v7251, %v7357
      %v7407 = vadd.f32 %v7252, %v7360
      %v7408 = vadd.f32 %v7253, %v7363
      %v7409 = vadd.f32 %v7254, %v7366
      %v7410 = vadd.f32 %v7255, %v7369
      %v7411 = vadd.f32 %v7256, %v7372
      %v7412 = vadd.f32 %v7257, %v7375
      %v7413 = vadd.f32 %v7258, %v7378
      %v7414 = vadd.f32 %v7259, %v7381
      %v7415 = vrot.slane %v6332, 2
      %v7416 = vrot.slane %v6333, 2
      %v7417 = vsel %vm1171, %v7415, %v7416
      %v7418 = vrot.slane %v6334, 2
      %v7419 = vsel %vm1171, %v7416, %v7418
      %v7420 = vsel %vm461, %v7417, 0
      %v7422 = vsel %vm461, %v7419, 0
      %7424 = vmatpush.msra.mxu0 0.0
      %7425 = vmatpush.msra.mxu0 0.0
      %7426 = vmatpush.msra.mxu0 0.0
      %7427 = vmatpush.msra.mxu0 0.0
      %7428 = vmatpush.msra.mxu0 0.0
      %7429 = vmatpush.msra.mxu0 0.0
      %7430 = vmatpush.msra.mxu0 0.0
      %7431 = vmatpush.msra.mxu0 0.0
      %7432 = vmatpush.msra.mxu0 0.0
      %7433 = vmatpush.msra.mxu0 0.0
      %7434 = vmatpush.msra.mxu0 0.0
      %7435 = vmatpush.msra.mxu0 0.0
      %7436 = vmatpush.msra.mxu0 0.0
      %7437 = vmatpush.msra.mxu0 0.0
      %7438 = vmatpush.msra.mxu0 0.0
      %7439 = vmatpush.msra.mxu0 %v4371
      %7440 = vmatmul.f32.gmra.mxu0 %v6904
      %v7441 = vpop.f32.mrf.mxu0
      %v7442 = vadd.f32 0.0, %v7441
      %7443 = vmatmul.f32.gmra.mxu0 %v6906
      %v7444 = vpop.f32.mrf.mxu0
      %v7445 = vadd.f32 0.0, %v7444
      %7446 = vmatmul.f32.gmra.mxu0 %v6908
      %v7447 = vpop.f32.mrf.mxu0
      %v7448 = vadd.f32 0.0, %v7447
      %7449 = vmatmul.f32.gmra.mxu0 %v6910
      %v7450 = vpop.f32.mrf.mxu0
      %v7451 = vadd.f32 0.0, %v7450
      %7452 = vmatmul.f32.gmra.mxu0 %v6912
      %v7453 = vpop.f32.mrf.mxu0
      %v7454 = vadd.f32 0.0, %v7453
      %7455 = vmatmul.f32.gmra.mxu0 %v6914
      %v7456 = vpop.f32.mrf.mxu0
      %v7457 = vadd.f32 0.0, %v7456
      %7458 = vmatmul.f32.gmra.mxu0 %v6916
      %v7459 = vpop.f32.mrf.mxu0
      %v7460 = vadd.f32 0.0, %v7459
      %7461 = vmatmul.f32.gmra.mxu0 %v6918
      %v7462 = vpop.f32.mrf.mxu0
      %v7463 = vadd.f32 0.0, %v7462
      %7464 = vmatmul.f32.gmra.mxu0 %v6920
      %v7465 = vpop.f32.mrf.mxu0
      %v7466 = vadd.f32 0.0, %v7465
      %7467 = vmatmul.f32.gmra.mxu0 %v6922
      %v7468 = vpop.f32.mrf.mxu0
      %v7469 = vadd.f32 0.0, %v7468
      %7470 = vmatmul.f32.gmra.mxu0 %v6924
      %v7471 = vpop.f32.mrf.mxu0
      %v7472 = vadd.f32 0.0, %v7471
      %7473 = vmatmul.f32.gmra.mxu0 %v6926
      %v7474 = vpop.f32.mrf.mxu0
      %v7475 = vadd.f32 0.0, %v7474
      %7476 = vmatmul.f32.gmra.mxu0 %v6928
      %v7477 = vpop.f32.mrf.mxu0
      %v7478 = vadd.f32 0.0, %v7477
      %7479 = vmatmul.f32.gmra.mxu0 %v6930
      %v7480 = vpop.f32.mrf.mxu0
      %v7481 = vadd.f32 0.0, %v7480
      %7482 = vmatmul.f32.gmra.mxu0 %v6932
      %v7483 = vpop.f32.mrf.mxu0
      %v7484 = vadd.f32 0.0, %v7483
      %7485 = vmatmul.f32.gmra.mxu0 %v6934
      %v7486 = vpop.f32.mrf.mxu0
      %v7487 = vadd.f32 0.0, %v7486
      %7488 = vmatmul.f32.gmra.mxu0 %v6936
      %v7489 = vpop.f32.mrf.mxu0
      %v7490 = vadd.f32 0.0, %v7489
      %7491 = vmatmul.f32.gmra.mxu0 %v6938
      %v7492 = vpop.f32.mrf.mxu0
      %v7493 = vadd.f32 0.0, %v7492
      %7494 = vmatmul.f32.gmra.mxu0 %v6940
      %v7495 = vpop.f32.mrf.mxu0
      %v7496 = vadd.f32 0.0, %v7495
      %7497 = vmatmul.f32.gmra.mxu0 %v6942
      %v7498 = vpop.f32.mrf.mxu0
      %v7499 = vadd.f32 0.0, %v7498
      %7500 = vmatmul.f32.gmra.mxu0 %v6944
      %v7501 = vpop.f32.mrf.mxu0
      %v7502 = vadd.f32 0.0, %v7501
      %7503 = vmatmul.f32.gmra.mxu0 %v6946
      %v7504 = vpop.f32.mrf.mxu0
      %v7505 = vadd.f32 0.0, %v7504
      %7506 = vmatmul.f32.gmra.mxu0 %v6948
      %v7507 = vpop.f32.mrf.mxu0
      %v7508 = vadd.f32 0.0, %v7507
      %7509 = vmatmul.f32.gmra.mxu0 %v6950
      %v7510 = vpop.f32.mrf.mxu0
      %v7511 = vadd.f32 0.0, %v7510
      %7512 = vmatmul.f32.gmra.mxu0 %v6952
      %v7513 = vpop.f32.mrf.mxu0
      %v7514 = vadd.f32 0.0, %v7513
      %7515 = vmatmul.f32.gmra.mxu0 %v6954
      %v7516 = vpop.f32.mrf.mxu0
      %v7517 = vadd.f32 0.0, %v7516
      %7518 = vmatmul.f32.gmra.mxu0 %v6956
      %v7519 = vpop.f32.mrf.mxu0
      %v7520 = vadd.f32 0.0, %v7519
      %7521 = vmatmul.f32.gmra.mxu0 %v6958
      %v7522 = vpop.f32.mrf.mxu0
      %v7523 = vadd.f32 0.0, %v7522
      %7524 = vmatmul.f32.gmra.mxu0 %v6960
      %v7525 = vpop.f32.mrf.mxu0
      %v7526 = vadd.f32 0.0, %v7525
      %7527 = vmatmul.f32.gmra.mxu0 %v6962
      %v7528 = vpop.f32.mrf.mxu0
      %v7529 = vadd.f32 0.0, %v7528
      %7530 = vmatmul.f32.gmra.mxu0 %v7420
      %v7531 = vpop.f32.mrf.mxu0
      %v7532 = vadd.f32 0.0, %v7531
      %7533 = vmatmul.f32.gmra.mxu0 %v7422
      %v7534 = vpop.f32.mrf.mxu0
      %v7535 = vadd.f32 0.0, %v7534
      %7536 = vdwg.mxu0
      %v7537 = vadd.f32 %v7383, %v7442
      %v7538 = vadd.f32 %v7384, %v7445
      %v7539 = vadd.f32 %v7385, %v7448
      %v7540 = vadd.f32 %v7386, %v7451
      %v7541 = vadd.f32 %v7387, %v7454
      %v7542 = vadd.f32 %v7388, %v7457
      %v7543 = vadd.f32 %v7389, %v7460
      %v7544 = vadd.f32 %v7390, %v7463
      %v7545 = vadd.f32 %v7391, %v7466
      %v7546 = vadd.f32 %v7392, %v7469
      %v7547 = vadd.f32 %v7393, %v7472
      %v7548 = vadd.f32 %v7394, %v7475
      %v7549 = vadd.f32 %v7395, %v7478
      %v7550 = vadd.f32 %v7396, %v7481
      %v7551 = vadd.f32 %v7397, %v7484
      %v7552 = vadd.f32 %v7398, %v7487
      %v7553 = vadd.f32 %v7399, %v7490
      %v7554 = vadd.f32 %v7400, %v7493
      %v7555 = vadd.f32 %v7401, %v7496
      %v7556 = vadd.f32 %v7402, %v7499
      %v7557 = vadd.f32 %v7403, %v7502
      %v7558 = vadd.f32 %v7404, %v7505
      %v7559 = vadd.f32 %v7405, %v7508
      %v7560 = vadd.f32 %v7406, %v7511
      %v7561 = vadd.f32 %v7407, %v7514
      %v7562 = vadd.f32 %v7408, %v7517
      %v7563 = vadd.f32 %v7409, %v7520
      %v7564 = vadd.f32 %v7410, %v7523
      %v7565 = vadd.f32 %v7411, %v7526
      %v7566 = vadd.f32 %v7412, %v7529
      %v7567 = vadd.f32 %v7413, %v7532
      %v7568 = vadd.f32 %v7414, %v7535
      %v7570 = vsel %vm461, %v6335, 0
      %v7573 = vsel %vm461, %v6336, 0
      %7575 = vmatpush.msra.mxu0 0.0
      %7576 = vmatpush.msra.mxu0 0.0
      %7577 = vmatpush.msra.mxu0 0.0
      %7578 = vmatpush.msra.mxu0 0.0
      %7579 = vmatpush.msra.mxu0 0.0
      %7580 = vmatpush.msra.mxu0 0.0
      %7581 = vmatpush.msra.mxu0 0.0
      %7582 = vmatpush.msra.mxu0 0.0
      %7583 = vmatpush.msra.mxu0 0.0
      %7584 = vmatpush.msra.mxu0 0.0
      %7585 = vmatpush.msra.mxu0 0.0
      %7586 = vmatpush.msra.mxu0 0.0
      %7587 = vmatpush.msra.mxu0 0.0
      %7588 = vmatpush.msra.mxu0 0.0
      %7589 = vmatpush.msra.mxu0 0.0
      %7590 = vmatpush.msra.mxu0 %v4372
      %7591 = vmatmul.f32.gmra.mxu0 %v6651
      %v7592 = vpop.f32.mrf.mxu0
      %v7593 = vadd.f32 0.0, %v7592
      %7594 = vmatmul.f32.gmra.mxu0 %v6653
      %v7595 = vpop.f32.mrf.mxu0
      %v7596 = vadd.f32 0.0, %v7595
      %7597 = vmatmul.f32.gmra.mxu0 %v6655
      %v7598 = vpop.f32.mrf.mxu0
      %v7599 = vadd.f32 0.0, %v7598
      %7600 = vmatmul.f32.gmra.mxu0 %v6657
      %v7601 = vpop.f32.mrf.mxu0
      %v7602 = vadd.f32 0.0, %v7601
      %7603 = vmatmul.f32.gmra.mxu0 %v6659
      %v7604 = vpop.f32.mrf.mxu0
      %v7605 = vadd.f32 0.0, %v7604
      %7606 = vmatmul.f32.gmra.mxu0 %v6661
      %v7607 = vpop.f32.mrf.mxu0
      %v7608 = vadd.f32 0.0, %v7607
      %7609 = vmatmul.f32.gmra.mxu0 %v6663
      %v7610 = vpop.f32.mrf.mxu0
      %v7611 = vadd.f32 0.0, %v7610
      %7612 = vmatmul.f32.gmra.mxu0 %v6665
      %v7613 = vpop.f32.mrf.mxu0
      %v7614 = vadd.f32 0.0, %v7613
      %7615 = vmatmul.f32.gmra.mxu0 %v6667
      %v7616 = vpop.f32.mrf.mxu0
      %v7617 = vadd.f32 0.0, %v7616
      %7618 = vmatmul.f32.gmra.mxu0 %v6669
      %v7619 = vpop.f32.mrf.mxu0
      %v7620 = vadd.f32 0.0, %v7619
      %7621 = vmatmul.f32.gmra.mxu0 %v6671
      %v7622 = vpop.f32.mrf.mxu0
      %v7623 = vadd.f32 0.0, %v7622
      %7624 = vmatmul.f32.gmra.mxu0 %v6673
      %v7625 = vpop.f32.mrf.mxu0
      %v7626 = vadd.f32 0.0, %v7625
      %7627 = vmatmul.f32.gmra.mxu0 %v6675
      %v7628 = vpop.f32.mrf.mxu0
      %v7629 = vadd.f32 0.0, %v7628
      %7630 = vmatmul.f32.gmra.mxu0 %v6677
      %v7631 = vpop.f32.mrf.mxu0
      %v7632 = vadd.f32 0.0, %v7631
      %7633 = vmatmul.f32.gmra.mxu0 %v6679
      %v7634 = vpop.f32.mrf.mxu0
      %v7635 = vadd.f32 0.0, %v7634
      %7636 = vmatmul.f32.gmra.mxu0 %v6681
      %v7637 = vpop.f32.mrf.mxu0
      %v7638 = vadd.f32 0.0, %v7637
      %7639 = vmatmul.f32.gmra.mxu0 %v6683
      %v7640 = vpop.f32.mrf.mxu0
      %v7641 = vadd.f32 0.0, %v7640
      %7642 = vmatmul.f32.gmra.mxu0 %v6685
      %v7643 = vpop.f32.mrf.mxu0
      %v7644 = vadd.f32 0.0, %v7643
      %7645 = vmatmul.f32.gmra.mxu0 %v6687
      %v7646 = vpop.f32.mrf.mxu0
      %v7647 = vadd.f32 0.0, %v7646
      %7648 = vmatmul.f32.gmra.mxu0 %v6689
      %v7649 = vpop.f32.mrf.mxu0
      %v7650 = vadd.f32 0.0, %v7649
      %7651 = vmatmul.f32.gmra.mxu0 %v6691
      %v7652 = vpop.f32.mrf.mxu0
      %v7653 = vadd.f32 0.0, %v7652
      %7654 = vmatmul.f32.gmra.mxu0 %v6693
      %v7655 = vpop.f32.mrf.mxu0
      %v7656 = vadd.f32 0.0, %v7655
      %7657 = vmatmul.f32.gmra.mxu0 %v6695
      %v7658 = vpop.f32.mrf.mxu0
      %v7659 = vadd.f32 0.0, %v7658
      %7660 = vmatmul.f32.gmra.mxu0 %v6697
      %v7661 = vpop.f32.mrf.mxu0
      %v7662 = vadd.f32 0.0, %v7661
      %7663 = vmatmul.f32.gmra.mxu0 %v6699
      %v7664 = vpop.f32.mrf.mxu0
      %v7665 = vadd.f32 0.0, %v7664
      %7666 = vmatmul.f32.gmra.mxu0 %v6701
      %v7667 = vpop.f32.mrf.mxu0
      %v7668 = vadd.f32 0.0, %v7667
      %7669 = vmatmul.f32.gmra.mxu0 %v6703
      %v7670 = vpop.f32.mrf.mxu0
      %v7671 = vadd.f32 0.0, %v7670
      %7672 = vmatmul.f32.gmra.mxu0 %v6705
      %v7673 = vpop.f32.mrf.mxu0
      %v7674 = vadd.f32 0.0, %v7673
      %7675 = vmatmul.f32.gmra.mxu0 %v7110
      %v7676 = vpop.f32.mrf.mxu0
      %v7677 = vadd.f32 0.0, %v7676
      %7678 = vmatmul.f32.gmra.mxu0 %v7113
      %v7679 = vpop.f32.mrf.mxu0
      %v7680 = vadd.f32 0.0, %v7679
      %7681 = vmatmul.f32.gmra.mxu0 %v7570
      %v7682 = vpop.f32.mrf.mxu0
      %v7683 = vadd.f32 0.0, %v7682
      %7684 = vmatmul.f32.gmra.mxu0 %v7573
      %v7685 = vpop.f32.mrf.mxu0
      %v7686 = vadd.f32 0.0, %v7685
      %7687 = vdwg.mxu0
      %v7688 = vadd.f32 %v7537, %v7593
      %v7689 = vadd.f32 %v7538, %v7596
      %v7690 = vadd.f32 %v7539, %v7599
      %v7691 = vadd.f32 %v7540, %v7602
      %v7692 = vadd.f32 %v7541, %v7605
      %v7693 = vadd.f32 %v7542, %v7608
      %v7694 = vadd.f32 %v7543, %v7611
      %v7695 = vadd.f32 %v7544, %v7614
      %v7696 = vadd.f32 %v7545, %v7617
      %v7697 = vadd.f32 %v7546, %v7620
      %v7698 = vadd.f32 %v7547, %v7623
      %v7699 = vadd.f32 %v7548, %v7626
      %v7700 = vadd.f32 %v7549, %v7629
      %v7701 = vadd.f32 %v7550, %v7632
      %v7702 = vadd.f32 %v7551, %v7635
      %v7703 = vadd.f32 %v7552, %v7638
      %v7704 = vadd.f32 %v7553, %v7641
      %v7705 = vadd.f32 %v7554, %v7644
      %v7706 = vadd.f32 %v7555, %v7647
      %v7707 = vadd.f32 %v7556, %v7650
      %v7708 = vadd.f32 %v7557, %v7653
      %v7709 = vadd.f32 %v7558, %v7656
      %v7710 = vadd.f32 %v7559, %v7659
      %v7711 = vadd.f32 %v7560, %v7662
      %v7712 = vadd.f32 %v7561, %v7665
      %v7713 = vadd.f32 %v7562, %v7668
      %v7714 = vadd.f32 %v7563, %v7671
      %v7715 = vadd.f32 %v7564, %v7674
      %v7716 = vadd.f32 %v7565, %v7677
      %v7717 = vadd.f32 %v7566, %v7680
      %v7718 = vadd.f32 %v7567, %v7683
      %v7719 = vadd.f32 %v7568, %v7686
      %v7721 = vrot.slane %v6335, 1
      %v7722 = vrot.slane %v6336, 1
      %v7723 = vsel %vm736, %v7721, %v7722
      %v7724 = vrot.slane %v6337, 1
      %v7725 = vsel %vm736, %v7722, %v7724
      %v7726 = vsel %vm461, %v7723, 0
      %v7728 = vsel %vm461, %v7725, 0
      %7730 = vmatpush.msra.mxu0 0.0
      %7731 = vmatpush.msra.mxu0 0.0
      %7732 = vmatpush.msra.mxu0 0.0
      %7733 = vmatpush.msra.mxu0 0.0
      %7734 = vmatpush.msra.mxu0 0.0
      %7735 = vmatpush.msra.mxu0 0.0
      %7736 = vmatpush.msra.mxu0 0.0
      %7737 = vmatpush.msra.mxu0 0.0
      %7738 = vmatpush.msra.mxu0 0.0
      %7739 = vmatpush.msra.mxu0 0.0
      %7740 = vmatpush.msra.mxu0 0.0
      %7741 = vmatpush.msra.mxu0 0.0
      %7742 = vmatpush.msra.mxu0 0.0
      %7743 = vmatpush.msra.mxu0 0.0
      %7744 = vmatpush.msra.mxu0 0.0
      %7745 = vmatpush.msra.mxu0 %v4373
      %7746 = vmatmul.f32.gmra.mxu0 %v6474
      %v7747 = vpop.f32.mrf.mxu0
      %v7748 = vadd.f32 0.0, %v7747
      %7749 = vmatmul.f32.gmra.mxu0 %v6476
      %v7750 = vpop.f32.mrf.mxu0
      %v7751 = vadd.f32 0.0, %v7750
      %7752 = vmatmul.f32.gmra.mxu0 %v6478
      %v7753 = vpop.f32.mrf.mxu0
      %v7754 = vadd.f32 0.0, %v7753
      %7755 = vmatmul.f32.gmra.mxu0 %v6480
      %v7756 = vpop.f32.mrf.mxu0
      %v7757 = vadd.f32 0.0, %v7756
      %7758 = vmatmul.f32.gmra.mxu0 %v6482
      %v7759 = vpop.f32.mrf.mxu0
      %v7760 = vadd.f32 0.0, %v7759
      %7761 = vmatmul.f32.gmra.mxu0 %v6484
      %v7762 = vpop.f32.mrf.mxu0
      %v7763 = vadd.f32 0.0, %v7762
      %7764 = vmatmul.f32.gmra.mxu0 %v6486
      %v7765 = vpop.f32.mrf.mxu0
      %v7766 = vadd.f32 0.0, %v7765
      %7767 = vmatmul.f32.gmra.mxu0 %v6488
      %v7768 = vpop.f32.mrf.mxu0
      %v7769 = vadd.f32 0.0, %v7768
      %7770 = vmatmul.f32.gmra.mxu0 %v6490
      %v7771 = vpop.f32.mrf.mxu0
      %v7772 = vadd.f32 0.0, %v7771
      %7773 = vmatmul.f32.gmra.mxu0 %v6492
      %v7774 = vpop.f32.mrf.mxu0
      %v7775 = vadd.f32 0.0, %v7774
      %7776 = vmatmul.f32.gmra.mxu0 %v6494
      %v7777 = vpop.f32.mrf.mxu0
      %v7778 = vadd.f32 0.0, %v7777
      %7779 = vmatmul.f32.gmra.mxu0 %v6496
      %v7780 = vpop.f32.mrf.mxu0
      %v7781 = vadd.f32 0.0, %v7780
      %7782 = vmatmul.f32.gmra.mxu0 %v6498
      %v7783 = vpop.f32.mrf.mxu0
      %v7784 = vadd.f32 0.0, %v7783
      %7785 = vmatmul.f32.gmra.mxu0 %v6500
      %v7786 = vpop.f32.mrf.mxu0
      %v7787 = vadd.f32 0.0, %v7786
      %7788 = vmatmul.f32.gmra.mxu0 %v6502
      %v7789 = vpop.f32.mrf.mxu0
      %v7790 = vadd.f32 0.0, %v7789
      %7791 = vmatmul.f32.gmra.mxu0 %v6504
      %v7792 = vpop.f32.mrf.mxu0
      %v7793 = vadd.f32 0.0, %v7792
      %7794 = vmatmul.f32.gmra.mxu0 %v6506
      %v7795 = vpop.f32.mrf.mxu0
      %v7796 = vadd.f32 0.0, %v7795
      %7797 = vmatmul.f32.gmra.mxu0 %v6508
      %v7798 = vpop.f32.mrf.mxu0
      %v7799 = vadd.f32 0.0, %v7798
      %7800 = vmatmul.f32.gmra.mxu0 %v6510
      %v7801 = vpop.f32.mrf.mxu0
      %v7802 = vadd.f32 0.0, %v7801
      %7803 = vmatmul.f32.gmra.mxu0 %v6512
      %v7804 = vpop.f32.mrf.mxu0
      %v7805 = vadd.f32 0.0, %v7804
      %7806 = vmatmul.f32.gmra.mxu0 %v6514
      %v7807 = vpop.f32.mrf.mxu0
      %v7808 = vadd.f32 0.0, %v7807
      %7809 = vmatmul.f32.gmra.mxu0 %v6516
      %v7810 = vpop.f32.mrf.mxu0
      %v7811 = vadd.f32 0.0, %v7810
      %7812 = vmatmul.f32.gmra.mxu0 %v6518
      %v7813 = vpop.f32.mrf.mxu0
      %v7814 = vadd.f32 0.0, %v7813
      %7815 = vmatmul.f32.gmra.mxu0 %v6520
      %v7816 = vpop.f32.mrf.mxu0
      %v7817 = vadd.f32 0.0, %v7816
      %7818 = vmatmul.f32.gmra.mxu0 %v6522
      %v7819 = vpop.f32.mrf.mxu0
      %v7820 = vadd.f32 0.0, %v7819
      %7821 = vmatmul.f32.gmra.mxu0 %v6524
      %v7822 = vpop.f32.mrf.mxu0
      %v7823 = vadd.f32 0.0, %v7822
      %7824 = vmatmul.f32.gmra.mxu0 %v6526
      %v7825 = vpop.f32.mrf.mxu0
      %v7826 = vadd.f32 0.0, %v7825
      %7827 = vmatmul.f32.gmra.mxu0 %v6528
      %v7828 = vpop.f32.mrf.mxu0
      %v7829 = vadd.f32 0.0, %v7828
      %7830 = vmatmul.f32.gmra.mxu0 %v7266
      %v7831 = vpop.f32.mrf.mxu0
      %v7832 = vadd.f32 0.0, %v7831
      %7833 = vmatmul.f32.gmra.mxu0 %v7268
      %v7834 = vpop.f32.mrf.mxu0
      %v7835 = vadd.f32 0.0, %v7834
      %7836 = vmatmul.f32.gmra.mxu0 %v7726
      %v7837 = vpop.f32.mrf.mxu0
      %v7838 = vadd.f32 0.0, %v7837
      %7839 = vmatmul.f32.gmra.mxu0 %v7728
      %v7840 = vpop.f32.mrf.mxu0
      %v7841 = vadd.f32 0.0, %v7840
      %7842 = vdwg.mxu0
      %v7843 = vadd.f32 %v7688, %v7748
      %v7844 = vadd.f32 %v7689, %v7751
      %v7845 = vadd.f32 %v7690, %v7754
      %v7846 = vadd.f32 %v7691, %v7757
      %v7847 = vadd.f32 %v7692, %v7760
      %v7848 = vadd.f32 %v7693, %v7763
      %v7849 = vadd.f32 %v7694, %v7766
      %v7850 = vadd.f32 %v7695, %v7769
      %v7851 = vadd.f32 %v7696, %v7772
      %v7852 = vadd.f32 %v7697, %v7775
      %v7853 = vadd.f32 %v7698, %v7778
      %v7854 = vadd.f32 %v7699, %v7781
      %v7855 = vadd.f32 %v7700, %v7784
      %v7856 = vadd.f32 %v7701, %v7787
      %v7857 = vadd.f32 %v7702, %v7790
      %v7858 = vadd.f32 %v7703, %v7793
      %v7859 = vadd.f32 %v7704, %v7796
      %v7860 = vadd.f32 %v7705, %v7799
      %v7861 = vadd.f32 %v7706, %v7802
      %v7862 = vadd.f32 %v7707, %v7805
      %v7863 = vadd.f32 %v7708, %v7808
      %v7864 = vadd.f32 %v7709, %v7811
      %v7865 = vadd.f32 %v7710, %v7814
      %v7866 = vadd.f32 %v7711, %v7817
      %v7867 = vadd.f32 %v7712, %v7820
      %v7868 = vadd.f32 %v7713, %v7823
      %v7869 = vadd.f32 %v7714, %v7826
      %v7870 = vadd.f32 %v7715, %v7829
      %v7871 = vadd.f32 %v7716, %v7832
      %v7872 = vadd.f32 %v7717, %v7835
      %v7873 = vadd.f32 %v7718, %v7838
      %v7874 = vadd.f32 %v7719, %v7841
      %v7875 = vrot.slane %v6335, 2
      %v7876 = vrot.slane %v6336, 2
      %v7877 = vsel %vm1171, %v7875, %v7876
      %v7878 = vrot.slane %v6337, 2
      %v7879 = vsel %vm1171, %v7876, %v7878
      %v7880 = vsel %vm461, %v7877, 0
      %v7882 = vsel %vm461, %v7879, 0
      %7884 = vmatpush.msra.mxu0 0.0
      %7885 = vmatpush.msra.mxu0 0.0
      %7886 = vmatpush.msra.mxu0 0.0
      %7887 = vmatpush.msra.mxu0 0.0
      %7888 = vmatpush.msra.mxu0 0.0
      %7889 = vmatpush.msra.mxu0 0.0
      %7890 = vmatpush.msra.mxu0 0.0
      %7891 = vmatpush.msra.mxu0 0.0
      %7892 = vmatpush.msra.mxu0 0.0
      %7893 = vmatpush.msra.mxu0 0.0
      %7894 = vmatpush.msra.mxu0 0.0
      %7895 = vmatpush.msra.mxu0 0.0
      %7896 = vmatpush.msra.mxu0 0.0
      %7897 = vmatpush.msra.mxu0 0.0
      %7898 = vmatpush.msra.mxu0 0.0
      %7899 = vmatpush.msra.mxu0 %v4374
      %7900 = vmatmul.f32.gmra.mxu0 %v6908
      %v7901 = vpop.f32.mrf.mxu0
      %v7902 = vadd.f32 0.0, %v7901
      %7903 = vmatmul.f32.gmra.mxu0 %v6910
      %v7904 = vpop.f32.mrf.mxu0
      %v7905 = vadd.f32 0.0, %v7904
      %7906 = vmatmul.f32.gmra.mxu0 %v6912
      %v7907 = vpop.f32.mrf.mxu0
      %v7908 = vadd.f32 0.0, %v7907
      %7909 = vmatmul.f32.gmra.mxu0 %v6914
      %v7910 = vpop.f32.mrf.mxu0
      %v7911 = vadd.f32 0.0, %v7910
      %7912 = vmatmul.f32.gmra.mxu0 %v6916
      %v7913 = vpop.f32.mrf.mxu0
      %v7914 = vadd.f32 0.0, %v7913
      %7915 = vmatmul.f32.gmra.mxu0 %v6918
      %v7916 = vpop.f32.mrf.mxu0
      %v7917 = vadd.f32 0.0, %v7916
      %7918 = vmatmul.f32.gmra.mxu0 %v6920
      %v7919 = vpop.f32.mrf.mxu0
      %v7920 = vadd.f32 0.0, %v7919
      %7921 = vmatmul.f32.gmra.mxu0 %v6922
      %v7922 = vpop.f32.mrf.mxu0
      %v7923 = vadd.f32 0.0, %v7922
      %7924 = vmatmul.f32.gmra.mxu0 %v6924
      %v7925 = vpop.f32.mrf.mxu0
      %v7926 = vadd.f32 0.0, %v7925
      %7927 = vmatmul.f32.gmra.mxu0 %v6926
      %v7928 = vpop.f32.mrf.mxu0
      %v7929 = vadd.f32 0.0, %v7928
      %7930 = vmatmul.f32.gmra.mxu0 %v6928
      %v7931 = vpop.f32.mrf.mxu0
      %v7932 = vadd.f32 0.0, %v7931
      %7933 = vmatmul.f32.gmra.mxu0 %v6930
      %v7934 = vpop.f32.mrf.mxu0
      %v7935 = vadd.f32 0.0, %v7934
      %7936 = vmatmul.f32.gmra.mxu0 %v6932
      %v7937 = vpop.f32.mrf.mxu0
      %v7938 = vadd.f32 0.0, %v7937
      %7939 = vmatmul.f32.gmra.mxu0 %v6934
      %v7940 = vpop.f32.mrf.mxu0
      %v7941 = vadd.f32 0.0, %v7940
      %7942 = vmatmul.f32.gmra.mxu0 %v6936
      %v7943 = vpop.f32.mrf.mxu0
      %v7944 = vadd.f32 0.0, %v7943
      %7945 = vmatmul.f32.gmra.mxu0 %v6938
      %v7946 = vpop.f32.mrf.mxu0
      %v7947 = vadd.f32 0.0, %v7946
      %7948 = vmatmul.f32.gmra.mxu0 %v6940
      %v7949 = vpop.f32.mrf.mxu0
      %v7950 = vadd.f32 0.0, %v7949
      %7951 = vmatmul.f32.gmra.mxu0 %v6942
      %v7952 = vpop.f32.mrf.mxu0
      %v7953 = vadd.f32 0.0, %v7952
      %7954 = vmatmul.f32.gmra.mxu0 %v6944
      %v7955 = vpop.f32.mrf.mxu0
      %v7956 = vadd.f32 0.0, %v7955
      %7957 = vmatmul.f32.gmra.mxu0 %v6946
      %v7958 = vpop.f32.mrf.mxu0
      %v7959 = vadd.f32 0.0, %v7958
      %7960 = vmatmul.f32.gmra.mxu0 %v6948
      %v7961 = vpop.f32.mrf.mxu0
      %v7962 = vadd.f32 0.0, %v7961
      %7963 = vmatmul.f32.gmra.mxu0 %v6950
      %v7964 = vpop.f32.mrf.mxu0
      %v7965 = vadd.f32 0.0, %v7964
      %7966 = vmatmul.f32.gmra.mxu0 %v6952
      %v7967 = vpop.f32.mrf.mxu0
      %v7968 = vadd.f32 0.0, %v7967
      %7969 = vmatmul.f32.gmra.mxu0 %v6954
      %v7970 = vpop.f32.mrf.mxu0
      %v7971 = vadd.f32 0.0, %v7970
      %7972 = vmatmul.f32.gmra.mxu0 %v6956
      %v7973 = vpop.f32.mrf.mxu0
      %v7974 = vadd.f32 0.0, %v7973
      %7975 = vmatmul.f32.gmra.mxu0 %v6958
      %v7976 = vpop.f32.mrf.mxu0
      %v7977 = vadd.f32 0.0, %v7976
      %7978 = vmatmul.f32.gmra.mxu0 %v6960
      %v7979 = vpop.f32.mrf.mxu0
      %v7980 = vadd.f32 0.0, %v7979
      %7981 = vmatmul.f32.gmra.mxu0 %v6962
      %v7982 = vpop.f32.mrf.mxu0
      %v7983 = vadd.f32 0.0, %v7982
      %7984 = vmatmul.f32.gmra.mxu0 %v7420
      %v7985 = vpop.f32.mrf.mxu0
      %v7986 = vadd.f32 0.0, %v7985
      %7987 = vmatmul.f32.gmra.mxu0 %v7422
      %v7988 = vpop.f32.mrf.mxu0
      %v7989 = vadd.f32 0.0, %v7988
      %7990 = vmatmul.f32.gmra.mxu0 %v7880
      %v7991 = vpop.f32.mrf.mxu0
      %v7992 = vadd.f32 0.0, %v7991
      %7993 = vmatmul.f32.gmra.mxu0 %v7882
      %v7994 = vpop.f32.mrf.mxu0
      %v7995 = vadd.f32 0.0, %v7994
      %7996 = vdwg.mxu0
      %v7997 = vadd.f32 %v7843, %v7902
      %v7998 = vadd.f32 %v7844, %v7905
      %v7999 = vadd.f32 %v7845, %v7908
      %v8000 = vadd.f32 %v7846, %v7911
      %v8001 = vadd.f32 %v7847, %v7914
      %v8002 = vadd.f32 %v7848, %v7917
      %v8003 = vadd.f32 %v7849, %v7920
      %v8004 = vadd.f32 %v7850, %v7923
      %v8005 = vadd.f32 %v7851, %v7926
      %v8006 = vadd.f32 %v7852, %v7929
      %v8007 = vadd.f32 %v7853, %v7932
      %v8008 = vadd.f32 %v7854, %v7935
      %v8009 = vadd.f32 %v7855, %v7938
      %v8010 = vadd.f32 %v7856, %v7941
      %v8011 = vadd.f32 %v7857, %v7944
      %v8012 = vadd.f32 %v7858, %v7947
      %v8013 = vadd.f32 %v7859, %v7950
      %v8014 = vadd.f32 %v7860, %v7953
      %v8015 = vadd.f32 %v7861, %v7956
      %v8016 = vadd.f32 %v7862, %v7959
      %v8017 = vadd.f32 %v7863, %v7962
      %v8018 = vadd.f32 %v7864, %v7965
      %v8019 = vadd.f32 %v7865, %v7968
      %v8020 = vadd.f32 %v7866, %v7971
      %v8021 = vadd.f32 %v7867, %v7974
      %v8022 = vadd.f32 %v7868, %v7977
      %v8023 = vadd.f32 %v7869, %v7980
      %v8024 = vadd.f32 %v7870, %v7983
      %v8025 = vadd.f32 %v7871, %v7986
      %v8026 = vadd.f32 %v7872, %v7989
      %v8027 = vadd.f32 %v7873, %v7992
      %v8028 = vadd.f32 %v7874, %v7995
      %v8030 = vperm.slane %v4375, 0
      %v8032 = vadd.f32 %v7997, %v8030
      %v8033 = vadd.f32 %v7998, %v8030
      %v8034 = vadd.f32 %v7999, %v8030
      %v8035 = vadd.f32 %v8000, %v8030
      %v8036 = vadd.f32 %v8001, %v8030
      %v8037 = vadd.f32 %v8002, %v8030
      %v8038 = vadd.f32 %v8003, %v8030
      %v8039 = vadd.f32 %v8004, %v8030
      %v8040 = vadd.f32 %v8005, %v8030
      %v8041 = vadd.f32 %v8006, %v8030
      %v8042 = vadd.f32 %v8007, %v8030
      %v8043 = vadd.f32 %v8008, %v8030
      %v8044 = vadd.f32 %v8009, %v8030
      %v8045 = vadd.f32 %v8010, %v8030
      %v8046 = vadd.f32 %v8011, %v8030
      %v8047 = vadd.f32 %v8012, %v8030
      %v8048 = vadd.f32 %v8013, %v8030
      %v8049 = vadd.f32 %v8014, %v8030
      %v8050 = vadd.f32 %v8015, %v8030
      %v8051 = vadd.f32 %v8016, %v8030
      %v8052 = vadd.f32 %v8017, %v8030
      %v8053 = vadd.f32 %v8018, %v8030
      %v8054 = vadd.f32 %v8019, %v8030
      %v8055 = vadd.f32 %v8020, %v8030
      %v8056 = vadd.f32 %v8021, %v8030
      %v8057 = vadd.f32 %v8022, %v8030
      %v8058 = vadd.f32 %v8023, %v8030
      %v8059 = vadd.f32 %v8024, %v8030
      %v8060 = vadd.f32 %v8025, %v8030
      %v8061 = vadd.f32 %v8026, %v8030
      %v8062 = vadd.f32 %v8027, %v8030
      %v8063 = vadd.f32 %v8028, %v8030
      %v8064 = vadd.f32 %v8032, %v4324
      %v8065 = vadd.f32 %v8033, %v4325
      %v8066 = vadd.f32 %v8034, %v4326
      %v8067 = vadd.f32 %v8035, %v4327
      %v8068 = vadd.f32 %v8036, %v4328
      %v8069 = vadd.f32 %v8037, %v4329
      %v8070 = vadd.f32 %v8038, %v4330
      %v8071 = vadd.f32 %v8039, %v4331
      %v8072 = vadd.f32 %v8040, %v4332
      %v8073 = vadd.f32 %v8041, %v4333
      %v8074 = vadd.f32 %v8042, %v4334
      %v8075 = vadd.f32 %v8043, %v4335
      %v8076 = vadd.f32 %v8044, %v4336
      %v8077 = vadd.f32 %v8045, %v4337
      %v8078 = vadd.f32 %v8046, %v4338
      %v8079 = vadd.f32 %v8047, %v4339
      %v8080 = vadd.f32 %v8048, %v4340
      %v8081 = vadd.f32 %v8049, %v4341
      %v8082 = vadd.f32 %v8050, %v4342
      %v8083 = vadd.f32 %v8051, %v4343
      %v8084 = vadd.f32 %v8052, %v4344
      %v8085 = vadd.f32 %v8053, %v4345
      %v8086 = vadd.f32 %v8054, %v4346
      %v8087 = vadd.f32 %v8055, %v4347
      %v8088 = vadd.f32 %v8056, %v4348
      %v8089 = vadd.f32 %v8057, %v4349
      %v8090 = vadd.f32 %v8058, %v4350
      %v8091 = vadd.f32 %v8059, %v4351
      %v8092 = vadd.f32 %v8060, %v4352
      %v8093 = vadd.f32 %v8061, %v4353
      %v8094 = vadd.f32 %v8062, %v4354
      %v8095 = vadd.f32 %v8063, %v4355
      %v8096 = vld [vmem:[%s10] sm:$0xff]
      %v8097 = vld [vmem:[%s11] sm:$0x1]
      %v8099 = vperm.slane %v8097, 0
      %v8102 = vsel %vm461, %v8064, 0
      %v8105 = vsel %vm461, %v8065, 0
      %v8108 = vsel %vm461, %v8066, 0
      %v8111 = vsel %vm461, %v8067, 0
      %v8114 = vsel %vm461, %v8068, 0
      %v8117 = vsel %vm461, %v8069, 0
      %v8120 = vsel %vm461, %v8070, 0
      %v8123 = vsel %vm461, %v8071, 0
      %v8126 = vsel %vm461, %v8072, 0
      %v8129 = vsel %vm461, %v8073, 0
      %v8132 = vsel %vm461, %v8074, 0
      %v8135 = vsel %vm461, %v8075, 0
      %v8138 = vsel %vm461, %v8076, 0
      %v8141 = vsel %vm461, %v8077, 0
      %v8144 = vsel %vm461, %v8078, 0
      %v8147 = vsel %vm461, %v8079, 0
      %v8150 = vsel %vm461, %v8080, 0
      %v8153 = vsel %vm461, %v8081, 0
      %v8156 = vsel %vm461, %v8082, 0
      %v8159 = vsel %vm461, %v8083, 0
      %v8162 = vsel %vm461, %v8084, 0
      %v8165 = vsel %vm461, %v8085, 0
      %v8168 = vsel %vm461, %v8086, 0
      %v8171 = vsel %vm461, %v8087, 0
      %v8174 = vsel %vm461, %v8088, 0
      %v8177 = vsel %vm461, %v8089, 0
      %v8180 = vsel %vm461, %v8090, 0
      %v8183 = vsel %vm461, %v8091, 0
      %v8186 = vsel %vm461, %v8092, 0
      %v8189 = vsel %vm461, %v8093, 0
      %v8192 = vsel %vm461, %v8094, 0
      %v8195 = vsel %vm461, %v8095, 0
      %8197 = vmatpush.msra.mxu0 0.0
      %8198 = vmatpush.msra.mxu0 0.0
      %8199 = vmatpush.msra.mxu0 0.0
      %8200 = vmatpush.msra.mxu0 0.0
      %8201 = vmatpush.msra.mxu0 0.0
      %8202 = vmatpush.msra.mxu0 0.0
      %8203 = vmatpush.msra.mxu0 0.0
      %8204 = vmatpush.msra.mxu0 0.0
      %8205 = vmatpush.msra.mxu0 0.0
      %8206 = vmatpush.msra.mxu0 0.0
      %8207 = vmatpush.msra.mxu0 0.0
      %8208 = vmatpush.msra.mxu0 0.0
      %8209 = vmatpush.msra.mxu0 0.0
      %8210 = vmatpush.msra.mxu0 0.0
      %8211 = vmatpush.msra.mxu0 0.0
      %8212 = vmatpush.msra.mxu0 %v8096
      %8213 = vmatmul.f32.gmra.mxu0 %v8102
      %v8214 = vpop.f32.mrf.mxu0
      %v8215 = vadd.f32 %v8099, %v8214
      %8216 = vmatmul.f32.gmra.mxu0 %v8105
      %v8217 = vpop.f32.mrf.mxu0
      %v8218 = vadd.f32 %v8099, %v8217
      %8219 = vmatmul.f32.gmra.mxu0 %v8108
      %v8220 = vpop.f32.mrf.mxu0
      %v8221 = vadd.f32 %v8099, %v8220
      %8222 = vmatmul.f32.gmra.mxu0 %v8111
      %v8223 = vpop.f32.mrf.mxu0
      %v8224 = vadd.f32 %v8099, %v8223
      %8225 = vmatmul.f32.gmra.mxu0 %v8114
      %v8226 = vpop.f32.mrf.mxu0
      %v8227 = vadd.f32 %v8099, %v8226
      %8228 = vmatmul.f32.gmra.mxu0 %v8117
      %v8229 = vpop.f32.mrf.mxu0
      %v8230 = vadd.f32 %v8099, %v8229
      %8231 = vmatmul.f32.gmra.mxu0 %v8120
      %v8232 = vpop.f32.mrf.mxu0
      %v8233 = vadd.f32 %v8099, %v8232
      %8234 = vmatmul.f32.gmra.mxu0 %v8123
      %v8235 = vpop.f32.mrf.mxu0
      %v8236 = vadd.f32 %v8099, %v8235
      %8237 = vmatmul.f32.gmra.mxu0 %v8126
      %v8238 = vpop.f32.mrf.mxu0
      %v8239 = vadd.f32 %v8099, %v8238
      %8240 = vmatmul.f32.gmra.mxu0 %v8129
      %v8241 = vpop.f32.mrf.mxu0
      %v8242 = vadd.f32 %v8099, %v8241
      %8243 = vmatmul.f32.gmra.mxu0 %v8132
      %v8244 = vpop.f32.mrf.mxu0
      %v8245 = vadd.f32 %v8099, %v8244
      %8246 = vmatmul.f32.gmra.mxu0 %v8135
      %v8247 = vpop.f32.mrf.mxu0
      %v8248 = vadd.f32 %v8099, %v8247
      %8249 = vmatmul.f32.gmra.mxu0 %v8138
      %v8250 = vpop.f32.mrf.mxu0
      %v8251 = vadd.f32 %v8099, %v8250
      %8252 = vmatmul.f32.gmra.mxu0 %v8141
      %v8253 = vpop.f32.mrf.mxu0
      %v8254 = vadd.f32 %v8099, %v8253
      %8255 = vmatmul.f32.gmra.mxu0 %v8144
      %v8256 = vpop.f32.mrf.mxu0
      %v8257 = vadd.f32 %v8099, %v8256
      %8258 = vmatmul.f32.gmra.mxu0 %v8147
      %v8259 = vpop.f32.mrf.mxu0
      %v8260 = vadd.f32 %v8099, %v8259
      %8261 = vmatmul.f32.gmra.mxu0 %v8150
      %v8262 = vpop.f32.mrf.mxu0
      %v8263 = vadd.f32 %v8099, %v8262
      %8264 = vmatmul.f32.gmra.mxu0 %v8153
      %v8265 = vpop.f32.mrf.mxu0
      %v8266 = vadd.f32 %v8099, %v8265
      %8267 = vmatmul.f32.gmra.mxu0 %v8156
      %v8268 = vpop.f32.mrf.mxu0
      %v8269 = vadd.f32 %v8099, %v8268
      %8270 = vmatmul.f32.gmra.mxu0 %v8159
      %v8271 = vpop.f32.mrf.mxu0
      %v8272 = vadd.f32 %v8099, %v8271
      %8273 = vmatmul.f32.gmra.mxu0 %v8162
      %v8274 = vpop.f32.mrf.mxu0
      %v8275 = vadd.f32 %v8099, %v8274
      %8276 = vmatmul.f32.gmra.mxu0 %v8165
      %v8277 = vpop.f32.mrf.mxu0
      %v8278 = vadd.f32 %v8099, %v8277
      %8279 = vmatmul.f32.gmra.mxu0 %v8168
      %v8280 = vpop.f32.mrf.mxu0
      %v8281 = vadd.f32 %v8099, %v8280
      %8282 = vmatmul.f32.gmra.mxu0 %v8171
      %v8283 = vpop.f32.mrf.mxu0
      %v8284 = vadd.f32 %v8099, %v8283
      %8285 = vmatmul.f32.gmra.mxu0 %v8174
      %v8286 = vpop.f32.mrf.mxu0
      %v8287 = vadd.f32 %v8099, %v8286
      %8288 = vmatmul.f32.gmra.mxu0 %v8177
      %v8289 = vpop.f32.mrf.mxu0
      %v8290 = vadd.f32 %v8099, %v8289
      %8291 = vmatmul.f32.gmra.mxu0 %v8180
      %v8292 = vpop.f32.mrf.mxu0
      %v8293 = vadd.f32 %v8099, %v8292
      %8294 = vmatmul.f32.gmra.mxu0 %v8183
      %v8295 = vpop.f32.mrf.mxu0
      %v8296 = vadd.f32 %v8099, %v8295
      %8297 = vmatmul.f32.gmra.mxu0 %v8186
      %v8298 = vpop.f32.mrf.mxu0
      %v8299 = vadd.f32 %v8099, %v8298
      %8300 = vmatmul.f32.gmra.mxu0 %v8189
      %v8301 = vpop.f32.mrf.mxu0
      %v8302 = vadd.f32 %v8099, %v8301
      %8303 = vmatmul.f32.gmra.mxu0 %v8192
      %v8304 = vpop.f32.mrf.mxu0
      %v8305 = vadd.f32 %v8099, %v8304
      %8306 = vmatmul.f32.gmra.mxu0 %v8195
      %v8307 = vpop.f32.mrf.mxu0
      %v8308 = vadd.f32 %v8099, %v8307
      %8309 = vdwg.mxu0
      %v8310 = vld [vmem:[%s12] sm:$0xff]
      %v8311 = vld [vmem:[%s12 + $0x8] sm:$0xff]
      %v8312 = vld [vmem:[%s12 + $0x10] sm:$0xff]
      %v8313 = vld [vmem:[%s12 + $0x18] sm:$0xff]
      %vm8314 = vcmask 130048
      %v8316 = vsel %vm8314, %v8310, 0
      %v8319 = vsel %vm8314, %v8311, 0
      %v8322 = vsel %vm8314, %v8312, 0
      %v8325 = vsel %vm8314, %v8313, 0
      %8327 = vmatpush.msra.mxu0 0.0
      %8328 = vmatpush.msra.mxu0 0.0
      %8329 = vmatpush.msra.mxu0 0.0
      %8330 = vmatpush.msra.mxu0 0.0
      %8331 = vmatpush.msra.mxu0 0.0
      %8332 = vmatpush.msra.mxu0 0.0
      %8333 = vmatpush.msra.mxu0 0.0
      %8334 = vmatpush.msra.mxu0 0.0
      %8335 = vmatpush.msra.mxu0 0.0
      %8336 = vmatpush.msra.mxu0 0.0
      %8337 = vmatpush.msra.mxu0 0.0
      %8338 = vmatpush.msra.mxu0 0.0
      %8339 = vmatpush.msra.mxu0 0.0
      %8340 = vmatpush.msra.mxu0 0.0
      %8341 = vmatpush.msra.mxu0 %v8218
      %8342 = vmatpush.msra.mxu0 %v8215
      %8343 = vmatmul.f32.gmra.mxu0 %v8316
      %v8344 = vpop.f32.mrf.mxu0
      %v8345 = vadd.f32 0.0, %v8344
      %8346 = vmatmul.f32.gmra.mxu0 %v8319
      %v8347 = vpop.f32.mrf.mxu0
      %v8348 = vadd.f32 0.0, %v8347
      %8349 = vmatmul.f32.gmra.mxu0 %v8322
      %v8350 = vpop.f32.mrf.mxu0
      %v8351 = vadd.f32 0.0, %v8350
      %8352 = vmatmul.f32.gmra.mxu0 %v8325
      %v8353 = vpop.f32.mrf.mxu0
      %v8354 = vadd.f32 0.0, %v8353
      %8355 = vdwg.mxu0
      %8356 = vst.msk [vmem:[%s460] sm:$0xff] %vm461, %v8345
      %8357 = vst.msk [vmem:[%s460 + $0x8] sm:$0xff] %vm461, %v8348
      %8358 = vst.msk [vmem:[%s460 + $0x10] sm:$0xff] %vm461, %v8351
      %8359 = vst.msk [vmem:[%s460 + $0x18] sm:$0xff] %vm461, %v8354
      %v8360 = vmul.f32 %v8215, 0.516129
      %v8361 = vmul.f32 %v8218, 0.516129
      %v8362 = vmul.f32 %v8221, 0.48387095
      %v8363 = vmul.f32 %v8224, 0.48387095
      %v8364 = vadd.f32 %v8360, %v8362
      %v8365 = vadd.f32 %v8361, %v8363
      %8366 = vmatpush.msra.mxu0 0.0
      %8367 = vmatpush.msra.mxu0 0.0
      %8368 = vmatpush.msra.mxu0 0.0
      %8369 = vmatpush.msra.mxu0 0.0
      %8370 = vmatpush.msra.mxu0 0.0
      %8371 = vmatpush.msra.mxu0 0.0
      %8372 = vmatpush.msra.mxu0 0.0
      %8373 = vmatpush.msra.mxu0 0.0
      %8374 = vmatpush.msra.mxu0 0.0
      %8375 = vmatpush.msra.mxu0 0.0
      %8376 = vmatpush.msra.mxu0 0.0
      %8377 = vmatpush.msra.mxu0 0.0
      %8378 = vmatpush.msra.mxu0 0.0
      %8379 = vmatpush.msra.mxu0 0.0
      %8380 = vmatpush.msra.mxu0 %v8365
      %8381 = vmatpush.msra.mxu0 %v8364
      %8382 = vmatmul.f32.gmra.mxu0 %v8316
      %v8383 = vpop.f32.mrf.mxu0
      %v8384 = vadd.f32 0.0, %v8383
      %8385 = vmatmul.f32.gmra.mxu0 %v8319
      %v8386 = vpop.f32.mrf.mxu0
      %v8387 = vadd.f32 0.0, %v8386
      %8388 = vmatmul.f32.gmra.mxu0 %v8322
      %v8389 = vpop.f32.mrf.mxu0
      %v8390 = vadd.f32 0.0, %v8389
      %8391 = vmatmul.f32.gmra.mxu0 %v8325
      %v8392 = vpop.f32.mrf.mxu0
      %v8393 = vadd.f32 0.0, %v8392
      %8394 = vdwg.mxu0
      %s8395 = scalar_lea.vmem %s460, 32
      %8396 = vst.msk [vmem:[%s8395] sm:$0xff] %vm461, %v8384
      %8397 = vst.msk [vmem:[%s8395 + $0x8] sm:$0xff] %vm461, %v8387
      %8398 = vst.msk [vmem:[%s8395 + $0x10] sm:$0xff] %vm461, %v8390
      %8399 = vst.msk [vmem:[%s8395 + $0x18] sm:$0xff] %vm461, %v8393
      %v8400 = vmul.f32 %v8215, 0.032258064
      %v8401 = vmul.f32 %v8218, 0.032258064
      %v8402 = vmul.f32 %v8221, 0.9677419
      %v8403 = vmul.f32 %v8224, 0.9677419
      %v8404 = vadd.f32 %v8400, %v8402
      %v8405 = vadd.f32 %v8401, %v8403
      %8406 = vmatpush.msra.mxu0 0.0
      %8407 = vmatpush.msra.mxu0 0.0
      %8408 = vmatpush.msra.mxu0 0.0
      %8409 = vmatpush.msra.mxu0 0.0
      %8410 = vmatpush.msra.mxu0 0.0
      %8411 = vmatpush.msra.mxu0 0.0
      %8412 = vmatpush.msra.mxu0 0.0
      %8413 = vmatpush.msra.mxu0 0.0
      %8414 = vmatpush.msra.mxu0 0.0
      %8415 = vmatpush.msra.mxu0 0.0
      %8416 = vmatpush.msra.mxu0 0.0
      %8417 = vmatpush.msra.mxu0 0.0
      %8418 = vmatpush.msra.mxu0 0.0
      %8419 = vmatpush.msra.mxu0 0.0
      %8420 = vmatpush.msra.mxu0 %v8405
      %8421 = vmatpush.msra.mxu0 %v8404
      %8422 = vmatmul.f32.gmra.mxu0 %v8316
      %v8423 = vpop.f32.mrf.mxu0
      %v8424 = vadd.f32 0.0, %v8423
      %8425 = vmatmul.f32.gmra.mxu0 %v8319
      %v8426 = vpop.f32.mrf.mxu0
      %v8427 = vadd.f32 0.0, %v8426
      %8428 = vmatmul.f32.gmra.mxu0 %v8322
      %v8429 = vpop.f32.mrf.mxu0
      %v8430 = vadd.f32 0.0, %v8429
      %8431 = vmatmul.f32.gmra.mxu0 %v8325
      %v8432 = vpop.f32.mrf.mxu0
      %v8433 = vadd.f32 0.0, %v8432
      %8434 = vdwg.mxu0
      %s8435 = scalar_lea.vmem %s460, 64
      %8436 = vst.msk [vmem:[%s8435] sm:$0xff] %vm461, %v8424
      %8437 = vst.msk [vmem:[%s8435 + $0x8] sm:$0xff] %vm461, %v8427
      %8438 = vst.msk [vmem:[%s8435 + $0x10] sm:$0xff] %vm461, %v8430
      %8439 = vst.msk [vmem:[%s8435 + $0x18] sm:$0xff] %vm461, %v8433
      %v8440 = vmul.f32 %v8221, 0.5483871
      %v8441 = vmul.f32 %v8224, 0.5483871
      %v8442 = vmul.f32 %v8227, 0.4516129
      %v8443 = vmul.f32 %v8230, 0.4516129
      %v8444 = vadd.f32 %v8440, %v8442
      %v8445 = vadd.f32 %v8441, %v8443
      %8446 = vmatpush.msra.mxu0 0.0
      %8447 = vmatpush.msra.mxu0 0.0
      %8448 = vmatpush.msra.mxu0 0.0
      %8449 = vmatpush.msra.mxu0 0.0
      %8450 = vmatpush.msra.mxu0 0.0
      %8451 = vmatpush.msra.mxu0 0.0
      %8452 = vmatpush.msra.mxu0 0.0
      %8453 = vmatpush.msra.mxu0 0.0
      %8454 = vmatpush.msra.mxu0 0.0
      %8455 = vmatpush.msra.mxu0 0.0
      %8456 = vmatpush.msra.mxu0 0.0
      %8457 = vmatpush.msra.mxu0 0.0
      %8458 = vmatpush.msra.mxu0 0.0
      %8459 = vmatpush.msra.mxu0 0.0
      %8460 = vmatpush.msra.mxu0 %v8445
      %8461 = vmatpush.msra.mxu0 %v8444
      %8462 = vmatmul.f32.gmra.mxu0 %v8316
      %v8463 = vpop.f32.mrf.mxu0
      %v8464 = vadd.f32 0.0, %v8463
      %8465 = vmatmul.f32.gmra.mxu0 %v8319
      %v8466 = vpop.f32.mrf.mxu0
      %v8467 = vadd.f32 0.0, %v8466
      %8468 = vmatmul.f32.gmra.mxu0 %v8322
      %v8469 = vpop.f32.mrf.mxu0
      %v8470 = vadd.f32 0.0, %v8469
      %8471 = vmatmul.f32.gmra.mxu0 %v8325
      %v8472 = vpop.f32.mrf.mxu0
      %v8473 = vadd.f32 0.0, %v8472
      %8474 = vdwg.mxu0
      %s8475 = scalar_lea.vmem %s460, 96
      %8476 = vst.msk [vmem:[%s8475] sm:$0xff] %vm461, %v8464
      %8477 = vst.msk [vmem:[%s8475 + $0x8] sm:$0xff] %vm461, %v8467
      %8478 = vst.msk [vmem:[%s8475 + $0x10] sm:$0xff] %vm461, %v8470
      %8479 = vst.msk [vmem:[%s8475 + $0x18] sm:$0xff] %vm461, %v8473
      %v8480 = vmul.f32 %v8221, 0.06451613
      %v8481 = vmul.f32 %v8224, 0.06451613
      %v8482 = vmul.f32 %v8227, 0.9354839
      %v8483 = vmul.f32 %v8230, 0.9354839
      %v8484 = vadd.f32 %v8480, %v8482
      %v8485 = vadd.f32 %v8481, %v8483
      %8486 = vmatpush.msra.mxu0 0.0
      %8487 = vmatpush.msra.mxu0 0.0
      %8488 = vmatpush.msra.mxu0 0.0
      %8489 = vmatpush.msra.mxu0 0.0
      %8490 = vmatpush.msra.mxu0 0.0
      %8491 = vmatpush.msra.mxu0 0.0
      %8492 = vmatpush.msra.mxu0 0.0
      %8493 = vmatpush.msra.mxu0 0.0
      %8494 = vmatpush.msra.mxu0 0.0
      %8495 = vmatpush.msra.mxu0 0.0
      %8496 = vmatpush.msra.mxu0 0.0
      %8497 = vmatpush.msra.mxu0 0.0
      %8498 = vmatpush.msra.mxu0 0.0
      %8499 = vmatpush.msra.mxu0 0.0
      %8500 = vmatpush.msra.mxu0 %v8485
      %8501 = vmatpush.msra.mxu0 %v8484
      %8502 = vmatmul.f32.gmra.mxu0 %v8316
      %v8503 = vpop.f32.mrf.mxu0
      %v8504 = vadd.f32 0.0, %v8503
      %8505 = vmatmul.f32.gmra.mxu0 %v8319
      %v8506 = vpop.f32.mrf.mxu0
      %v8507 = vadd.f32 0.0, %v8506
      %8508 = vmatmul.f32.gmra.mxu0 %v8322
      %v8509 = vpop.f32.mrf.mxu0
      %v8510 = vadd.f32 0.0, %v8509
      %8511 = vmatmul.f32.gmra.mxu0 %v8325
      %v8512 = vpop.f32.mrf.mxu0
      %v8513 = vadd.f32 0.0, %v8512
      %8514 = vdwg.mxu0
      %s8515 = scalar_lea.vmem %s460, 128
      %8516 = vst.msk [vmem:[%s8515] sm:$0xff] %vm461, %v8504
      %8517 = vst.msk [vmem:[%s8515 + $0x8] sm:$0xff] %vm461, %v8507
      %8518 = vst.msk [vmem:[%s8515 + $0x10] sm:$0xff] %vm461, %v8510
      %8519 = vst.msk [vmem:[%s8515 + $0x18] sm:$0xff] %vm461, %v8513
      %v8520 = vmul.f32 %v8227, 0.58064514
      %v8521 = vmul.f32 %v8230, 0.58064514
      %v8522 = vmul.f32 %v8233, 0.41935483
      %v8523 = vmul.f32 %v8236, 0.41935483
      %v8524 = vadd.f32 %v8520, %v8522
      %v8525 = vadd.f32 %v8521, %v8523
      %8526 = vmatpush.msra.mxu0 0.0
      %8527 = vmatpush.msra.mxu0 0.0
      %8528 = vmatpush.msra.mxu0 0.0
      %8529 = vmatpush.msra.mxu0 0.0
      %8530 = vmatpush.msra.mxu0 0.0
      %8531 = vmatpush.msra.mxu0 0.0
      %8532 = vmatpush.msra.mxu0 0.0
      %8533 = vmatpush.msra.mxu0 0.0
      %8534 = vmatpush.msra.mxu0 0.0
      %8535 = vmatpush.msra.mxu0 0.0
      %8536 = vmatpush.msra.mxu0 0.0
      %8537 = vmatpush.msra.mxu0 0.0
      %8538 = vmatpush.msra.mxu0 0.0
      %8539 = vmatpush.msra.mxu0 0.0
      %8540 = vmatpush.msra.mxu0 %v8525
      %8541 = vmatpush.msra.mxu0 %v8524
      %8542 = vmatmul.f32.gmra.mxu0 %v8316
      %v8543 = vpop.f32.mrf.mxu0
      %v8544 = vadd.f32 0.0, %v8543
      %8545 = vmatmul.f32.gmra.mxu0 %v8319
      %v8546 = vpop.f32.mrf.mxu0
      %v8547 = vadd.f32 0.0, %v8546
      %8548 = vmatmul.f32.gmra.mxu0 %v8322
      %v8549 = vpop.f32.mrf.mxu0
      %v8550 = vadd.f32 0.0, %v8549
      %8551 = vmatmul.f32.gmra.mxu0 %v8325
      %v8552 = vpop.f32.mrf.mxu0
      %v8553 = vadd.f32 0.0, %v8552
      %8554 = vdwg.mxu0
      %s8555 = scalar_lea.vmem %s460, 160
      %8556 = vst.msk [vmem:[%s8555] sm:$0xff] %vm461, %v8544
      %8557 = vst.msk [vmem:[%s8555 + $0x8] sm:$0xff] %vm461, %v8547
      %8558 = vst.msk [vmem:[%s8555 + $0x10] sm:$0xff] %vm461, %v8550
      %8559 = vst.msk [vmem:[%s8555 + $0x18] sm:$0xff] %vm461, %v8553
      %v8560 = vmul.f32 %v8227, 0.09677419
      %v8561 = vmul.f32 %v8230, 0.09677419
      %v8562 = vmul.f32 %v8233, 0.9032258
      %v8563 = vmul.f32 %v8236, 0.9032258
      %v8564 = vadd.f32 %v8560, %v8562
      %v8565 = vadd.f32 %v8561, %v8563
      %8566 = vmatpush.msra.mxu0 0.0
      %8567 = vmatpush.msra.mxu0 0.0
      %8568 = vmatpush.msra.mxu0 0.0
      %8569 = vmatpush.msra.mxu0 0.0
      %8570 = vmatpush.msra.mxu0 0.0
      %8571 = vmatpush.msra.mxu0 0.0
      %8572 = vmatpush.msra.mxu0 0.0
      %8573 = vmatpush.msra.mxu0 0.0
      %8574 = vmatpush.msra.mxu0 0.0
      %8575 = vmatpush.msra.mxu0 0.0
      %8576 = vmatpush.msra.mxu0 0.0
      %8577 = vmatpush.msra.mxu0 0.0
      %8578 = vmatpush.msra.mxu0 0.0
      %8579 = vmatpush.msra.mxu0 0.0
      %8580 = vmatpush.msra.mxu0 %v8565
      %8581 = vmatpush.msra.mxu0 %v8564
      %8582 = vmatmul.f32.gmra.mxu0 %v8316
      %v8583 = vpop.f32.mrf.mxu0
      %v8584 = vadd.f32 0.0, %v8583
      %8585 = vmatmul.f32.gmra.mxu0 %v8319
      %v8586 = vpop.f32.mrf.mxu0
      %v8587 = vadd.f32 0.0, %v8586
      %8588 = vmatmul.f32.gmra.mxu0 %v8322
      %v8589 = vpop.f32.mrf.mxu0
      %v8590 = vadd.f32 0.0, %v8589
      %8591 = vmatmul.f32.gmra.mxu0 %v8325
      %v8592 = vpop.f32.mrf.mxu0
      %v8593 = vadd.f32 0.0, %v8592
      %8594 = vdwg.mxu0
      %s8595 = scalar_lea.vmem %s460, 192
      %8596 = vst.msk [vmem:[%s8595] sm:$0xff] %vm461, %v8584
      %8597 = vst.msk [vmem:[%s8595 + $0x8] sm:$0xff] %vm461, %v8587
      %8598 = vst.msk [vmem:[%s8595 + $0x10] sm:$0xff] %vm461, %v8590
      %8599 = vst.msk [vmem:[%s8595 + $0x18] sm:$0xff] %vm461, %v8593
      %v8600 = vmul.f32 %v8233, 0.61290324
      %v8601 = vmul.f32 %v8236, 0.61290324
      %v8602 = vmul.f32 %v8239, 0.38709676
      %v8603 = vmul.f32 %v8242, 0.38709676
      %v8604 = vadd.f32 %v8600, %v8602
      %v8605 = vadd.f32 %v8601, %v8603
      %8606 = vmatpush.msra.mxu0 0.0
      %8607 = vmatpush.msra.mxu0 0.0
      %8608 = vmatpush.msra.mxu0 0.0
      %8609 = vmatpush.msra.mxu0 0.0
      %8610 = vmatpush.msra.mxu0 0.0
      %8611 = vmatpush.msra.mxu0 0.0
      %8612 = vmatpush.msra.mxu0 0.0
      %8613 = vmatpush.msra.mxu0 0.0
      %8614 = vmatpush.msra.mxu0 0.0
      %8615 = vmatpush.msra.mxu0 0.0
      %8616 = vmatpush.msra.mxu0 0.0
      %8617 = vmatpush.msra.mxu0 0.0
      %8618 = vmatpush.msra.mxu0 0.0
      %8619 = vmatpush.msra.mxu0 0.0
      %8620 = vmatpush.msra.mxu0 %v8605
      %8621 = vmatpush.msra.mxu0 %v8604
      %8622 = vmatmul.f32.gmra.mxu0 %v8316
      %v8623 = vpop.f32.mrf.mxu0
      %v8624 = vadd.f32 0.0, %v8623
      %8625 = vmatmul.f32.gmra.mxu0 %v8319
      %v8626 = vpop.f32.mrf.mxu0
      %v8627 = vadd.f32 0.0, %v8626
      %8628 = vmatmul.f32.gmra.mxu0 %v8322
      %v8629 = vpop.f32.mrf.mxu0
      %v8630 = vadd.f32 0.0, %v8629
      %8631 = vmatmul.f32.gmra.mxu0 %v8325
      %v8632 = vpop.f32.mrf.mxu0
      %v8633 = vadd.f32 0.0, %v8632
      %8634 = vdwg.mxu0
      %s8635 = scalar_lea.vmem %s460, 224
      %8636 = vst.msk [vmem:[%s8635] sm:$0xff] %vm461, %v8624
      %8637 = vst.msk [vmem:[%s8635 + $0x8] sm:$0xff] %vm461, %v8627
      %8638 = vst.msk [vmem:[%s8635 + $0x10] sm:$0xff] %vm461, %v8630
      %8639 = vst.msk [vmem:[%s8635 + $0x18] sm:$0xff] %vm461, %v8633
      %v8640 = vmul.f32 %v8233, 0.12903225
      %v8641 = vmul.f32 %v8236, 0.12903225
      %v8642 = vmul.f32 %v8239, 0.87096775
      %v8643 = vmul.f32 %v8242, 0.87096775
      %v8644 = vadd.f32 %v8640, %v8642
      %v8645 = vadd.f32 %v8641, %v8643
      %8646 = vmatpush.msra.mxu0 0.0
      %8647 = vmatpush.msra.mxu0 0.0
      %8648 = vmatpush.msra.mxu0 0.0
      %8649 = vmatpush.msra.mxu0 0.0
      %8650 = vmatpush.msra.mxu0 0.0
      %8651 = vmatpush.msra.mxu0 0.0
      %8652 = vmatpush.msra.mxu0 0.0
      %8653 = vmatpush.msra.mxu0 0.0
      %8654 = vmatpush.msra.mxu0 0.0
      %8655 = vmatpush.msra.mxu0 0.0
      %8656 = vmatpush.msra.mxu0 0.0
      %8657 = vmatpush.msra.mxu0 0.0
      %8658 = vmatpush.msra.mxu0 0.0
      %8659 = vmatpush.msra.mxu0 0.0
      %8660 = vmatpush.msra.mxu0 %v8645
      %8661 = vmatpush.msra.mxu0 %v8644
      %8662 = vmatmul.f32.gmra.mxu0 %v8316
      %v8663 = vpop.f32.mrf.mxu0
      %v8664 = vadd.f32 0.0, %v8663
      %8665 = vmatmul.f32.gmra.mxu0 %v8319
      %v8666 = vpop.f32.mrf.mxu0
      %v8667 = vadd.f32 0.0, %v8666
      %8668 = vmatmul.f32.gmra.mxu0 %v8322
      %v8669 = vpop.f32.mrf.mxu0
      %v8670 = vadd.f32 0.0, %v8669
      %8671 = vmatmul.f32.gmra.mxu0 %v8325
      %v8672 = vpop.f32.mrf.mxu0
      %v8673 = vadd.f32 0.0, %v8672
      %8674 = vdwg.mxu0
      %s8675 = scalar_lea.vmem %s460, 256
      %8676 = vst.msk [vmem:[%s8675] sm:$0xff] %vm461, %v8664
      %8677 = vst.msk [vmem:[%s8675 + $0x8] sm:$0xff] %vm461, %v8667
      %8678 = vst.msk [vmem:[%s8675 + $0x10] sm:$0xff] %vm461, %v8670
      %8679 = vst.msk [vmem:[%s8675 + $0x18] sm:$0xff] %vm461, %v8673
      %v8680 = vmul.f32 %v8239, 0.6451613
      %v8681 = vmul.f32 %v8242, 0.6451613
      %v8682 = vmul.f32 %v8245, 0.3548387
      %v8683 = vmul.f32 %v8248, 0.3548387
      %v8684 = vadd.f32 %v8680, %v8682
      %v8685 = vadd.f32 %v8681, %v8683
      %8686 = vmatpush.msra.mxu0 0.0
      %8687 = vmatpush.msra.mxu0 0.0
      %8688 = vmatpush.msra.mxu0 0.0
      %8689 = vmatpush.msra.mxu0 0.0
      %8690 = vmatpush.msra.mxu0 0.0
      %8691 = vmatpush.msra.mxu0 0.0
      %8692 = vmatpush.msra.mxu0 0.0
      %8693 = vmatpush.msra.mxu0 0.0
      %8694 = vmatpush.msra.mxu0 0.0
      %8695 = vmatpush.msra.mxu0 0.0
      %8696 = vmatpush.msra.mxu0 0.0
      %8697 = vmatpush.msra.mxu0 0.0
      %8698 = vmatpush.msra.mxu0 0.0
      %8699 = vmatpush.msra.mxu0 0.0
      %8700 = vmatpush.msra.mxu0 %v8685
      %8701 = vmatpush.msra.mxu0 %v8684
      %8702 = vmatmul.f32.gmra.mxu0 %v8316
      %v8703 = vpop.f32.mrf.mxu0
      %v8704 = vadd.f32 0.0, %v8703
      %8705 = vmatmul.f32.gmra.mxu0 %v8319
      %v8706 = vpop.f32.mrf.mxu0
      %v8707 = vadd.f32 0.0, %v8706
      %8708 = vmatmul.f32.gmra.mxu0 %v8322
      %v8709 = vpop.f32.mrf.mxu0
      %v8710 = vadd.f32 0.0, %v8709
      %8711 = vmatmul.f32.gmra.mxu0 %v8325
      %v8712 = vpop.f32.mrf.mxu0
      %v8713 = vadd.f32 0.0, %v8712
      %8714 = vdwg.mxu0
      %s8715 = scalar_lea.vmem %s460, 288
      %8716 = vst.msk [vmem:[%s8715] sm:$0xff] %vm461, %v8704
      %8717 = vst.msk [vmem:[%s8715 + $0x8] sm:$0xff] %vm461, %v8707
      %8718 = vst.msk [vmem:[%s8715 + $0x10] sm:$0xff] %vm461, %v8710
      %8719 = vst.msk [vmem:[%s8715 + $0x18] sm:$0xff] %vm461, %v8713
      %v8720 = vmul.f32 %v8239, 0.16129032
      %v8721 = vmul.f32 %v8242, 0.16129032
      %v8722 = vmul.f32 %v8245, 0.83870965
      %v8723 = vmul.f32 %v8248, 0.83870965
      %v8724 = vadd.f32 %v8720, %v8722
      %v8725 = vadd.f32 %v8721, %v8723
      %8726 = vmatpush.msra.mxu0 0.0
      %8727 = vmatpush.msra.mxu0 0.0
      %8728 = vmatpush.msra.mxu0 0.0
      %8729 = vmatpush.msra.mxu0 0.0
      %8730 = vmatpush.msra.mxu0 0.0
      %8731 = vmatpush.msra.mxu0 0.0
      %8732 = vmatpush.msra.mxu0 0.0
      %8733 = vmatpush.msra.mxu0 0.0
      %8734 = vmatpush.msra.mxu0 0.0
      %8735 = vmatpush.msra.mxu0 0.0
      %8736 = vmatpush.msra.mxu0 0.0
      %8737 = vmatpush.msra.mxu0 0.0
      %8738 = vmatpush.msra.mxu0 0.0
      %8739 = vmatpush.msra.mxu0 0.0
      %8740 = vmatpush.msra.mxu0 %v8725
      %8741 = vmatpush.msra.mxu0 %v8724
      %8742 = vmatmul.f32.gmra.mxu0 %v8316
      %v8743 = vpop.f32.mrf.mxu0
      %v8744 = vadd.f32 0.0, %v8743
      %8745 = vmatmul.f32.gmra.mxu0 %v8319
      %v8746 = vpop.f32.mrf.mxu0
      %v8747 = vadd.f32 0.0, %v8746
      %8748 = vmatmul.f32.gmra.mxu0 %v8322
      %v8749 = vpop.f32.mrf.mxu0
      %v8750 = vadd.f32 0.0, %v8749
      %8751 = vmatmul.f32.gmra.mxu0 %v8325
      %v8752 = vpop.f32.mrf.mxu0
      %v8753 = vadd.f32 0.0, %v8752
      %8754 = vdwg.mxu0
      %s8755 = scalar_lea.vmem %s460, 320
      %8756 = vst.msk [vmem:[%s8755] sm:$0xff] %vm461, %v8744
      %8757 = vst.msk [vmem:[%s8755 + $0x8] sm:$0xff] %vm461, %v8747
      %8758 = vst.msk [vmem:[%s8755 + $0x10] sm:$0xff] %vm461, %v8750
      %8759 = vst.msk [vmem:[%s8755 + $0x18] sm:$0xff] %vm461, %v8753
      %v8760 = vmul.f32 %v8245, 0.67741936
      %v8761 = vmul.f32 %v8248, 0.67741936
      %v8762 = vmul.f32 %v8251, 0.32258064
      %v8763 = vmul.f32 %v8254, 0.32258064
      %v8764 = vadd.f32 %v8760, %v8762
      %v8765 = vadd.f32 %v8761, %v8763
      %8766 = vmatpush.msra.mxu0 0.0
      %8767 = vmatpush.msra.mxu0 0.0
      %8768 = vmatpush.msra.mxu0 0.0
      %8769 = vmatpush.msra.mxu0 0.0
      %8770 = vmatpush.msra.mxu0 0.0
      %8771 = vmatpush.msra.mxu0 0.0
      %8772 = vmatpush.msra.mxu0 0.0
      %8773 = vmatpush.msra.mxu0 0.0
      %8774 = vmatpush.msra.mxu0 0.0
      %8775 = vmatpush.msra.mxu0 0.0
      %8776 = vmatpush.msra.mxu0 0.0
      %8777 = vmatpush.msra.mxu0 0.0
      %8778 = vmatpush.msra.mxu0 0.0
      %8779 = vmatpush.msra.mxu0 0.0
      %8780 = vmatpush.msra.mxu0 %v8765
      %8781 = vmatpush.msra.mxu0 %v8764
      %8782 = vmatmul.f32.gmra.mxu0 %v8316
      %v8783 = vpop.f32.mrf.mxu0
      %v8784 = vadd.f32 0.0, %v8783
      %8785 = vmatmul.f32.gmra.mxu0 %v8319
      %v8786 = vpop.f32.mrf.mxu0
      %v8787 = vadd.f32 0.0, %v8786
      %8788 = vmatmul.f32.gmra.mxu0 %v8322
      %v8789 = vpop.f32.mrf.mxu0
      %v8790 = vadd.f32 0.0, %v8789
      %8791 = vmatmul.f32.gmra.mxu0 %v8325
      %v8792 = vpop.f32.mrf.mxu0
      %v8793 = vadd.f32 0.0, %v8792
      %8794 = vdwg.mxu0
      %s8795 = scalar_lea.vmem %s460, 352
      %8796 = vst.msk [vmem:[%s8795] sm:$0xff] %vm461, %v8784
      %8797 = vst.msk [vmem:[%s8795 + $0x8] sm:$0xff] %vm461, %v8787
      %8798 = vst.msk [vmem:[%s8795 + $0x10] sm:$0xff] %vm461, %v8790
      %8799 = vst.msk [vmem:[%s8795 + $0x18] sm:$0xff] %vm461, %v8793
      %v8800 = vmul.f32 %v8245, 0.19354838
      %v8801 = vmul.f32 %v8248, 0.19354838
      %v8802 = vmul.f32 %v8251, 0.8064516
      %v8803 = vmul.f32 %v8254, 0.8064516
      %v8804 = vadd.f32 %v8800, %v8802
      %v8805 = vadd.f32 %v8801, %v8803
      %8806 = vmatpush.msra.mxu0 0.0
      %8807 = vmatpush.msra.mxu0 0.0
      %8808 = vmatpush.msra.mxu0 0.0
      %8809 = vmatpush.msra.mxu0 0.0
      %8810 = vmatpush.msra.mxu0 0.0
      %8811 = vmatpush.msra.mxu0 0.0
      %8812 = vmatpush.msra.mxu0 0.0
      %8813 = vmatpush.msra.mxu0 0.0
      %8814 = vmatpush.msra.mxu0 0.0
      %8815 = vmatpush.msra.mxu0 0.0
      %8816 = vmatpush.msra.mxu0 0.0
      %8817 = vmatpush.msra.mxu0 0.0
      %8818 = vmatpush.msra.mxu0 0.0
      %8819 = vmatpush.msra.mxu0 0.0
      %8820 = vmatpush.msra.mxu0 %v8805
      %8821 = vmatpush.msra.mxu0 %v8804
      %8822 = vmatmul.f32.gmra.mxu0 %v8316
      %v8823 = vpop.f32.mrf.mxu0
      %v8824 = vadd.f32 0.0, %v8823
      %8825 = vmatmul.f32.gmra.mxu0 %v8319
      %v8826 = vpop.f32.mrf.mxu0
      %v8827 = vadd.f32 0.0, %v8826
      %8828 = vmatmul.f32.gmra.mxu0 %v8322
      %v8829 = vpop.f32.mrf.mxu0
      %v8830 = vadd.f32 0.0, %v8829
      %8831 = vmatmul.f32.gmra.mxu0 %v8325
      %v8832 = vpop.f32.mrf.mxu0
      %v8833 = vadd.f32 0.0, %v8832
      %8834 = vdwg.mxu0
      %s8835 = scalar_lea.vmem %s460, 384
      %8836 = vst.msk [vmem:[%s8835] sm:$0xff] %vm461, %v8824
      %8837 = vst.msk [vmem:[%s8835 + $0x8] sm:$0xff] %vm461, %v8827
      %8838 = vst.msk [vmem:[%s8835 + $0x10] sm:$0xff] %vm461, %v8830
      %8839 = vst.msk [vmem:[%s8835 + $0x18] sm:$0xff] %vm461, %v8833
      %v8840 = vmul.f32 %v8251, 0.7096774
      %v8841 = vmul.f32 %v8254, 0.7096774
      %v8842 = vmul.f32 %v8257, 0.29032257
      %v8843 = vmul.f32 %v8260, 0.29032257
      %v8844 = vadd.f32 %v8840, %v8842
      %v8845 = vadd.f32 %v8841, %v8843
      %8846 = vmatpush.msra.mxu0 0.0
      %8847 = vmatpush.msra.mxu0 0.0
      %8848 = vmatpush.msra.mxu0 0.0
      %8849 = vmatpush.msra.mxu0 0.0
      %8850 = vmatpush.msra.mxu0 0.0
      %8851 = vmatpush.msra.mxu0 0.0
      %8852 = vmatpush.msra.mxu0 0.0
      %8853 = vmatpush.msra.mxu0 0.0
      %8854 = vmatpush.msra.mxu0 0.0
      %8855 = vmatpush.msra.mxu0 0.0
      %8856 = vmatpush.msra.mxu0 0.0
      %8857 = vmatpush.msra.mxu0 0.0
      %8858 = vmatpush.msra.mxu0 0.0
      %8859 = vmatpush.msra.mxu0 0.0
      %8860 = vmatpush.msra.mxu0 %v8845
      %8861 = vmatpush.msra.mxu0 %v8844
      %8862 = vmatmul.f32.gmra.mxu0 %v8316
      %v8863 = vpop.f32.mrf.mxu0
      %v8864 = vadd.f32 0.0, %v8863
      %8865 = vmatmul.f32.gmra.mxu0 %v8319
      %v8866 = vpop.f32.mrf.mxu0
      %v8867 = vadd.f32 0.0, %v8866
      %8868 = vmatmul.f32.gmra.mxu0 %v8322
      %v8869 = vpop.f32.mrf.mxu0
      %v8870 = vadd.f32 0.0, %v8869
      %8871 = vmatmul.f32.gmra.mxu0 %v8325
      %v8872 = vpop.f32.mrf.mxu0
      %v8873 = vadd.f32 0.0, %v8872
      %8874 = vdwg.mxu0
      %s8875 = scalar_lea.vmem %s460, 416
      %8876 = vst.msk [vmem:[%s8875] sm:$0xff] %vm461, %v8864
      %8877 = vst.msk [vmem:[%s8875 + $0x8] sm:$0xff] %vm461, %v8867
      %8878 = vst.msk [vmem:[%s8875 + $0x10] sm:$0xff] %vm461, %v8870
      %8879 = vst.msk [vmem:[%s8875 + $0x18] sm:$0xff] %vm461, %v8873
      %v8880 = vmul.f32 %v8251, 0.22580644
      %v8881 = vmul.f32 %v8254, 0.22580644
      %v8882 = vmul.f32 %v8257, 0.7741935
      %v8883 = vmul.f32 %v8260, 0.7741935
      %v8884 = vadd.f32 %v8880, %v8882
      %v8885 = vadd.f32 %v8881, %v8883
      %8886 = vmatpush.msra.mxu0 0.0
      %8887 = vmatpush.msra.mxu0 0.0
      %8888 = vmatpush.msra.mxu0 0.0
      %8889 = vmatpush.msra.mxu0 0.0
      %8890 = vmatpush.msra.mxu0 0.0
      %8891 = vmatpush.msra.mxu0 0.0
      %8892 = vmatpush.msra.mxu0 0.0
      %8893 = vmatpush.msra.mxu0 0.0
      %8894 = vmatpush.msra.mxu0 0.0
      %8895 = vmatpush.msra.mxu0 0.0
      %8896 = vmatpush.msra.mxu0 0.0
      %8897 = vmatpush.msra.mxu0 0.0
      %8898 = vmatpush.msra.mxu0 0.0
      %8899 = vmatpush.msra.mxu0 0.0
      %8900 = vmatpush.msra.mxu0 %v8885
      %8901 = vmatpush.msra.mxu0 %v8884
      %8902 = vmatmul.f32.gmra.mxu0 %v8316
      %v8903 = vpop.f32.mrf.mxu0
      %v8904 = vadd.f32 0.0, %v8903
      %8905 = vmatmul.f32.gmra.mxu0 %v8319
      %v8906 = vpop.f32.mrf.mxu0
      %v8907 = vadd.f32 0.0, %v8906
      %8908 = vmatmul.f32.gmra.mxu0 %v8322
      %v8909 = vpop.f32.mrf.mxu0
      %v8910 = vadd.f32 0.0, %v8909
      %8911 = vmatmul.f32.gmra.mxu0 %v8325
      %v8912 = vpop.f32.mrf.mxu0
      %v8913 = vadd.f32 0.0, %v8912
      %8914 = vdwg.mxu0
      %s8915 = scalar_lea.vmem %s460, 448
      %8916 = vst.msk [vmem:[%s8915] sm:$0xff] %vm461, %v8904
      %8917 = vst.msk [vmem:[%s8915 + $0x8] sm:$0xff] %vm461, %v8907
      %8918 = vst.msk [vmem:[%s8915 + $0x10] sm:$0xff] %vm461, %v8910
      %8919 = vst.msk [vmem:[%s8915 + $0x18] sm:$0xff] %vm461, %v8913
      %v8920 = vmul.f32 %v8257, 0.7419355
      %v8921 = vmul.f32 %v8260, 0.7419355
      %v8922 = vmul.f32 %v8263, 0.2580645
      %v8923 = vmul.f32 %v8266, 0.2580645
      %v8924 = vadd.f32 %v8920, %v8922
      %v8925 = vadd.f32 %v8921, %v8923
      %8926 = vmatpush.msra.mxu0 0.0
      %8927 = vmatpush.msra.mxu0 0.0
      %8928 = vmatpush.msra.mxu0 0.0
      %8929 = vmatpush.msra.mxu0 0.0
      %8930 = vmatpush.msra.mxu0 0.0
      %8931 = vmatpush.msra.mxu0 0.0
      %8932 = vmatpush.msra.mxu0 0.0
      %8933 = vmatpush.msra.mxu0 0.0
      %8934 = vmatpush.msra.mxu0 0.0
      %8935 = vmatpush.msra.mxu0 0.0
      %8936 = vmatpush.msra.mxu0 0.0
      %8937 = vmatpush.msra.mxu0 0.0
      %8938 = vmatpush.msra.mxu0 0.0
      %8939 = vmatpush.msra.mxu0 0.0
      %8940 = vmatpush.msra.mxu0 %v8925
      %8941 = vmatpush.msra.mxu0 %v8924
      %8942 = vmatmul.f32.gmra.mxu0 %v8316
      %v8943 = vpop.f32.mrf.mxu0
      %v8944 = vadd.f32 0.0, %v8943
      %8945 = vmatmul.f32.gmra.mxu0 %v8319
      %v8946 = vpop.f32.mrf.mxu0
      %v8947 = vadd.f32 0.0, %v8946
      %8948 = vmatmul.f32.gmra.mxu0 %v8322
      %v8949 = vpop.f32.mrf.mxu0
      %v8950 = vadd.f32 0.0, %v8949
      %8951 = vmatmul.f32.gmra.mxu0 %v8325
      %v8952 = vpop.f32.mrf.mxu0
      %v8953 = vadd.f32 0.0, %v8952
      %8954 = vdwg.mxu0
      %s8955 = scalar_lea.vmem %s460, 480
      %8956 = vst.msk [vmem:[%s8955] sm:$0xff] %vm461, %v8944
      %8957 = vst.msk [vmem:[%s8955 + $0x8] sm:$0xff] %vm461, %v8947
      %8958 = vst.msk [vmem:[%s8955 + $0x10] sm:$0xff] %vm461, %v8950
      %8959 = vst.msk [vmem:[%s8955 + $0x18] sm:$0xff] %vm461, %v8953
      %v8960 = vmul.f32 %v8257, 0.2580645
      %v8961 = vmul.f32 %v8260, 0.2580645
      %v8962 = vmul.f32 %v8263, 0.7419355
      %v8963 = vmul.f32 %v8266, 0.7419355
      %v8964 = vadd.f32 %v8960, %v8962
      %v8965 = vadd.f32 %v8961, %v8963
      %8966 = vmatpush.msra.mxu0 0.0
      %8967 = vmatpush.msra.mxu0 0.0
      %8968 = vmatpush.msra.mxu0 0.0
      %8969 = vmatpush.msra.mxu0 0.0
      %8970 = vmatpush.msra.mxu0 0.0
      %8971 = vmatpush.msra.mxu0 0.0
      %8972 = vmatpush.msra.mxu0 0.0
      %8973 = vmatpush.msra.mxu0 0.0
      %8974 = vmatpush.msra.mxu0 0.0
      %8975 = vmatpush.msra.mxu0 0.0
      %8976 = vmatpush.msra.mxu0 0.0
      %8977 = vmatpush.msra.mxu0 0.0
      %8978 = vmatpush.msra.mxu0 0.0
      %8979 = vmatpush.msra.mxu0 0.0
      %8980 = vmatpush.msra.mxu0 %v8965
      %8981 = vmatpush.msra.mxu0 %v8964
      %8982 = vmatmul.f32.gmra.mxu0 %v8316
      %v8983 = vpop.f32.mrf.mxu0
      %v8984 = vadd.f32 0.0, %v8983
      %8985 = vmatmul.f32.gmra.mxu0 %v8319
      %v8986 = vpop.f32.mrf.mxu0
      %v8987 = vadd.f32 0.0, %v8986
      %8988 = vmatmul.f32.gmra.mxu0 %v8322
      %v8989 = vpop.f32.mrf.mxu0
      %v8990 = vadd.f32 0.0, %v8989
      %8991 = vmatmul.f32.gmra.mxu0 %v8325
      %v8992 = vpop.f32.mrf.mxu0
      %v8993 = vadd.f32 0.0, %v8992
      %8994 = vdwg.mxu0
      %s8995 = scalar_lea.vmem %s460, 512
      %8996 = vst.msk [vmem:[%s8995] sm:$0xff] %vm461, %v8984
      %8997 = vst.msk [vmem:[%s8995 + $0x8] sm:$0xff] %vm461, %v8987
      %8998 = vst.msk [vmem:[%s8995 + $0x10] sm:$0xff] %vm461, %v8990
      %8999 = vst.msk [vmem:[%s8995 + $0x18] sm:$0xff] %vm461, %v8993
      %v9000 = vmul.f32 %v8263, 0.7741935
      %v9001 = vmul.f32 %v8266, 0.7741935
      %v9002 = vmul.f32 %v8269, 0.22580644
      %v9003 = vmul.f32 %v8272, 0.22580644
      %v9004 = vadd.f32 %v9000, %v9002
      %v9005 = vadd.f32 %v9001, %v9003
      %9006 = vmatpush.msra.mxu0 0.0
      %9007 = vmatpush.msra.mxu0 0.0
      %9008 = vmatpush.msra.mxu0 0.0
      %9009 = vmatpush.msra.mxu0 0.0
      %9010 = vmatpush.msra.mxu0 0.0
      %9011 = vmatpush.msra.mxu0 0.0
      %9012 = vmatpush.msra.mxu0 0.0
      %9013 = vmatpush.msra.mxu0 0.0
      %9014 = vmatpush.msra.mxu0 0.0
      %9015 = vmatpush.msra.mxu0 0.0
      %9016 = vmatpush.msra.mxu0 0.0
      %9017 = vmatpush.msra.mxu0 0.0
      %9018 = vmatpush.msra.mxu0 0.0
      %9019 = vmatpush.msra.mxu0 0.0
      %9020 = vmatpush.msra.mxu0 %v9005
      %9021 = vmatpush.msra.mxu0 %v9004
      %9022 = vmatmul.f32.gmra.mxu0 %v8316
      %v9023 = vpop.f32.mrf.mxu0
      %v9024 = vadd.f32 0.0, %v9023
      %9025 = vmatmul.f32.gmra.mxu0 %v8319
      %v9026 = vpop.f32.mrf.mxu0
      %v9027 = vadd.f32 0.0, %v9026
      %9028 = vmatmul.f32.gmra.mxu0 %v8322
      %v9029 = vpop.f32.mrf.mxu0
      %v9030 = vadd.f32 0.0, %v9029
      %9031 = vmatmul.f32.gmra.mxu0 %v8325
      %v9032 = vpop.f32.mrf.mxu0
      %v9033 = vadd.f32 0.0, %v9032
      %9034 = vdwg.mxu0
      %s9035 = scalar_lea.vmem %s460, 544
      %9036 = vst.msk [vmem:[%s9035] sm:$0xff] %vm461, %v9024
      %9037 = vst.msk [vmem:[%s9035 + $0x8] sm:$0xff] %vm461, %v9027
      %9038 = vst.msk [vmem:[%s9035 + $0x10] sm:$0xff] %vm461, %v9030
      %9039 = vst.msk [vmem:[%s9035 + $0x18] sm:$0xff] %vm461, %v9033
      %v9040 = vmul.f32 %v8263, 0.29032257
      %v9041 = vmul.f32 %v8266, 0.29032257
      %v9042 = vmul.f32 %v8269, 0.7096774
      %v9043 = vmul.f32 %v8272, 0.7096774
      %v9044 = vadd.f32 %v9040, %v9042
      %v9045 = vadd.f32 %v9041, %v9043
      %9046 = vmatpush.msra.mxu0 0.0
      %9047 = vmatpush.msra.mxu0 0.0
      %9048 = vmatpush.msra.mxu0 0.0
      %9049 = vmatpush.msra.mxu0 0.0
      %9050 = vmatpush.msra.mxu0 0.0
      %9051 = vmatpush.msra.mxu0 0.0
      %9052 = vmatpush.msra.mxu0 0.0
      %9053 = vmatpush.msra.mxu0 0.0
      %9054 = vmatpush.msra.mxu0 0.0
      %9055 = vmatpush.msra.mxu0 0.0
      %9056 = vmatpush.msra.mxu0 0.0
      %9057 = vmatpush.msra.mxu0 0.0
      %9058 = vmatpush.msra.mxu0 0.0
      %9059 = vmatpush.msra.mxu0 0.0
      %9060 = vmatpush.msra.mxu0 %v9045
      %9061 = vmatpush.msra.mxu0 %v9044
      %9062 = vmatmul.f32.gmra.mxu0 %v8316
      %v9063 = vpop.f32.mrf.mxu0
      %v9064 = vadd.f32 0.0, %v9063
      %9065 = vmatmul.f32.gmra.mxu0 %v8319
      %v9066 = vpop.f32.mrf.mxu0
      %v9067 = vadd.f32 0.0, %v9066
      %9068 = vmatmul.f32.gmra.mxu0 %v8322
      %v9069 = vpop.f32.mrf.mxu0
      %v9070 = vadd.f32 0.0, %v9069
      %9071 = vmatmul.f32.gmra.mxu0 %v8325
      %v9072 = vpop.f32.mrf.mxu0
      %v9073 = vadd.f32 0.0, %v9072
      %9074 = vdwg.mxu0
      %s9075 = scalar_lea.vmem %s460, 576
      %9076 = vst.msk [vmem:[%s9075] sm:$0xff] %vm461, %v9064
      %9077 = vst.msk [vmem:[%s9075 + $0x8] sm:$0xff] %vm461, %v9067
      %9078 = vst.msk [vmem:[%s9075 + $0x10] sm:$0xff] %vm461, %v9070
      %9079 = vst.msk [vmem:[%s9075 + $0x18] sm:$0xff] %vm461, %v9073
      %v9080 = vmul.f32 %v8269, 0.8064516
      %v9081 = vmul.f32 %v8272, 0.8064516
      %v9082 = vmul.f32 %v8275, 0.19354838
      %v9083 = vmul.f32 %v8278, 0.19354838
      %v9084 = vadd.f32 %v9080, %v9082
      %v9085 = vadd.f32 %v9081, %v9083
      %9086 = vmatpush.msra.mxu0 0.0
      %9087 = vmatpush.msra.mxu0 0.0
      %9088 = vmatpush.msra.mxu0 0.0
      %9089 = vmatpush.msra.mxu0 0.0
      %9090 = vmatpush.msra.mxu0 0.0
      %9091 = vmatpush.msra.mxu0 0.0
      %9092 = vmatpush.msra.mxu0 0.0
      %9093 = vmatpush.msra.mxu0 0.0
      %9094 = vmatpush.msra.mxu0 0.0
      %9095 = vmatpush.msra.mxu0 0.0
      %9096 = vmatpush.msra.mxu0 0.0
      %9097 = vmatpush.msra.mxu0 0.0
      %9098 = vmatpush.msra.mxu0 0.0
      %9099 = vmatpush.msra.mxu0 0.0
      %9100 = vmatpush.msra.mxu0 %v9085
      %9101 = vmatpush.msra.mxu0 %v9084
      %9102 = vmatmul.f32.gmra.mxu0 %v8316
      %v9103 = vpop.f32.mrf.mxu0
      %v9104 = vadd.f32 0.0, %v9103
      %9105 = vmatmul.f32.gmra.mxu0 %v8319
      %v9106 = vpop.f32.mrf.mxu0
      %v9107 = vadd.f32 0.0, %v9106
      %9108 = vmatmul.f32.gmra.mxu0 %v8322
      %v9109 = vpop.f32.mrf.mxu0
      %v9110 = vadd.f32 0.0, %v9109
      %9111 = vmatmul.f32.gmra.mxu0 %v8325
      %v9112 = vpop.f32.mrf.mxu0
      %v9113 = vadd.f32 0.0, %v9112
      %9114 = vdwg.mxu0
      %s9115 = scalar_lea.vmem %s460, 608
      %9116 = vst.msk [vmem:[%s9115] sm:$0xff] %vm461, %v9104
      %9117 = vst.msk [vmem:[%s9115 + $0x8] sm:$0xff] %vm461, %v9107
      %9118 = vst.msk [vmem:[%s9115 + $0x10] sm:$0xff] %vm461, %v9110
      %9119 = vst.msk [vmem:[%s9115 + $0x18] sm:$0xff] %vm461, %v9113
      %v9120 = vmul.f32 %v8269, 0.32258064
      %v9121 = vmul.f32 %v8272, 0.32258064
      %v9122 = vmul.f32 %v8275, 0.67741936
      %v9123 = vmul.f32 %v8278, 0.67741936
      %v9124 = vadd.f32 %v9120, %v9122
      %v9125 = vadd.f32 %v9121, %v9123
      %9126 = vmatpush.msra.mxu0 0.0
      %9127 = vmatpush.msra.mxu0 0.0
      %9128 = vmatpush.msra.mxu0 0.0
      %9129 = vmatpush.msra.mxu0 0.0
      %9130 = vmatpush.msra.mxu0 0.0
      %9131 = vmatpush.msra.mxu0 0.0
      %9132 = vmatpush.msra.mxu0 0.0
      %9133 = vmatpush.msra.mxu0 0.0
      %9134 = vmatpush.msra.mxu0 0.0
      %9135 = vmatpush.msra.mxu0 0.0
      %9136 = vmatpush.msra.mxu0 0.0
      %9137 = vmatpush.msra.mxu0 0.0
      %9138 = vmatpush.msra.mxu0 0.0
      %9139 = vmatpush.msra.mxu0 0.0
      %9140 = vmatpush.msra.mxu0 %v9125
      %9141 = vmatpush.msra.mxu0 %v9124
      %9142 = vmatmul.f32.gmra.mxu0 %v8316
      %v9143 = vpop.f32.mrf.mxu0
      %v9144 = vadd.f32 0.0, %v9143
      %9145 = vmatmul.f32.gmra.mxu0 %v8319
      %v9146 = vpop.f32.mrf.mxu0
      %v9147 = vadd.f32 0.0, %v9146
      %9148 = vmatmul.f32.gmra.mxu0 %v8322
      %v9149 = vpop.f32.mrf.mxu0
      %v9150 = vadd.f32 0.0, %v9149
      %9151 = vmatmul.f32.gmra.mxu0 %v8325
      %v9152 = vpop.f32.mrf.mxu0
      %v9153 = vadd.f32 0.0, %v9152
      %9154 = vdwg.mxu0
      %s9155 = scalar_lea.vmem %s460, 640
      %9156 = vst.msk [vmem:[%s9155] sm:$0xff] %vm461, %v9144
      %9157 = vst.msk [vmem:[%s9155 + $0x8] sm:$0xff] %vm461, %v9147
      %9158 = vst.msk [vmem:[%s9155 + $0x10] sm:$0xff] %vm461, %v9150
      %9159 = vst.msk [vmem:[%s9155 + $0x18] sm:$0xff] %vm461, %v9153
      %v9160 = vmul.f32 %v8275, 0.83870965
      %v9161 = vmul.f32 %v8278, 0.83870965
      %v9162 = vmul.f32 %v8281, 0.16129032
      %v9163 = vmul.f32 %v8284, 0.16129032
      %v9164 = vadd.f32 %v9160, %v9162
      %v9165 = vadd.f32 %v9161, %v9163
      %9166 = vmatpush.msra.mxu0 0.0
      %9167 = vmatpush.msra.mxu0 0.0
      %9168 = vmatpush.msra.mxu0 0.0
      %9169 = vmatpush.msra.mxu0 0.0
      %9170 = vmatpush.msra.mxu0 0.0
      %9171 = vmatpush.msra.mxu0 0.0
      %9172 = vmatpush.msra.mxu0 0.0
      %9173 = vmatpush.msra.mxu0 0.0
      %9174 = vmatpush.msra.mxu0 0.0
      %9175 = vmatpush.msra.mxu0 0.0
      %9176 = vmatpush.msra.mxu0 0.0
      %9177 = vmatpush.msra.mxu0 0.0
      %9178 = vmatpush.msra.mxu0 0.0
      %9179 = vmatpush.msra.mxu0 0.0
      %9180 = vmatpush.msra.mxu0 %v9165
      %9181 = vmatpush.msra.mxu0 %v9164
      %9182 = vmatmul.f32.gmra.mxu0 %v8316
      %v9183 = vpop.f32.mrf.mxu0
      %v9184 = vadd.f32 0.0, %v9183
      %9185 = vmatmul.f32.gmra.mxu0 %v8319
      %v9186 = vpop.f32.mrf.mxu0
      %v9187 = vadd.f32 0.0, %v9186
      %9188 = vmatmul.f32.gmra.mxu0 %v8322
      %v9189 = vpop.f32.mrf.mxu0
      %v9190 = vadd.f32 0.0, %v9189
      %9191 = vmatmul.f32.gmra.mxu0 %v8325
      %v9192 = vpop.f32.mrf.mxu0
      %v9193 = vadd.f32 0.0, %v9192
      %9194 = vdwg.mxu0
      %s9195 = scalar_lea.vmem %s460, 672
      %9196 = vst.msk [vmem:[%s9195] sm:$0xff] %vm461, %v9184
      %9197 = vst.msk [vmem:[%s9195 + $0x8] sm:$0xff] %vm461, %v9187
      %9198 = vst.msk [vmem:[%s9195 + $0x10] sm:$0xff] %vm461, %v9190
      %9199 = vst.msk [vmem:[%s9195 + $0x18] sm:$0xff] %vm461, %v9193
      %v9200 = vmul.f32 %v8275, 0.3548387
      %v9201 = vmul.f32 %v8278, 0.3548387
      %v9202 = vmul.f32 %v8281, 0.6451613
      %v9203 = vmul.f32 %v8284, 0.6451613
      %v9204 = vadd.f32 %v9200, %v9202
      %v9205 = vadd.f32 %v9201, %v9203
      %9206 = vmatpush.msra.mxu0 0.0
      %9207 = vmatpush.msra.mxu0 0.0
      %9208 = vmatpush.msra.mxu0 0.0
      %9209 = vmatpush.msra.mxu0 0.0
      %9210 = vmatpush.msra.mxu0 0.0
      %9211 = vmatpush.msra.mxu0 0.0
      %9212 = vmatpush.msra.mxu0 0.0
      %9213 = vmatpush.msra.mxu0 0.0
      %9214 = vmatpush.msra.mxu0 0.0
      %9215 = vmatpush.msra.mxu0 0.0
      %9216 = vmatpush.msra.mxu0 0.0
      %9217 = vmatpush.msra.mxu0 0.0
      %9218 = vmatpush.msra.mxu0 0.0
      %9219 = vmatpush.msra.mxu0 0.0
      %9220 = vmatpush.msra.mxu0 %v9205
      %9221 = vmatpush.msra.mxu0 %v9204
      %9222 = vmatmul.f32.gmra.mxu0 %v8316
      %v9223 = vpop.f32.mrf.mxu0
      %v9224 = vadd.f32 0.0, %v9223
      %9225 = vmatmul.f32.gmra.mxu0 %v8319
      %v9226 = vpop.f32.mrf.mxu0
      %v9227 = vadd.f32 0.0, %v9226
      %9228 = vmatmul.f32.gmra.mxu0 %v8322
      %v9229 = vpop.f32.mrf.mxu0
      %v9230 = vadd.f32 0.0, %v9229
      %9231 = vmatmul.f32.gmra.mxu0 %v8325
      %v9232 = vpop.f32.mrf.mxu0
      %v9233 = vadd.f32 0.0, %v9232
      %9234 = vdwg.mxu0
      %s9235 = scalar_lea.vmem %s460, 704
      %9236 = vst.msk [vmem:[%s9235] sm:$0xff] %vm461, %v9224
      %9237 = vst.msk [vmem:[%s9235 + $0x8] sm:$0xff] %vm461, %v9227
      %9238 = vst.msk [vmem:[%s9235 + $0x10] sm:$0xff] %vm461, %v9230
      %9239 = vst.msk [vmem:[%s9235 + $0x18] sm:$0xff] %vm461, %v9233
      %v9240 = vmul.f32 %v8281, 0.87096775
      %v9241 = vmul.f32 %v8284, 0.87096775
      %v9242 = vmul.f32 %v8287, 0.12903225
      %v9243 = vmul.f32 %v8290, 0.12903225
      %v9244 = vadd.f32 %v9240, %v9242
      %v9245 = vadd.f32 %v9241, %v9243
      %9246 = vmatpush.msra.mxu0 0.0
      %9247 = vmatpush.msra.mxu0 0.0
      %9248 = vmatpush.msra.mxu0 0.0
      %9249 = vmatpush.msra.mxu0 0.0
      %9250 = vmatpush.msra.mxu0 0.0
      %9251 = vmatpush.msra.mxu0 0.0
      %9252 = vmatpush.msra.mxu0 0.0
      %9253 = vmatpush.msra.mxu0 0.0
      %9254 = vmatpush.msra.mxu0 0.0
      %9255 = vmatpush.msra.mxu0 0.0
      %9256 = vmatpush.msra.mxu0 0.0
      %9257 = vmatpush.msra.mxu0 0.0
      %9258 = vmatpush.msra.mxu0 0.0
      %9259 = vmatpush.msra.mxu0 0.0
      %9260 = vmatpush.msra.mxu0 %v9245
      %9261 = vmatpush.msra.mxu0 %v9244
      %9262 = vmatmul.f32.gmra.mxu0 %v8316
      %v9263 = vpop.f32.mrf.mxu0
      %v9264 = vadd.f32 0.0, %v9263
      %9265 = vmatmul.f32.gmra.mxu0 %v8319
      %v9266 = vpop.f32.mrf.mxu0
      %v9267 = vadd.f32 0.0, %v9266
      %9268 = vmatmul.f32.gmra.mxu0 %v8322
      %v9269 = vpop.f32.mrf.mxu0
      %v9270 = vadd.f32 0.0, %v9269
      %9271 = vmatmul.f32.gmra.mxu0 %v8325
      %v9272 = vpop.f32.mrf.mxu0
      %v9273 = vadd.f32 0.0, %v9272
      %9274 = vdwg.mxu0
      %s9275 = scalar_lea.vmem %s460, 736
      %9276 = vst.msk [vmem:[%s9275] sm:$0xff] %vm461, %v9264
      %9277 = vst.msk [vmem:[%s9275 + $0x8] sm:$0xff] %vm461, %v9267
      %9278 = vst.msk [vmem:[%s9275 + $0x10] sm:$0xff] %vm461, %v9270
      %9279 = vst.msk [vmem:[%s9275 + $0x18] sm:$0xff] %vm461, %v9273
      %v9280 = vmul.f32 %v8281, 0.38709676
      %v9281 = vmul.f32 %v8284, 0.38709676
      %v9282 = vmul.f32 %v8287, 0.61290324
      %v9283 = vmul.f32 %v8290, 0.61290324
      %v9284 = vadd.f32 %v9280, %v9282
      %v9285 = vadd.f32 %v9281, %v9283
      %9286 = vmatpush.msra.mxu0 0.0
      %9287 = vmatpush.msra.mxu0 0.0
      %9288 = vmatpush.msra.mxu0 0.0
      %9289 = vmatpush.msra.mxu0 0.0
      %9290 = vmatpush.msra.mxu0 0.0
      %9291 = vmatpush.msra.mxu0 0.0
      %9292 = vmatpush.msra.mxu0 0.0
      %9293 = vmatpush.msra.mxu0 0.0
      %9294 = vmatpush.msra.mxu0 0.0
      %9295 = vmatpush.msra.mxu0 0.0
      %9296 = vmatpush.msra.mxu0 0.0
      %9297 = vmatpush.msra.mxu0 0.0
      %9298 = vmatpush.msra.mxu0 0.0
      %9299 = vmatpush.msra.mxu0 0.0
      %9300 = vmatpush.msra.mxu0 %v9285
      %9301 = vmatpush.msra.mxu0 %v9284
      %9302 = vmatmul.f32.gmra.mxu0 %v8316
      %v9303 = vpop.f32.mrf.mxu0
      %v9304 = vadd.f32 0.0, %v9303
      %9305 = vmatmul.f32.gmra.mxu0 %v8319
      %v9306 = vpop.f32.mrf.mxu0
      %v9307 = vadd.f32 0.0, %v9306
      %9308 = vmatmul.f32.gmra.mxu0 %v8322
      %v9309 = vpop.f32.mrf.mxu0
      %v9310 = vadd.f32 0.0, %v9309
      %9311 = vmatmul.f32.gmra.mxu0 %v8325
      %v9312 = vpop.f32.mrf.mxu0
      %v9313 = vadd.f32 0.0, %v9312
      %9314 = vdwg.mxu0
      %s9315 = scalar_lea.vmem %s460, 768
      %9316 = vst.msk [vmem:[%s9315] sm:$0xff] %vm461, %v9304
      %9317 = vst.msk [vmem:[%s9315 + $0x8] sm:$0xff] %vm461, %v9307
      %9318 = vst.msk [vmem:[%s9315 + $0x10] sm:$0xff] %vm461, %v9310
      %9319 = vst.msk [vmem:[%s9315 + $0x18] sm:$0xff] %vm461, %v9313
      %v9320 = vmul.f32 %v8287, 0.9032258
      %v9321 = vmul.f32 %v8290, 0.9032258
      %v9322 = vmul.f32 %v8293, 0.09677419
      %v9323 = vmul.f32 %v8296, 0.09677419
      %v9324 = vadd.f32 %v9320, %v9322
      %v9325 = vadd.f32 %v9321, %v9323
      %9326 = vmatpush.msra.mxu0 0.0
      %9327 = vmatpush.msra.mxu0 0.0
      %9328 = vmatpush.msra.mxu0 0.0
      %9329 = vmatpush.msra.mxu0 0.0
      %9330 = vmatpush.msra.mxu0 0.0
      %9331 = vmatpush.msra.mxu0 0.0
      %9332 = vmatpush.msra.mxu0 0.0
      %9333 = vmatpush.msra.mxu0 0.0
      %9334 = vmatpush.msra.mxu0 0.0
      %9335 = vmatpush.msra.mxu0 0.0
      %9336 = vmatpush.msra.mxu0 0.0
      %9337 = vmatpush.msra.mxu0 0.0
      %9338 = vmatpush.msra.mxu0 0.0
      %9339 = vmatpush.msra.mxu0 0.0
      %9340 = vmatpush.msra.mxu0 %v9325
      %9341 = vmatpush.msra.mxu0 %v9324
      %9342 = vmatmul.f32.gmra.mxu0 %v8316
      %v9343 = vpop.f32.mrf.mxu0
      %v9344 = vadd.f32 0.0, %v9343
      %9345 = vmatmul.f32.gmra.mxu0 %v8319
      %v9346 = vpop.f32.mrf.mxu0
      %v9347 = vadd.f32 0.0, %v9346
      %9348 = vmatmul.f32.gmra.mxu0 %v8322
      %v9349 = vpop.f32.mrf.mxu0
      %v9350 = vadd.f32 0.0, %v9349
      %9351 = vmatmul.f32.gmra.mxu0 %v8325
      %v9352 = vpop.f32.mrf.mxu0
      %v9353 = vadd.f32 0.0, %v9352
      %9354 = vdwg.mxu0
      %s9355 = scalar_lea.vmem %s460, 800
      %9356 = vst.msk [vmem:[%s9355] sm:$0xff] %vm461, %v9344
      %9357 = vst.msk [vmem:[%s9355 + $0x8] sm:$0xff] %vm461, %v9347
      %9358 = vst.msk [vmem:[%s9355 + $0x10] sm:$0xff] %vm461, %v9350
      %9359 = vst.msk [vmem:[%s9355 + $0x18] sm:$0xff] %vm461, %v9353
      %v9360 = vmul.f32 %v8287, 0.41935483
      %v9361 = vmul.f32 %v8290, 0.41935483
      %v9362 = vmul.f32 %v8293, 0.58064514
      %v9363 = vmul.f32 %v8296, 0.58064514
      %v9364 = vadd.f32 %v9360, %v9362
      %v9365 = vadd.f32 %v9361, %v9363
      %9366 = vmatpush.msra.mxu0 0.0
      %9367 = vmatpush.msra.mxu0 0.0
      %9368 = vmatpush.msra.mxu0 0.0
      %9369 = vmatpush.msra.mxu0 0.0
      %9370 = vmatpush.msra.mxu0 0.0
      %9371 = vmatpush.msra.mxu0 0.0
      %9372 = vmatpush.msra.mxu0 0.0
      %9373 = vmatpush.msra.mxu0 0.0
      %9374 = vmatpush.msra.mxu0 0.0
      %9375 = vmatpush.msra.mxu0 0.0
      %9376 = vmatpush.msra.mxu0 0.0
      %9377 = vmatpush.msra.mxu0 0.0
      %9378 = vmatpush.msra.mxu0 0.0
      %9379 = vmatpush.msra.mxu0 0.0
      %9380 = vmatpush.msra.mxu0 %v9365
      %9381 = vmatpush.msra.mxu0 %v9364
      %9382 = vmatmul.f32.gmra.mxu0 %v8316
      %v9383 = vpop.f32.mrf.mxu0
      %v9384 = vadd.f32 0.0, %v9383
      %9385 = vmatmul.f32.gmra.mxu0 %v8319
      %v9386 = vpop.f32.mrf.mxu0
      %v9387 = vadd.f32 0.0, %v9386
      %9388 = vmatmul.f32.gmra.mxu0 %v8322
      %v9389 = vpop.f32.mrf.mxu0
      %v9390 = vadd.f32 0.0, %v9389
      %9391 = vmatmul.f32.gmra.mxu0 %v8325
      %v9392 = vpop.f32.mrf.mxu0
      %v9393 = vadd.f32 0.0, %v9392
      %9394 = vdwg.mxu0
      %s9395 = scalar_lea.vmem %s460, 832
      %9396 = vst.msk [vmem:[%s9395] sm:$0xff] %vm461, %v9384
      %9397 = vst.msk [vmem:[%s9395 + $0x8] sm:$0xff] %vm461, %v9387
      %9398 = vst.msk [vmem:[%s9395 + $0x10] sm:$0xff] %vm461, %v9390
      %9399 = vst.msk [vmem:[%s9395 + $0x18] sm:$0xff] %vm461, %v9393
      %v9400 = vmul.f32 %v8293, 0.9354839
      %v9401 = vmul.f32 %v8296, 0.9354839
      %v9402 = vmul.f32 %v8299, 0.06451613
      %v9403 = vmul.f32 %v8302, 0.06451613
      %v9404 = vadd.f32 %v9400, %v9402
      %v9405 = vadd.f32 %v9401, %v9403
      %9406 = vmatpush.msra.mxu0 0.0
      %9407 = vmatpush.msra.mxu0 0.0
      %9408 = vmatpush.msra.mxu0 0.0
      %9409 = vmatpush.msra.mxu0 0.0
      %9410 = vmatpush.msra.mxu0 0.0
      %9411 = vmatpush.msra.mxu0 0.0
      %9412 = vmatpush.msra.mxu0 0.0
      %9413 = vmatpush.msra.mxu0 0.0
      %9414 = vmatpush.msra.mxu0 0.0
      %9415 = vmatpush.msra.mxu0 0.0
      %9416 = vmatpush.msra.mxu0 0.0
      %9417 = vmatpush.msra.mxu0 0.0
      %9418 = vmatpush.msra.mxu0 0.0
      %9419 = vmatpush.msra.mxu0 0.0
      %9420 = vmatpush.msra.mxu0 %v9405
      %9421 = vmatpush.msra.mxu0 %v9404
      %9422 = vmatmul.f32.gmra.mxu0 %v8316
      %v9423 = vpop.f32.mrf.mxu0
      %v9424 = vadd.f32 0.0, %v9423
      %9425 = vmatmul.f32.gmra.mxu0 %v8319
      %v9426 = vpop.f32.mrf.mxu0
      %v9427 = vadd.f32 0.0, %v9426
      %9428 = vmatmul.f32.gmra.mxu0 %v8322
      %v9429 = vpop.f32.mrf.mxu0
      %v9430 = vadd.f32 0.0, %v9429
      %9431 = vmatmul.f32.gmra.mxu0 %v8325
      %v9432 = vpop.f32.mrf.mxu0
      %v9433 = vadd.f32 0.0, %v9432
      %9434 = vdwg.mxu0
      %s9435 = scalar_lea.vmem %s460, 864
      %9436 = vst.msk [vmem:[%s9435] sm:$0xff] %vm461, %v9424
      %9437 = vst.msk [vmem:[%s9435 + $0x8] sm:$0xff] %vm461, %v9427
      %9438 = vst.msk [vmem:[%s9435 + $0x10] sm:$0xff] %vm461, %v9430
      %9439 = vst.msk [vmem:[%s9435 + $0x18] sm:$0xff] %vm461, %v9433
      %v9440 = vmul.f32 %v8293, 0.4516129
      %v9441 = vmul.f32 %v8296, 0.4516129
      %v9442 = vmul.f32 %v8299, 0.5483871
      %v9443 = vmul.f32 %v8302, 0.5483871
      %v9444 = vadd.f32 %v9440, %v9442
      %v9445 = vadd.f32 %v9441, %v9443
      %9446 = vmatpush.msra.mxu0 0.0
      %9447 = vmatpush.msra.mxu0 0.0
      %9448 = vmatpush.msra.mxu0 0.0
      %9449 = vmatpush.msra.mxu0 0.0
      %9450 = vmatpush.msra.mxu0 0.0
      %9451 = vmatpush.msra.mxu0 0.0
      %9452 = vmatpush.msra.mxu0 0.0
      %9453 = vmatpush.msra.mxu0 0.0
      %9454 = vmatpush.msra.mxu0 0.0
      %9455 = vmatpush.msra.mxu0 0.0
      %9456 = vmatpush.msra.mxu0 0.0
      %9457 = vmatpush.msra.mxu0 0.0
      %9458 = vmatpush.msra.mxu0 0.0
      %9459 = vmatpush.msra.mxu0 0.0
      %9460 = vmatpush.msra.mxu0 %v9445
      %9461 = vmatpush.msra.mxu0 %v9444
      %9462 = vmatmul.f32.gmra.mxu0 %v8316
      %v9463 = vpop.f32.mrf.mxu0
      %v9464 = vadd.f32 0.0, %v9463
      %9465 = vmatmul.f32.gmra.mxu0 %v8319
      %v9466 = vpop.f32.mrf.mxu0
      %v9467 = vadd.f32 0.0, %v9466
      %9468 = vmatmul.f32.gmra.mxu0 %v8322
      %v9469 = vpop.f32.mrf.mxu0
      %v9470 = vadd.f32 0.0, %v9469
      %9471 = vmatmul.f32.gmra.mxu0 %v8325
      %v9472 = vpop.f32.mrf.mxu0
      %v9473 = vadd.f32 0.0, %v9472
      %9474 = vdwg.mxu0
      %s9475 = scalar_lea.vmem %s460, 896
      %9476 = vst.msk [vmem:[%s9475] sm:$0xff] %vm461, %v9464
      %9477 = vst.msk [vmem:[%s9475 + $0x8] sm:$0xff] %vm461, %v9467
      %9478 = vst.msk [vmem:[%s9475 + $0x10] sm:$0xff] %vm461, %v9470
      %9479 = vst.msk [vmem:[%s9475 + $0x18] sm:$0xff] %vm461, %v9473
      %v9480 = vmul.f32 %v8299, 0.9677419
      %v9481 = vmul.f32 %v8302, 0.9677419
      %v9482 = vmul.f32 %v8305, 0.032258064
      %v9483 = vmul.f32 %v8308, 0.032258064
      %v9484 = vadd.f32 %v9480, %v9482
      %v9485 = vadd.f32 %v9481, %v9483
      %9486 = vmatpush.msra.mxu0 0.0
      %9487 = vmatpush.msra.mxu0 0.0
      %9488 = vmatpush.msra.mxu0 0.0
      %9489 = vmatpush.msra.mxu0 0.0
      %9490 = vmatpush.msra.mxu0 0.0
      %9491 = vmatpush.msra.mxu0 0.0
      %9492 = vmatpush.msra.mxu0 0.0
      %9493 = vmatpush.msra.mxu0 0.0
      %9494 = vmatpush.msra.mxu0 0.0
      %9495 = vmatpush.msra.mxu0 0.0
      %9496 = vmatpush.msra.mxu0 0.0
      %9497 = vmatpush.msra.mxu0 0.0
      %9498 = vmatpush.msra.mxu0 0.0
      %9499 = vmatpush.msra.mxu0 0.0
      %9500 = vmatpush.msra.mxu0 %v9485
      %9501 = vmatpush.msra.mxu0 %v9484
      %9502 = vmatmul.f32.gmra.mxu0 %v8316
      %v9503 = vpop.f32.mrf.mxu0
      %v9504 = vadd.f32 0.0, %v9503
      %9505 = vmatmul.f32.gmra.mxu0 %v8319
      %v9506 = vpop.f32.mrf.mxu0
      %v9507 = vadd.f32 0.0, %v9506
      %9508 = vmatmul.f32.gmra.mxu0 %v8322
      %v9509 = vpop.f32.mrf.mxu0
      %v9510 = vadd.f32 0.0, %v9509
      %9511 = vmatmul.f32.gmra.mxu0 %v8325
      %v9512 = vpop.f32.mrf.mxu0
      %v9513 = vadd.f32 0.0, %v9512
      %9514 = vdwg.mxu0
      %s9515 = scalar_lea.vmem %s460, 928
      %9516 = vst.msk [vmem:[%s9515] sm:$0xff] %vm461, %v9504
      %9517 = vst.msk [vmem:[%s9515 + $0x8] sm:$0xff] %vm461, %v9507
      %9518 = vst.msk [vmem:[%s9515 + $0x10] sm:$0xff] %vm461, %v9510
      %9519 = vst.msk [vmem:[%s9515 + $0x18] sm:$0xff] %vm461, %v9513
      %v9520 = vmul.f32 %v8299, 0.48387095
      %v9521 = vmul.f32 %v8302, 0.48387095
      %v9522 = vmul.f32 %v8305, 0.516129
      %v9523 = vmul.f32 %v8308, 0.516129
      %v9524 = vadd.f32 %v9520, %v9522
      %v9525 = vadd.f32 %v9521, %v9523
      %9526 = vmatpush.msra.mxu0 0.0
      %9527 = vmatpush.msra.mxu0 0.0
      %9528 = vmatpush.msra.mxu0 0.0
      %9529 = vmatpush.msra.mxu0 0.0
      %9530 = vmatpush.msra.mxu0 0.0
      %9531 = vmatpush.msra.mxu0 0.0
      %9532 = vmatpush.msra.mxu0 0.0
      %9533 = vmatpush.msra.mxu0 0.0
      %9534 = vmatpush.msra.mxu0 0.0
      %9535 = vmatpush.msra.mxu0 0.0
      %9536 = vmatpush.msra.mxu0 0.0
      %9537 = vmatpush.msra.mxu0 0.0
      %9538 = vmatpush.msra.mxu0 0.0
      %9539 = vmatpush.msra.mxu0 0.0
      %9540 = vmatpush.msra.mxu0 %v9525
      %9541 = vmatpush.msra.mxu0 %v9524
      %9542 = vmatmul.f32.gmra.mxu0 %v8316
      %v9543 = vpop.f32.mrf.mxu0
      %v9544 = vadd.f32 0.0, %v9543
      %9545 = vmatmul.f32.gmra.mxu0 %v8319
      %v9546 = vpop.f32.mrf.mxu0
      %v9547 = vadd.f32 0.0, %v9546
      %9548 = vmatmul.f32.gmra.mxu0 %v8322
      %v9549 = vpop.f32.mrf.mxu0
      %v9550 = vadd.f32 0.0, %v9549
      %9551 = vmatmul.f32.gmra.mxu0 %v8325
      %v9552 = vpop.f32.mrf.mxu0
      %v9553 = vadd.f32 0.0, %v9552
      %9554 = vdwg.mxu0
      %s9555 = scalar_lea.vmem %s460, 960
      %9556 = vst.msk [vmem:[%s9555] sm:$0xff] %vm461, %v9544
      %9557 = vst.msk [vmem:[%s9555 + $0x8] sm:$0xff] %vm461, %v9547
      %9558 = vst.msk [vmem:[%s9555 + $0x10] sm:$0xff] %vm461, %v9550
      %9559 = vst.msk [vmem:[%s9555 + $0x18] sm:$0xff] %vm461, %v9553
      %v9560 = vmul.f32 %v8299, 0.0
      %v9561 = vmul.f32 %v8302, 0.0
      %v9562 = vadd.f32 %v9560, %v8305
      %v9563 = vadd.f32 %v9561, %v8308
      %9564 = vmatpush.msra.mxu0 0.0
      %9565 = vmatpush.msra.mxu0 0.0
      %9566 = vmatpush.msra.mxu0 0.0
      %9567 = vmatpush.msra.mxu0 0.0
      %9568 = vmatpush.msra.mxu0 0.0
      %9569 = vmatpush.msra.mxu0 0.0
      %9570 = vmatpush.msra.mxu0 0.0
      %9571 = vmatpush.msra.mxu0 0.0
      %9572 = vmatpush.msra.mxu0 0.0
      %9573 = vmatpush.msra.mxu0 0.0
      %9574 = vmatpush.msra.mxu0 0.0
      %9575 = vmatpush.msra.mxu0 0.0
      %9576 = vmatpush.msra.mxu0 0.0
      %9577 = vmatpush.msra.mxu0 0.0
      %9578 = vmatpush.msra.mxu0 %v9563
      %9579 = vmatpush.msra.mxu0 %v9562
      %9580 = vmatmul.f32.gmra.mxu0 %v8316
      %v9581 = vpop.f32.mrf.mxu0
      %v9582 = vadd.f32 0.0, %v9581
      %9583 = vmatmul.f32.gmra.mxu0 %v8319
      %v9584 = vpop.f32.mrf.mxu0
      %v9585 = vadd.f32 0.0, %v9584
      %9586 = vmatmul.f32.gmra.mxu0 %v8322
      %v9587 = vpop.f32.mrf.mxu0
      %v9588 = vadd.f32 0.0, %v9587
      %9589 = vmatmul.f32.gmra.mxu0 %v8325
      %v9590 = vpop.f32.mrf.mxu0
      %v9591 = vadd.f32 0.0, %v9590
      %9592 = vdwg.mxu0
      %s9593 = scalar_lea.vmem %s460, 992
      %9594 = vst.msk [vmem:[%s9593] sm:$0xff] %vm461, %v9582
      %9595 = vst.msk [vmem:[%s9593 + $0x8] sm:$0xff] %vm461, %v9585
      %9596 = vst.msk [vmem:[%s9593 + $0x10] sm:$0xff] %vm461, %v9588
      %9597 = vst.msk [vmem:[%s9593 + $0x18] sm:$0xff] %vm461, %v9591
      %p9598 = scmp.lt.s32.totalorder %s24, 1
      %s9599 = scalar_select %p9598, %s24, 1
      %s9600 = smul.addr %s9599, 128
      %s9601 = smul.addr %s9600, 8
      %s9602 = scalar_lea.vmem %s13, %s9601
      // Predicated region
      $region73: #{tpu_custom_call.1} parent=71 // pred_check
        %p9603 = pneg %p325
      $region74: #{tpu_custom_call.1} parent=71 // pred_check_branch
        %9605 = sbr.rel (%p9603) target = $region76
      $region75: #{tpu_custom_call.1} parent=71 // pred_region
        _
      $region76: #{tpu_custom_call.1} parent=71 // pred_fallthru
        _
    $region72: #{tpu_custom_call.1} parent=5 // pred_fallthru
      _
    %p9606 = scmp.le.s32.totalorder 2, %s19
    // Predicated region
    $region77: #{tpu_custom_call.1} parent=5 // pred_check
      %p9607 = pneg %p9606
    $region78: #{tpu_custom_call.1} parent=5 // pred_check_branch
      %9609 = sbr.rel (%p9607) target = $region80
    $region79: #{tpu_custom_call.1} parent=5 // pred_region
      %s9610 = ssub.s32 %s19, 2
      // Predicated region
      $region81: #{tpu_custom_call.1} parent=79 // pred_check
        %p9611 = pneg %p331
      $region82: #{tpu_custom_call.1} parent=79 // pred_check_branch
        %9613 = sbr.rel (%p9611) target = $region84
      $region83: #{tpu_custom_call.1} parent=79 // pred_region
        %p9614 = scmp.lt.s32.totalorder %s25, 1
        %s9615 = scalar_select %p9614, %s25, 1
        %s9616 = smul.addr %s9615, 128
        %s9617 = smul.addr %s9616, 8
        %s9618 = scalar_lea.vmem %s13, %s9617
      $region84: #{tpu_custom_call.1} parent=79 // pred_fallthru
        _
    $region80: #{tpu_custom_call.1} parent=5 // pred_fallthru
      _
  $region6: #{tpu_custom_call.1} parent=0 // loop_footer
    %s23 = sadd.s32 1, %s19
  $region7: #{tpu_custom_call.1} parent=0 // loop_footer_branch
    %18 = sbr.rel target = $region3
  $region8: #{tpu_custom_call.1} parent=0 // loop_exit
    _

</llo_original>
